<compile_context>
chip_gen: v6e
topology: v6e:2x2x1
jax: 0.10.0
libtpu: 0.0.40
codegen_flags: <defaults>
</compile_context>

<pallas_src>
import numpy as np
import jax
import jax.numpy as jnp
from jax import lax
from jax.experimental import pallas as pl
from jax.experimental.pallas import tpu as pltpu


# -----------------------------------------------------------------------------
# sym7 wavelet filter bank (pywt 'sym7' dec_lo; sum == sqrt(2))
# -----------------------------------------------------------------------------
_SYM7_DEC_LO = np.array([
    0.002681814568257878, -0.0010473848886829163, -0.01263630340325193,
    0.03051551316596357, 0.0678926935013727, -0.049552834937127255,
    0.017441255086855827, 0.5361019170917628, 0.767764317003164,
    0.2886296317515146, -0.14004724044296152, -0.10780823770381774,
    0.004010244871533663, 0.010268176708511255], dtype=np.float64)


def _wavelet_filters():
    dec_lo = _SYM7_DEC_LO
    L = len(dec_lo)
    dec_hi = np.array([((-1.0) ** (k + 1)) * dec_lo[L - 1 - k] for k in range(L)])
    rec_lo = dec_lo[::-1].copy()
    rec_hi = dec_hi[::-1].copy()
    return dec_lo, dec_hi, rec_lo, rec_hi


def _analysis_matrices(n):
    """1-D single-level DWT (mode='reflect', pytorch_wavelets) as dense matrices."""
    dec_lo, dec_hi, _, _ = _wavelet_filters()
    L = len(dec_lo)
    n_out = (n + L - 1) // 2
    p = 2 * (n_out - 1) - n + L

    def apply(sig, filt):
        padded = np.pad(sig, (p // 2, p - p // 2), mode='reflect')
        fr = filt[::-1]  # conv2d is correlation; pytorch_wavelets stores reversed filters
        return np.array([np.dot(padded[2 * i:2 * i + L], fr) for i in range(n_out)])

    a_lo = np.zeros((n_out, n))
    a_hi = np.zeros((n_out, n))
    for j in range(n):
        e = np.zeros(n); e[j] = 1.0
        a_lo[:, j] = apply(e, dec_lo)
        a_hi[:, j] = apply(e, dec_hi)
    return a_lo, a_hi, n_out


def _synthesis_matrices(n_c, n_out):
    """1-D inverse DWT (conv_transpose, stride 2, padding L-2) as dense matrices."""
    _, _, rec_lo, rec_hi = _wavelet_filters()
    L = len(rec_lo)

    def apply(coef, filt):
        up = np.zeros(2 * (n_c - 1) + 1)
        up[::2] = coef
        full = np.convolve(up, filt)
        pad = L - 2
        return full[pad:pad + n_out]

    s_lo = np.zeros((n_out, n_c))
    s_hi = np.zeros((n_out, n_c))
    for j in range(n_c):
        e = np.zeros(n_c); e[j] = 1.0
        s_lo[:, j] = apply(e, rec_lo)
        s_hi[:, j] = apply(e, rec_hi)
    return s_lo, s_hi


def _dx_matrix(n):
    # d[0]=0 ; d[1]=u[1]-u[n-1] ; d[j]=u[j]-u[j-1], j>=2   (== Dx_f / Dy_f)
    m = np.zeros((n, n))
    m[1, 1] = 1.0; m[1, n - 1] = -1.0
    for j in range(2, n):
        m[j, j] = 1.0; m[j, j - 1] = -1.0
    return m


def _dxt_matrix(n):
    # d[0]=0 ; d[j]=u[j]-u[j+1], 1<=j<=n-2 ; d[n-1]=u[n-1]-u[1]  (== Dxt_f / Dyt_f)
    m = np.zeros((n, n))
    for j in range(1, n - 1):
        m[j, j] = 1.0; m[j, j + 1] = -1.0
    m[n - 1, n - 1] = 1.0; m[n - 1, 1] = -1.0
    return m


def _round_up(x, m):
    return ((x + m - 1) // m) * m


# -----------------------------------------------------------------------------
# generation-aware sizing
# -----------------------------------------------------------------------------
def _tpu_vmem_capacity_bytes():
    try:
        return int(pltpu.get_tpu_info().vmem_capacity_bytes)
    except Exception:
        return 64 << 20  # conservative default (v7x per-TC VMEM)


def _tpu_has_two_tensorcores():
    # v7x has 2 TensorCores per chip; v5e/v6e have 1.
    try:
        kind = jax.devices()[0].device_kind.lower()
    except Exception:
        kind = ""
    return ("v7" in kind) or ("7x" in kind)


def _pick_nb_tile(NB, H, W, Hc, Wc, budget_bytes, keep_two_steps):
    """Largest divisor of NB whose per-grid-step VMEM fits the budget.

    Accounting (worst call = post): 6 blocked inputs (5 slab + 1 coef),
    7 blocked outputs (5 slab + 2 coef), all double-buffered; constant
    matrices double-buffered too; in-kernel broadcasts of the small operators
    across nb_tile; headroom for live intermediates.
    On 2-TC chips (v7x) keep >= 2 grid steps so the 'parallel' batch axis can
    be split across both TensorCores; on single-TC chips use the whole batch.
    """
    cap = max(1, NB // 2) if (keep_two_steps and NB > 1) else NB
    mats = 4 * (2 * Hc * H + 2 * W * Wc + 2 * W * W + 2 * H * H)
    best = 1
    for t in range(1, cap + 1):
        if NB % t:
            continue
        S = 4 * t * H * W            # one slab block
        Cb = 4 * t * Hc * Wc         # one coefficient block
        bcast = 4 * t * (Hc * H + W * Wc + W * W + H * H)
        live = 6 * max(S, Cb)
        need = 2 * (10 * S + 3 * Cb) + 2 * mats + bcast + live
        if need <= budget_bytes:
            best = t
    return best


# -----------------------------------------------------------------------------
# model builder
# -----------------------------------------------------------------------------
def build_dsb_net(n_sig, B, C, H, W, use_bf16_matmul=False):
    f32 = jnp.float32
    # deterministic parameter init (mirrors DSB_NET.__init__)
    lam = float(1.0 / (3.0 * n_sig))   # self.lam
    gama = float(1.0 / (1.0 * n_sig))  # self.gama
    mmu = 40.0                         # self.mmu
    prelu_a = 0.2                      # nn.PReLU(num_parameters=1, init=0.2)
    inv_lam = 1.0 / lam
    inv_gama = 1.0 / gama

    acol_lo, acol_hi, Ho = _analysis_matrices(H)
    arow_lo, arow_hi, Wo = _analysis_matrices(W)
    scol_lo, scol_hi = _synthesis_matrices(Ho, H)
    srow_lo, srow_hi = _synthesis_matrices(Wo, W)

    NB = B * C
    Hc = _round_up(2 * Ho, 8)      # coefficient rows per slab, sublane-aligned
    Wc = _round_up(2 * Wo, 128)    # coefficient lanes, lane-dense (padding inert)

    vmem_cap = _tpu_vmem_capacity_bytes()
    two_tc = _tpu_has_two_tensorcores()
    budget = int(0.65 * vmem_cap)                                  # working-set target
    vmem_limit = int(min(vmem_cap - (4 << 20), budget + (8 << 20)))
    nbt = _pick_nb_tile(NB, H, W, Hc, Wc, budget, keep_two_steps=two_tc)
    G = NB // nbt                 # pallas grid over the batch axis

    # Finite differences: roll+mask when tile aligned, small dense matrices otherwise.
    use_roll_fd = (W % 128 == 0) and (H % 8 == 0)

    # ---- small per-slab operators (no kron block diagonals) ------------------
    ac = np.zeros((Hc, H));  ac[:Ho] = acol_lo;        ac[Ho:2 * Ho] = acol_hi
    sc = np.zeros((H, Hc));  sc[:, :Ho] = scol_lo;     sc[:, Ho:2 * Ho] = scol_hi
    arT = np.zeros((W, Wc)); arT[:, :Wo] = arow_lo.T;  arT[:, Wo:2 * Wo] = arow_hi.T
    srP = np.zeros((Wc, W)); srP[:Wo] = srow_lo.T;     srP[Wo:2 * Wo] = srow_hi.T

    Ac = jnp.asarray(ac, f32)       # (Hc, H)  column analysis bank
    Sc = jnp.asarray(sc, f32)       # (H, Hc)  column synthesis bank
    ArT = jnp.asarray(arT, f32)     # (W, Wc)  row analysis bank (transposed)
    SrP = jnp.asarray(srP, f32)     # (Wc, W)  row synthesis bank
    MdxT = jnp.asarray(_dx_matrix(W).T, f32)     # u @ MdxT  == Dx_f(u)
    MdxtT = jnp.asarray(_dxt_matrix(W).T, f32)   # u @ MdxtT == Dxt_f(u)
    Mdy = jnp.asarray(_dx_matrix(H), f32)        # Mdy  @ u  == Dy_f(u)
    Mdyt = jnp.asarray(_dxt_matrix(H), f32)      # Mdyt @ u  == Dyt_f(u)

    mm_dtype = jnp.bfloat16 if use_bf16_matmul else f32

    # --------------------------- in-kernel helpers ----------------------------
    def bmm(a, b):
        # canonical batched matmul (n, M, K) x (n, K, N) -> (n, M, N) on the MXU
        return lax.dot_general(a.astype(mm_dtype), b.astype(mm_dtype),
                               (((2,), (1,)), ((0,), (0,))),
                               preferred_element_type=f32)

    def bc(mat_ref):
        # broadcast a small constant operator across nb_tile (hoisted, single use);
        # exact per-slab MACs, unlike the old kron(I_nb_tile, .) operators.
        return jnp.broadcast_to(mat_ref[...], (nbt,) + mat_ref.shape)

    def prelu(x):
        return jnp.where(x >= 0.0, x, prelu_a * x)

    def dwt2(u, ac_ref, arT_ref):
        t = bmm(u, bc(arT_ref))          # (n, H, Wc)  row analysis
        return bmm(bc(ac_ref), t)        # (n, Hc, Wc) column analysis

    def idwt2(c, sc_ref, srP_ref):
        t = bmm(bc(sc_ref), c)           # (n, H, Wc)  column synthesis
        return bmm(t, bc(srP_ref))       # (n, H, W)   row synthesis

    if use_roll_fd:
        # pltpu.roll follows jnp.roll semantics: out[i] = in[(i - shift) % n].
        # Boundary rows/cols of the reference stencil are patched with iota masks.
        def _fd(u, shift_a, shift_b, fix_idx, axis):
            idx = lax.broadcasted_iota(jnp.int32, u.shape, axis)
            base = u - pltpu.roll(u, shift_a, axis)
            fix = u - pltpu.roll(u, shift_b, axis)
            d = jnp.where(idx == fix_idx, fix, base)
            return jnp.where(idx == 0, 0.0, d)

        def dx_f(u, _):  return _fd(u, 1, 2, 1, 2)
        def dxt_f(u, _): return _fd(u, W - 1, W - 2, W - 1, 2)
        def dy_f(u, _):  return _fd(u, 1, 2, 1, 1)
        def dyt_f(u, _): return _fd(u, H - 1, H - 2, H - 1, 1)
    else:
        def dx_f(u, mref):  return bmm(u, bc(mref))      # u @ MdxT
        def dxt_f(u, mref): return bmm(u, bc(mref))      # u @ MdxtT
        def dy_f(u, mref):  return bmm(bc(mref), u)      # Mdy  @ u
        def dyt_f(u, mref): return bmm(bc(mref), u)      # Mdyt @ u

    # ------------------------------ Pallas kernels ----------------------------
    def dwt_kernel(x_ref, ac_ref, arT_ref, w_ref):
        w_ref[...] = dwt2(x_ref[...], ac_ref, arT_ref)

    def pre_kernel(w_ref, bw_ref, dx_ref, bx_ref, dy_ref, by_ref, murf_ref,
                   sc_ref, srP_ref, mdxtT_ref, mdyt_ref, rhs_ref):
        # rhs = murf + lam*Dxt(dx-bx) + lam*Dyt(dy-by) + gama*IDWT(w-bw)
        idwt = idwt2(w_ref[...] - bw_ref[...], sc_ref, srP_ref)
        dxt = dxt_f(dx_ref[...] - bx_ref[...], mdxtT_ref)
        dyt = dyt_f(dy_ref[...] - by_ref[...], mdyt_ref)
        rhs_ref[...] = murf_ref[...] + lam * (dxt + dyt) + gama * idwt

    def post_kernel(up_ref, dx_ref, bx_ref, dy_ref, by_ref, bw_ref,
                    ac_ref, arT_ref, mdxT_ref, mdy_ref,
                    u_ref, dxo_ref, dyo_ref, bxo_ref, byo_ref, wo_ref, bwo_ref):
        # PReLU(u), isotropic shrink, DWT(u), w / bw / bx / by updates — fused.
        u = prelu(up_ref[...])                          # srelu(u)
        u_ref[...] = u

        px = dx_ref[...] + bx_ref[...]
        py = dy_ref[...] + by_ref[...]
        s = jnp.sqrt(px * px + py * py)
        dxn = prelu(px - inv_lam * s)                   # matches reference shrink
        dyn = prelu(py - inv_lam * s)
        dxo_ref[...] = dxn
        dyo_ref[...] = dyn

        uw = dwt2(u, ac_ref, arT_ref)                   # DWT(u)
        bw = bw_ref[...]
        wn = prelu(uw + bw - inv_gama)                  # srelu(DWT(u)+bw - 1/gama)
        wo_ref[...] = wn
        bwo_ref[...] = bw + uw - wn                     # bw += DWT(u) - w

        bxo_ref[...] = bx_ref[...] + dx_f(u, mdxT_ref) - dxn   # bx += Dx(u) - dx
        byo_ref[...] = by_ref[...] + dy_f(u, mdy_ref) - dyn    # by += Dy(u) - dy

    # ------------------------------ pallas_call wiring ------------------------
    # TODO(synk): slab blocks keep W on the lane axis; for production H, W should
    # be multiples of 8 / 128 so slab stores are lane-dense (this 16x16 smoke
    # test tolerates masked stores).  Coefficient tensors are already lane-dense.
    slab_spec = pl.BlockSpec((nbt, H, W), lambda i: (i, 0, 0))
    coef_spec = pl.BlockSpec((nbt, Hc, Wc), lambda i: (i, 0, 0))

    def mat_spec(m):
        return pl.BlockSpec(m.shape, lambda i: (0, 0))

    slab_sds = jax.ShapeDtypeStruct((NB, H, W), f32)
    coef_sds = jax.ShapeDtypeStruct((NB, Hc, Wc), f32)
    cparams = pltpu.CompilerParams(dimension_semantics=("parallel",),
                                   vmem_limit_bytes=vmem_limit)

    slab_e = NB * H * W
    coef_e = NB * Hc * Wc
    fd_flops = 0 if use_roll_fd else 2 * NB * (H * W * W + H * H * W)

    ce_dwt = pl.CostEstimate(
        flops=2 * NB * (H * W * Wc + Hc * H * Wc),
        transcendentals=0,
        bytes_accessed=4 * (slab_e + coef_e + Hc * H + W * Wc))
    ce_pre = pl.CostEstimate(
        flops=2 * NB * (H * Hc * Wc + H * Wc * W) + fd_flops + 8 * slab_e,
        transcendentals=0,
        bytes_accessed=4 * (2 * coef_e + 6 * slab_e + H * Hc + Wc * W + W * W + H * H))
    ce_post = pl.CostEstimate(
        flops=2 * NB * (H * W * Wc + Hc * H * Wc) + fd_flops + 24 * slab_e,
        transcendentals=slab_e,
        bytes_accessed=4 * (10 * slab_e + 3 * coef_e + Hc * H + W * Wc + W * W + H * H))

    dwt_call = pl.pallas_call(
        dwt_kernel, grid=(G,),
        in_specs=[slab_spec, mat_spec(Ac), mat_spec(ArT)],
        out_specs=coef_spec, out_shape=coef_sds,
        compiler_params=cparams, cost_estimate=ce_dwt)

    pre_call = pl.pallas_call(
        pre_kernel, grid=(G,),
        in_specs=[coef_spec, coef_spec, slab_spec, slab_spec, slab_spec,
                  slab_spec, slab_spec, mat_spec(Sc), mat_spec(SrP),
                  mat_spec(MdxtT), mat_spec(Mdyt)],
        out_specs=slab_spec, out_shape=slab_sds,
        input_output_aliases={6: 0},     # murf_real buffer is reused for rhs
        compiler_params=cparams, cost_estimate=ce_pre)

    post_call = pl.pallas_call(
        post_kernel, grid=(G,),
        in_specs=[slab_spec] * 5 + [coef_spec, mat_spec(Ac), mat_spec(ArT),
                                    mat_spec(MdxT), mat_spec(Mdy)],
        out_specs=[slab_spec] * 5 + [coef_spec] * 2,
        out_shape=[slab_sds] * 5 + [coef_sds] * 2,
        # in-place state updates: u_pre->u, dx->dx', dy->dy', bx->bx', by->by', bw->bw'
        input_output_aliases={0: 0, 1: 1, 3: 2, 2: 3, 4: 4, 5: 6},
        compiler_params=cparams, cost_estimate=ce_post)

    # ------------------------- forward (mirrors DSB_NET) ----------------------
    def forward(u, uvMask, dirtyMap, f):
        del dirtyMap  # reference only uses its shape for zeros_like
        u = u.astype(f32)
        mask = uvMask.astype(f32)
        f = f.astype(jnp.complex64)
        f0 = f

        u3 = u.reshape(NB, H, W)
        w = dwt_call(u3, Ac, ArT)                        # w = DWT(u)
        zeros_slab = jnp.zeros((NB, H, W), f32)
        dx = zeros_slab
        dy = zeros_slab
        # TODO(synk): reference inits bx/by from undefined `t_dirtyMap`; zeros used here.
        bx = zeros_slab
        by = zeros_slab
        bw = jnp.zeros((NB, Hc, Wc), f32)                # DWT(0) == 0, no kernel call

        murf = jnp.fft.ifft2(mask * f) * mmu

        # stencil indices mirror the reference exactly (shifted Laplacian as written)
        uker0 = jnp.zeros((B, C, H, W), f32)
        uker0 = uker0.at[..., 1, 1].set(4.0)
        uker0 = uker0.at[..., 1, 2].set(-1.0)
        uker0 = uker0.at[..., 2, 1].set(-1.0)
        uker0 = uker0.at[..., -1, 1].set(-1.0)
        uker0 = uker0.at[..., 1, -1].set(-1.0)
        uker = (jnp.conj(mask) * mask) * mmu + lam * jnp.fft.fft2(uker0) + gama
        inv_uker = 1.0 / uker                            # complex reciprocal, once

        for _ in range(2):
            murf_r = jnp.real(murf).astype(f32).reshape(NB, H, W)
            rhs_r = pre_call(w, bw, dx, bx, dy, by, murf_r, Sc, SrP, MdxtT, Mdyt)
            rhs = lax.complex(rhs_r.reshape(B, C, H, W), jnp.imag(murf))
            u_pre = jnp.real(jnp.fft.ifft2(jnp.fft.fft2(rhs) * inv_uker)).astype(f32)

            u3, dx, dy, bx, by, w, bw = post_call(
                u_pre.reshape(NB, H, W), dx, bx, dy, by, bw, Ac, ArT, MdxT, Mdy)

            u4 = u3.reshape(B, C, H, W)
            f = f + f0 - mask * jnp.fft.fft2(u4)
            murf = jnp.fft.ifft2(mask * f) * mmu
        return u3.reshape(B, C, H, W)

    return forward


if __name__ == "__main__":
    B, C, H, W = 2, 2, 16, 16
    key = jax.random.PRNGKey(0)
    k1, k2, k3, k4, k5 = jax.random.split(key, 5)
    u0 = jax.random.normal(k1, (B, C, H, W), dtype=jnp.float32)
    dirtyMap = jax.random.normal(k2, (B, C, H, W), dtype=jnp.float32)
    uvMask = (jax.random.uniform(k3, (B, C, H, W)) > 0.5).astype(jnp.float32)
    f = (jax.random.normal(k4, (B, C, H, W), dtype=jnp.float32)
         + 1j * jax.random.normal(k5, (B, C, H, W), dtype=jnp.float32)
         ).astype(jnp.complex64)

    forward = build_dsb_net(n_sig=1.0, B=B, C=C, H=H, W=W)
    out = jax.block_until_ready(jax.jit(forward)(u0, uvMask, dirtyMap, f))
    assert out.shape == (B, C, H, W) and out.dtype == jnp.float32
    assert bool(jnp.all(jnp.isfinite(out)))
    print("KERNEL_OK")
</pallas_src>

<mosaic_0001>
module attributes {stable_mosaic.version = 11 : i64} {
  func.func @dwt_kernel(%arg0: i32, %arg1: memref<4x16x16xf32, #tpu.memory_space<vmem>>, %arg2: memref<32x16xf32, #tpu.memory_space<vmem>>, %arg3: memref<16x128xf32, #tpu.memory_space<vmem>>, %arg4: memref<4x32x128xf32, #tpu.memory_space<vmem>>) attributes {dimension_semantics = [#tpu.dimension_semantics<parallel>], iteration_bounds = array<i64: 1>, scalar_prefetch = 0 : i64, scratch_operands = 0 : i64, tpu.core_type = #tpu.core_type<tc>, window_params = [{transform_indices = @transform_0, window_bounds = array<i64: 4, 16, 16>}, {pipeline_mode = #tpu.pipeline_mode<synchronous>, transform_indices = @transform_1, window_bounds = array<i64: 32, 16>}, {pipeline_mode = #tpu.pipeline_mode<synchronous>, transform_indices = @transform_2, window_bounds = array<i64: 16, 128>}, {transform_indices = @transform_3, window_bounds = array<i64: 4, 32, 128>}]} {
    %c0 = arith.constant 0 : index
    %c0_0 = arith.constant 0 : index
    %c0_1 = arith.constant 0 : index
    %0 = vector.load %arg1[%c0, %c0_0, %c0_1] : memref<4x16x16xf32, #tpu.memory_space<vmem>>, vector<4x16x16xf32>
    %c0_2 = arith.constant 0 : index
    %c0_3 = arith.constant 0 : index
    %1 = vector.load %arg3[%c0_2, %c0_3] : memref<16x128xf32, #tpu.memory_space<vmem>>, vector<16x128xf32>
    %2 = vector.shape_cast %1 : vector<16x128xf32> to vector<1x16x128xf32>
    %3 = vector.broadcast %2 : vector<1x16x128xf32> to vector<4x16x128xf32>
    %cst = arith.constant dense<0.000000e+00> : vector<4x16x128xf32>
    %4 = tpu.matmul %0, %3, %cst {dimension_numbers = #tpu.dot_dimension_numbers<[2], [1], [1], [2], [0, 0, 0, 1, 1, 2], [0], [0]>} : vector<4x16x16xf32>, vector<4x16x128xf32>, vector<4x16x128xf32> -> vector<4x16x128xf32>
    %c0_4 = arith.constant 0 : index
    %c0_5 = arith.constant 0 : index
    %5 = vector.load %arg2[%c0_4, %c0_5] : memref<32x16xf32, #tpu.memory_space<vmem>>, vector<32x16xf32>
    %6 = vector.shape_cast %5 : vector<32x16xf32> to vector<1x32x16xf32>
    %7 = vector.broadcast %6 : vector<1x32x16xf32> to vector<4x32x16xf32>
    %cst_6 = arith.constant dense<0.000000e+00> : vector<4x32x128xf32>
    %8 = tpu.matmul %7, %4, %cst_6 {dimension_numbers = #tpu.dot_dimension_numbers<[2], [1], [1], [2], [0, 0, 0, 1, 1, 2], [0], [0]>} : vector<4x32x16xf32>, vector<4x16x128xf32>, vector<4x32x128xf32> -> vector<4x32x128xf32>
    %c0_7 = arith.constant 0 : index
    %c0_8 = arith.constant 0 : index
    %c0_9 = arith.constant 0 : index
    %9 = vector.load %arg4[%c0_7, %c0_8, %c0_9] : memref<4x32x128xf32, #tpu.memory_space<vmem>>, vector<4x32x128xf32>
    tpu.vector_store %arg4[%c0_7, %c0_8, %c0_9], %8 {strides = array<i32>} : memref<4x32x128xf32, #tpu.memory_space<vmem>>, vector<4x32x128xf32>,
    return
  }
  func.func @transform_0(%arg0: i32) -> (i32, i32, i32) {
    %c0_i32 = arith.constant 0 : i32
    %c0_i32_0 = arith.constant 0 : i32
    %c0_i32_1 = arith.constant 0 : i32
    return %arg0, %c0_i32, %c0_i32_0 : i32, i32, i32
  }
  func.func @transform_1(%arg0: i32) -> (i32, i32) {
    %c0_i32 = arith.constant 0 : i32
    %c0_i32_0 = arith.constant 0 : i32
    %c0_i32_1 = arith.constant 0 : i32
    return %c0_i32, %c0_i32_0 : i32, i32
  }
  func.func @transform_2(%arg0: i32) -> (i32, i32) {
    %c0_i32 = arith.constant 0 : i32
    %c0_i32_0 = arith.constant 0 : i32
    %c0_i32_1 = arith.constant 0 : i32
    return %c0_i32, %c0_i32_0 : i32, i32
  }
  func.func @transform_3(%arg0: i32) -> (i32, i32, i32) {
    %c0_i32 = arith.constant 0 : i32
    %c0_i32_0 = arith.constant 0 : i32
    %c0_i32_1 = arith.constant 0 : i32
    return %arg0, %c0_i32, %c0_i32_0 : i32, i32, i32
  }
}

module attributes {stable_mosaic.version = 11 : i64} {
  func.func @pre_kernel(%arg0: i32, %arg1: memref<4x32x128xf32, #tpu.memory_space<vmem>>, %arg2: memref<4x32x128xf32, #tpu.memory_space<vmem>>, %arg3: memref<4x16x16xf32, #tpu.memory_space<vmem>>, %arg4: memref<4x16x16xf32, #tpu.memory_space<vmem>>, %arg5: memref<4x16x16xf32, #tpu.memory_space<vmem>>, %arg6: memref<4x16x16xf32, #tpu.memory_space<vmem>>, %arg7: memref<4x16x16xf32, #tpu.memory_space<vmem>>, %arg8: memref<16x32xf32, #tpu.memory_space<vmem>>, %arg9: memref<128x16xf32, #tpu.memory_space<vmem>>, %arg10: memref<16x16xf32, #tpu.memory_space<vmem>>, %arg11: memref<16x16xf32, #tpu.memory_space<vmem>>, %arg12: memref<4x16x16xf32, #tpu.memory_space<vmem>>) attributes {dimension_semantics = [#tpu.dimension_semantics<parallel>], iteration_bounds = array<i64: 1>, scalar_prefetch = 0 : i64, scratch_operands = 0 : i64, tpu.core_type = #tpu.core_type<tc>, window_params = [{transform_indices = @transform_0, window_bounds = array<i64: 4, 32, 128>}, {transform_indices = @transform_1, window_bounds = array<i64: 4, 32, 128>}, {transform_indices = @transform_2, window_bounds = array<i64: 4, 16, 16>}, {transform_indices = @transform_3, window_bounds = array<i64: 4, 16, 16>}, {transform_indices = @transform_4, window_bounds = array<i64: 4, 16, 16>}, {transform_indices = @transform_5, window_bounds = array<i64: 4, 16, 16>}, {transform_indices = @transform_6, window_bounds = array<i64: 4, 16, 16>}, {pipeline_mode = #tpu.pipeline_mode<synchronous>, transform_indices = @transform_7, window_bounds = array<i64: 16, 32>}, {pipeline_mode = #tpu.pipeline_mode<synchronous>, transform_indices = @transform_8, window_bounds = array<i64: 128, 16>}, {pipeline_mode = #tpu.pipeline_mode<synchronous>, transform_indices = @transform_9, window_bounds = array<i64: 16, 16>}, {pipeline_mode = #tpu.pipeline_mode<synchronous>, transform_indices = @transform_10, window_bounds = array<i64: 16, 16>}, {transform_indices = @transform_11, window_bounds = array<i64: 4, 16, 16>}]} {
    %c0 = arith.constant 0 : index
    %c0_0 = arith.constant 0 : index
    %c0_1 = arith.constant 0 : index
    %0 = vector.load %arg1[%c0, %c0_0, %c0_1] : memref<4x32x128xf32, #tpu.memory_space<vmem>>, vector<4x32x128xf32>
    %c0_2 = arith.constant 0 : index
    %c0_3 = arith.constant 0 : index
    %c0_4 = arith.constant 0 : index
    %1 = vector.load %arg2[%c0_2, %c0_3, %c0_4] : memref<4x32x128xf32, #tpu.memory_space<vmem>>, vector<4x32x128xf32>
    %2 = arith.subf %0, %1 : vector<4x32x128xf32>
    %c0_5 = arith.constant 0 : index
    %c0_6 = arith.constant 0 : index
    %3 = vector.load %arg8[%c0_5, %c0_6] : memref<16x32xf32, #tpu.memory_space<vmem>>, vector<16x32xf32>
    %4 = vector.shape_cast %3 : vector<16x32xf32> to vector<1x16x32xf32>
    %5 = vector.broadcast %4 : vector<1x16x32xf32> to vector<4x16x32xf32>
    %cst = arith.constant dense<0.000000e+00> : vector<4x16x128xf32>
    %6 = tpu.matmul %5, %2, %cst {dimension_numbers = #tpu.dot_dimension_numbers<[2], [1], [1], [2], [0, 0, 0, 1, 1, 2], [0], [0]>} : vector<4x16x32xf32>, vector<4x32x128xf32>, vector<4x16x128xf32> -> vector<4x16x128xf32>
    %c0_7 = arith.constant 0 : index
    %c0_8 = arith.constant 0 : index
    %7 = vector.load %arg9[%c0_7, %c0_8] : memref<128x16xf32, #tpu.memory_space<vmem>>, vector<128x16xf32>
    %8 = vector.shape_cast %7 : vector<128x16xf32> to vector<1x128x16xf32>
    %9 = vector.broadcast %8 : vector<1x128x16xf32> to vector<4x128x16xf32>
    %cst_9 = arith.constant dense<0.000000e+00> : vector<4x16x16xf32>
    %10 = tpu.matmul %6, %9, %cst_9 {dimension_numbers = #tpu.dot_dimension_numbers<[2], [1], [1], [2], [0, 0, 0, 1, 1, 2], [0], [0]>} : vector<4x16x128xf32>, vector<4x128x16xf32>, vector<4x16x16xf32> -> vector<4x16x16xf32>
    %c0_10 = arith.constant 0 : index
    %c0_11 = arith.constant 0 : index
    %c0_12 = arith.constant 0 : index
    %11 = vector.load %arg3[%c0_10, %c0_11, %c0_12] : memref<4x16x16xf32, #tpu.memory_space<vmem>>, vector<4x16x16xf32>
    %c0_13 = arith.constant 0 : index
    %c0_14 = arith.constant 0 : index
    %c0_15 = arith.constant 0 : index
    %12 = vector.load %arg4[%c0_13, %c0_14, %c0_15] : memref<4x16x16xf32, #tpu.memory_space<vmem>>, vector<4x16x16xf32>
    %13 = arith.subf %11, %12 : vector<4x16x16xf32>
    %c0_16 = arith.constant 0 : index
    %c0_17 = arith.constant 0 : index
    %14 = vector.load %arg10[%c0_16, %c0_17] : memref<16x16xf32, #tpu.memory_space<vmem>>, vector<16x16xf32>
    %15 = vector.shape_cast %14 : vector<16x16xf32> to vector<1x16x16xf32>
    %16 = vector.broadcast %15 : vector<1x16x16xf32> to vector<4x16x16xf32>
    %cst_18 = arith.constant dense<0.000000e+00> : vector<4x16x16xf32>
    %17 = tpu.matmul %13, %16, %cst_18 {dimension_numbers = #tpu.dot_dimension_numbers<[2], [1], [1], [2], [0, 0, 0, 1, 1, 2], [0], [0]>} : vector<4x16x16xf32>, vector<4x16x16xf32>, vector<4x16x16xf32> -> vector<4x16x16xf32>
    %c0_19 = arith.constant 0 : index
    %c0_20 = arith.constant 0 : index
    %c0_21 = arith.constant 0 : index
    %18 = vector.load %arg5[%c0_19, %c0_20, %c0_21] : memref<4x16x16xf32, #tpu.memory_space<vmem>>, vector<4x16x16xf32>
    %c0_22 = arith.constant 0 : index
    %c0_23 = arith.constant 0 : index
    %c0_24 = arith.constant 0 : index
    %19 = vector.load %arg6[%c0_22, %c0_23, %c0_24] : memref<4x16x16xf32, #tpu.memory_space<vmem>>, vector<4x16x16xf32>
    %20 = arith.subf %18, %19 : vector<4x16x16xf32>
    %c0_25 = arith.constant 0 : index
    %c0_26 = arith.constant 0 : index
    %21 = vector.load %arg11[%c0_25, %c0_26] : memref<16x16xf32, #tpu.memory_space<vmem>>, vector<16x16xf32>
    %22 = vector.shape_cast %21 : vector<16x16xf32> to vector<1x16x16xf32>
    %23 = vector.broadcast %22 : vector<1x16x16xf32> to vector<4x16x16xf32>
    %cst_27 = arith.constant dense<0.000000e+00> : vector<4x16x16xf32>
    %24 = tpu.matmul %23, %20, %cst_27 {dimension_numbers = #tpu.dot_dimension_numbers<[2], [1], [1], [2], [0, 0, 0, 1, 1, 2], [0], [0]>} : vector<4x16x16xf32>, vector<4x16x16xf32>, vector<4x16x16xf32> -> vector<4x16x16xf32>
    %c0_28 = arith.constant 0 : index
    %c0_29 = arith.constant 0 : index
    %c0_30 = arith.constant 0 : index
    %25 = vector.load %arg7[%c0_28, %c0_29, %c0_30] : memref<4x16x16xf32, #tpu.memory_space<vmem>>, vector<4x16x16xf32>
    %26 = arith.addf %17, %24 : vector<4x16x16xf32>
    %cst_31 = arith.constant 0.333333343 : f32
    %27 = vector.broadcast %cst_31 : f32 to vector<4x16x16xf32>
    %28 = arith.mulf %27, %26 : vector<4x16x16xf32>
    %29 = arith.addf %25, %28 : vector<4x16x16xf32>
    %cst_32 = arith.constant 1.000000e+00 : f32
    %30 = vector.broadcast %cst_32 : f32 to vector<4x16x16xf32>
    %31 = arith.mulf %30, %10 : vector<4x16x16xf32>
    %32 = arith.addf %29, %31 : vector<4x16x16xf32>
    %c0_33 = arith.constant 0 : index
    %c0_34 = arith.constant 0 : index
    %c0_35 = arith.constant 0 : index
    %33 = vector.load %arg12[%c0_33, %c0_34, %c0_35] : memref<4x16x16xf32, #tpu.memory_space<vmem>>, vector<4x16x16xf32>
    tpu.vector_store %arg12[%c0_33, %c0_34, %c0_35], %32 {strides = array<i32>} : memref<4x16x16xf32, #tpu.memory_space<vmem>>, vector<4x16x16xf32>,
    return
  }
  func.func @transform_0(%arg0: i32) -> (i32, i32, i32) {
    %c0_i32 = arith.constant 0 : i32
    %c0_i32_0 = arith.constant 0 : i32
    %c0_i32_1 = arith.constant 0 : i32
    return %arg0, %c0_i32, %c0_i32_0 : i32, i32, i32
  }
  func.func @transform_1(%arg0: i32) -> (i32, i32, i32) {
    %c0_i32 = arith.constant 0 : i32
    %c0_i32_0 = arith.constant 0 : i32
    %c0_i32_1 = arith.constant 0 : i32
    return %arg0, %c0_i32, %c0_i32_0 : i32, i32, i32
  }
  func.func @transform_2(%arg0: i32) -> (i32, i32, i32) {
    %c0_i32 = arith.constant 0 : i32
    %c0_i32_0 = arith.constant 0 : i32
    %c0_i32_1 = arith.constant 0 : i32
    return %arg0, %c0_i32, %c0_i32_0 : i32, i32, i32
  }
  func.func @transform_3(%arg0: i32) -> (i32, i32, i32) {
    %c0_i32 = arith.constant 0 : i32
    %c0_i32_0 = arith.constant 0 : i32
    %c0_i32_1 = arith.constant 0 : i32
    return %arg0, %c0_i32, %c0_i32_0 : i32, i32, i32
  }
  func.func @transform_4(%arg0: i32) -> (i32, i32, i32) {
    %c0_i32 = arith.constant 0 : i32
    %c0_i32_0 = arith.constant 0 : i32
    %c0_i32_1 = arith.constant 0 : i32
    return %arg0, %c0_i32, %c0_i32_0 : i32, i32, i32
  }
  func.func @transform_5(%arg0: i32) -> (i32, i32, i32) {
    %c0_i32 = arith.constant 0 : i32
    %c0_i32_0 = arith.constant 0 : i32
    %c0_i32_1 = arith.constant 0 : i32
    return %arg0, %c0_i32, %c0_i32_0 : i32, i32, i32
  }
  func.func @transform_6(%arg0: i32) -> (i32, i32, i32) {
    %c0_i32 = arith.constant 0 : i32
    %c0_i32_0 = arith.constant 0 : i32
    %c0_i32_1 = arith.constant 0 : i32
    return %arg0, %c0_i32, %c0_i32_0 : i32, i32, i32
  }
  func.func @transform_7(%arg0: i32) -> (i32, i32) {
    %c0_i32 = arith.constant 0 : i32
    %c0_i32_0 = arith.constant 0 : i32
    %c0_i32_1 = arith.constant 0 : i32
    return %c0_i32, %c0_i32_0 : i32, i32
  }
  func.func @transform_8(%arg0: i32) -> (i32, i32) {
    %c0_i32 = arith.constant 0 : i32
    %c0_i32_0 = arith.constant 0 : i32
    %c0_i32_1 = arith.constant 0 : i32
    return %c0_i32, %c0_i32_0 : i32, i32
  }
  func.func @transform_9(%arg0: i32) -> (i32, i32) {
    %c0_i32 = arith.constant 0 : i32
    %c0_i32_0 = arith.constant 0 : i32
    %c0_i32_1 = arith.constant 0 : i32
    return %c0_i32, %c0_i32_0 : i32, i32
  }
  func.func @transform_10(%arg0: i32) -> (i32, i32) {
    %c0_i32 = arith.constant 0 : i32
    %c0_i32_0 = arith.constant 0 : i32
    %c0_i32_1 = arith.constant 0 : i32
    return %c0_i32, %c0_i32_0 : i32, i32
  }
  func.func @transform_11(%arg0: i32) -> (i32, i32, i32) {
    %c0_i32 = arith.constant 0 : i32
    %c0_i32_0 = arith.constant 0 : i32
    %c0_i32_1 = arith.constant 0 : i32
    return %arg0, %c0_i32, %c0_i32_0 : i32, i32, i32
  }
}

module attributes {stable_mosaic.version = 11 : i64} {
  func.func @post_kernel(%arg0: i32, %arg1: memref<4x16x16xf32, #tpu.memory_space<vmem>>, %arg2: memref<4x16x16xf32, #tpu.memory_space<vmem>>, %arg3: memref<4x16x16xf32, #tpu.memory_space<vmem>>, %arg4: memref<4x16x16xf32, #tpu.memory_space<vmem>>, %arg5: memref<4x16x16xf32, #tpu.memory_space<vmem>>, %arg6: memref<4x32x128xf32, #tpu.memory_space<vmem>>, %arg7: memref<32x16xf32, #tpu.memory_space<vmem>>, %arg8: memref<16x128xf32, #tpu.memory_space<vmem>>, %arg9: memref<16x16xf32, #tpu.memory_space<vmem>>, %arg10: memref<16x16xf32, #tpu.memory_space<vmem>>, %arg11: memref<4x16x16xf32, #tpu.memory_space<vmem>>, %arg12: memref<4x16x16xf32, #tpu.memory_space<vmem>>, %arg13: memref<4x16x16xf32, #tpu.memory_space<vmem>>, %arg14: memref<4x16x16xf32, #tpu.memory_space<vmem>>, %arg15: memref<4x16x16xf32, #tpu.memory_space<vmem>>, %arg16: memref<4x32x128xf32, #tpu.memory_space<vmem>>, %arg17: memref<4x32x128xf32, #tpu.memory_space<vmem>>) attributes {dimension_semantics = [#tpu.dimension_semantics<parallel>], iteration_bounds = array<i64: 1>, scalar_prefetch = 0 : i64, scratch_operands = 0 : i64, tpu.core_type = #tpu.core_type<tc>, window_params = [{transform_indices = @transform_0, window_bounds = array<i64: 4, 16, 16>}, {transform_indices = @transform_1, window_bounds = array<i64: 4, 16, 16>}, {transform_indices = @transform_2, window_bounds = array<i64: 4, 16, 16>}, {transform_indices = @transform_3, window_bounds = array<i64: 4, 16, 16>}, {transform_indices = @transform_4, window_bounds = array<i64: 4, 16, 16>}, {transform_indices = @transform_5, window_bounds = array<i64: 4, 32, 128>}, {pipeline_mode = #tpu.pipeline_mode<synchronous>, transform_indices = @transform_6, window_bounds = array<i64: 32, 16>}, {pipeline_mode = #tpu.pipeline_mode<synchronous>, transform_indices = @transform_7, window_bounds = array<i64: 16, 128>}, {pipeline_mode = #tpu.pipeline_mode<synchronous>, transform_indices = @transform_8, window_bounds = array<i64: 16, 16>}, {pipeline_mode = #tpu.pipeline_mode<synchronous>, transform_indices = @transform_9, window_bounds = array<i64: 16, 16>}, {transform_indices = @transform_10, window_bounds = array<i64: 4, 16, 16>}, {transform_indices = @transform_11, window_bounds = array<i64: 4, 16, 16>}, {transform_indices = @transform_12, window_bounds = array<i64: 4, 16, 16>}, {transform_indices = @transform_13, window_bounds = array<i64: 4, 16, 16>}, {transform_indices = @transform_14, window_bounds = array<i64: 4, 16, 16>}, {transform_indices = @transform_15, window_bounds = array<i64: 4, 32, 128>}, {transform_indices = @transform_16, window_bounds = array<i64: 4, 32, 128>}]} {
    %c0 = arith.constant 0 : index
    %c0_0 = arith.constant 0 : index
    %c0_1 = arith.constant 0 : index
    %0 = vector.load %arg1[%c0, %c0_0, %c0_1] : memref<4x16x16xf32, #tpu.memory_space<vmem>>, vector<4x16x16xf32>
    %cst = arith.constant 0.000000e+00 : f32
    %1 = vector.broadcast %cst : f32 to vector<4x16x16xf32>
    %2 = arith.cmpf oge, %0, %1 : vector<4x16x16xf32>
    %cst_2 = arith.constant 2.000000e-01 : f32
    %3 = vector.broadcast %cst_2 : f32 to vector<4x16x16xf32>
    %4 = arith.mulf %3, %0 : vector<4x16x16xf32>
    %5 = arith.select %2, %0, %4 : vector<4x16x16xi1>, vector<4x16x16xf32>
    %c0_3 = arith.constant 0 : index
    %c0_4 = arith.constant 0 : index
    %c0_5 = arith.constant 0 : index
    %6 = vector.load %arg11[%c0_3, %c0_4, %c0_5] : memref<4x16x16xf32, #tpu.memory_space<vmem>>, vector<4x16x16xf32>
    tpu.vector_store %arg11[%c0_3, %c0_4, %c0_5], %5 {strides = array<i32>} : memref<4x16x16xf32, #tpu.memory_space<vmem>>, vector<4x16x16xf32>,
    %c0_6 = arith.constant 0 : index
    %c0_7 = arith.constant 0 : index
    %c0_8 = arith.constant 0 : index
    %7 = vector.load %arg2[%c0_6, %c0_7, %c0_8] : memref<4x16x16xf32, #tpu.memory_space<vmem>>, vector<4x16x16xf32>
    %c0_9 = arith.constant 0 : index
    %c0_10 = arith.constant 0 : index
    %c0_11 = arith.constant 0 : index
    %8 = vector.load %arg3[%c0_9, %c0_10, %c0_11] : memref<4x16x16xf32, #tpu.memory_space<vmem>>, vector<4x16x16xf32>
    %9 = arith.addf %7, %8 : vector<4x16x16xf32>
    %c0_12 = arith.constant 0 : index
    %c0_13 = arith.constant 0 : index
    %c0_14 = arith.constant 0 : index
    %10 = vector.load %arg4[%c0_12, %c0_13, %c0_14] : memref<4x16x16xf32, #tpu.memory_space<vmem>>, vector<4x16x16xf32>
    %c0_15 = arith.constant 0 : index
    %c0_16 = arith.constant 0 : index
    %c0_17 = arith.constant 0 : index
    %11 = vector.load %arg5[%c0_15, %c0_16, %c0_17] : memref<4x16x16xf32, #tpu.memory_space<vmem>>, vector<4x16x16xf32>
    %12 = arith.addf %10, %11 : vector<4x16x16xf32>
    %13 = arith.mulf %9, %9 : vector<4x16x16xf32>
    %14 = arith.mulf %12, %12 : vector<4x16x16xf32>
    %15 = arith.addf %13, %14 : vector<4x16x16xf32>
    %16 = math.sqrt %15 : vector<4x16x16xf32>
    %cst_18 = arith.constant 3.000000e+00 : f32
    %17 = vector.broadcast %cst_18 : f32 to vector<4x16x16xf32>
    %18 = arith.mulf %17, %16 : vector<4x16x16xf32>
    %19 = arith.subf %9, %18 : vector<4x16x16xf32>
    %cst_19 = arith.constant 0.000000e+00 : f32
    %20 = vector.broadcast %cst_19 : f32 to vector<4x16x16xf32>
    %21 = arith.cmpf oge, %19, %20 : vector<4x16x16xf32>
    %cst_20 = arith.constant 2.000000e-01 : f32
    %22 = vector.broadcast %cst_20 : f32 to vector<4x16x16xf32>
    %23 = arith.mulf %22, %19 : vector<4x16x16xf32>
    %24 = arith.select %21, %19, %23 : vector<4x16x16xi1>, vector<4x16x16xf32>
    %cst_21 = arith.constant 3.000000e+00 : f32
    %25 = vector.broadcast %cst_21 : f32 to vector<4x16x16xf32>
    %26 = arith.mulf %25, %16 : vector<4x16x16xf32>
    %27 = arith.subf %12, %26 : vector<4x16x16xf32>
    %cst_22 = arith.constant 0.000000e+00 : f32
    %28 = vector.broadcast %cst_22 : f32 to vector<4x16x16xf32>
    %29 = arith.cmpf oge, %27, %28 : vector<4x16x16xf32>
    %cst_23 = arith.constant 2.000000e-01 : f32
    %30 = vector.broadcast %cst_23 : f32 to vector<4x16x16xf32>
    %31 = arith.mulf %30, %27 : vector<4x16x16xf32>
    %32 = arith.select %29, %27, %31 : vector<4x16x16xi1>, vector<4x16x16xf32>
    %c0_24 = arith.constant 0 : index
    %c0_25 = arith.constant 0 : index
    %c0_26 = arith.constant 0 : index
    %33 = vector.load %arg12[%c0_24, %c0_25, %c0_26] : memref<4x16x16xf32, #tpu.memory_space<vmem>>, vector<4x16x16xf32>
    tpu.vector_store %arg12[%c0_24, %c0_25, %c0_26], %24 {strides = array<i32>} : memref<4x16x16xf32, #tpu.memory_space<vmem>>, vector<4x16x16xf32>,
    %c0_27 = arith.constant 0 : index
    %c0_28 = arith.constant 0 : index
    %c0_29 = arith.constant 0 : index
    %34 = vector.load %arg13[%c0_27, %c0_28, %c0_29] : memref<4x16x16xf32, #tpu.memory_space<vmem>>, vector<4x16x16xf32>
    tpu.vector_store %arg13[%c0_27, %c0_28, %c0_29], %32 {strides = array<i32>} : memref<4x16x16xf32, #tpu.memory_space<vmem>>, vector<4x16x16xf32>,
    %c0_30 = arith.constant 0 : index
    %c0_31 = arith.constant 0 : index
    %35 = vector.load %arg8[%c0_30, %c0_31] : memref<16x128xf32, #tpu.memory_space<vmem>>, vector<16x128xf32>
    %36 = vector.shape_cast %35 : vector<16x128xf32> to vector<1x16x128xf32>
    %37 = vector.broadcast %36 : vector<1x16x128xf32> to vector<4x16x128xf32>
    %cst_32 = arith.constant dense<0.000000e+00> : vector<4x16x128xf32>
    %38 = tpu.matmul %5, %37, %cst_32 {dimension_numbers = #tpu.dot_dimension_numbers<[2], [1], [1], [2], [0, 0, 0, 1, 1, 2], [0], [0]>} : vector<4x16x16xf32>, vector<4x16x128xf32>, vector<4x16x128xf32> -> vector<4x16x128xf32>
    %c0_33 = arith.constant 0 : index
    %c0_34 = arith.constant 0 : index
    %39 = vector.load %arg7[%c0_33, %c0_34] : memref<32x16xf32, #tpu.memory_space<vmem>>, vector<32x16xf32>
    %40 = vector.shape_cast %39 : vector<32x16xf32> to vector<1x32x16xf32>
    %41 = vector.broadcast %40 : vector<1x32x16xf32> to vector<4x32x16xf32>
    %cst_35 = arith.constant dense<0.000000e+00> : vector<4x32x128xf32>
    %42 = tpu.matmul %41, %38, %cst_35 {dimension_numbers = #tpu.dot_dimension_numbers<[2], [1], [1], [2], [0, 0, 0, 1, 1, 2], [0], [0]>} : vector<4x32x16xf32>, vector<4x16x128xf32>, vector<4x32x128xf32> -> vector<4x32x128xf32>
    %c0_36 = arith.constant 0 : index
    %c0_37 = arith.constant 0 : index
    %c0_38 = arith.constant 0 : index
    %43 = vector.load %arg6[%c0_36, %c0_37, %c0_38] : memref<4x32x128xf32, #tpu.memory_space<vmem>>, vector<4x32x128xf32>
    %44 = arith.addf %42, %43 : vector<4x32x128xf32>
    %cst_39 = arith.constant 1.000000e+00 : f32
    %45 = vector.broadcast %cst_39 : f32 to vector<4x32x128xf32>
    %46 = arith.subf %44, %45 : vector<4x32x128xf32>
    %cst_40 = arith.constant 0.000000e+00 : f32
    %47 = vector.broadcast %cst_40 : f32 to vector<4x32x128xf32>
    %48 = arith.cmpf oge, %46, %47 : vector<4x32x128xf32>
    %cst_41 = arith.constant 2.000000e-01 : f32
    %49 = vector.broadcast %cst_41 : f32 to vector<4x32x128xf32>
    %50 = arith.mulf %49, %46 : vector<4x32x128xf32>
    %51 = arith.select %48, %46, %50 : vector<4x32x128xi1>, vector<4x32x128xf32>
    %c0_42 = arith.constant 0 : index
    %c0_43 = arith.constant 0 : index
    %c0_44 = arith.constant 0 : index
    %52 = vector.load %arg16[%c0_42, %c0_43, %c0_44] : memref<4x32x128xf32, #tpu.memory_space<vmem>>, vector<4x32x128xf32>
    tpu.vector_store %arg16[%c0_42, %c0_43, %c0_44], %51 {strides = array<i32>} : memref<4x32x128xf32, #tpu.memory_space<vmem>>, vector<4x32x128xf32>,
    %53 = arith.addf %43, %42 : vector<4x32x128xf32>
    %54 = arith.subf %53, %51 : vector<4x32x128xf32>
    %c0_45 = arith.constant 0 : index
    %c0_46 = arith.constant 0 : index
    %c0_47 = arith.constant 0 : index
    %55 = vector.load %arg17[%c0_45, %c0_46, %c0_47] : memref<4x32x128xf32, #tpu.memory_space<vmem>>, vector<4x32x128xf32>
    tpu.vector_store %arg17[%c0_45, %c0_46, %c0_47], %54 {strides = array<i32>} : memref<4x32x128xf32, #tpu.memory_space<vmem>>, vector<4x32x128xf32>,
    %c0_48 = arith.constant 0 : index
    %c0_49 = arith.constant 0 : index
    %c0_50 = arith.constant 0 : index
    %56 = vector.load %arg3[%c0_48, %c0_49, %c0_50] : memref<4x16x16xf32, #tpu.memory_space<vmem>>, vector<4x16x16xf32>
    %c0_51 = arith.constant 0 : index
    %c0_52 = arith.constant 0 : index
    %57 = vector.load %arg9[%c0_51, %c0_52] : memref<16x16xf32, #tpu.memory_space<vmem>>, vector<16x16xf32>
    %58 = vector.shape_cast %57 : vector<16x16xf32> to vector<1x16x16xf32>
    %59 = vector.broadcast %58 : vector<1x16x16xf32> to vector<4x16x16xf32>
    %cst_53 = arith.constant dense<0.000000e+00> : vector<4x16x16xf32>
    %60 = tpu.matmul %5, %59, %cst_53 {dimension_numbers = #tpu.dot_dimension_numbers<[2], [1], [1], [2], [0, 0, 0, 1, 1, 2], [0], [0]>} : vector<4x16x16xf32>, vector<4x16x16xf32>, vector<4x16x16xf32> -> vector<4x16x16xf32>
    %61 = arith.addf %56, %60 : vector<4x16x16xf32>
    %62 = arith.subf %61, %24 : vector<4x16x16xf32>
    %c0_54 = arith.constant 0 : index
    %c0_55 = arith.constant 0 : index
    %c0_56 = arith.constant 0 : index
    %63 = vector.load %arg14[%c0_54, %c0_55, %c0_56] : memref<4x16x16xf32, #tpu.memory_space<vmem>>, vector<4x16x16xf32>
    tpu.vector_store %arg14[%c0_54, %c0_55, %c0_56], %62 {strides = array<i32>} : memref<4x16x16xf32, #tpu.memory_space<vmem>>, vector<4x16x16xf32>,
    %c0_57 = arith.constant 0 : index
    %c0_58 = arith.constant 0 : index
    %c0_59 = arith.constant 0 : index
    %64 = vector.load %arg5[%c0_57, %c0_58, %c0_59] : memref<4x16x16xf32, #tpu.memory_space<vmem>>, vector<4x16x16xf32>
    %c0_60 = arith.constant 0 : index
    %c0_61 = arith.constant 0 : index
    %65 = vector.load %arg10[%c0_60, %c0_61] : memref<16x16xf32, #tpu.memory_space<vmem>>, vector<16x16xf32>
    %66 = vector.shape_cast %65 : vector<16x16xf32> to vector<1x16x16xf32>
    %67 = vector.broadcast %66 : vector<1x16x16xf32> to vector<4x16x16xf32>
    %cst_62 = arith.constant dense<0.000000e+00> : vector<4x16x16xf32>
    %68 = tpu.matmul %67, %5, %cst_62 {dimension_numbers = #tpu.dot_dimension_numbers<[2], [1], [1], [2], [0, 0, 0, 1, 1, 2], [0], [0]>} : vector<4x16x16xf32>, vector<4x16x16xf32>, vector<4x16x16xf32> -> vector<4x16x16xf32>
    %69 = arith.addf %64, %68 : vector<4x16x16xf32>
    %70 = arith.subf %69, %32 : vector<4x16x16xf32>
    %c0_63 = arith.constant 0 : index
    %c0_64 = arith.constant 0 : index
    %c0_65 = arith.constant 0 : index
    %71 = vector.load %arg15[%c0_63, %c0_64, %c0_65] : memref<4x16x16xf32, #tpu.memory_space<vmem>>, vector<4x16x16xf32>
    tpu.vector_store %arg15[%c0_63, %c0_64, %c0_65], %70 {strides = array<i32>} : memref<4x16x16xf32, #tpu.memory_space<vmem>>, vector<4x16x16xf32>,
    return
  }
  func.func @transform_0(%arg0: i32) -> (i32, i32, i32) {
    %c0_i32 = arith.constant 0 : i32
    %c0_i32_0 = arith.constant 0 : i32
    %c0_i32_1 = arith.constant 0 : i32
    return %arg0, %c0_i32, %c0_i32_0 : i32, i32, i32
  }
  func.func @transform_1(%arg0: i32) -> (i32, i32, i32) {
    %c0_i32 = arith.constant 0 : i32
    %c0_i32_0 = arith.constant 0 : i32
    %c0_i32_1 = arith.constant 0 : i32
    return %arg0, %c0_i32, %c0_i32_0 : i32, i32, i32
  }
  func.func @transform_2(%arg0: i32) -> (i32, i32, i32) {
    %c0_i32 = arith.constant 0 : i32
    %c0_i32_0 = arith.constant 0 : i32
    %c0_i32_1 = arith.constant 0 : i32
    return %arg0, %c0_i32, %c0_i32_0 : i32, i32, i32
  }
  func.func @transform_3(%arg0: i32) -> (i32, i32, i32) {
    %c0_i32 = arith.constant 0 : i32
    %c0_i32_0 = arith.constant 0 : i32
    %c0_i32_1 = arith.constant 0 : i32
    return %arg0, %c0_i32, %c0_i32_0 : i32, i32, i32
  }
  func.func @transform_4(%arg0: i32) -> (i32, i32, i32) {
    %c0_i32 = arith.constant 0 : i32
    %c0_i32_0 = arith.constant 0 : i32
    %c0_i32_1 = arith.constant 0 : i32
    return %arg0, %c0_i32, %c0_i32_0 : i32, i32, i32
  }
  func.func @transform_5(%arg0: i32) -> (i32, i32, i32) {
    %c0_i32 = arith.constant 0 : i32
    %c0_i32_0 = arith.constant 0 : i32
    %c0_i32_1 = arith.constant 0 : i32
    return %arg0, %c0_i32, %c0_i32_0 : i32, i32, i32
  }
  func.func @transform_6(%arg0: i32) -> (i32, i32) {
    %c0_i32 = arith.constant 0 : i32
    %c0_i32_0 = arith.constant 0 : i32
    %c0_i32_1 = arith.constant 0 : i32
    return %c0_i32, %c0_i32_0 : i32, i32
  }
  func.func @transform_7(%arg0: i32) -> (i32, i32) {
    %c0_i32 = arith.constant 0 : i32
    %c0_i32_0 = arith.constant 0 : i32
    %c0_i32_1 = arith.constant 0 : i32
    return %c0_i32, %c0_i32_0 : i32, i32
  }
  func.func @transform_8(%arg0: i32) -> (i32, i32) {
    %c0_i32 = arith.constant 0 : i32
    %c0_i32_0 = arith.constant 0 : i32
    %c0_i32_1 = arith.constant 0 : i32
    return %c0_i32, %c0_i32_0 : i32, i32
  }
  func.func @transform_9(%arg0: i32) -> (i32, i32) {
    %c0_i32 = arith.constant 0 : i32
    %c0_i32_0 = arith.constant 0 : i32
    %c0_i32_1 = arith.constant 0 : i32
    return %c0_i32, %c0_i32_0 : i32, i32
  }
  func.func @transform_10(%arg0: i32) -> (i32, i32, i32) {
    %c0_i32 = arith.constant 0 : i32
    %c0_i32_0 = arith.constant 0 : i32
    %c0_i32_1 = arith.constant 0 : i32
    return %arg0, %c0_i32, %c0_i32_0 : i32, i32, i32
  }
  func.func @transform_11(%arg0: i32) -> (i32, i32, i32) {
    %c0_i32 = arith.constant 0 : i32
    %c0_i32_0 = arith.constant 0 : i32
    %c0_i32_1 = arith.constant 0 : i32
    return %arg0, %c0_i32, %c0_i32_0 : i32, i32, i32
  }
  func.func @transform_12(%arg0: i32) -> (i32, i32, i32) {
    %c0_i32 = arith.constant 0 : i32
    %c0_i32_0 = arith.constant 0 : i32
    %c0_i32_1 = arith.constant 0 : i32
    return %arg0, %c0_i32, %c0_i32_0 : i32, i32, i32
  }
  func.func @transform_13(%arg0: i32) -> (i32, i32, i32) {
    %c0_i32 = arith.constant 0 : i32
    %c0_i32_0 = arith.constant 0 : i32
    %c0_i32_1 = arith.constant 0 : i32
    return %arg0, %c0_i32, %c0_i32_0 : i32, i32, i32
  }
  func.func @transform_14(%arg0: i32) -> (i32, i32, i32) {
    %c0_i32 = arith.constant 0 : i32
    %c0_i32_0 = arith.constant 0 : i32
    %c0_i32_1 = arith.constant 0 : i32
    return %arg0, %c0_i32, %c0_i32_0 : i32, i32, i32
  }
  func.func @transform_15(%arg0: i32) -> (i32, i32, i32) {
    %c0_i32 = arith.constant 0 : i32
    %c0_i32_0 = arith.constant 0 : i32
    %c0_i32_1 = arith.constant 0 : i32
    return %arg0, %c0_i32, %c0_i32_0 : i32, i32, i32
  }
  func.func @transform_16(%arg0: i32) -> (i32, i32, i32) {
    %c0_i32 = arith.constant 0 : i32
    %c0_i32_0 = arith.constant 0 : i32
    %c0_i32_1 = arith.constant 0 : i32
    return %arg0, %c0_i32, %c0_i32_0 : i32, i32, i32
  }
}

module attributes {stable_mosaic.version = 11 : i64} {
  func.func @post_kernel(%arg0: i32, %arg1: memref<4x16x16xf32, #tpu.memory_space<vmem>>, %arg2: memref<4x16x16xf32, #tpu.memory_space<vmem>>, %arg3: memref<4x16x16xf32, #tpu.memory_space<vmem>>, %arg4: memref<4x16x16xf32, #tpu.memory_space<vmem>>, %arg5: memref<4x16x16xf32, #tpu.memory_space<vmem>>, %arg6: memref<4x32x128xf32, #tpu.memory_space<vmem>>, %arg7: memref<32x16xf32, #tpu.memory_space<vmem>>, %arg8: memref<16x128xf32, #tpu.memory_space<vmem>>, %arg9: memref<16x16xf32, #tpu.memory_space<vmem>>, %arg10: memref<16x16xf32, #tpu.memory_space<vmem>>, %arg11: memref<4x16x16xf32, #tpu.memory_space<vmem>>, %arg12: memref<4x16x16xf32, #tpu.memory_space<vmem>>, %arg13: memref<4x16x16xf32, #tpu.memory_space<vmem>>, %arg14: memref<4x16x16xf32, #tpu.memory_space<vmem>>, %arg15: memref<4x16x16xf32, #tpu.memory_space<vmem>>, %arg16: memref<4x32x128xf32, #tpu.memory_space<vmem>>, %arg17: memref<4x32x128xf32, #tpu.memory_space<vmem>>) attributes {dimension_semantics = [#tpu.dimension_semantics<parallel>], iteration_bounds = array<i64: 1>, scalar_prefetch = 0 : i64, scratch_operands = 0 : i64, tpu.core_type = #tpu.core_type<tc>, window_params = [{transform_indices = @transform_0, window_bounds = array<i64: 4, 16, 16>}, {transform_indices = @transform_1, window_bounds = array<i64: 4, 16, 16>}, {transform_indices = @transform_2, window_bounds = array<i64: 4, 16, 16>}, {transform_indices = @transform_3, window_bounds = array<i64: 4, 16, 16>}, {transform_indices = @transform_4, window_bounds = array<i64: 4, 16, 16>}, {transform_indices = @transform_5, window_bounds = array<i64: 4, 32, 128>}, {pipeline_mode = #tpu.pipeline_mode<synchronous>, transform_indices = @transform_6, window_bounds = array<i64: 32, 16>}, {pipeline_mode = #tpu.pipeline_mode<synchronous>, transform_indices = @transform_7, window_bounds = array<i64: 16, 128>}, {pipeline_mode = #tpu.pipeline_mode<synchronous>, transform_indices = @transform_8, window_bounds = array<i64: 16, 16>}, {pipeline_mode = #tpu.pipeline_mode<synchronous>, transform_indices = @transform_9, window_bounds = array<i64: 16, 16>}, {transform_indices = @transform_10, window_bounds = array<i64: 4, 16, 16>}, {transform_indices = @transform_11, window_bounds = array<i64: 4, 16, 16>}, {transform_indices = @transform_12, window_bounds = array<i64: 4, 16, 16>}, {transform_indices = @transform_13, window_bounds = array<i64: 4, 16, 16>}, {transform_indices = @transform_14, window_bounds = array<i64: 4, 16, 16>}, {transform_indices = @transform_15, window_bounds = array<i64: 4, 32, 128>}, {transform_indices = @transform_16, window_bounds = array<i64: 4, 32, 128>}]} {
    %c0 = arith.constant 0 : index
    %c0_0 = arith.constant 0 : index
    %c0_1 = arith.constant 0 : index
    %0 = vector.load %arg1[%c0, %c0_0, %c0_1] : memref<4x16x16xf32, #tpu.memory_space<vmem>>, vector<4x16x16xf32>
    %cst = arith.constant 0.000000e+00 : f32
    %1 = vector.broadcast %cst : f32 to vector<4x16x16xf32>
    %2 = arith.cmpf oge, %0, %1 : vector<4x16x16xf32>
    %cst_2 = arith.constant 2.000000e-01 : f32
    %3 = vector.broadcast %cst_2 : f32 to vector<4x16x16xf32>
    %4 = arith.mulf %3, %0 : vector<4x16x16xf32>
    %5 = arith.select %2, %0, %4 : vector<4x16x16xi1>, vector<4x16x16xf32>
    %c0_3 = arith.constant 0 : index
    %c0_4 = arith.constant 0 : index
    %c0_5 = arith.constant 0 : index
    %6 = vector.load %arg11[%c0_3, %c0_4, %c0_5] : memref<4x16x16xf32, #tpu.memory_space<vmem>>, vector<4x16x16xf32>
    tpu.vector_store %arg11[%c0_3, %c0_4, %c0_5], %5 {strides = array<i32>} : memref<4x16x16xf32, #tpu.memory_space<vmem>>, vector<4x16x16xf32>,
    %c0_6 = arith.constant 0 : index
    %c0_7 = arith.constant 0 : index
    %c0_8 = arith.constant 0 : index
    %7 = vector.load %arg2[%c0_6, %c0_7, %c0_8] : memref<4x16x16xf32, #tpu.memory_space<vmem>>, vector<4x16x16xf32>
    %c0_9 = arith.constant 0 : index
    %c0_10 = arith.constant 0 : index
    %c0_11 = arith.constant 0 : index
    %8 = vector.load %arg3[%c0_9, %c0_10, %c0_11] : memref<4x16x16xf32, #tpu.memory_space<vmem>>, vector<4x16x16xf32>
    %9 = arith.addf %7, %8 : vector<4x16x16xf32>
    %c0_12 = arith.constant 0 : index
    %c0_13 = arith.constant 0 : index
    %c0_14 = arith.constant 0 : index
    %10 = vector.load %arg4[%c0_12, %c0_13, %c0_14] : memref<4x16x16xf32, #tpu.memory_space<vmem>>, vector<4x16x16xf32>
    %c0_15 = arith.constant 0 : index
    %c0_16 = arith.constant 0 : index
    %c0_17 = arith.constant 0 : index
    %11 = vector.load %arg5[%c0_15, %c0_16, %c0_17] : memref<4x16x16xf32, #tpu.memory_space<vmem>>, vector<4x16x16xf32>
    %12 = arith.addf %10, %11 : vector<4x16x16xf32>
    %13 = arith.mulf %9, %9 : vector<4x16x16xf32>
    %14 = arith.mulf %12, %12 : vector<4x16x16xf32>
    %15 = arith.addf %13, %14 : vector<4x16x16xf32>
    %16 = math.sqrt %15 : vector<4x16x16xf32>
    %cst_18 = arith.constant 3.000000e+00 : f32
    %17 = vector.broadcast %cst_18 : f32 to vector<4x16x16xf32>
    %18 = arith.mulf %17, %16 : vector<4x16x16xf32>
    %19 = arith.subf %9, %18 : vector<4x16x16xf32>
    %cst_19 = arith.constant 0.000000e+00 : f32
    %20 = vector.broadcast %cst_19 : f32 to vector<4x16x16xf32>
    %21 = arith.cmpf oge, %19, %20 : vector<4x16x16xf32>
    %cst_20 = arith.constant 2.000000e-01 : f32
    %22 = vector.broadcast %cst_20 : f32 to vector<4x16x16xf32>
    %23 = arith.mulf %22, %19 : vector<4x16x16xf32>
    %24 = arith.select %21, %19, %23 : vector<4x16x16xi1>, vector<4x16x16xf32>
    %cst_21 = arith.constant 3.000000e+00 : f32
    %25 = vector.broadcast %cst_21 : f32 to vector<4x16x16xf32>
    %26 = arith.mulf %25, %16 : vector<4x16x16xf32>
    %27 = arith.subf %12, %26 : vector<4x16x16xf32>
    %cst_22 = arith.constant 0.000000e+00 : f32
    %28 = vector.broadcast %cst_22 : f32 to vector<4x16x16xf32>
    %29 = arith.cmpf oge, %27, %28 : vector<4x16x16xf32>
    %cst_23 = arith.constant 2.000000e-01 : f32
    %30 = vector.broadcast %cst_23 : f32 to vector<4x16x16xf32>
    %31 = arith.mulf %30, %27 : vector<4x16x16xf32>
    %32 = arith.select %29, %27, %31 : vector<4x16x16xi1>, vector<4x16x16xf32>
    %c0_24 = arith.constant 0 : index
    %c0_25 = arith.constant 0 : index
    %c0_26 = arith.constant 0 : index
    %33 = vector.load %arg12[%c0_24, %c0_25, %c0_26] : memref<4x16x16xf32, #tpu.memory_space<vmem>>, vector<4x16x16xf32>
    tpu.vector_store %arg12[%c0_24, %c0_25, %c0_26], %24 {strides = array<i32>} : memref<4x16x16xf32, #tpu.memory_space<vmem>>, vector<4x16x16xf32>,
    %c0_27 = arith.constant 0 : index
    %c0_28 = arith.constant 0 : index
    %c0_29 = arith.constant 0 : index
    %34 = vector.load %arg13[%c0_27, %c0_28, %c0_29] : memref<4x16x16xf32, #tpu.memory_space<vmem>>, vector<4x16x16xf32>
    tpu.vector_store %arg13[%c0_27, %c0_28, %c0_29], %32 {strides = array<i32>} : memref<4x16x16xf32, #tpu.memory_space<vmem>>, vector<4x16x16xf32>,
    %c0_30 = arith.constant 0 : index
    %c0_31 = arith.constant 0 : index
    %35 = vector.load %arg8[%c0_30, %c0_31] : memref<16x128xf32, #tpu.memory_space<vmem>>, vector<16x128xf32>
    %36 = vector.shape_cast %35 : vector<16x128xf32> to vector<1x16x128xf32>
    %37 = vector.broadcast %36 : vector<1x16x128xf32> to vector<4x16x128xf32>
    %cst_32 = arith.constant dense<0.000000e+00> : vector<4x16x128xf32>
    %38 = tpu.matmul %5, %37, %cst_32 {dimension_numbers = #tpu.dot_dimension_numbers<[2], [1], [1], [2], [0, 0, 0, 1, 1, 2], [0], [0]>} : vector<4x16x16xf32>, vector<4x16x128xf32>, vector<4x16x128xf32> -> vector<4x16x128xf32>
    %c0_33 = arith.constant 0 : index
    %c0_34 = arith.constant 0 : index
    %39 = vector.load %arg7[%c0_33, %c0_34] : memref<32x16xf32, #tpu.memory_space<vmem>>, vector<32x16xf32>
    %40 = vector.shape_cast %39 : vector<32x16xf32> to vector<1x32x16xf32>
    %41 = vector.broadcast %40 : vector<1x32x16xf32> to vector<4x32x16xf32>
    %cst_35 = arith.constant dense<0.000000e+00> : vector<4x32x128xf32>
    %42 = tpu.matmul %41, %38, %cst_35 {dimension_numbers = #tpu.dot_dimension_numbers<[2], [1], [1], [2], [0, 0, 0, 1, 1, 2], [0], [0]>} : vector<4x32x16xf32>, vector<4x16x128xf32>, vector<4x32x128xf32> -> vector<4x32x128xf32>
    %c0_36 = arith.constant 0 : index
    %c0_37 = arith.constant 0 : index
    %c0_38 = arith.constant 0 : index
    %43 = vector.load %arg6[%c0_36, %c0_37, %c0_38] : memref<4x32x128xf32, #tpu.memory_space<vmem>>, vector<4x32x128xf32>
    %44 = arith.addf %42, %43 : vector<4x32x128xf32>
    %cst_39 = arith.constant 1.000000e+00 : f32
    %45 = vector.broadcast %cst_39 : f32 to vector<4x32x128xf32>
    %46 = arith.subf %44, %45 : vector<4x32x128xf32>
    %cst_40 = arith.constant 0.000000e+00 : f32
    %47 = vector.broadcast %cst_40 : f32 to vector<4x32x128xf32>
    %48 = arith.cmpf oge, %46, %47 : vector<4x32x128xf32>
    %cst_41 = arith.constant 2.000000e-01 : f32
    %49 = vector.broadcast %cst_41 : f32 to vector<4x32x128xf32>
    %50 = arith.mulf %49, %46 : vector<4x32x128xf32>
    %51 = arith.select %48, %46, %50 : vector<4x32x128xi1>, vector<4x32x128xf32>
    %c0_42 = arith.constant 0 : index
    %c0_43 = arith.constant 0 : index
    %c0_44 = arith.constant 0 : index
    %52 = vector.load %arg16[%c0_42, %c0_43, %c0_44] : memref<4x32x128xf32, #tpu.memory_space<vmem>>, vector<4x32x128xf32>
    tpu.vector_store %arg16[%c0_42, %c0_43, %c0_44], %51 {strides = array<i32>} : memref<4x32x128xf32, #tpu.memory_space<vmem>>, vector<4x32x128xf32>,
    %53 = arith.addf %43, %42 : vector<4x32x128xf32>
    %54 = arith.subf %53, %51 : vector<4x32x128xf32>
    %c0_45 = arith.constant 0 : index
    %c0_46 = arith.constant 0 : index
    %c0_47 = arith.constant 0 : index
    %55 = vector.load %arg17[%c0_45, %c0_46, %c0_47] : memref<4x32x128xf32, #tpu.memory_space<vmem>>, vector<4x32x128xf32>
    tpu.vector_store %arg17[%c0_45, %c0_46, %c0_47], %54 {strides = array<i32>} : memref<4x32x128xf32, #tpu.memory_space<vmem>>, vector<4x32x128xf32>,
    %c0_48 = arith.constant 0 : index
    %c0_49 = arith.constant 0 : index
    %c0_50 = arith.constant 0 : index
    %56 = vector.load %arg3[%c0_48, %c0_49, %c0_50] : memref<4x16x16xf32, #tpu.memory_space<vmem>>, vector<4x16x16xf32>
    %c0_51 = arith.constant 0 : index
    %c0_52 = arith.constant 0 : index
    %57 = vector.load %arg9[%c0_51, %c0_52] : memref<16x16xf32, #tpu.memory_space<vmem>>, vector<16x16xf32>
    %58 = vector.shape_cast %57 : vector<16x16xf32> to vector<1x16x16xf32>
    %59 = vector.broadcast %58 : vector<1x16x16xf32> to vector<4x16x16xf32>
    %cst_53 = arith.constant dense<0.000000e+00> : vector<4x16x16xf32>
    %60 = tpu.matmul %5, %59, %cst_53 {dimension_numbers = #tpu.dot_dimension_numbers<[2], [1], [1], [2], [0, 0, 0, 1, 1, 2], [0], [0]>} : vector<4x16x16xf32>, vector<4x16x16xf32>, vector<4x16x16xf32> -> vector<4x16x16xf32>
    %61 = arith.addf %56, %60 : vector<4x16x16xf32>
    %62 = arith.subf %61, %24 : vector<4x16x16xf32>
    %c0_54 = arith.constant 0 : index
    %c0_55 = arith.constant 0 : index
    %c0_56 = arith.constant 0 : index
    %63 = vector.load %arg14[%c0_54, %c0_55, %c0_56] : memref<4x16x16xf32, #tpu.memory_space<vmem>>, vector<4x16x16xf32>
    tpu.vector_store %arg14[%c0_54, %c0_55, %c0_56], %62 {strides = array<i32>} : memref<4x16x16xf32, #tpu.memory_space<vmem>>, vector<4x16x16xf32>,
    %c0_57 = arith.constant 0 : index
    %c0_58 = arith.constant 0 : index
    %c0_59 = arith.constant 0 : index
    %64 = vector.load %arg5[%c0_57, %c0_58, %c0_59] : memref<4x16x16xf32, #tpu.memory_space<vmem>>, vector<4x16x16xf32>
    %c0_60 = arith.constant 0 : index
    %c0_61 = arith.constant 0 : index
    %65 = vector.load %arg10[%c0_60, %c0_61] : memref<16x16xf32, #tpu.memory_space<vmem>>, vector<16x16xf32>
    %66 = vector.shape_cast %65 : vector<16x16xf32> to vector<1x16x16xf32>
    %67 = vector.broadcast %66 : vector<1x16x16xf32> to vector<4x16x16xf32>
    %cst_62 = arith.constant dense<0.000000e+00> : vector<4x16x16xf32>
    %68 = tpu.matmul %67, %5, %cst_62 {dimension_numbers = #tpu.dot_dimension_numbers<[2], [1], [1], [2], [0, 0, 0, 1, 1, 2], [0], [0]>} : vector<4x16x16xf32>, vector<4x16x16xf32>, vector<4x16x16xf32> -> vector<4x16x16xf32>
    %69 = arith.addf %64, %68 : vector<4x16x16xf32>
    %70 = arith.subf %69, %32 : vector<4x16x16xf32>
    %c0_63 = arith.constant 0 : index
    %c0_64 = arith.constant 0 : index
    %c0_65 = arith.constant 0 : index
    %71 = vector.load %arg15[%c0_63, %c0_64, %c0_65] : memref<4x16x16xf32, #tpu.memory_space<vmem>>, vector<4x16x16xf32>
    tpu.vector_store %arg15[%c0_63, %c0_64, %c0_65], %70 {strides = array<i32>} : memref<4x16x16xf32, #tpu.memory_space<vmem>>, vector<4x16x16xf32>,
    return
  }
  func.func @transform_0(%arg0: i32) -> (i32, i32, i32) {
    %c0_i32 = arith.constant 0 : i32
    %c0_i32_0 = arith.constant 0 : i32
    %c0_i32_1 = arith.constant 0 : i32
    return %arg0, %c0_i32, %c0_i32_0 : i32, i32, i32
  }
  func.func @transform_1(%arg0: i32) -> (i32, i32, i32) {
    %c0_i32 = arith.constant 0 : i32
    %c0_i32_0 = arith.constant 0 : i32
    %c0_i32_1 = arith.constant 0 : i32
    return %arg0, %c0_i32, %c0_i32_0 : i32, i32, i32
  }
  func.func @transform_2(%arg0: i32) -> (i32, i32, i32) {
    %c0_i32 = arith.constant 0 : i32
    %c0_i32_0 = arith.constant 0 : i32
    %c0_i32_1 = arith.constant 0 : i32
    return %arg0, %c0_i32, %c0_i32_0 : i32, i32, i32
  }
  func.func @transform_3(%arg0: i32) -> (i32, i32, i32) {
    %c0_i32 = arith.constant 0 : i32
    %c0_i32_0 = arith.constant 0 : i32
    %c0_i32_1 = arith.constant 0 : i32
    return %arg0, %c0_i32, %c0_i32_0 : i32, i32, i32
  }
  func.func @transform_4(%arg0: i32) -> (i32, i32, i32) {
    %c0_i32 = arith.constant 0 : i32
    %c0_i32_0 = arith.constant 0 : i32
    %c0_i32_1 = arith.constant 0 : i32
    return %arg0, %c0_i32, %c0_i32_0 : i32, i32, i32
  }
  func.func @transform_5(%arg0: i32) -> (i32, i32, i32) {
    %c0_i32 = arith.constant 0 : i32
    %c0_i32_0 = arith.constant 0 : i32
    %c0_i32_1 = arith.constant 0 : i32
    return %arg0, %c0_i32, %c0_i32_0 : i32, i32, i32
  }
  func.func @transform_6(%arg0: i32) -> (i32, i32) {
    %c0_i32 = arith.constant 0 : i32
    %c0_i32_0 = arith.constant 0 : i32
    %c0_i32_1 = arith.constant 0 : i32
    return %c0_i32, %c0_i32_0 : i32, i32
  }
  func.func @transform_7(%arg0: i32) -> (i32, i32) {
    %c0_i32 = arith.constant 0 : i32
    %c0_i32_0 = arith.constant 0 : i32
    %c0_i32_1 = arith.constant 0 : i32
    return %c0_i32, %c0_i32_0 : i32, i32
  }
  func.func @transform_8(%arg0: i32) -> (i32, i32) {
    %c0_i32 = arith.constant 0 : i32
    %c0_i32_0 = arith.constant 0 : i32
    %c0_i32_1 = arith.constant 0 : i32
    return %c0_i32, %c0_i32_0 : i32, i32
  }
  func.func @transform_9(%arg0: i32) -> (i32, i32) {
    %c0_i32 = arith.constant 0 : i32
    %c0_i32_0 = arith.constant 0 : i32
    %c0_i32_1 = arith.constant 0 : i32
    return %c0_i32, %c0_i32_0 : i32, i32
  }
  func.func @transform_10(%arg0: i32) -> (i32, i32, i32) {
    %c0_i32 = arith.constant 0 : i32
    %c0_i32_0 = arith.constant 0 : i32
    %c0_i32_1 = arith.constant 0 : i32
    return %arg0, %c0_i32, %c0_i32_0 : i32, i32, i32
  }
  func.func @transform_11(%arg0: i32) -> (i32, i32, i32) {
    %c0_i32 = arith.constant 0 : i32
    %c0_i32_0 = arith.constant 0 : i32
    %c0_i32_1 = arith.constant 0 : i32
    return %arg0, %c0_i32, %c0_i32_0 : i32, i32, i32
  }
  func.func @transform_12(%arg0: i32) -> (i32, i32, i32) {
    %c0_i32 = arith.constant 0 : i32
    %c0_i32_0 = arith.constant 0 : i32
    %c0_i32_1 = arith.constant 0 : i32
    return %arg0, %c0_i32, %c0_i32_0 : i32, i32, i32
  }
  func.func @transform_13(%arg0: i32) -> (i32, i32, i32) {
    %c0_i32 = arith.constant 0 : i32
    %c0_i32_0 = arith.constant 0 : i32
    %c0_i32_1 = arith.constant 0 : i32
    return %arg0, %c0_i32, %c0_i32_0 : i32, i32, i32
  }
  func.func @transform_14(%arg0: i32) -> (i32, i32, i32) {
    %c0_i32 = arith.constant 0 : i32
    %c0_i32_0 = arith.constant 0 : i32
    %c0_i32_1 = arith.constant 0 : i32
    return %arg0, %c0_i32, %c0_i32_0 : i32, i32, i32
  }
  func.func @transform_15(%arg0: i32) -> (i32, i32, i32) {
    %c0_i32 = arith.constant 0 : i32
    %c0_i32_0 = arith.constant 0 : i32
    %c0_i32_1 = arith.constant 0 : i32
    return %arg0, %c0_i32, %c0_i32_0 : i32, i32, i32
  }
  func.func @transform_16(%arg0: i32) -> (i32, i32, i32) {
    %c0_i32 = arith.constant 0 : i32
    %c0_i32_0 = arith.constant 0 : i32
    %c0_i32_1 = arith.constant 0 : i32
    return %arg0, %c0_i32, %c0_i32_0 : i32, i32, i32
  }
}

</mosaic_0001>

<llo_original>
// kernel: custom-call.1
$region0: #{custom-call.1}
  %s0 = inlined_call_operand.vmem [shape: c64[2,2,16,16], index: 0, kind: input, shape index: {}]
  %s1 = inlined_call_operand.vmem [shape: f32[2,2,16,16], index: 1, kind: output, shape index: {}]
  %s2 = scalar_lea.vmem %s0, 64
  %v3 = vld [vmem:[%s2] sm:$0xff]
  %4 = vst [vmem:[%s1] sm:$0xff] %v3
  %s5 = scalar_lea.vmem %s1, 8
  %s6 = scalar_lea.vmem %s2, 8
  %v7 = vld [vmem:[%s6] sm:$0xff]
  %8 = vst [vmem:[%s5] sm:$0xff] %v7
  %s9 = scalar_lea.vmem %s1, 16
  %s10 = scalar_lea.vmem %s2, 16
  %v11 = vld [vmem:[%s10] sm:$0xff]
  %12 = vst [vmem:[%s9] sm:$0xff] %v11
  %s13 = scalar_lea.vmem %s1, 24
  %s14 = scalar_lea.vmem %s2, 24
  %v15 = vld [vmem:[%s14] sm:$0xff]
  %16 = vst [vmem:[%s13] sm:$0xff] %v15
  %s17 = scalar_lea.vmem %s1, 32
  %s18 = scalar_lea.vmem %s2, 32
  %v19 = vld [vmem:[%s18] sm:$0xff]
  %20 = vst [vmem:[%s17] sm:$0xff] %v19
  %s21 = scalar_lea.vmem %s1, 40
  %s22 = scalar_lea.vmem %s2, 40
  %v23 = vld [vmem:[%s22] sm:$0xff]
  %24 = vst [vmem:[%s21] sm:$0xff] %v23
  %s25 = scalar_lea.vmem %s1, 48
  %s26 = scalar_lea.vmem %s2, 48
  %v27 = vld [vmem:[%s26] sm:$0xff]
  %28 = vst [vmem:[%s25] sm:$0xff] %v27
  %s29 = scalar_lea.vmem %s1, 56
  %s30 = scalar_lea.vmem %s2, 56
  %v31 = vld [vmem:[%s30] sm:$0xff]
  %32 = vst [vmem:[%s29] sm:$0xff] %v31

// kernel: custom-call
$region0: #{custom-call}
  %s0 = inlined_call_operand.vmem [shape: c64[2,2,16,16], index: 0, kind: input, shape index: {}]
  %s1 = inlined_call_operand.vmem [shape: f32[2,2,16,16], index: 1, kind: output, shape index: {}]
  %v2 = vld [vmem:[%s0] sm:$0xff]
  %3 = vst [vmem:[%s1] sm:$0xff] %v2
  %s4 = scalar_lea.vmem %s1, 8
  %s5 = scalar_lea.vmem %s0, 8
  %v6 = vld [vmem:[%s5] sm:$0xff]
  %7 = vst [vmem:[%s4] sm:$0xff] %v6
  %s8 = scalar_lea.vmem %s1, 16
  %s9 = scalar_lea.vmem %s0, 16
  %v10 = vld [vmem:[%s9] sm:$0xff]
  %11 = vst [vmem:[%s8] sm:$0xff] %v10
  %s12 = scalar_lea.vmem %s1, 24
  %s13 = scalar_lea.vmem %s0, 24
  %v14 = vld [vmem:[%s13] sm:$0xff]
  %15 = vst [vmem:[%s12] sm:$0xff] %v14
  %s16 = scalar_lea.vmem %s1, 32
  %s17 = scalar_lea.vmem %s0, 32
  %v18 = vld [vmem:[%s17] sm:$0xff]
  %19 = vst [vmem:[%s16] sm:$0xff] %v18
  %s20 = scalar_lea.vmem %s1, 40
  %s21 = scalar_lea.vmem %s0, 40
  %v22 = vld [vmem:[%s21] sm:$0xff]
  %23 = vst [vmem:[%s20] sm:$0xff] %v22
  %s24 = scalar_lea.vmem %s1, 48
  %s25 = scalar_lea.vmem %s0, 48
  %v26 = vld [vmem:[%s25] sm:$0xff]
  %27 = vst [vmem:[%s24] sm:$0xff] %v26
  %s28 = scalar_lea.vmem %s1, 56
  %s29 = scalar_lea.vmem %s0, 56
  %v30 = vld [vmem:[%s29] sm:$0xff]
  %31 = vst [vmem:[%s28] sm:$0xff] %v30

// kernel: forward.5
$region0: #{forward.5}
  #allocation0 [shape = 'u32[]', space=smem, size = 0x4, offset = 0x4, fixed_abs, tag = 'smem constant byte address 0x4 - core index']
  #allocation1 [shape = 'u32[144,128]{1,0:T(1,128)}', space=vmem, size = 0x12000, scoped, tag = 'internal scratch']
  %s0 = inlined_call_operand.vmem [shape: f32[4,16,16], index: 0, kind: input, shape index: {}]
  %s1 = inlined_call_operand.vmem [shape: f32[32,16], index: 1, kind: input, shape index: {}]
  %s2 = inlined_call_operand.vmem [shape: f32[16,128], index: 2, kind: input, shape index: {}]
  %s3 = inlined_call_operand.vmem [shape: f32[4,32,128], index: 3, kind: output, shape index: {}]
  %s4 = sld [smem:[#allocation0]]
  $region22: #{forward.5} parent=0
    _
  %s6 = ssub.s32 1, %s4
  %s7 = scalar_select 0, %s6, %s4
  // Predicated region
  $region2: #{forward.5} parent=0 // pred_check
    _
  $region3: #{forward.5} parent=0 // pred_check_branch
    %9 = sbr.rel (0) target = $region5
  $region4: #{forward.5} parent=0 // pred_region
    _
  $region5: #{forward.5} parent=0 // pred_fallthru
    _
  // Predicated region
  $region6: #{forward.5} parent=0 // pred_check
    _
  $region7: #{forward.5} parent=0 // pred_check_branch
    %11 = sbr.rel (0) target = $region9
  $region8: #{forward.5} parent=0 // pred_region
    _
  $region9: #{forward.5} parent=0 // pred_fallthru
    _
  // Predicated region
  $region10: #{forward.5} parent=0 // pred_check
    _
  $region11: #{forward.5} parent=0 // pred_check_branch
    %13 = sbr.rel (0) target = $region13
  $region12: #{forward.5} parent=0 // pred_region
    _
  $region13: #{forward.5} parent=0 // pred_fallthru
    _
  %v14 = vld [vmem:[%s0] sm:$0xff]
  %v15 = vld [vmem:[%s0 + $0x8] sm:$0xff]
  %v16 = vld [vmem:[%s0 + $0x10] sm:$0xff]
  %v17 = vld [vmem:[%s0 + $0x18] sm:$0xff]
  %v18 = vld [vmem:[%s0 + $0x20] sm:$0xff]
  %v19 = vld [vmem:[%s0 + $0x28] sm:$0xff]
  %v20 = vld [vmem:[%s0 + $0x30] sm:$0xff]
  %v21 = vld [vmem:[%s0 + $0x38] sm:$0xff]
  %v22 = vld [vmem:[%s2] sm:$0xff]
  %v23 = vld [vmem:[%s2 + $0x8] sm:$0xff]
  %vm24 = vcmask 130048
  %v26 = vsel %vm24, %v14, 0
  %v29 = vsel %vm24, %v15, 0
  %31 = vmatprep.subr.mxu0 0.0
  %32 = vmatpush1.msra.mxu0 0.0
  %33 = vmatprep.subr.mxu0 0.0
  %34 = vmatpush1.msra.mxu0 0.0
  %35 = vmatprep.subr.mxu0 0.0
  %36 = vmatpush1.msra.mxu0 0.0
  %37 = vmatprep.subr.mxu0 0.0
  %38 = vmatpush1.msra.mxu0 0.0
  %39 = vmatprep.subr.mxu0 0.0
  %40 = vmatpush1.msra.mxu0 0.0
  %41 = vmatprep.subr.mxu0 0.0
  %42 = vmatpush1.msra.mxu0 0.0
  %43 = vmatprep.subr.mxu0 0.0
  %44 = vmatpush1.msra.mxu0 0.0
  %45 = vmatprep.subr.mxu0 0.0
  %46 = vmatpush1.msra.mxu0 0.0
  %47 = vmatprep.subr.mxu0 0.0
  %48 = vmatpush1.msra.mxu0 0.0
  %49 = vmatprep.subr.mxu0 0.0
  %50 = vmatpush1.msra.mxu0 0.0
  %51 = vmatprep.subr.mxu0 0.0
  %52 = vmatpush1.msra.mxu0 0.0
  %53 = vmatprep.subr.mxu0 0.0
  %54 = vmatpush1.msra.mxu0 0.0
  %55 = vmatprep.subr.mxu0 0.0
  %56 = vmatpush1.msra.mxu0 0.0
  %57 = vmatprep.subr.mxu0 0.0
  %58 = vmatpush1.msra.mxu0 0.0
  %59 = vmatprep.subr.mxu0 0.0
  %60 = vmatpush1.msra.mxu0 %v23
  %61 = vmatprep.subr.mxu0 0.0
  %62 = vmatpush1.msra.mxu0 %v22
  %63 = vmatprep.subr.mxu0 0.0
  %64 = vmatpush2.msra.mxu0 0.0
  %65 = vmatprep.subr.mxu0 0.0
  %66 = vmatpush2.msra.mxu0 0.0
  %67 = vmatprep.subr.mxu0 0.0
  %68 = vmatpush2.msra.mxu0 0.0
  %69 = vmatprep.subr.mxu0 0.0
  %70 = vmatpush2.msra.mxu0 0.0
  %71 = vmatprep.subr.mxu0 0.0
  %72 = vmatpush2.msra.mxu0 0.0
  %73 = vmatprep.subr.mxu0 0.0
  %74 = vmatpush2.msra.mxu0 0.0
  %75 = vmatprep.subr.mxu0 0.0
  %76 = vmatpush2.msra.mxu0 0.0
  %77 = vmatprep.subr.mxu0 0.0
  %78 = vmatpush2.msra.mxu0 0.0
  %79 = vmatprep.subr.mxu0 0.0
  %80 = vmatpush2.msra.mxu0 0.0
  %81 = vmatprep.subr.mxu0 0.0
  %82 = vmatpush2.msra.mxu0 0.0
  %83 = vmatprep.subr.mxu0 0.0
  %84 = vmatpush2.msra.mxu0 0.0
  %85 = vmatprep.subr.mxu0 0.0
  %86 = vmatpush2.msra.mxu0 0.0
  %87 = vmatprep.subr.mxu0 0.0
  %88 = vmatpush2.msra.mxu0 0.0
  %89 = vmatprep.subr.mxu0 0.0
  %90 = vmatpush2.msra.mxu0 0.0
  %91 = vmatprep.subr.mxu0 0.0
  %92 = vmatpush2.msra.mxu0 0.0
  %93 = vmatprep.subr.mxu0 0.0
  %94 = vmatpush2.msra.mxu0 0.0
  %95 = vmatprep.mubr.f32.mxu0 0.0
  %96 = vmatmul.mubr.f32.gmra.mxu0 %v26
  %v97 = vpop.f32.mrf.mxu0
  %v98 = vadd.f32 0.0, %v97
  %v99 = vpop.f32.mrf.mxu0
  %100 = vmatprep.mubr.f32.mxu0 0.0
  %101 = vmatmul.mubr.f32.gmra.mxu0 %v29
  %v102 = vpop.f32.mrf.mxu0
  %v103 = vadd.f32 0.0, %v102
  %v104 = vpop.f32.mrf.mxu0
  %105 = vdwg.mxu0
  %v107 = vsel %vm24, %v16, 0
  %v110 = vsel %vm24, %v17, 0
  %112 = vmatprep.subr.mxu0 0.0
  %113 = vmatpush1.msra.mxu0 0.0
  %114 = vmatprep.subr.mxu0 0.0
  %115 = vmatpush1.msra.mxu0 0.0
  %116 = vmatprep.subr.mxu0 0.0
  %117 = vmatpush1.msra.mxu0 0.0
  %118 = vmatprep.subr.mxu0 0.0
  %119 = vmatpush1.msra.mxu0 0.0
  %120 = vmatprep.subr.mxu0 0.0
  %121 = vmatpush1.msra.mxu0 0.0
  %122 = vmatprep.subr.mxu0 0.0
  %123 = vmatpush1.msra.mxu0 0.0
  %124 = vmatprep.subr.mxu0 0.0
  %125 = vmatpush1.msra.mxu0 0.0
  %126 = vmatprep.subr.mxu0 0.0
  %127 = vmatpush1.msra.mxu0 0.0
  %128 = vmatprep.subr.mxu0 0.0
  %129 = vmatpush1.msra.mxu0 0.0
  %130 = vmatprep.subr.mxu0 0.0
  %131 = vmatpush1.msra.mxu0 0.0
  %132 = vmatprep.subr.mxu0 0.0
  %133 = vmatpush1.msra.mxu0 0.0
  %134 = vmatprep.subr.mxu0 0.0
  %135 = vmatpush1.msra.mxu0 0.0
  %136 = vmatprep.subr.mxu0 0.0
  %137 = vmatpush1.msra.mxu0 0.0
  %138 = vmatprep.subr.mxu0 0.0
  %139 = vmatpush1.msra.mxu0 0.0
  %140 = vmatprep.subr.mxu0 0.0
  %141 = vmatpush1.msra.mxu0 %v23
  %142 = vmatprep.subr.mxu0 0.0
  %143 = vmatpush1.msra.mxu0 %v22
  %144 = vmatprep.subr.mxu0 0.0
  %145 = vmatpush2.msra.mxu0 0.0
  %146 = vmatprep.subr.mxu0 0.0
  %147 = vmatpush2.msra.mxu0 0.0
  %148 = vmatprep.subr.mxu0 0.0
  %149 = vmatpush2.msra.mxu0 0.0
  %150 = vmatprep.subr.mxu0 0.0
  %151 = vmatpush2.msra.mxu0 0.0
  %152 = vmatprep.subr.mxu0 0.0
  %153 = vmatpush2.msra.mxu0 0.0
  %154 = vmatprep.subr.mxu0 0.0
  %155 = vmatpush2.msra.mxu0 0.0
  %156 = vmatprep.subr.mxu0 0.0
  %157 = vmatpush2.msra.mxu0 0.0
  %158 = vmatprep.subr.mxu0 0.0
  %159 = vmatpush2.msra.mxu0 0.0
  %160 = vmatprep.subr.mxu0 0.0
  %161 = vmatpush2.msra.mxu0 0.0
  %162 = vmatprep.subr.mxu0 0.0
  %163 = vmatpush2.msra.mxu0 0.0
  %164 = vmatprep.subr.mxu0 0.0
  %165 = vmatpush2.msra.mxu0 0.0
  %166 = vmatprep.subr.mxu0 0.0
  %167 = vmatpush2.msra.mxu0 0.0
  %168 = vmatprep.subr.mxu0 0.0
  %169 = vmatpush2.msra.mxu0 0.0
  %170 = vmatprep.subr.mxu0 0.0
  %171 = vmatpush2.msra.mxu0 0.0
  %172 = vmatprep.subr.mxu0 0.0
  %173 = vmatpush2.msra.mxu0 0.0
  %174 = vmatprep.subr.mxu0 0.0
  %175 = vmatpush2.msra.mxu0 0.0
  %176 = vmatprep.mubr.f32.mxu0 0.0
  %177 = vmatmul.mubr.f32.gmra.mxu0 %v107
  %v178 = vpop.f32.mrf.mxu0
  %v179 = vadd.f32 0.0, %v178
  %v180 = vpop.f32.mrf.mxu0
  %181 = vmatprep.mubr.f32.mxu0 0.0
  %182 = vmatmul.mubr.f32.gmra.mxu0 %v110
  %v183 = vpop.f32.mrf.mxu0
  %v184 = vadd.f32 0.0, %v183
  %v185 = vpop.f32.mrf.mxu0
  %186 = vdwg.mxu0
  %v188 = vsel %vm24, %v18, 0
  %v191 = vsel %vm24, %v19, 0
  %193 = vmatprep.subr.mxu0 0.0
  %194 = vmatpush1.msra.mxu0 0.0
  %195 = vmatprep.subr.mxu0 0.0
  %196 = vmatpush1.msra.mxu0 0.0
  %197 = vmatprep.subr.mxu0 0.0
  %198 = vmatpush1.msra.mxu0 0.0
  %199 = vmatprep.subr.mxu0 0.0
  %200 = vmatpush1.msra.mxu0 0.0
  %201 = vmatprep.subr.mxu0 0.0
  %202 = vmatpush1.msra.mxu0 0.0
  %203 = vmatprep.subr.mxu0 0.0
  %204 = vmatpush1.msra.mxu0 0.0
  %205 = vmatprep.subr.mxu0 0.0
  %206 = vmatpush1.msra.mxu0 0.0
  %207 = vmatprep.subr.mxu0 0.0
  %208 = vmatpush1.msra.mxu0 0.0
  %209 = vmatprep.subr.mxu0 0.0
  %210 = vmatpush1.msra.mxu0 0.0
  %211 = vmatprep.subr.mxu0 0.0
  %212 = vmatpush1.msra.mxu0 0.0
  %213 = vmatprep.subr.mxu0 0.0
  %214 = vmatpush1.msra.mxu0 0.0
  %215 = vmatprep.subr.mxu0 0.0
  %216 = vmatpush1.msra.mxu0 0.0
  %217 = vmatprep.subr.mxu0 0.0
  %218 = vmatpush1.msra.mxu0 0.0
  %219 = vmatprep.subr.mxu0 0.0
  %220 = vmatpush1.msra.mxu0 0.0
  %221 = vmatprep.subr.mxu0 0.0
  %222 = vmatpush1.msra.mxu0 %v23
  %223 = vmatprep.subr.mxu0 0.0
  %224 = vmatpush1.msra.mxu0 %v22
  %225 = vmatprep.subr.mxu0 0.0
  %226 = vmatpush2.msra.mxu0 0.0
  %227 = vmatprep.subr.mxu0 0.0
  %228 = vmatpush2.msra.mxu0 0.0
  %229 = vmatprep.subr.mxu0 0.0
  %230 = vmatpush2.msra.mxu0 0.0
  %231 = vmatprep.subr.mxu0 0.0
  %232 = vmatpush2.msra.mxu0 0.0
  %233 = vmatprep.subr.mxu0 0.0
  %234 = vmatpush2.msra.mxu0 0.0
  %235 = vmatprep.subr.mxu0 0.0
  %236 = vmatpush2.msra.mxu0 0.0
  %237 = vmatprep.subr.mxu0 0.0
  %238 = vmatpush2.msra.mxu0 0.0
  %239 = vmatprep.subr.mxu0 0.0
  %240 = vmatpush2.msra.mxu0 0.0
  %241 = vmatprep.subr.mxu0 0.0
  %242 = vmatpush2.msra.mxu0 0.0
  %243 = vmatprep.subr.mxu0 0.0
  %244 = vmatpush2.msra.mxu0 0.0
  %245 = vmatprep.subr.mxu0 0.0
  %246 = vmatpush2.msra.mxu0 0.0
  %247 = vmatprep.subr.mxu0 0.0
  %248 = vmatpush2.msra.mxu0 0.0
  %249 = vmatprep.subr.mxu0 0.0
  %250 = vmatpush2.msra.mxu0 0.0
  %251 = vmatprep.subr.mxu0 0.0
  %252 = vmatpush2.msra.mxu0 0.0
  %253 = vmatprep.subr.mxu0 0.0
  %254 = vmatpush2.msra.mxu0 0.0
  %255 = vmatprep.subr.mxu0 0.0
  %256 = vmatpush2.msra.mxu0 0.0
  %257 = vmatprep.mubr.f32.mxu0 0.0
  %258 = vmatmul.mubr.f32.gmra.mxu0 %v188
  %v259 = vpop.f32.mrf.mxu0
  %v260 = vadd.f32 0.0, %v259
  %v261 = vpop.f32.mrf.mxu0
  %262 = vmatprep.mubr.f32.mxu0 0.0
  %263 = vmatmul.mubr.f32.gmra.mxu0 %v191
  %v264 = vpop.f32.mrf.mxu0
  %v265 = vadd.f32 0.0, %v264
  %v266 = vpop.f32.mrf.mxu0
  %267 = vdwg.mxu0
  %v269 = vsel %vm24, %v20, 0
  %v272 = vsel %vm24, %v21, 0
  %274 = vmatprep.subr.mxu0 0.0
  %275 = vmatpush1.msra.mxu0 0.0
  %276 = vmatprep.subr.mxu0 0.0
  %277 = vmatpush1.msra.mxu0 0.0
  %278 = vmatprep.subr.mxu0 0.0
  %279 = vmatpush1.msra.mxu0 0.0
  %280 = vmatprep.subr.mxu0 0.0
  %281 = vmatpush1.msra.mxu0 0.0
  %282 = vmatprep.subr.mxu0 0.0
  %283 = vmatpush1.msra.mxu0 0.0
  %284 = vmatprep.subr.mxu0 0.0
  %285 = vmatpush1.msra.mxu0 0.0
  %286 = vmatprep.subr.mxu0 0.0
  %287 = vmatpush1.msra.mxu0 0.0
  %288 = vmatprep.subr.mxu0 0.0
  %289 = vmatpush1.msra.mxu0 0.0
  %290 = vmatprep.subr.mxu0 0.0
  %291 = vmatpush1.msra.mxu0 0.0
  %292 = vmatprep.subr.mxu0 0.0
  %293 = vmatpush1.msra.mxu0 0.0
  %294 = vmatprep.subr.mxu0 0.0
  %295 = vmatpush1.msra.mxu0 0.0
  %296 = vmatprep.subr.mxu0 0.0
  %297 = vmatpush1.msra.mxu0 0.0
  %298 = vmatprep.subr.mxu0 0.0
  %299 = vmatpush1.msra.mxu0 0.0
  %300 = vmatprep.subr.mxu0 0.0
  %301 = vmatpush1.msra.mxu0 0.0
  %302 = vmatprep.subr.mxu0 0.0
  %303 = vmatpush1.msra.mxu0 %v23
  %304 = vmatprep.subr.mxu0 0.0
  %305 = vmatpush1.msra.mxu0 %v22
  %306 = vmatprep.subr.mxu0 0.0
  %307 = vmatpush2.msra.mxu0 0.0
  %308 = vmatprep.subr.mxu0 0.0
  %309 = vmatpush2.msra.mxu0 0.0
  %310 = vmatprep.subr.mxu0 0.0
  %311 = vmatpush2.msra.mxu0 0.0
  %312 = vmatprep.subr.mxu0 0.0
  %313 = vmatpush2.msra.mxu0 0.0
  %314 = vmatprep.subr.mxu0 0.0
  %315 = vmatpush2.msra.mxu0 0.0
  %316 = vmatprep.subr.mxu0 0.0
  %317 = vmatpush2.msra.mxu0 0.0
  %318 = vmatprep.subr.mxu0 0.0
  %319 = vmatpush2.msra.mxu0 0.0
  %320 = vmatprep.subr.mxu0 0.0
  %321 = vmatpush2.msra.mxu0 0.0
  %322 = vmatprep.subr.mxu0 0.0
  %323 = vmatpush2.msra.mxu0 0.0
  %324 = vmatprep.subr.mxu0 0.0
  %325 = vmatpush2.msra.mxu0 0.0
  %326 = vmatprep.subr.mxu0 0.0
  %327 = vmatpush2.msra.mxu0 0.0
  %328 = vmatprep.subr.mxu0 0.0
  %329 = vmatpush2.msra.mxu0 0.0
  %330 = vmatprep.subr.mxu0 0.0
  %331 = vmatpush2.msra.mxu0 0.0
  %332 = vmatprep.subr.mxu0 0.0
  %333 = vmatpush2.msra.mxu0 0.0
  %334 = vmatprep.subr.mxu0 0.0
  %335 = vmatpush2.msra.mxu0 0.0
  %336 = vmatprep.subr.mxu0 0.0
  %337 = vmatpush2.msra.mxu0 0.0
  %338 = vmatprep.mubr.f32.mxu0 0.0
  %339 = vmatmul.mubr.f32.gmra.mxu0 %v269
  %v340 = vpop.f32.mrf.mxu0
  %v341 = vadd.f32 0.0, %v340
  %v342 = vpop.f32.mrf.mxu0
  %343 = vmatprep.mubr.f32.mxu0 0.0
  %344 = vmatmul.mubr.f32.gmra.mxu0 %v272
  %v345 = vpop.f32.mrf.mxu0
  %v346 = vadd.f32 0.0, %v345
  %v347 = vpop.f32.mrf.mxu0
  %348 = vdwg.mxu0
  %v349 = vld [vmem:[%s1] sm:$0xff]
  %v350 = vld [vmem:[%s1 + $0x8] sm:$0xff]
  %v351 = vld [vmem:[%s1 + $0x10] sm:$0xff]
  %v352 = vld [vmem:[%s1 + $0x18] sm:$0xff]
  %v354 = vsel %vm24, %v349, 0
  %v357 = vsel %vm24, %v350, 0
  %v360 = vsel %vm24, %v351, 0
  %v363 = vsel %vm24, %v352, 0
  %365 = vmatprep.subr.mxu0 0.0
  %366 = vmatpush1.msra.mxu0 0.0
  %367 = vmatprep.subr.mxu0 0.0
  %368 = vmatpush1.msra.mxu0 0.0
  %369 = vmatprep.subr.mxu0 0.0
  %370 = vmatpush1.msra.mxu0 0.0
  %371 = vmatprep.subr.mxu0 0.0
  %372 = vmatpush1.msra.mxu0 0.0
  %373 = vmatprep.subr.mxu0 0.0
  %374 = vmatpush1.msra.mxu0 0.0
  %375 = vmatprep.subr.mxu0 0.0
  %376 = vmatpush1.msra.mxu0 0.0
  %377 = vmatprep.subr.mxu0 0.0
  %378 = vmatpush1.msra.mxu0 0.0
  %379 = vmatprep.subr.mxu0 0.0
  %380 = vmatpush1.msra.mxu0 0.0
  %381 = vmatprep.subr.mxu0 0.0
  %382 = vmatpush1.msra.mxu0 0.0
  %383 = vmatprep.subr.mxu0 0.0
  %384 = vmatpush1.msra.mxu0 0.0
  %385 = vmatprep.subr.mxu0 0.0
  %386 = vmatpush1.msra.mxu0 0.0
  %387 = vmatprep.subr.mxu0 0.0
  %388 = vmatpush1.msra.mxu0 0.0
  %389 = vmatprep.subr.mxu0 0.0
  %390 = vmatpush1.msra.mxu0 0.0
  %391 = vmatprep.subr.mxu0 0.0
  %392 = vmatpush1.msra.mxu0 0.0
  %393 = vmatprep.subr.mxu0 0.0
  %394 = vmatpush1.msra.mxu0 %v103
  %395 = vmatprep.subr.mxu0 0.0
  %396 = vmatpush1.msra.mxu0 %v98
  %397 = vmatprep.subr.mxu0 0.0
  %398 = vmatpush2.msra.mxu0 0.0
  %399 = vmatprep.subr.mxu0 0.0
  %400 = vmatpush2.msra.mxu0 0.0
  %401 = vmatprep.subr.mxu0 0.0
  %402 = vmatpush2.msra.mxu0 0.0
  %403 = vmatprep.subr.mxu0 0.0
  %404 = vmatpush2.msra.mxu0 0.0
  %405 = vmatprep.subr.mxu0 0.0
  %406 = vmatpush2.msra.mxu0 0.0
  %407 = vmatprep.subr.mxu0 0.0
  %408 = vmatpush2.msra.mxu0 0.0
  %409 = vmatprep.subr.mxu0 0.0
  %410 = vmatpush2.msra.mxu0 0.0
  %411 = vmatprep.subr.mxu0 0.0
  %412 = vmatpush2.msra.mxu0 0.0
  %413 = vmatprep.subr.mxu0 0.0
  %414 = vmatpush2.msra.mxu0 0.0
  %415 = vmatprep.subr.mxu0 0.0
  %416 = vmatpush2.msra.mxu0 0.0
  %417 = vmatprep.subr.mxu0 0.0
  %418 = vmatpush2.msra.mxu0 0.0
  %419 = vmatprep.subr.mxu0 0.0
  %420 = vmatpush2.msra.mxu0 0.0
  %421 = vmatprep.subr.mxu0 0.0
  %422 = vmatpush2.msra.mxu0 0.0
  %423 = vmatprep.subr.mxu0 0.0
  %424 = vmatpush2.msra.mxu0 0.0
  %425 = vmatprep.subr.mxu0 0.0
  %426 = vmatpush2.msra.mxu0 0.0
  %427 = vmatprep.subr.mxu0 0.0
  %428 = vmatpush2.msra.mxu0 0.0
  %429 = vmatprep.mubr.f32.mxu0 0.0
  %430 = vmatmul.mubr.f32.gmra.mxu0 %v354
  %v431 = vpop.f32.mrf.mxu0
  %v432 = vadd.f32 0.0, %v431
  %v433 = vpop.f32.mrf.mxu0
  %434 = vmatprep.mubr.f32.mxu0 0.0
  %435 = vmatmul.mubr.f32.gmra.mxu0 %v357
  %v436 = vpop.f32.mrf.mxu0
  %v437 = vadd.f32 0.0, %v436
  %v438 = vpop.f32.mrf.mxu0
  %439 = vmatprep.mubr.f32.mxu0 0.0
  %440 = vmatmul.mubr.f32.gmra.mxu0 %v360
  %v441 = vpop.f32.mrf.mxu0
  %v442 = vadd.f32 0.0, %v441
  %v443 = vpop.f32.mrf.mxu0
  %444 = vmatprep.mubr.f32.mxu0 0.0
  %445 = vmatmul.mubr.f32.gmra.mxu0 %v363
  %v446 = vpop.f32.mrf.mxu0
  %v447 = vadd.f32 0.0, %v446
  %v448 = vpop.f32.mrf.mxu0
  %449 = vdwg.mxu0
  %450 = vmatprep.subr.mxu0 0.0
  %451 = vmatpush1.msra.mxu0 0.0
  %452 = vmatprep.subr.mxu0 0.0
  %453 = vmatpush1.msra.mxu0 0.0
  %454 = vmatprep.subr.mxu0 0.0
  %455 = vmatpush1.msra.mxu0 0.0
  %456 = vmatprep.subr.mxu0 0.0
  %457 = vmatpush1.msra.mxu0 0.0
  %458 = vmatprep.subr.mxu0 0.0
  %459 = vmatpush1.msra.mxu0 0.0
  %460 = vmatprep.subr.mxu0 0.0
  %461 = vmatpush1.msra.mxu0 0.0
  %462 = vmatprep.subr.mxu0 0.0
  %463 = vmatpush1.msra.mxu0 0.0
  %464 = vmatprep.subr.mxu0 0.0
  %465 = vmatpush1.msra.mxu0 0.0
  %466 = vmatprep.subr.mxu0 0.0
  %467 = vmatpush1.msra.mxu0 0.0
  %468 = vmatprep.subr.mxu0 0.0
  %469 = vmatpush1.msra.mxu0 0.0
  %470 = vmatprep.subr.mxu0 0.0
  %471 = vmatpush1.msra.mxu0 0.0
  %472 = vmatprep.subr.mxu0 0.0
  %473 = vmatpush1.msra.mxu0 0.0
  %474 = vmatprep.subr.mxu0 0.0
  %475 = vmatpush1.msra.mxu0 0.0
  %476 = vmatprep.subr.mxu0 0.0
  %477 = vmatpush1.msra.mxu0 0.0
  %478 = vmatprep.subr.mxu0 0.0
  %479 = vmatpush1.msra.mxu0 %v184
  %480 = vmatprep.subr.mxu0 0.0
  %481 = vmatpush1.msra.mxu0 %v179
  %482 = vmatprep.subr.mxu0 0.0
  %483 = vmatpush2.msra.mxu0 0.0
  %484 = vmatprep.subr.mxu0 0.0
  %485 = vmatpush2.msra.mxu0 0.0
  %486 = vmatprep.subr.mxu0 0.0
  %487 = vmatpush2.msra.mxu0 0.0
  %488 = vmatprep.subr.mxu0 0.0
  %489 = vmatpush2.msra.mxu0 0.0
  %490 = vmatprep.subr.mxu0 0.0
  %491 = vmatpush2.msra.mxu0 0.0
  %492 = vmatprep.subr.mxu0 0.0
  %493 = vmatpush2.msra.mxu0 0.0
  %494 = vmatprep.subr.mxu0 0.0
  %495 = vmatpush2.msra.mxu0 0.0
  %496 = vmatprep.subr.mxu0 0.0
  %497 = vmatpush2.msra.mxu0 0.0
  %498 = vmatprep.subr.mxu0 0.0
  %499 = vmatpush2.msra.mxu0 0.0
  %500 = vmatprep.subr.mxu0 0.0
  %501 = vmatpush2.msra.mxu0 0.0
  %502 = vmatprep.subr.mxu0 0.0
  %503 = vmatpush2.msra.mxu0 0.0
  %504 = vmatprep.subr.mxu0 0.0
  %505 = vmatpush2.msra.mxu0 0.0
  %506 = vmatprep.subr.mxu0 0.0
  %507 = vmatpush2.msra.mxu0 0.0
  %508 = vmatprep.subr.mxu0 0.0
  %509 = vmatpush2.msra.mxu0 0.0
  %510 = vmatprep.subr.mxu0 0.0
  %511 = vmatpush2.msra.mxu0 0.0
  %512 = vmatprep.subr.mxu0 0.0
  %513 = vmatpush2.msra.mxu0 0.0
  %514 = vmatprep.mubr.f32.mxu0 0.0
  %515 = vmatmul.mubr.f32.gmra.mxu0 %v354
  %v516 = vpop.f32.mrf.mxu0
  %v517 = vadd.f32 0.0, %v516
  %v518 = vpop.f32.mrf.mxu0
  %519 = vmatprep.mubr.f32.mxu0 0.0
  %520 = vmatmul.mubr.f32.gmra.mxu0 %v357
  %v521 = vpop.f32.mrf.mxu0
  %v522 = vadd.f32 0.0, %v521
  %v523 = vpop.f32.mrf.mxu0
  %524 = vmatprep.mubr.f32.mxu0 0.0
  %525 = vmatmul.mubr.f32.gmra.mxu0 %v360
  %v526 = vpop.f32.mrf.mxu0
  %v527 = vadd.f32 0.0, %v526
  %v528 = vpop.f32.mrf.mxu0
  %529 = vmatprep.mubr.f32.mxu0 0.0
  %530 = vmatmul.mubr.f32.gmra.mxu0 %v363
  %v531 = vpop.f32.mrf.mxu0
  %v532 = vadd.f32 0.0, %v531
  %v533 = vpop.f32.mrf.mxu0
  %534 = vdwg.mxu0
  %535 = vmatprep.subr.mxu0 0.0
  %536 = vmatpush1.msra.mxu0 0.0
  %537 = vmatprep.subr.mxu0 0.0
  %538 = vmatpush1.msra.mxu0 0.0
  %539 = vmatprep.subr.mxu0 0.0
  %540 = vmatpush1.msra.mxu0 0.0
  %541 = vmatprep.subr.mxu0 0.0
  %542 = vmatpush1.msra.mxu0 0.0
  %543 = vmatprep.subr.mxu0 0.0
  %544 = vmatpush1.msra.mxu0 0.0
  %545 = vmatprep.subr.mxu0 0.0
  %546 = vmatpush1.msra.mxu0 0.0
  %547 = vmatprep.subr.mxu0 0.0
  %548 = vmatpush1.msra.mxu0 0.0
  %549 = vmatprep.subr.mxu0 0.0
  %550 = vmatpush1.msra.mxu0 0.0
  %551 = vmatprep.subr.mxu0 0.0
  %552 = vmatpush1.msra.mxu0 0.0
  %553 = vmatprep.subr.mxu0 0.0
  %554 = vmatpush1.msra.mxu0 0.0
  %555 = vmatprep.subr.mxu0 0.0
  %556 = vmatpush1.msra.mxu0 0.0
  %557 = vmatprep.subr.mxu0 0.0
  %558 = vmatpush1.msra.mxu0 0.0
  %559 = vmatprep.subr.mxu0 0.0
  %560 = vmatpush1.msra.mxu0 0.0
  %561 = vmatprep.subr.mxu0 0.0
  %562 = vmatpush1.msra.mxu0 0.0
  %563 = vmatprep.subr.mxu0 0.0
  %564 = vmatpush1.msra.mxu0 %v265
  %565 = vmatprep.subr.mxu0 0.0
  %566 = vmatpush1.msra.mxu0 %v260
  %567 = vmatprep.subr.mxu0 0.0
  %568 = vmatpush2.msra.mxu0 0.0
  %569 = vmatprep.subr.mxu0 0.0
  %570 = vmatpush2.msra.mxu0 0.0
  %571 = vmatprep.subr.mxu0 0.0
  %572 = vmatpush2.msra.mxu0 0.0
  %573 = vmatprep.subr.mxu0 0.0
  %574 = vmatpush2.msra.mxu0 0.0
  %575 = vmatprep.subr.mxu0 0.0
  %576 = vmatpush2.msra.mxu0 0.0
  %577 = vmatprep.subr.mxu0 0.0
  %578 = vmatpush2.msra.mxu0 0.0
  %579 = vmatprep.subr.mxu0 0.0
  %580 = vmatpush2.msra.mxu0 0.0
  %581 = vmatprep.subr.mxu0 0.0
  %582 = vmatpush2.msra.mxu0 0.0
  %583 = vmatprep.subr.mxu0 0.0
  %584 = vmatpush2.msra.mxu0 0.0
  %585 = vmatprep.subr.mxu0 0.0
  %586 = vmatpush2.msra.mxu0 0.0
  %587 = vmatprep.subr.mxu0 0.0
  %588 = vmatpush2.msra.mxu0 0.0
  %589 = vmatprep.subr.mxu0 0.0
  %590 = vmatpush2.msra.mxu0 0.0
  %591 = vmatprep.subr.mxu0 0.0
  %592 = vmatpush2.msra.mxu0 0.0
  %593 = vmatprep.subr.mxu0 0.0
  %594 = vmatpush2.msra.mxu0 0.0
  %595 = vmatprep.subr.mxu0 0.0
  %596 = vmatpush2.msra.mxu0 0.0
  %597 = vmatprep.subr.mxu0 0.0
  %598 = vmatpush2.msra.mxu0 0.0
  %599 = vmatprep.mubr.f32.mxu0 0.0
  %600 = vmatmul.mubr.f32.gmra.mxu0 %v354
  %v601 = vpop.f32.mrf.mxu0
  %v602 = vadd.f32 0.0, %v601
  %v603 = vpop.f32.mrf.mxu0
  %604 = vmatprep.mubr.f32.mxu0 0.0
  %605 = vmatmul.mubr.f32.gmra.mxu0 %v357
  %v606 = vpop.f32.mrf.mxu0
  %v607 = vadd.f32 0.0, %v606
  %v608 = vpop.f32.mrf.mxu0
  %609 = vmatprep.mubr.f32.mxu0 0.0
  %610 = vmatmul.mubr.f32.gmra.mxu0 %v360
  %v611 = vpop.f32.mrf.mxu0
  %v612 = vadd.f32 0.0, %v611
  %v613 = vpop.f32.mrf.mxu0
  %614 = vmatprep.mubr.f32.mxu0 0.0
  %615 = vmatmul.mubr.f32.gmra.mxu0 %v363
  %v616 = vpop.f32.mrf.mxu0
  %v617 = vadd.f32 0.0, %v616
  %v618 = vpop.f32.mrf.mxu0
  %619 = vdwg.mxu0
  %620 = vmatprep.subr.mxu0 0.0
  %621 = vmatpush1.msra.mxu0 0.0
  %622 = vmatprep.subr.mxu0 0.0
  %623 = vmatpush1.msra.mxu0 0.0
  %624 = vmatprep.subr.mxu0 0.0
  %625 = vmatpush1.msra.mxu0 0.0
  %626 = vmatprep.subr.mxu0 0.0
  %627 = vmatpush1.msra.mxu0 0.0
  %628 = vmatprep.subr.mxu0 0.0
  %629 = vmatpush1.msra.mxu0 0.0
  %630 = vmatprep.subr.mxu0 0.0
  %631 = vmatpush1.msra.mxu0 0.0
  %632 = vmatprep.subr.mxu0 0.0
  %633 = vmatpush1.msra.mxu0 0.0
  %634 = vmatprep.subr.mxu0 0.0
  %635 = vmatpush1.msra.mxu0 0.0
  %636 = vmatprep.subr.mxu0 0.0
  %637 = vmatpush1.msra.mxu0 0.0
  %638 = vmatprep.subr.mxu0 0.0
  %639 = vmatpush1.msra.mxu0 0.0
  %640 = vmatprep.subr.mxu0 0.0
  %641 = vmatpush1.msra.mxu0 0.0
  %642 = vmatprep.subr.mxu0 0.0
  %643 = vmatpush1.msra.mxu0 0.0
  %644 = vmatprep.subr.mxu0 0.0
  %645 = vmatpush1.msra.mxu0 0.0
  %646 = vmatprep.subr.mxu0 0.0
  %647 = vmatpush1.msra.mxu0 0.0
  %648 = vmatprep.subr.mxu0 0.0
  %649 = vmatpush1.msra.mxu0 %v346
  %650 = vmatprep.subr.mxu0 0.0
  %651 = vmatpush1.msra.mxu0 %v341
  %652 = vmatprep.subr.mxu0 0.0
  %653 = vmatpush2.msra.mxu0 0.0
  %654 = vmatprep.subr.mxu0 0.0
  %655 = vmatpush2.msra.mxu0 0.0
  %656 = vmatprep.subr.mxu0 0.0
  %657 = vmatpush2.msra.mxu0 0.0
  %658 = vmatprep.subr.mxu0 0.0
  %659 = vmatpush2.msra.mxu0 0.0
  %660 = vmatprep.subr.mxu0 0.0
  %661 = vmatpush2.msra.mxu0 0.0
  %662 = vmatprep.subr.mxu0 0.0
  %663 = vmatpush2.msra.mxu0 0.0
  %664 = vmatprep.subr.mxu0 0.0
  %665 = vmatpush2.msra.mxu0 0.0
  %666 = vmatprep.subr.mxu0 0.0
  %667 = vmatpush2.msra.mxu0 0.0
  %668 = vmatprep.subr.mxu0 0.0
  %669 = vmatpush2.msra.mxu0 0.0
  %670 = vmatprep.subr.mxu0 0.0
  %671 = vmatpush2.msra.mxu0 0.0
  %672 = vmatprep.subr.mxu0 0.0
  %673 = vmatpush2.msra.mxu0 0.0
  %674 = vmatprep.subr.mxu0 0.0
  %675 = vmatpush2.msra.mxu0 0.0
  %676 = vmatprep.subr.mxu0 0.0
  %677 = vmatpush2.msra.mxu0 0.0
  %678 = vmatprep.subr.mxu0 0.0
  %679 = vmatpush2.msra.mxu0 0.0
  %680 = vmatprep.subr.mxu0 0.0
  %681 = vmatpush2.msra.mxu0 0.0
  %682 = vmatprep.subr.mxu0 0.0
  %683 = vmatpush2.msra.mxu0 0.0
  %684 = vmatprep.mubr.f32.mxu0 0.0
  %685 = vmatmul.mubr.f32.gmra.mxu0 %v354
  %v686 = vpop.f32.mrf.mxu0
  %v687 = vadd.f32 0.0, %v686
  %v688 = vpop.f32.mrf.mxu0
  %689 = vmatprep.mubr.f32.mxu0 0.0
  %690 = vmatmul.mubr.f32.gmra.mxu0 %v357
  %v691 = vpop.f32.mrf.mxu0
  %v692 = vadd.f32 0.0, %v691
  %v693 = vpop.f32.mrf.mxu0
  %694 = vmatprep.mubr.f32.mxu0 0.0
  %695 = vmatmul.mubr.f32.gmra.mxu0 %v360
  %v696 = vpop.f32.mrf.mxu0
  %v697 = vadd.f32 0.0, %v696
  %v698 = vpop.f32.mrf.mxu0
  %699 = vmatprep.mubr.f32.mxu0 0.0
  %700 = vmatmul.mubr.f32.gmra.mxu0 %v363
  %v701 = vpop.f32.mrf.mxu0
  %v702 = vadd.f32 0.0, %v701
  %v703 = vpop.f32.mrf.mxu0
  %704 = vdwg.mxu0
  %705 = vst [vmem:[%s3] sm:$0xff] %v432
  %706 = vst [vmem:[%s3 + $0x8] sm:$0xff] %v437
  %707 = vst [vmem:[%s3 + $0x10] sm:$0xff] %v442
  %708 = vst [vmem:[%s3 + $0x18] sm:$0xff] %v447
  %709 = vst [vmem:[%s3 + $0x20] sm:$0xff] %v517
  %710 = vst [vmem:[%s3 + $0x28] sm:$0xff] %v522
  %711 = vst [vmem:[%s3 + $0x30] sm:$0xff] %v527
  %712 = vst [vmem:[%s3 + $0x38] sm:$0xff] %v532
  %713 = vst [vmem:[%s3 + $0x40] sm:$0xff] %v602
  %714 = vst [vmem:[%s3 + $0x48] sm:$0xff] %v607
  %715 = vst [vmem:[%s3 + $0x50] sm:$0xff] %v612
  %716 = vst [vmem:[%s3 + $0x58] sm:$0xff] %v617
  %717 = vst [vmem:[%s3 + $0x60] sm:$0xff] %v687
  %718 = vst [vmem:[%s3 + $0x68] sm:$0xff] %v692
  %719 = vst [vmem:[%s3 + $0x70] sm:$0xff] %v697
  %720 = vst [vmem:[%s3 + $0x78] sm:$0xff] %v702
  // Predicated region
  $region14: #{forward.5} parent=0 // pred_check
    _
  $region15: #{forward.5} parent=0 // pred_check_branch
    %722 = sbr.rel (0) target = $region17
  $region16: #{forward.5} parent=0 // pred_region
    _
  $region17: #{forward.5} parent=0 // pred_fallthru
    _
  // Predicated region
  $region18: #{forward.5} parent=0 // pred_check
    _
  $region19: #{forward.5} parent=0 // pred_check_branch
    %724 = sbr.rel (0) target = $region21
  $region20: #{forward.5} parent=0 // pred_region
    _
  $region21: #{forward.5} parent=0 // pred_fallthru
    _

// kernel: forward.6
$region0: #{forward.6}
  #allocation0 [shape = 'u32[]', space=smem, size = 0x4, offset = 0x4, fixed_abs, tag = 'smem constant byte address 0x4 - core index']
  #allocation1 [shape = 'u32[144,128]{1,0:T(1,128)}', space=vmem, size = 0x12000, scoped, tag = 'internal scratch']
  %s0 = inlined_call_operand.vmem [shape: f32[4,32,128], index: 0, kind: input, shape index: {}]
  %s1 = inlined_call_operand.vmem [shape: f32[4,32,128], index: 1, kind: input, shape index: {}]
  %s2 = inlined_call_operand.vmem [shape: f32[4,16,16], index: 2, kind: input, shape index: {}, may-alias: {2,3,4,5}]
  %s3 = inlined_call_operand.vmem [shape: f32[4,16,16], index: 3, kind: input, shape index: {}, may-alias: {2,3,4,5}]
  %s4 = inlined_call_operand.vmem [shape: f32[4,16,16], index: 4, kind: input, shape index: {}, may-alias: {2,3,4,5}]
  %s5 = inlined_call_operand.vmem [shape: f32[4,16,16], index: 5, kind: input, shape index: {}, may-alias: {2,3,4,5}]
  %s6 = inlined_call_operand.vmem [shape: f32[4,16,16], index: 6, kind: input, shape index: {}, may-alias: {6,11}]
  %s7 = inlined_call_operand.vmem [shape: f32[16,32], index: 7, kind: input, shape index: {}]
  %s8 = inlined_call_operand.vmem [shape: f32[128,16], index: 8, kind: input, shape index: {}]
  %s9 = inlined_call_operand.vmem [shape: f32[16,16], index: 9, kind: input, shape index: {}]
  %s10 = inlined_call_operand.vmem [shape: f32[16,16], index: 10, kind: input, shape index: {}]
  %s11 = inlined_call_operand.vmem [shape: f32[4,16,16], index: 11, kind: output, shape index: {}, may-alias: {6,11}]
  %s12 = sld [smem:[#allocation0]]
  $region54: #{forward.6} parent=0
    _
  %s14 = ssub.s32 1, %s12
  %s15 = scalar_select 0, %s14, %s12
  // Predicated region
  $region2: #{forward.6} parent=0 // pred_check
    _
  $region3: #{forward.6} parent=0 // pred_check_branch
    %17 = sbr.rel (0) target = $region5
  $region4: #{forward.6} parent=0 // pred_region
    _
  $region5: #{forward.6} parent=0 // pred_fallthru
    _
  // Predicated region
  $region6: #{forward.6} parent=0 // pred_check
    _
  $region7: #{forward.6} parent=0 // pred_check_branch
    %19 = sbr.rel (0) target = $region9
  $region8: #{forward.6} parent=0 // pred_region
    _
  $region9: #{forward.6} parent=0 // pred_fallthru
    _
  // Predicated region
  $region10: #{forward.6} parent=0 // pred_check
    _
  $region11: #{forward.6} parent=0 // pred_check_branch
    %21 = sbr.rel (0) target = $region13
  $region12: #{forward.6} parent=0 // pred_region
    _
  $region13: #{forward.6} parent=0 // pred_fallthru
    _
  // Predicated region
  $region14: #{forward.6} parent=0 // pred_check
    _
  $region15: #{forward.6} parent=0 // pred_check_branch
    %23 = sbr.rel (0) target = $region17
  $region16: #{forward.6} parent=0 // pred_region
    _
  $region17: #{forward.6} parent=0 // pred_fallthru
    _
  // Predicated region
  $region18: #{forward.6} parent=0 // pred_check
    _
  $region19: #{forward.6} parent=0 // pred_check_branch
    %25 = sbr.rel (0) target = $region21
  $region20: #{forward.6} parent=0 // pred_region
    _
  $region21: #{forward.6} parent=0 // pred_fallthru
    _
  // Predicated region
  $region22: #{forward.6} parent=0 // pred_check
    _
  $region23: #{forward.6} parent=0 // pred_check_branch
    %27 = sbr.rel (0) target = $region25
  $region24: #{forward.6} parent=0 // pred_region
    _
  $region25: #{forward.6} parent=0 // pred_fallthru
    _
  // Predicated region
  $region26: #{forward.6} parent=0 // pred_check
    _
  $region27: #{forward.6} parent=0 // pred_check_branch
    %29 = sbr.rel (0) target = $region29
  $region28: #{forward.6} parent=0 // pred_region
    _
  $region29: #{forward.6} parent=0 // pred_fallthru
    _
  // Predicated region
  $region30: #{forward.6} parent=0 // pred_check
    _
  $region31: #{forward.6} parent=0 // pred_check_branch
    %31 = sbr.rel (0) target = $region33
  $region32: #{forward.6} parent=0 // pred_region
    _
  $region33: #{forward.6} parent=0 // pred_fallthru
    _
  // Predicated region
  $region34: #{forward.6} parent=0 // pred_check
    _
  $region35: #{forward.6} parent=0 // pred_check_branch
    %33 = sbr.rel (0) target = $region37
  $region36: #{forward.6} parent=0 // pred_region
    _
  $region37: #{forward.6} parent=0 // pred_fallthru
    _
  // Predicated region
  $region38: #{forward.6} parent=0 // pred_check
    _
  $region39: #{forward.6} parent=0 // pred_check_branch
    %35 = sbr.rel (0) target = $region41
  $region40: #{forward.6} parent=0 // pred_region
    _
  $region41: #{forward.6} parent=0 // pred_fallthru
    _
  // Predicated region
  $region42: #{forward.6} parent=0 // pred_check
    _
  $region43: #{forward.6} parent=0 // pred_check_branch
    %37 = sbr.rel (0) target = $region45
  $region44: #{forward.6} parent=0 // pred_region
    _
  $region45: #{forward.6} parent=0 // pred_fallthru
    _
  %v38 = vld [vmem:[%s0] sm:$0xff]
  %v39 = vld [vmem:[%s0 + $0x8] sm:$0xff]
  %v40 = vld [vmem:[%s0 + $0x10] sm:$0xff]
  %v41 = vld [vmem:[%s0 + $0x18] sm:$0xff]
  %v42 = vld [vmem:[%s0 + $0x20] sm:$0xff]
  %v43 = vld [vmem:[%s0 + $0x28] sm:$0xff]
  %v44 = vld [vmem:[%s0 + $0x30] sm:$0xff]
  %v45 = vld [vmem:[%s0 + $0x38] sm:$0xff]
  %v46 = vld [vmem:[%s0 + $0x40] sm:$0xff]
  %v47 = vld [vmem:[%s0 + $0x48] sm:$0xff]
  %v48 = vld [vmem:[%s0 + $0x50] sm:$0xff]
  %v49 = vld [vmem:[%s0 + $0x58] sm:$0xff]
  %v50 = vld [vmem:[%s0 + $0x60] sm:$0xff]
  %v51 = vld [vmem:[%s0 + $0x68] sm:$0xff]
  %v52 = vld [vmem:[%s0 + $0x70] sm:$0xff]
  %v53 = vld [vmem:[%s0 + $0x78] sm:$0xff]
  %v54 = vld [vmem:[%s1] sm:$0xff]
  %v55 = vld [vmem:[%s1 + $0x8] sm:$0xff]
  %v56 = vld [vmem:[%s1 + $0x10] sm:$0xff]
  %v57 = vld [vmem:[%s1 + $0x18] sm:$0xff]
  %v58 = vld [vmem:[%s1 + $0x20] sm:$0xff]
  %v59 = vld [vmem:[%s1 + $0x28] sm:$0xff]
  %v60 = vld [vmem:[%s1 + $0x30] sm:$0xff]
  %v61 = vld [vmem:[%s1 + $0x38] sm:$0xff]
  %v62 = vld [vmem:[%s1 + $0x40] sm:$0xff]
  %v63 = vld [vmem:[%s1 + $0x48] sm:$0xff]
  %v64 = vld [vmem:[%s1 + $0x50] sm:$0xff]
  %v65 = vld [vmem:[%s1 + $0x58] sm:$0xff]
  %v66 = vld [vmem:[%s1 + $0x60] sm:$0xff]
  %v67 = vld [vmem:[%s1 + $0x68] sm:$0xff]
  %v68 = vld [vmem:[%s1 + $0x70] sm:$0xff]
  %v69 = vld [vmem:[%s1 + $0x78] sm:$0xff]
  %v70 = vsub.f32 %v38, %v54
  %v71 = vsub.f32 %v39, %v55
  %v72 = vsub.f32 %v40, %v56
  %v73 = vsub.f32 %v41, %v57
  %v74 = vsub.f32 %v42, %v58
  %v75 = vsub.f32 %v43, %v59
  %v76 = vsub.f32 %v44, %v60
  %v77 = vsub.f32 %v45, %v61
  %v78 = vsub.f32 %v46, %v62
  %v79 = vsub.f32 %v47, %v63
  %v80 = vsub.f32 %v48, %v64
  %v81 = vsub.f32 %v49, %v65
  %v82 = vsub.f32 %v50, %v66
  %v83 = vsub.f32 %v51, %v67
  %v84 = vsub.f32 %v52, %v68
  %v85 = vsub.f32 %v53, %v69
  %v86 = vld [vmem:[%s7] sm:$0xff]
  %v87 = vld [vmem:[%s7 + $0x8] sm:$0xff]
  %vm88 = vcmask 261120
  %v90 = vsel %vm88, %v86, 0
  %v93 = vsel %vm88, %v87, 0
  %95 = vmatprep.subr.mxu0 0.0
  %96 = vmatpush1.msra.mxu0 0.0
  %97 = vmatprep.subr.mxu0 0.0
  %98 = vmatpush1.msra.mxu0 0.0
  %99 = vmatprep.subr.mxu0 0.0
  %100 = vmatpush1.msra.mxu0 0.0
  %101 = vmatprep.subr.mxu0 0.0
  %102 = vmatpush1.msra.mxu0 0.0
  %103 = vmatprep.subr.mxu0 0.0
  %104 = vmatpush1.msra.mxu0 0.0
  %105 = vmatprep.subr.mxu0 0.0
  %106 = vmatpush1.msra.mxu0 0.0
  %107 = vmatprep.subr.mxu0 0.0
  %108 = vmatpush1.msra.mxu0 0.0
  %109 = vmatprep.subr.mxu0 0.0
  %110 = vmatpush1.msra.mxu0 0.0
  %111 = vmatprep.subr.mxu0 0.0
  %112 = vmatpush1.msra.mxu0 0.0
  %113 = vmatprep.subr.mxu0 0.0
  %114 = vmatpush1.msra.mxu0 0.0
  %115 = vmatprep.subr.mxu0 0.0
  %116 = vmatpush1.msra.mxu0 0.0
  %117 = vmatprep.subr.mxu0 0.0
  %118 = vmatpush1.msra.mxu0 0.0
  %119 = vmatprep.subr.mxu0 0.0
  %120 = vmatpush1.msra.mxu0 %v73
  %121 = vmatprep.subr.mxu0 0.0
  %122 = vmatpush1.msra.mxu0 %v72
  %123 = vmatprep.subr.mxu0 0.0
  %124 = vmatpush1.msra.mxu0 %v71
  %125 = vmatprep.subr.mxu0 0.0
  %126 = vmatpush1.msra.mxu0 %v70
  %127 = vmatprep.subr.mxu0 0.0
  %128 = vmatpush2.msra.mxu0 0.0
  %129 = vmatprep.subr.mxu0 0.0
  %130 = vmatpush2.msra.mxu0 0.0
  %131 = vmatprep.subr.mxu0 0.0
  %132 = vmatpush2.msra.mxu0 0.0
  %133 = vmatprep.subr.mxu0 0.0
  %134 = vmatpush2.msra.mxu0 0.0
  %135 = vmatprep.subr.mxu0 0.0
  %136 = vmatpush2.msra.mxu0 0.0
  %137 = vmatprep.subr.mxu0 0.0
  %138 = vmatpush2.msra.mxu0 0.0
  %139 = vmatprep.subr.mxu0 0.0
  %140 = vmatpush2.msra.mxu0 0.0
  %141 = vmatprep.subr.mxu0 0.0
  %142 = vmatpush2.msra.mxu0 0.0
  %143 = vmatprep.subr.mxu0 0.0
  %144 = vmatpush2.msra.mxu0 0.0
  %145 = vmatprep.subr.mxu0 0.0
  %146 = vmatpush2.msra.mxu0 0.0
  %147 = vmatprep.subr.mxu0 0.0
  %148 = vmatpush2.msra.mxu0 0.0
  %149 = vmatprep.subr.mxu0 0.0
  %150 = vmatpush2.msra.mxu0 0.0
  %151 = vmatprep.subr.mxu0 0.0
  %152 = vmatpush2.msra.mxu0 0.0
  %153 = vmatprep.subr.mxu0 0.0
  %154 = vmatpush2.msra.mxu0 0.0
  %155 = vmatprep.subr.mxu0 0.0
  %156 = vmatpush2.msra.mxu0 0.0
  %157 = vmatprep.subr.mxu0 0.0
  %158 = vmatpush2.msra.mxu0 0.0
  %159 = vmatprep.mubr.f32.mxu0 0.0
  %160 = vmatmul.mubr.f32.gmra.mxu0 %v90
  %v161 = vpop.f32.mrf.mxu0
  %v162 = vadd.f32 0.0, %v161
  %v163 = vpop.f32.mrf.mxu0
  %164 = vmatprep.mubr.f32.mxu0 0.0
  %165 = vmatmul.mubr.f32.gmra.mxu0 %v93
  %v166 = vpop.f32.mrf.mxu0
  %v167 = vadd.f32 0.0, %v166
  %v168 = vpop.f32.mrf.mxu0
  %169 = vdwg.mxu0
  %170 = vmatprep.subr.mxu0 0.0
  %171 = vmatpush1.msra.mxu0 0.0
  %172 = vmatprep.subr.mxu0 0.0
  %173 = vmatpush1.msra.mxu0 0.0
  %174 = vmatprep.subr.mxu0 0.0
  %175 = vmatpush1.msra.mxu0 0.0
  %176 = vmatprep.subr.mxu0 0.0
  %177 = vmatpush1.msra.mxu0 0.0
  %178 = vmatprep.subr.mxu0 0.0
  %179 = vmatpush1.msra.mxu0 0.0
  %180 = vmatprep.subr.mxu0 0.0
  %181 = vmatpush1.msra.mxu0 0.0
  %182 = vmatprep.subr.mxu0 0.0
  %183 = vmatpush1.msra.mxu0 0.0
  %184 = vmatprep.subr.mxu0 0.0
  %185 = vmatpush1.msra.mxu0 0.0
  %186 = vmatprep.subr.mxu0 0.0
  %187 = vmatpush1.msra.mxu0 0.0
  %188 = vmatprep.subr.mxu0 0.0
  %189 = vmatpush1.msra.mxu0 0.0
  %190 = vmatprep.subr.mxu0 0.0
  %191 = vmatpush1.msra.mxu0 0.0
  %192 = vmatprep.subr.mxu0 0.0
  %193 = vmatpush1.msra.mxu0 0.0
  %194 = vmatprep.subr.mxu0 0.0
  %195 = vmatpush1.msra.mxu0 %v77
  %196 = vmatprep.subr.mxu0 0.0
  %197 = vmatpush1.msra.mxu0 %v76
  %198 = vmatprep.subr.mxu0 0.0
  %199 = vmatpush1.msra.mxu0 %v75
  %200 = vmatprep.subr.mxu0 0.0
  %201 = vmatpush1.msra.mxu0 %v74
  %202 = vmatprep.subr.mxu0 0.0
  %203 = vmatpush2.msra.mxu0 0.0
  %204 = vmatprep.subr.mxu0 0.0
  %205 = vmatpush2.msra.mxu0 0.0
  %206 = vmatprep.subr.mxu0 0.0
  %207 = vmatpush2.msra.mxu0 0.0
  %208 = vmatprep.subr.mxu0 0.0
  %209 = vmatpush2.msra.mxu0 0.0
  %210 = vmatprep.subr.mxu0 0.0
  %211 = vmatpush2.msra.mxu0 0.0
  %212 = vmatprep.subr.mxu0 0.0
  %213 = vmatpush2.msra.mxu0 0.0
  %214 = vmatprep.subr.mxu0 0.0
  %215 = vmatpush2.msra.mxu0 0.0
  %216 = vmatprep.subr.mxu0 0.0
  %217 = vmatpush2.msra.mxu0 0.0
  %218 = vmatprep.subr.mxu0 0.0
  %219 = vmatpush2.msra.mxu0 0.0
  %220 = vmatprep.subr.mxu0 0.0
  %221 = vmatpush2.msra.mxu0 0.0
  %222 = vmatprep.subr.mxu0 0.0
  %223 = vmatpush2.msra.mxu0 0.0
  %224 = vmatprep.subr.mxu0 0.0
  %225 = vmatpush2.msra.mxu0 0.0
  %226 = vmatprep.subr.mxu0 0.0
  %227 = vmatpush2.msra.mxu0 0.0
  %228 = vmatprep.subr.mxu0 0.0
  %229 = vmatpush2.msra.mxu0 0.0
  %230 = vmatprep.subr.mxu0 0.0
  %231 = vmatpush2.msra.mxu0 0.0
  %232 = vmatprep.subr.mxu0 0.0
  %233 = vmatpush2.msra.mxu0 0.0
  %234 = vmatprep.mubr.f32.mxu0 0.0
  %235 = vmatmul.mubr.f32.gmra.mxu0 %v90
  %v236 = vpop.f32.mrf.mxu0
  %v237 = vadd.f32 0.0, %v236
  %v238 = vpop.f32.mrf.mxu0
  %239 = vmatprep.mubr.f32.mxu0 0.0
  %240 = vmatmul.mubr.f32.gmra.mxu0 %v93
  %v241 = vpop.f32.mrf.mxu0
  %v242 = vadd.f32 0.0, %v241
  %v243 = vpop.f32.mrf.mxu0
  %244 = vdwg.mxu0
  %245 = vmatprep.subr.mxu0 0.0
  %246 = vmatpush1.msra.mxu0 0.0
  %247 = vmatprep.subr.mxu0 0.0
  %248 = vmatpush1.msra.mxu0 0.0
  %249 = vmatprep.subr.mxu0 0.0
  %250 = vmatpush1.msra.mxu0 0.0
  %251 = vmatprep.subr.mxu0 0.0
  %252 = vmatpush1.msra.mxu0 0.0
  %253 = vmatprep.subr.mxu0 0.0
  %254 = vmatpush1.msra.mxu0 0.0
  %255 = vmatprep.subr.mxu0 0.0
  %256 = vmatpush1.msra.mxu0 0.0
  %257 = vmatprep.subr.mxu0 0.0
  %258 = vmatpush1.msra.mxu0 0.0
  %259 = vmatprep.subr.mxu0 0.0
  %260 = vmatpush1.msra.mxu0 0.0
  %261 = vmatprep.subr.mxu0 0.0
  %262 = vmatpush1.msra.mxu0 0.0
  %263 = vmatprep.subr.mxu0 0.0
  %264 = vmatpush1.msra.mxu0 0.0
  %265 = vmatprep.subr.mxu0 0.0
  %266 = vmatpush1.msra.mxu0 0.0
  %267 = vmatprep.subr.mxu0 0.0
  %268 = vmatpush1.msra.mxu0 0.0
  %269 = vmatprep.subr.mxu0 0.0
  %270 = vmatpush1.msra.mxu0 %v81
  %271 = vmatprep.subr.mxu0 0.0
  %272 = vmatpush1.msra.mxu0 %v80
  %273 = vmatprep.subr.mxu0 0.0
  %274 = vmatpush1.msra.mxu0 %v79
  %275 = vmatprep.subr.mxu0 0.0
  %276 = vmatpush1.msra.mxu0 %v78
  %277 = vmatprep.subr.mxu0 0.0
  %278 = vmatpush2.msra.mxu0 0.0
  %279 = vmatprep.subr.mxu0 0.0
  %280 = vmatpush2.msra.mxu0 0.0
  %281 = vmatprep.subr.mxu0 0.0
  %282 = vmatpush2.msra.mxu0 0.0
  %283 = vmatprep.subr.mxu0 0.0
  %284 = vmatpush2.msra.mxu0 0.0
  %285 = vmatprep.subr.mxu0 0.0
  %286 = vmatpush2.msra.mxu0 0.0
  %287 = vmatprep.subr.mxu0 0.0
  %288 = vmatpush2.msra.mxu0 0.0
  %289 = vmatprep.subr.mxu0 0.0
  %290 = vmatpush2.msra.mxu0 0.0
  %291 = vmatprep.subr.mxu0 0.0
  %292 = vmatpush2.msra.mxu0 0.0
  %293 = vmatprep.subr.mxu0 0.0
  %294 = vmatpush2.msra.mxu0 0.0
  %295 = vmatprep.subr.mxu0 0.0
  %296 = vmatpush2.msra.mxu0 0.0
  %297 = vmatprep.subr.mxu0 0.0
  %298 = vmatpush2.msra.mxu0 0.0
  %299 = vmatprep.subr.mxu0 0.0
  %300 = vmatpush2.msra.mxu0 0.0
  %301 = vmatprep.subr.mxu0 0.0
  %302 = vmatpush2.msra.mxu0 0.0
  %303 = vmatprep.subr.mxu0 0.0
  %304 = vmatpush2.msra.mxu0 0.0
  %305 = vmatprep.subr.mxu0 0.0
  %306 = vmatpush2.msra.mxu0 0.0
  %307 = vmatprep.subr.mxu0 0.0
  %308 = vmatpush2.msra.mxu0 0.0
  %309 = vmatprep.mubr.f32.mxu0 0.0
  %310 = vmatmul.mubr.f32.gmra.mxu0 %v90
  %v311 = vpop.f32.mrf.mxu0
  %v312 = vadd.f32 0.0, %v311
  %v313 = vpop.f32.mrf.mxu0
  %314 = vmatprep.mubr.f32.mxu0 0.0
  %315 = vmatmul.mubr.f32.gmra.mxu0 %v93
  %v316 = vpop.f32.mrf.mxu0
  %v317 = vadd.f32 0.0, %v316
  %v318 = vpop.f32.mrf.mxu0
  %319 = vdwg.mxu0
  %320 = vmatprep.subr.mxu0 0.0
  %321 = vmatpush1.msra.mxu0 0.0
  %322 = vmatprep.subr.mxu0 0.0
  %323 = vmatpush1.msra.mxu0 0.0
  %324 = vmatprep.subr.mxu0 0.0
  %325 = vmatpush1.msra.mxu0 0.0
  %326 = vmatprep.subr.mxu0 0.0
  %327 = vmatpush1.msra.mxu0 0.0
  %328 = vmatprep.subr.mxu0 0.0
  %329 = vmatpush1.msra.mxu0 0.0
  %330 = vmatprep.subr.mxu0 0.0
  %331 = vmatpush1.msra.mxu0 0.0
  %332 = vmatprep.subr.mxu0 0.0
  %333 = vmatpush1.msra.mxu0 0.0
  %334 = vmatprep.subr.mxu0 0.0
  %335 = vmatpush1.msra.mxu0 0.0
  %336 = vmatprep.subr.mxu0 0.0
  %337 = vmatpush1.msra.mxu0 0.0
  %338 = vmatprep.subr.mxu0 0.0
  %339 = vmatpush1.msra.mxu0 0.0
  %340 = vmatprep.subr.mxu0 0.0
  %341 = vmatpush1.msra.mxu0 0.0
  %342 = vmatprep.subr.mxu0 0.0
  %343 = vmatpush1.msra.mxu0 0.0
  %344 = vmatprep.subr.mxu0 0.0
  %345 = vmatpush1.msra.mxu0 %v85
  %346 = vmatprep.subr.mxu0 0.0
  %347 = vmatpush1.msra.mxu0 %v84
  %348 = vmatprep.subr.mxu0 0.0
  %349 = vmatpush1.msra.mxu0 %v83
  %350 = vmatprep.subr.mxu0 0.0
  %351 = vmatpush1.msra.mxu0 %v82
  %352 = vmatprep.subr.mxu0 0.0
  %353 = vmatpush2.msra.mxu0 0.0
  %354 = vmatprep.subr.mxu0 0.0
  %355 = vmatpush2.msra.mxu0 0.0
  %356 = vmatprep.subr.mxu0 0.0
  %357 = vmatpush2.msra.mxu0 0.0
  %358 = vmatprep.subr.mxu0 0.0
  %359 = vmatpush2.msra.mxu0 0.0
  %360 = vmatprep.subr.mxu0 0.0
  %361 = vmatpush2.msra.mxu0 0.0
  %362 = vmatprep.subr.mxu0 0.0
  %363 = vmatpush2.msra.mxu0 0.0
  %364 = vmatprep.subr.mxu0 0.0
  %365 = vmatpush2.msra.mxu0 0.0
  %366 = vmatprep.subr.mxu0 0.0
  %367 = vmatpush2.msra.mxu0 0.0
  %368 = vmatprep.subr.mxu0 0.0
  %369 = vmatpush2.msra.mxu0 0.0
  %370 = vmatprep.subr.mxu0 0.0
  %371 = vmatpush2.msra.mxu0 0.0
  %372 = vmatprep.subr.mxu0 0.0
  %373 = vmatpush2.msra.mxu0 0.0
  %374 = vmatprep.subr.mxu0 0.0
  %375 = vmatpush2.msra.mxu0 0.0
  %376 = vmatprep.subr.mxu0 0.0
  %377 = vmatpush2.msra.mxu0 0.0
  %378 = vmatprep.subr.mxu0 0.0
  %379 = vmatpush2.msra.mxu0 0.0
  %380 = vmatprep.subr.mxu0 0.0
  %381 = vmatpush2.msra.mxu0 0.0
  %382 = vmatprep.subr.mxu0 0.0
  %383 = vmatpush2.msra.mxu0 0.0
  %384 = vmatprep.mubr.f32.mxu0 0.0
  %385 = vmatmul.mubr.f32.gmra.mxu0 %v90
  %v386 = vpop.f32.mrf.mxu0
  %v387 = vadd.f32 0.0, %v386
  %v388 = vpop.f32.mrf.mxu0
  %389 = vmatprep.mubr.f32.mxu0 0.0
  %390 = vmatmul.mubr.f32.gmra.mxu0 %v93
  %v391 = vpop.f32.mrf.mxu0
  %v392 = vadd.f32 0.0, %v391
  %v393 = vpop.f32.mrf.mxu0
  %394 = vdwg.mxu0
  %v395 = vld [vmem:[%s8] sm:$0xff]
  %v396 = vld [vmem:[%s8 + $0x8] sm:$0xff]
  %v397 = vld [vmem:[%s8 + $0x10] sm:$0xff]
  %v398 = vld [vmem:[%s8 + $0x18] sm:$0xff]
  %v399 = vld [vmem:[%s8 + $0x20] sm:$0xff]
  %v400 = vld [vmem:[%s8 + $0x28] sm:$0xff]
  %v401 = vld [vmem:[%s8 + $0x30] sm:$0xff]
  %v402 = vld [vmem:[%s8 + $0x38] sm:$0xff]
  %v403 = vld [vmem:[%s8 + $0x40] sm:$0xff]
  %v404 = vld [vmem:[%s8 + $0x48] sm:$0xff]
  %v405 = vld [vmem:[%s8 + $0x50] sm:$0xff]
  %v406 = vld [vmem:[%s8 + $0x58] sm:$0xff]
  %v407 = vld [vmem:[%s8 + $0x60] sm:$0xff]
  %v408 = vld [vmem:[%s8 + $0x68] sm:$0xff]
  %v409 = vld [vmem:[%s8 + $0x70] sm:$0xff]
  %v410 = vld [vmem:[%s8 + $0x78] sm:$0xff]
  %411 = vmatprep.subr.mxu0 0.0
  %412 = vmatpush1.msra.mxu0 %v410
  %413 = vmatprep.subr.mxu0 0.0
  %414 = vmatpush1.msra.mxu0 %v409
  %415 = vmatprep.subr.mxu0 0.0
  %416 = vmatpush1.msra.mxu0 %v408
  %417 = vmatprep.subr.mxu0 0.0
  %418 = vmatpush1.msra.mxu0 %v407
  %419 = vmatprep.subr.mxu0 0.0
  %420 = vmatpush1.msra.mxu0 %v406
  %421 = vmatprep.subr.mxu0 0.0
  %422 = vmatpush1.msra.mxu0 %v405
  %423 = vmatprep.subr.mxu0 0.0
  %424 = vmatpush1.msra.mxu0 %v404
  %425 = vmatprep.subr.mxu0 0.0
  %426 = vmatpush1.msra.mxu0 %v403
  %427 = vmatprep.subr.mxu0 0.0
  %428 = vmatpush1.msra.mxu0 %v402
  %429 = vmatprep.subr.mxu0 0.0
  %430 = vmatpush1.msra.mxu0 %v401
  %431 = vmatprep.subr.mxu0 0.0
  %432 = vmatpush1.msra.mxu0 %v400
  %433 = vmatprep.subr.mxu0 0.0
  %434 = vmatpush1.msra.mxu0 %v399
  %435 = vmatprep.subr.mxu0 0.0
  %436 = vmatpush1.msra.mxu0 %v398
  %437 = vmatprep.subr.mxu0 0.0
  %438 = vmatpush1.msra.mxu0 %v397
  %439 = vmatprep.subr.mxu0 0.0
  %440 = vmatpush1.msra.mxu0 %v396
  %441 = vmatprep.subr.mxu0 0.0
  %442 = vmatpush1.msra.mxu0 %v395
  %443 = vmatprep.subr.mxu0 0.0
  %444 = vmatpush2.msra.mxu0 0.0
  %445 = vmatprep.subr.mxu0 0.0
  %446 = vmatpush2.msra.mxu0 0.0
  %447 = vmatprep.subr.mxu0 0.0
  %448 = vmatpush2.msra.mxu0 0.0
  %449 = vmatprep.subr.mxu0 0.0
  %450 = vmatpush2.msra.mxu0 0.0
  %451 = vmatprep.subr.mxu0 0.0
  %452 = vmatpush2.msra.mxu0 0.0
  %453 = vmatprep.subr.mxu0 0.0
  %454 = vmatpush2.msra.mxu0 0.0
  %455 = vmatprep.subr.mxu0 0.0
  %456 = vmatpush2.msra.mxu0 0.0
  %457 = vmatprep.subr.mxu0 0.0
  %458 = vmatpush2.msra.mxu0 0.0
  %459 = vmatprep.subr.mxu0 0.0
  %460 = vmatpush2.msra.mxu0 0.0
  %461 = vmatprep.subr.mxu0 0.0
  %462 = vmatpush2.msra.mxu0 0.0
  %463 = vmatprep.subr.mxu0 0.0
  %464 = vmatpush2.msra.mxu0 0.0
  %465 = vmatprep.subr.mxu0 0.0
  %466 = vmatpush2.msra.mxu0 0.0
  %467 = vmatprep.subr.mxu0 0.0
  %468 = vmatpush2.msra.mxu0 0.0
  %469 = vmatprep.subr.mxu0 0.0
  %470 = vmatpush2.msra.mxu0 0.0
  %471 = vmatprep.subr.mxu0 0.0
  %472 = vmatpush2.msra.mxu0 0.0
  %473 = vmatprep.subr.mxu0 0.0
  %474 = vmatpush2.msra.mxu0 0.0
  %475 = vmatprep.mubr.f32.mxu0 0.0
  %476 = vmatmul.mubr.f32.gmra.mxu0 %v162
  %v477 = vpop.f32.mrf.mxu0
  %v478 = vadd.f32 0.0, %v477
  %v479 = vpop.f32.mrf.mxu0
  %480 = vmatprep.mubr.f32.mxu0 0.0
  %481 = vmatmul.mubr.f32.gmra.mxu0 %v167
  %v482 = vpop.f32.mrf.mxu0
  %v483 = vadd.f32 0.0, %v482
  %v484 = vpop.f32.mrf.mxu0
  %485 = vdwg.mxu0
  %486 = vmatprep.subr.mxu0 0.0
  %487 = vmatpush1.msra.mxu0 %v410
  %488 = vmatprep.subr.mxu0 0.0
  %489 = vmatpush1.msra.mxu0 %v409
  %490 = vmatprep.subr.mxu0 0.0
  %491 = vmatpush1.msra.mxu0 %v408
  %492 = vmatprep.subr.mxu0 0.0
  %493 = vmatpush1.msra.mxu0 %v407
  %494 = vmatprep.subr.mxu0 0.0
  %495 = vmatpush1.msra.mxu0 %v406
  %496 = vmatprep.subr.mxu0 0.0
  %497 = vmatpush1.msra.mxu0 %v405
  %498 = vmatprep.subr.mxu0 0.0
  %499 = vmatpush1.msra.mxu0 %v404
  %500 = vmatprep.subr.mxu0 0.0
  %501 = vmatpush1.msra.mxu0 %v403
  %502 = vmatprep.subr.mxu0 0.0
  %503 = vmatpush1.msra.mxu0 %v402
  %504 = vmatprep.subr.mxu0 0.0
  %505 = vmatpush1.msra.mxu0 %v401
  %506 = vmatprep.subr.mxu0 0.0
  %507 = vmatpush1.msra.mxu0 %v400
  %508 = vmatprep.subr.mxu0 0.0
  %509 = vmatpush1.msra.mxu0 %v399
  %510 = vmatprep.subr.mxu0 0.0
  %511 = vmatpush1.msra.mxu0 %v398
  %512 = vmatprep.subr.mxu0 0.0
  %513 = vmatpush1.msra.mxu0 %v397
  %514 = vmatprep.subr.mxu0 0.0
  %515 = vmatpush1.msra.mxu0 %v396
  %516 = vmatprep.subr.mxu0 0.0
  %517 = vmatpush1.msra.mxu0 %v395
  %518 = vmatprep.subr.mxu0 0.0
  %519 = vmatpush2.msra.mxu0 0.0
  %520 = vmatprep.subr.mxu0 0.0
  %521 = vmatpush2.msra.mxu0 0.0
  %522 = vmatprep.subr.mxu0 0.0
  %523 = vmatpush2.msra.mxu0 0.0
  %524 = vmatprep.subr.mxu0 0.0
  %525 = vmatpush2.msra.mxu0 0.0
  %526 = vmatprep.subr.mxu0 0.0
  %527 = vmatpush2.msra.mxu0 0.0
  %528 = vmatprep.subr.mxu0 0.0
  %529 = vmatpush2.msra.mxu0 0.0
  %530 = vmatprep.subr.mxu0 0.0
  %531 = vmatpush2.msra.mxu0 0.0
  %532 = vmatprep.subr.mxu0 0.0
  %533 = vmatpush2.msra.mxu0 0.0
  %534 = vmatprep.subr.mxu0 0.0
  %535 = vmatpush2.msra.mxu0 0.0
  %536 = vmatprep.subr.mxu0 0.0
  %537 = vmatpush2.msra.mxu0 0.0
  %538 = vmatprep.subr.mxu0 0.0
  %539 = vmatpush2.msra.mxu0 0.0
  %540 = vmatprep.subr.mxu0 0.0
  %541 = vmatpush2.msra.mxu0 0.0
  %542 = vmatprep.subr.mxu0 0.0
  %543 = vmatpush2.msra.mxu0 0.0
  %544 = vmatprep.subr.mxu0 0.0
  %545 = vmatpush2.msra.mxu0 0.0
  %546 = vmatprep.subr.mxu0 0.0
  %547 = vmatpush2.msra.mxu0 0.0
  %548 = vmatprep.subr.mxu0 0.0
  %549 = vmatpush2.msra.mxu0 0.0
  %550 = vmatprep.mubr.f32.mxu0 0.0
  %551 = vmatmul.mubr.f32.gmra.mxu0 %v237
  %v552 = vpop.f32.mrf.mxu0
  %v553 = vadd.f32 0.0, %v552
  %v554 = vpop.f32.mrf.mxu0
  %555 = vmatprep.mubr.f32.mxu0 0.0
  %556 = vmatmul.mubr.f32.gmra.mxu0 %v242
  %v557 = vpop.f32.mrf.mxu0
  %v558 = vadd.f32 0.0, %v557
  %v559 = vpop.f32.mrf.mxu0
  %560 = vdwg.mxu0
  %561 = vmatprep.subr.mxu0 0.0
  %562 = vmatpush1.msra.mxu0 %v410
  %563 = vmatprep.subr.mxu0 0.0
  %564 = vmatpush1.msra.mxu0 %v409
  %565 = vmatprep.subr.mxu0 0.0
  %566 = vmatpush1.msra.mxu0 %v408
  %567 = vmatprep.subr.mxu0 0.0
  %568 = vmatpush1.msra.mxu0 %v407
  %569 = vmatprep.subr.mxu0 0.0
  %570 = vmatpush1.msra.mxu0 %v406
  %571 = vmatprep.subr.mxu0 0.0
  %572 = vmatpush1.msra.mxu0 %v405
  %573 = vmatprep.subr.mxu0 0.0
  %574 = vmatpush1.msra.mxu0 %v404
  %575 = vmatprep.subr.mxu0 0.0
  %576 = vmatpush1.msra.mxu0 %v403
  %577 = vmatprep.subr.mxu0 0.0
  %578 = vmatpush1.msra.mxu0 %v402
  %579 = vmatprep.subr.mxu0 0.0
  %580 = vmatpush1.msra.mxu0 %v401
  %581 = vmatprep.subr.mxu0 0.0
  %582 = vmatpush1.msra.mxu0 %v400
  %583 = vmatprep.subr.mxu0 0.0
  %584 = vmatpush1.msra.mxu0 %v399
  %585 = vmatprep.subr.mxu0 0.0
  %586 = vmatpush1.msra.mxu0 %v398
  %587 = vmatprep.subr.mxu0 0.0
  %588 = vmatpush1.msra.mxu0 %v397
  %589 = vmatprep.subr.mxu0 0.0
  %590 = vmatpush1.msra.mxu0 %v396
  %591 = vmatprep.subr.mxu0 0.0
  %592 = vmatpush1.msra.mxu0 %v395
  %593 = vmatprep.subr.mxu0 0.0
  %594 = vmatpush2.msra.mxu0 0.0
  %595 = vmatprep.subr.mxu0 0.0
  %596 = vmatpush2.msra.mxu0 0.0
  %597 = vmatprep.subr.mxu0 0.0
  %598 = vmatpush2.msra.mxu0 0.0
  %599 = vmatprep.subr.mxu0 0.0
  %600 = vmatpush2.msra.mxu0 0.0
  %601 = vmatprep.subr.mxu0 0.0
  %602 = vmatpush2.msra.mxu0 0.0
  %603 = vmatprep.subr.mxu0 0.0
  %604 = vmatpush2.msra.mxu0 0.0
  %605 = vmatprep.subr.mxu0 0.0
  %606 = vmatpush2.msra.mxu0 0.0
  %607 = vmatprep.subr.mxu0 0.0
  %608 = vmatpush2.msra.mxu0 0.0
  %609 = vmatprep.subr.mxu0 0.0
  %610 = vmatpush2.msra.mxu0 0.0
  %611 = vmatprep.subr.mxu0 0.0
  %612 = vmatpush2.msra.mxu0 0.0
  %613 = vmatprep.subr.mxu0 0.0
  %614 = vmatpush2.msra.mxu0 0.0
  %615 = vmatprep.subr.mxu0 0.0
  %616 = vmatpush2.msra.mxu0 0.0
  %617 = vmatprep.subr.mxu0 0.0
  %618 = vmatpush2.msra.mxu0 0.0
  %619 = vmatprep.subr.mxu0 0.0
  %620 = vmatpush2.msra.mxu0 0.0
  %621 = vmatprep.subr.mxu0 0.0
  %622 = vmatpush2.msra.mxu0 0.0
  %623 = vmatprep.subr.mxu0 0.0
  %624 = vmatpush2.msra.mxu0 0.0
  %625 = vmatprep.mubr.f32.mxu0 0.0
  %626 = vmatmul.mubr.f32.gmra.mxu0 %v312
  %v627 = vpop.f32.mrf.mxu0
  %v628 = vadd.f32 0.0, %v627
  %v629 = vpop.f32.mrf.mxu0
  %630 = vmatprep.mubr.f32.mxu0 0.0
  %631 = vmatmul.mubr.f32.gmra.mxu0 %v317
  %v632 = vpop.f32.mrf.mxu0
  %v633 = vadd.f32 0.0, %v632
  %v634 = vpop.f32.mrf.mxu0
  %635 = vdwg.mxu0
  %636 = vmatprep.subr.mxu0 0.0
  %637 = vmatpush1.msra.mxu0 %v410
  %638 = vmatprep.subr.mxu0 0.0
  %639 = vmatpush1.msra.mxu0 %v409
  %640 = vmatprep.subr.mxu0 0.0
  %641 = vmatpush1.msra.mxu0 %v408
  %642 = vmatprep.subr.mxu0 0.0
  %643 = vmatpush1.msra.mxu0 %v407
  %644 = vmatprep.subr.mxu0 0.0
  %645 = vmatpush1.msra.mxu0 %v406
  %646 = vmatprep.subr.mxu0 0.0
  %647 = vmatpush1.msra.mxu0 %v405
  %648 = vmatprep.subr.mxu0 0.0
  %649 = vmatpush1.msra.mxu0 %v404
  %650 = vmatprep.subr.mxu0 0.0
  %651 = vmatpush1.msra.mxu0 %v403
  %652 = vmatprep.subr.mxu0 0.0
  %653 = vmatpush1.msra.mxu0 %v402
  %654 = vmatprep.subr.mxu0 0.0
  %655 = vmatpush1.msra.mxu0 %v401
  %656 = vmatprep.subr.mxu0 0.0
  %657 = vmatpush1.msra.mxu0 %v400
  %658 = vmatprep.subr.mxu0 0.0
  %659 = vmatpush1.msra.mxu0 %v399
  %660 = vmatprep.subr.mxu0 0.0
  %661 = vmatpush1.msra.mxu0 %v398
  %662 = vmatprep.subr.mxu0 0.0
  %663 = vmatpush1.msra.mxu0 %v397
  %664 = vmatprep.subr.mxu0 0.0
  %665 = vmatpush1.msra.mxu0 %v396
  %666 = vmatprep.subr.mxu0 0.0
  %667 = vmatpush1.msra.mxu0 %v395
  %668 = vmatprep.subr.mxu0 0.0
  %669 = vmatpush2.msra.mxu0 0.0
  %670 = vmatprep.subr.mxu0 0.0
  %671 = vmatpush2.msra.mxu0 0.0
  %672 = vmatprep.subr.mxu0 0.0
  %673 = vmatpush2.msra.mxu0 0.0
  %674 = vmatprep.subr.mxu0 0.0
  %675 = vmatpush2.msra.mxu0 0.0
  %676 = vmatprep.subr.mxu0 0.0
  %677 = vmatpush2.msra.mxu0 0.0
  %678 = vmatprep.subr.mxu0 0.0
  %679 = vmatpush2.msra.mxu0 0.0
  %680 = vmatprep.subr.mxu0 0.0
  %681 = vmatpush2.msra.mxu0 0.0
  %682 = vmatprep.subr.mxu0 0.0
  %683 = vmatpush2.msra.mxu0 0.0
  %684 = vmatprep.subr.mxu0 0.0
  %685 = vmatpush2.msra.mxu0 0.0
  %686 = vmatprep.subr.mxu0 0.0
  %687 = vmatpush2.msra.mxu0 0.0
  %688 = vmatprep.subr.mxu0 0.0
  %689 = vmatpush2.msra.mxu0 0.0
  %690 = vmatprep.subr.mxu0 0.0
  %691 = vmatpush2.msra.mxu0 0.0
  %692 = vmatprep.subr.mxu0 0.0
  %693 = vmatpush2.msra.mxu0 0.0
  %694 = vmatprep.subr.mxu0 0.0
  %695 = vmatpush2.msra.mxu0 0.0
  %696 = vmatprep.subr.mxu0 0.0
  %697 = vmatpush2.msra.mxu0 0.0
  %698 = vmatprep.subr.mxu0 0.0
  %699 = vmatpush2.msra.mxu0 0.0
  %700 = vmatprep.mubr.f32.mxu0 0.0
  %701 = vmatmul.mubr.f32.gmra.mxu0 %v387
  %v702 = vpop.f32.mrf.mxu0
  %v703 = vadd.f32 0.0, %v702
  %v704 = vpop.f32.mrf.mxu0
  %705 = vmatprep.mubr.f32.mxu0 0.0
  %706 = vmatmul.mubr.f32.gmra.mxu0 %v392
  %v707 = vpop.f32.mrf.mxu0
  %v708 = vadd.f32 0.0, %v707
  %v709 = vpop.f32.mrf.mxu0
  %710 = vdwg.mxu0
  %v711 = vld [vmem:[%s2] sm:$0xff]
  %v712 = vld [vmem:[%s2 + $0x8] sm:$0xff]
  %v713 = vld [vmem:[%s2 + $0x10] sm:$0xff]
  %v714 = vld [vmem:[%s2 + $0x18] sm:$0xff]
  %v715 = vld [vmem:[%s2 + $0x20] sm:$0xff]
  %v716 = vld [vmem:[%s2 + $0x28] sm:$0xff]
  %v717 = vld [vmem:[%s2 + $0x30] sm:$0xff]
  %v718 = vld [vmem:[%s2 + $0x38] sm:$0xff]
  %v719 = vld [vmem:[%s3] sm:$0xff]
  %v720 = vld [vmem:[%s3 + $0x8] sm:$0xff]
  %v721 = vld [vmem:[%s3 + $0x10] sm:$0xff]
  %v722 = vld [vmem:[%s3 + $0x18] sm:$0xff]
  %v723 = vld [vmem:[%s3 + $0x20] sm:$0xff]
  %v724 = vld [vmem:[%s3 + $0x28] sm:$0xff]
  %v725 = vld [vmem:[%s3 + $0x30] sm:$0xff]
  %v726 = vld [vmem:[%s3 + $0x38] sm:$0xff]
  %v727 = vsub.f32 %v711, %v719
  %v728 = vsub.f32 %v712, %v720
  %v729 = vsub.f32 %v713, %v721
  %v730 = vsub.f32 %v714, %v722
  %v731 = vsub.f32 %v715, %v723
  %v732 = vsub.f32 %v716, %v724
  %v733 = vsub.f32 %v717, %v725
  %v734 = vsub.f32 %v718, %v726
  %v735 = vld [vmem:[%s9] sm:$0xff]
  %v736 = vld [vmem:[%s9 + $0x8] sm:$0xff]
  %v737 = vld [vmem:[%s4] sm:$0xff]
  %v738 = vld [vmem:[%s4 + $0x8] sm:$0xff]
  %v739 = vld [vmem:[%s4 + $0x10] sm:$0xff]
  %v740 = vld [vmem:[%s4 + $0x18] sm:$0xff]
  %v741 = vld [vmem:[%s4 + $0x20] sm:$0xff]
  %v742 = vld [vmem:[%s4 + $0x28] sm:$0xff]
  %v743 = vld [vmem:[%s4 + $0x30] sm:$0xff]
  %v744 = vld [vmem:[%s4 + $0x38] sm:$0xff]
  %v745 = vld [vmem:[%s5] sm:$0xff]
  %v746 = vld [vmem:[%s5 + $0x8] sm:$0xff]
  %v747 = vld [vmem:[%s5 + $0x10] sm:$0xff]
  %v748 = vld [vmem:[%s5 + $0x18] sm:$0xff]
  %v749 = vld [vmem:[%s5 + $0x20] sm:$0xff]
  %v750 = vld [vmem:[%s5 + $0x28] sm:$0xff]
  %v751 = vld [vmem:[%s5 + $0x30] sm:$0xff]
  %v752 = vld [vmem:[%s5 + $0x38] sm:$0xff]
  %v753 = vsub.f32 %v737, %v745
  %v754 = vsub.f32 %v738, %v746
  %v755 = vsub.f32 %v739, %v747
  %v756 = vsub.f32 %v740, %v748
  %v757 = vsub.f32 %v741, %v749
  %v758 = vsub.f32 %v742, %v750
  %v759 = vsub.f32 %v743, %v751
  %v760 = vsub.f32 %v744, %v752
  %v761 = vld [vmem:[%s10] sm:$0xff]
  %v762 = vld [vmem:[%s10 + $0x8] sm:$0xff]
  %vm763 = vcmask 130048
  %v765 = vsel %vm763, %v761, 0
  %v768 = vsel %vm763, %v762, 0
  %770 = vmatprep.subr.mxu0 0.0
  %771 = vmatpush1.msra.mxu0 0.0
  %772 = vmatprep.subr.mxu0 0.0
  %773 = vmatpush1.msra.mxu0 0.0
  %774 = vmatprep.subr.mxu0 0.0
  %775 = vmatpush1.msra.mxu0 0.0
  %776 = vmatprep.subr.mxu0 0.0
  %777 = vmatpush1.msra.mxu0 0.0
  %778 = vmatprep.subr.mxu0 0.0
  %779 = vmatpush1.msra.mxu0 0.0
  %780 = vmatprep.subr.mxu0 0.0
  %781 = vmatpush1.msra.mxu0 0.0
  %782 = vmatprep.subr.mxu0 0.0
  %783 = vmatpush1.msra.mxu0 0.0
  %784 = vmatprep.subr.mxu0 0.0
  %785 = vmatpush1.msra.mxu0 0.0
  %786 = vmatprep.subr.mxu0 0.0
  %787 = vmatpush1.msra.mxu0 0.0
  %788 = vmatprep.subr.mxu0 0.0
  %789 = vmatpush1.msra.mxu0 0.0
  %790 = vmatprep.subr.mxu0 0.0
  %791 = vmatpush1.msra.mxu0 0.0
  %792 = vmatprep.subr.mxu0 0.0
  %793 = vmatpush1.msra.mxu0 0.0
  %794 = vmatprep.subr.mxu0 0.0
  %795 = vmatpush1.msra.mxu0 0.0
  %796 = vmatprep.subr.mxu0 0.0
  %797 = vmatpush1.msra.mxu0 0.0
  %798 = vmatprep.subr.mxu0 0.0
  %799 = vmatpush1.msra.mxu0 %v754
  %800 = vmatprep.subr.mxu0 0.0
  %801 = vmatpush1.msra.mxu0 %v753
  %802 = vmatprep.subr.mxu0 0.0
  %803 = vmatpush2.msra.mxu0 0.0
  %804 = vmatprep.subr.mxu0 0.0
  %805 = vmatpush2.msra.mxu0 0.0
  %806 = vmatprep.subr.mxu0 0.0
  %807 = vmatpush2.msra.mxu0 0.0
  %808 = vmatprep.subr.mxu0 0.0
  %809 = vmatpush2.msra.mxu0 0.0
  %810 = vmatprep.subr.mxu0 0.0
  %811 = vmatpush2.msra.mxu0 0.0
  %812 = vmatprep.subr.mxu0 0.0
  %813 = vmatpush2.msra.mxu0 0.0
  %814 = vmatprep.subr.mxu0 0.0
  %815 = vmatpush2.msra.mxu0 0.0
  %816 = vmatprep.subr.mxu0 0.0
  %817 = vmatpush2.msra.mxu0 0.0
  %818 = vmatprep.subr.mxu0 0.0
  %819 = vmatpush2.msra.mxu0 0.0
  %820 = vmatprep.subr.mxu0 0.0
  %821 = vmatpush2.msra.mxu0 0.0
  %822 = vmatprep.subr.mxu0 0.0
  %823 = vmatpush2.msra.mxu0 0.0
  %824 = vmatprep.subr.mxu0 0.0
  %825 = vmatpush2.msra.mxu0 0.0
  %826 = vmatprep.subr.mxu0 0.0
  %827 = vmatpush2.msra.mxu0 0.0
  %828 = vmatprep.subr.mxu0 0.0
  %829 = vmatpush2.msra.mxu0 0.0
  %830 = vmatprep.subr.mxu0 0.0
  %831 = vmatpush2.msra.mxu0 0.0
  %832 = vmatprep.subr.mxu0 0.0
  %833 = vmatpush2.msra.mxu0 0.0
  %834 = vmatprep.mubr.f32.mxu0 0.0
  %835 = vmatmul.mubr.f32.gmra.mxu0 %v765
  %v836 = vpop.f32.mrf.mxu0
  %v837 = vadd.f32 0.0, %v836
  %v838 = vpop.f32.mrf.mxu0
  %839 = vmatprep.mubr.f32.mxu0 0.0
  %840 = vmatmul.mubr.f32.gmra.mxu0 %v768
  %v841 = vpop.f32.mrf.mxu0
  %v842 = vadd.f32 0.0, %v841
  %v843 = vpop.f32.mrf.mxu0
  %844 = vdwg.mxu0
  %845 = vmatprep.subr.mxu0 0.0
  %846 = vmatpush1.msra.mxu0 0.0
  %847 = vmatprep.subr.mxu0 0.0
  %848 = vmatpush1.msra.mxu0 0.0
  %849 = vmatprep.subr.mxu0 0.0
  %850 = vmatpush1.msra.mxu0 0.0
  %851 = vmatprep.subr.mxu0 0.0
  %852 = vmatpush1.msra.mxu0 0.0
  %853 = vmatprep.subr.mxu0 0.0
  %854 = vmatpush1.msra.mxu0 0.0
  %855 = vmatprep.subr.mxu0 0.0
  %856 = vmatpush1.msra.mxu0 0.0
  %857 = vmatprep.subr.mxu0 0.0
  %858 = vmatpush1.msra.mxu0 0.0
  %859 = vmatprep.subr.mxu0 0.0
  %860 = vmatpush1.msra.mxu0 0.0
  %861 = vmatprep.subr.mxu0 0.0
  %862 = vmatpush1.msra.mxu0 0.0
  %863 = vmatprep.subr.mxu0 0.0
  %864 = vmatpush1.msra.mxu0 0.0
  %865 = vmatprep.subr.mxu0 0.0
  %866 = vmatpush1.msra.mxu0 0.0
  %867 = vmatprep.subr.mxu0 0.0
  %868 = vmatpush1.msra.mxu0 0.0
  %869 = vmatprep.subr.mxu0 0.0
  %870 = vmatpush1.msra.mxu0 0.0
  %871 = vmatprep.subr.mxu0 0.0
  %872 = vmatpush1.msra.mxu0 0.0
  %873 = vmatprep.subr.mxu0 0.0
  %874 = vmatpush1.msra.mxu0 %v756
  %875 = vmatprep.subr.mxu0 0.0
  %876 = vmatpush1.msra.mxu0 %v755
  %877 = vmatprep.subr.mxu0 0.0
  %878 = vmatpush2.msra.mxu0 0.0
  %879 = vmatprep.subr.mxu0 0.0
  %880 = vmatpush2.msra.mxu0 0.0
  %881 = vmatprep.subr.mxu0 0.0
  %882 = vmatpush2.msra.mxu0 0.0
  %883 = vmatprep.subr.mxu0 0.0
  %884 = vmatpush2.msra.mxu0 0.0
  %885 = vmatprep.subr.mxu0 0.0
  %886 = vmatpush2.msra.mxu0 0.0
  %887 = vmatprep.subr.mxu0 0.0
  %888 = vmatpush2.msra.mxu0 0.0
  %889 = vmatprep.subr.mxu0 0.0
  %890 = vmatpush2.msra.mxu0 0.0
  %891 = vmatprep.subr.mxu0 0.0
  %892 = vmatpush2.msra.mxu0 0.0
  %893 = vmatprep.subr.mxu0 0.0
  %894 = vmatpush2.msra.mxu0 0.0
  %895 = vmatprep.subr.mxu0 0.0
  %896 = vmatpush2.msra.mxu0 0.0
  %897 = vmatprep.subr.mxu0 0.0
  %898 = vmatpush2.msra.mxu0 0.0
  %899 = vmatprep.subr.mxu0 0.0
  %900 = vmatpush2.msra.mxu0 0.0
  %901 = vmatprep.subr.mxu0 0.0
  %902 = vmatpush2.msra.mxu0 0.0
  %903 = vmatprep.subr.mxu0 0.0
  %904 = vmatpush2.msra.mxu0 0.0
  %905 = vmatprep.subr.mxu0 0.0
  %906 = vmatpush2.msra.mxu0 0.0
  %907 = vmatprep.subr.mxu0 0.0
  %908 = vmatpush2.msra.mxu0 0.0
  %909 = vmatprep.mubr.f32.mxu0 0.0
  %910 = vmatmul.mubr.f32.gmra.mxu0 %v765
  %v911 = vpop.f32.mrf.mxu0
  %v912 = vadd.f32 0.0, %v911
  %v913 = vpop.f32.mrf.mxu0
  %914 = vmatprep.mubr.f32.mxu0 0.0
  %915 = vmatmul.mubr.f32.gmra.mxu0 %v768
  %v916 = vpop.f32.mrf.mxu0
  %v917 = vadd.f32 0.0, %v916
  %v918 = vpop.f32.mrf.mxu0
  %919 = vdwg.mxu0
  %920 = vmatprep.subr.mxu0 0.0
  %921 = vmatpush1.msra.mxu0 0.0
  %922 = vmatprep.subr.mxu0 0.0
  %923 = vmatpush1.msra.mxu0 0.0
  %924 = vmatprep.subr.mxu0 0.0
  %925 = vmatpush1.msra.mxu0 0.0
  %926 = vmatprep.subr.mxu0 0.0
  %927 = vmatpush1.msra.mxu0 0.0
  %928 = vmatprep.subr.mxu0 0.0
  %929 = vmatpush1.msra.mxu0 0.0
  %930 = vmatprep.subr.mxu0 0.0
  %931 = vmatpush1.msra.mxu0 0.0
  %932 = vmatprep.subr.mxu0 0.0
  %933 = vmatpush1.msra.mxu0 0.0
  %934 = vmatprep.subr.mxu0 0.0
  %935 = vmatpush1.msra.mxu0 0.0
  %936 = vmatprep.subr.mxu0 0.0
  %937 = vmatpush1.msra.mxu0 0.0
  %938 = vmatprep.subr.mxu0 0.0
  %939 = vmatpush1.msra.mxu0 0.0
  %940 = vmatprep.subr.mxu0 0.0
  %941 = vmatpush1.msra.mxu0 0.0
  %942 = vmatprep.subr.mxu0 0.0
  %943 = vmatpush1.msra.mxu0 0.0
  %944 = vmatprep.subr.mxu0 0.0
  %945 = vmatpush1.msra.mxu0 0.0
  %946 = vmatprep.subr.mxu0 0.0
  %947 = vmatpush1.msra.mxu0 0.0
  %948 = vmatprep.subr.mxu0 0.0
  %949 = vmatpush1.msra.mxu0 %v758
  %950 = vmatprep.subr.mxu0 0.0
  %951 = vmatpush1.msra.mxu0 %v757
  %952 = vmatprep.subr.mxu0 0.0
  %953 = vmatpush2.msra.mxu0 0.0
  %954 = vmatprep.subr.mxu0 0.0
  %955 = vmatpush2.msra.mxu0 0.0
  %956 = vmatprep.subr.mxu0 0.0
  %957 = vmatpush2.msra.mxu0 0.0
  %958 = vmatprep.subr.mxu0 0.0
  %959 = vmatpush2.msra.mxu0 0.0
  %960 = vmatprep.subr.mxu0 0.0
  %961 = vmatpush2.msra.mxu0 0.0
  %962 = vmatprep.subr.mxu0 0.0
  %963 = vmatpush2.msra.mxu0 0.0
  %964 = vmatprep.subr.mxu0 0.0
  %965 = vmatpush2.msra.mxu0 0.0
  %966 = vmatprep.subr.mxu0 0.0
  %967 = vmatpush2.msra.mxu0 0.0
  %968 = vmatprep.subr.mxu0 0.0
  %969 = vmatpush2.msra.mxu0 0.0
  %970 = vmatprep.subr.mxu0 0.0
  %971 = vmatpush2.msra.mxu0 0.0
  %972 = vmatprep.subr.mxu0 0.0
  %973 = vmatpush2.msra.mxu0 0.0
  %974 = vmatprep.subr.mxu0 0.0
  %975 = vmatpush2.msra.mxu0 0.0
  %976 = vmatprep.subr.mxu0 0.0
  %977 = vmatpush2.msra.mxu0 0.0
  %978 = vmatprep.subr.mxu0 0.0
  %979 = vmatpush2.msra.mxu0 0.0
  %980 = vmatprep.subr.mxu0 0.0
  %981 = vmatpush2.msra.mxu0 0.0
  %982 = vmatprep.subr.mxu0 0.0
  %983 = vmatpush2.msra.mxu0 0.0
  %984 = vmatprep.mubr.f32.mxu0 0.0
  %985 = vmatmul.mubr.f32.gmra.mxu0 %v765
  %v986 = vpop.f32.mrf.mxu0
  %v987 = vadd.f32 0.0, %v986
  %v988 = vpop.f32.mrf.mxu0
  %989 = vmatprep.mubr.f32.mxu0 0.0
  %990 = vmatmul.mubr.f32.gmra.mxu0 %v768
  %v991 = vpop.f32.mrf.mxu0
  %v992 = vadd.f32 0.0, %v991
  %v993 = vpop.f32.mrf.mxu0
  %994 = vdwg.mxu0
  %995 = vmatprep.subr.mxu0 0.0
  %996 = vmatpush1.msra.mxu0 0.0
  %997 = vmatprep.subr.mxu0 0.0
  %998 = vmatpush1.msra.mxu0 0.0
  %999 = vmatprep.subr.mxu0 0.0
  %1000 = vmatpush1.msra.mxu0 0.0
  %1001 = vmatprep.subr.mxu0 0.0
  %1002 = vmatpush1.msra.mxu0 0.0
  %1003 = vmatprep.subr.mxu0 0.0
  %1004 = vmatpush1.msra.mxu0 0.0
  %1005 = vmatprep.subr.mxu0 0.0
  %1006 = vmatpush1.msra.mxu0 0.0
  %1007 = vmatprep.subr.mxu0 0.0
  %1008 = vmatpush1.msra.mxu0 0.0
  %1009 = vmatprep.subr.mxu0 0.0
  %1010 = vmatpush1.msra.mxu0 0.0
  %1011 = vmatprep.subr.mxu0 0.0
  %1012 = vmatpush1.msra.mxu0 0.0
  %1013 = vmatprep.subr.mxu0 0.0
  %1014 = vmatpush1.msra.mxu0 0.0
  %1015 = vmatprep.subr.mxu0 0.0
  %1016 = vmatpush1.msra.mxu0 0.0
  %1017 = vmatprep.subr.mxu0 0.0
  %1018 = vmatpush1.msra.mxu0 0.0
  %1019 = vmatprep.subr.mxu0 0.0
  %1020 = vmatpush1.msra.mxu0 0.0
  %1021 = vmatprep.subr.mxu0 0.0
  %1022 = vmatpush1.msra.mxu0 0.0
  %1023 = vmatprep.subr.mxu0 0.0
  %1024 = vmatpush1.msra.mxu0 %v760
  %1025 = vmatprep.subr.mxu0 0.0
  %1026 = vmatpush1.msra.mxu0 %v759
  %1027 = vmatprep.subr.mxu0 0.0
  %1028 = vmatpush2.msra.mxu0 0.0
  %1029 = vmatprep.subr.mxu0 0.0
  %1030 = vmatpush2.msra.mxu0 0.0
  %1031 = vmatprep.subr.mxu0 0.0
  %1032 = vmatpush2.msra.mxu0 0.0
  %1033 = vmatprep.subr.mxu0 0.0
  %1034 = vmatpush2.msra.mxu0 0.0
  %1035 = vmatprep.subr.mxu0 0.0
  %1036 = vmatpush2.msra.mxu0 0.0
  %1037 = vmatprep.subr.mxu0 0.0
  %1038 = vmatpush2.msra.mxu0 0.0
  %1039 = vmatprep.subr.mxu0 0.0
  %1040 = vmatpush2.msra.mxu0 0.0
  %1041 = vmatprep.subr.mxu0 0.0
  %1042 = vmatpush2.msra.mxu0 0.0
  %1043 = vmatprep.subr.mxu0 0.0
  %1044 = vmatpush2.msra.mxu0 0.0
  %1045 = vmatprep.subr.mxu0 0.0
  %1046 = vmatpush2.msra.mxu0 0.0
  %1047 = vmatprep.subr.mxu0 0.0
  %1048 = vmatpush2.msra.mxu0 0.0
  %1049 = vmatprep.subr.mxu0 0.0
  %1050 = vmatpush2.msra.mxu0 0.0
  %1051 = vmatprep.subr.mxu0 0.0
  %1052 = vmatpush2.msra.mxu0 0.0
  %1053 = vmatprep.subr.mxu0 0.0
  %1054 = vmatpush2.msra.mxu0 0.0
  %1055 = vmatprep.subr.mxu0 0.0
  %1056 = vmatpush2.msra.mxu0 0.0
  %1057 = vmatprep.subr.mxu0 0.0
  %1058 = vmatpush2.msra.mxu0 0.0
  %1059 = vmatprep.mubr.f32.mxu0 0.0
  %1060 = vmatmul.mubr.f32.gmra.mxu0 %v765
  %v1061 = vpop.f32.mrf.mxu0
  %v1062 = vadd.f32 0.0, %v1061
  %v1063 = vpop.f32.mrf.mxu0
  %1064 = vmatprep.mubr.f32.mxu0 0.0
  %1065 = vmatmul.mubr.f32.gmra.mxu0 %v768
  %v1066 = vpop.f32.mrf.mxu0
  %v1067 = vadd.f32 0.0, %v1066
  %v1068 = vpop.f32.mrf.mxu0
  %1069 = vdwg.mxu0
  %v1070 = vld [vmem:[%s6] sm:$0xff]
  %v1071 = vld [vmem:[%s6 + $0x8] sm:$0xff]
  %v1072 = vld [vmem:[%s6 + $0x10] sm:$0xff]
  %v1073 = vld [vmem:[%s6 + $0x18] sm:$0xff]
  %v1074 = vld [vmem:[%s6 + $0x20] sm:$0xff]
  %v1075 = vld [vmem:[%s6 + $0x28] sm:$0xff]
  %v1076 = vld [vmem:[%s6 + $0x30] sm:$0xff]
  %v1077 = vld [vmem:[%s6 + $0x38] sm:$0xff]
  %v1079 = vsel %vm763, %v727, 0
  %v1082 = vsel %vm763, %v728, 0
  %1084 = vmatprep.subr.mxu0 0.0
  %1085 = vmatpush1.msra.mxu0 0.0
  %1086 = vmatprep.subr.mxu0 0.0
  %1087 = vmatpush1.msra.mxu0 0.0
  %1088 = vmatprep.subr.mxu0 0.0
  %1089 = vmatpush1.msra.mxu0 0.0
  %1090 = vmatprep.subr.mxu0 0.0
  %1091 = vmatpush1.msra.mxu0 0.0
  %1092 = vmatprep.subr.mxu0 0.0
  %1093 = vmatpush1.msra.mxu0 0.0
  %1094 = vmatprep.subr.mxu0 0.0
  %1095 = vmatpush1.msra.mxu0 0.0
  %1096 = vmatprep.subr.mxu0 0.0
  %1097 = vmatpush1.msra.mxu0 0.0
  %1098 = vmatprep.subr.mxu0 0.0
  %1099 = vmatpush1.msra.mxu0 0.0
  %1100 = vmatprep.subr.mxu0 0.0
  %1101 = vmatpush1.msra.mxu0 0.0
  %1102 = vmatprep.subr.mxu0 0.0
  %1103 = vmatpush1.msra.mxu0 0.0
  %1104 = vmatprep.subr.mxu0 0.0
  %1105 = vmatpush1.msra.mxu0 0.0
  %1106 = vmatprep.subr.mxu0 0.0
  %1107 = vmatpush1.msra.mxu0 0.0
  %1108 = vmatprep.subr.mxu0 0.0
  %1109 = vmatpush1.msra.mxu0 0.0
  %1110 = vmatprep.subr.mxu0 0.0
  %1111 = vmatpush1.msra.mxu0 0.0
  %1112 = vmatprep.subr.mxu0 0.0
  %1113 = vmatpush1.msra.mxu0 %v736
  %1114 = vmatprep.subr.mxu0 0.0
  %1115 = vmatpush1.msra.mxu0 %v735
  %1116 = vmatprep.subr.mxu0 0.0
  %1117 = vmatpush2.msra.mxu0 0.0
  %1118 = vmatprep.subr.mxu0 0.0
  %1119 = vmatpush2.msra.mxu0 0.0
  %1120 = vmatprep.subr.mxu0 0.0
  %1121 = vmatpush2.msra.mxu0 0.0
  %1122 = vmatprep.subr.mxu0 0.0
  %1123 = vmatpush2.msra.mxu0 0.0
  %1124 = vmatprep.subr.mxu0 0.0
  %1125 = vmatpush2.msra.mxu0 0.0
  %1126 = vmatprep.subr.mxu0 0.0
  %1127 = vmatpush2.msra.mxu0 0.0
  %1128 = vmatprep.subr.mxu0 0.0
  %1129 = vmatpush2.msra.mxu0 0.0
  %1130 = vmatprep.subr.mxu0 0.0
  %1131 = vmatpush2.msra.mxu0 0.0
  %1132 = vmatprep.subr.mxu0 0.0
  %1133 = vmatpush2.msra.mxu0 0.0
  %1134 = vmatprep.subr.mxu0 0.0
  %1135 = vmatpush2.msra.mxu0 0.0
  %1136 = vmatprep.subr.mxu0 0.0
  %1137 = vmatpush2.msra.mxu0 0.0
  %1138 = vmatprep.subr.mxu0 0.0
  %1139 = vmatpush2.msra.mxu0 0.0
  %1140 = vmatprep.subr.mxu0 0.0
  %1141 = vmatpush2.msra.mxu0 0.0
  %1142 = vmatprep.subr.mxu0 0.0
  %1143 = vmatpush2.msra.mxu0 0.0
  %1144 = vmatprep.subr.mxu0 0.0
  %1145 = vmatpush2.msra.mxu0 0.0
  %1146 = vmatprep.subr.mxu0 0.0
  %1147 = vmatpush2.msra.mxu0 0.0
  %1148 = vmatprep.mubr.f32.mxu0 0.0
  %1149 = vmatmul.mubr.f32.gmra.mxu0 %v1079
  %v1150 = vpop.f32.mrf.mxu0
  %v1151 = vadd.f32 %v837, %v1150
  %v1152 = vpop.f32.mrf.mxu0
  %1153 = vmatprep.mubr.f32.mxu0 0.0
  %1154 = vmatmul.mubr.f32.gmra.mxu0 %v1082
  %v1155 = vpop.f32.mrf.mxu0
  %v1156 = vadd.f32 %v842, %v1155
  %v1157 = vpop.f32.mrf.mxu0
  %1158 = vdwg.mxu0
  %v1160 = vsel %vm763, %v729, 0
  %v1163 = vsel %vm763, %v730, 0
  %1165 = vmatprep.subr.mxu0 0.0
  %1166 = vmatpush1.msra.mxu0 0.0
  %1167 = vmatprep.subr.mxu0 0.0
  %1168 = vmatpush1.msra.mxu0 0.0
  %1169 = vmatprep.subr.mxu0 0.0
  %1170 = vmatpush1.msra.mxu0 0.0
  %1171 = vmatprep.subr.mxu0 0.0
  %1172 = vmatpush1.msra.mxu0 0.0
  %1173 = vmatprep.subr.mxu0 0.0
  %1174 = vmatpush1.msra.mxu0 0.0
  %1175 = vmatprep.subr.mxu0 0.0
  %1176 = vmatpush1.msra.mxu0 0.0
  %1177 = vmatprep.subr.mxu0 0.0
  %1178 = vmatpush1.msra.mxu0 0.0
  %1179 = vmatprep.subr.mxu0 0.0
  %1180 = vmatpush1.msra.mxu0 0.0
  %1181 = vmatprep.subr.mxu0 0.0
  %1182 = vmatpush1.msra.mxu0 0.0
  %1183 = vmatprep.subr.mxu0 0.0
  %1184 = vmatpush1.msra.mxu0 0.0
  %1185 = vmatprep.subr.mxu0 0.0
  %1186 = vmatpush1.msra.mxu0 0.0
  %1187 = vmatprep.subr.mxu0 0.0
  %1188 = vmatpush1.msra.mxu0 0.0
  %1189 = vmatprep.subr.mxu0 0.0
  %1190 = vmatpush1.msra.mxu0 0.0
  %1191 = vmatprep.subr.mxu0 0.0
  %1192 = vmatpush1.msra.mxu0 0.0
  %1193 = vmatprep.subr.mxu0 0.0
  %1194 = vmatpush1.msra.mxu0 %v736
  %1195 = vmatprep.subr.mxu0 0.0
  %1196 = vmatpush1.msra.mxu0 %v735
  %1197 = vmatprep.subr.mxu0 0.0
  %1198 = vmatpush2.msra.mxu0 0.0
  %1199 = vmatprep.subr.mxu0 0.0
  %1200 = vmatpush2.msra.mxu0 0.0
  %1201 = vmatprep.subr.mxu0 0.0
  %1202 = vmatpush2.msra.mxu0 0.0
  %1203 = vmatprep.subr.mxu0 0.0
  %1204 = vmatpush2.msra.mxu0 0.0
  %1205 = vmatprep.subr.mxu0 0.0
  %1206 = vmatpush2.msra.mxu0 0.0
  %1207 = vmatprep.subr.mxu0 0.0
  %1208 = vmatpush2.msra.mxu0 0.0
  %1209 = vmatprep.subr.mxu0 0.0
  %1210 = vmatpush2.msra.mxu0 0.0
  %1211 = vmatprep.subr.mxu0 0.0
  %1212 = vmatpush2.msra.mxu0 0.0
  %1213 = vmatprep.subr.mxu0 0.0
  %1214 = vmatpush2.msra.mxu0 0.0
  %1215 = vmatprep.subr.mxu0 0.0
  %1216 = vmatpush2.msra.mxu0 0.0
  %1217 = vmatprep.subr.mxu0 0.0
  %1218 = vmatpush2.msra.mxu0 0.0
  %1219 = vmatprep.subr.mxu0 0.0
  %1220 = vmatpush2.msra.mxu0 0.0
  %1221 = vmatprep.subr.mxu0 0.0
  %1222 = vmatpush2.msra.mxu0 0.0
  %1223 = vmatprep.subr.mxu0 0.0
  %1224 = vmatpush2.msra.mxu0 0.0
  %1225 = vmatprep.subr.mxu0 0.0
  %1226 = vmatpush2.msra.mxu0 0.0
  %1227 = vmatprep.subr.mxu0 0.0
  %1228 = vmatpush2.msra.mxu0 0.0
  %1229 = vmatprep.mubr.f32.mxu0 0.0
  %1230 = vmatmul.mubr.f32.gmra.mxu0 %v1160
  %v1231 = vpop.f32.mrf.mxu0
  %v1232 = vadd.f32 %v912, %v1231
  %v1233 = vpop.f32.mrf.mxu0
  %1234 = vmatprep.mubr.f32.mxu0 0.0
  %1235 = vmatmul.mubr.f32.gmra.mxu0 %v1163
  %v1236 = vpop.f32.mrf.mxu0
  %v1237 = vadd.f32 %v917, %v1236
  %v1238 = vpop.f32.mrf.mxu0
  %1239 = vdwg.mxu0
  %v1241 = vsel %vm763, %v731, 0
  %v1244 = vsel %vm763, %v732, 0
  %1246 = vmatprep.subr.mxu0 0.0
  %1247 = vmatpush1.msra.mxu0 0.0
  %1248 = vmatprep.subr.mxu0 0.0
  %1249 = vmatpush1.msra.mxu0 0.0
  %1250 = vmatprep.subr.mxu0 0.0
  %1251 = vmatpush1.msra.mxu0 0.0
  %1252 = vmatprep.subr.mxu0 0.0
  %1253 = vmatpush1.msra.mxu0 0.0
  %1254 = vmatprep.subr.mxu0 0.0
  %1255 = vmatpush1.msra.mxu0 0.0
  %1256 = vmatprep.subr.mxu0 0.0
  %1257 = vmatpush1.msra.mxu0 0.0
  %1258 = vmatprep.subr.mxu0 0.0
  %1259 = vmatpush1.msra.mxu0 0.0
  %1260 = vmatprep.subr.mxu0 0.0
  %1261 = vmatpush1.msra.mxu0 0.0
  %1262 = vmatprep.subr.mxu0 0.0
  %1263 = vmatpush1.msra.mxu0 0.0
  %1264 = vmatprep.subr.mxu0 0.0
  %1265 = vmatpush1.msra.mxu0 0.0
  %1266 = vmatprep.subr.mxu0 0.0
  %1267 = vmatpush1.msra.mxu0 0.0
  %1268 = vmatprep.subr.mxu0 0.0
  %1269 = vmatpush1.msra.mxu0 0.0
  %1270 = vmatprep.subr.mxu0 0.0
  %1271 = vmatpush1.msra.mxu0 0.0
  %1272 = vmatprep.subr.mxu0 0.0
  %1273 = vmatpush1.msra.mxu0 0.0
  %1274 = vmatprep.subr.mxu0 0.0
  %1275 = vmatpush1.msra.mxu0 %v736
  %1276 = vmatprep.subr.mxu0 0.0
  %1277 = vmatpush1.msra.mxu0 %v735
  %1278 = vmatprep.subr.mxu0 0.0
  %1279 = vmatpush2.msra.mxu0 0.0
  %1280 = vmatprep.subr.mxu0 0.0
  %1281 = vmatpush2.msra.mxu0 0.0
  %1282 = vmatprep.subr.mxu0 0.0
  %1283 = vmatpush2.msra.mxu0 0.0
  %1284 = vmatprep.subr.mxu0 0.0
  %1285 = vmatpush2.msra.mxu0 0.0
  %1286 = vmatprep.subr.mxu0 0.0
  %1287 = vmatpush2.msra.mxu0 0.0
  %1288 = vmatprep.subr.mxu0 0.0
  %1289 = vmatpush2.msra.mxu0 0.0
  %1290 = vmatprep.subr.mxu0 0.0
  %1291 = vmatpush2.msra.mxu0 0.0
  %1292 = vmatprep.subr.mxu0 0.0
  %1293 = vmatpush2.msra.mxu0 0.0
  %1294 = vmatprep.subr.mxu0 0.0
  %1295 = vmatpush2.msra.mxu0 0.0
  %1296 = vmatprep.subr.mxu0 0.0
  %1297 = vmatpush2.msra.mxu0 0.0
  %1298 = vmatprep.subr.mxu0 0.0
  %1299 = vmatpush2.msra.mxu0 0.0
  %1300 = vmatprep.subr.mxu0 0.0
  %1301 = vmatpush2.msra.mxu0 0.0
  %1302 = vmatprep.subr.mxu0 0.0
  %1303 = vmatpush2.msra.mxu0 0.0
  %1304 = vmatprep.subr.mxu0 0.0
  %1305 = vmatpush2.msra.mxu0 0.0
  %1306 = vmatprep.subr.mxu0 0.0
  %1307 = vmatpush2.msra.mxu0 0.0
  %1308 = vmatprep.subr.mxu0 0.0
  %1309 = vmatpush2.msra.mxu0 0.0
  %1310 = vmatprep.mubr.f32.mxu0 0.0
  %1311 = vmatmul.mubr.f32.gmra.mxu0 %v1241
  %v1312 = vpop.f32.mrf.mxu0
  %v1313 = vadd.f32 %v987, %v1312
  %v1314 = vpop.f32.mrf.mxu0
  %1315 = vmatprep.mubr.f32.mxu0 0.0
  %1316 = vmatmul.mubr.f32.gmra.mxu0 %v1244
  %v1317 = vpop.f32.mrf.mxu0
  %v1318 = vadd.f32 %v992, %v1317
  %v1319 = vpop.f32.mrf.mxu0
  %1320 = vdwg.mxu0
  %v1322 = vsel %vm763, %v733, 0
  %v1325 = vsel %vm763, %v734, 0
  %1327 = vmatprep.subr.mxu0 0.0
  %1328 = vmatpush1.msra.mxu0 0.0
  %1329 = vmatprep.subr.mxu0 0.0
  %1330 = vmatpush1.msra.mxu0 0.0
  %1331 = vmatprep.subr.mxu0 0.0
  %1332 = vmatpush1.msra.mxu0 0.0
  %1333 = vmatprep.subr.mxu0 0.0
  %1334 = vmatpush1.msra.mxu0 0.0
  %1335 = vmatprep.subr.mxu0 0.0
  %1336 = vmatpush1.msra.mxu0 0.0
  %1337 = vmatprep.subr.mxu0 0.0
  %1338 = vmatpush1.msra.mxu0 0.0
  %1339 = vmatprep.subr.mxu0 0.0
  %1340 = vmatpush1.msra.mxu0 0.0
  %1341 = vmatprep.subr.mxu0 0.0
  %1342 = vmatpush1.msra.mxu0 0.0
  %1343 = vmatprep.subr.mxu0 0.0
  %1344 = vmatpush1.msra.mxu0 0.0
  %1345 = vmatprep.subr.mxu0 0.0
  %1346 = vmatpush1.msra.mxu0 0.0
  %1347 = vmatprep.subr.mxu0 0.0
  %1348 = vmatpush1.msra.mxu0 0.0
  %1349 = vmatprep.subr.mxu0 0.0
  %1350 = vmatpush1.msra.mxu0 0.0
  %1351 = vmatprep.subr.mxu0 0.0
  %1352 = vmatpush1.msra.mxu0 0.0
  %1353 = vmatprep.subr.mxu0 0.0
  %1354 = vmatpush1.msra.mxu0 0.0
  %1355 = vmatprep.subr.mxu0 0.0
  %1356 = vmatpush1.msra.mxu0 %v736
  %1357 = vmatprep.subr.mxu0 0.0
  %1358 = vmatpush1.msra.mxu0 %v735
  %1359 = vmatprep.subr.mxu0 0.0
  %1360 = vmatpush2.msra.mxu0 0.0
  %1361 = vmatprep.subr.mxu0 0.0
  %1362 = vmatpush2.msra.mxu0 0.0
  %1363 = vmatprep.subr.mxu0 0.0
  %1364 = vmatpush2.msra.mxu0 0.0
  %1365 = vmatprep.subr.mxu0 0.0
  %1366 = vmatpush2.msra.mxu0 0.0
  %1367 = vmatprep.subr.mxu0 0.0
  %1368 = vmatpush2.msra.mxu0 0.0
  %1369 = vmatprep.subr.mxu0 0.0
  %1370 = vmatpush2.msra.mxu0 0.0
  %1371 = vmatprep.subr.mxu0 0.0
  %1372 = vmatpush2.msra.mxu0 0.0
  %1373 = vmatprep.subr.mxu0 0.0
  %1374 = vmatpush2.msra.mxu0 0.0
  %1375 = vmatprep.subr.mxu0 0.0
  %1376 = vmatpush2.msra.mxu0 0.0
  %1377 = vmatprep.subr.mxu0 0.0
  %1378 = vmatpush2.msra.mxu0 0.0
  %1379 = vmatprep.subr.mxu0 0.0
  %1380 = vmatpush2.msra.mxu0 0.0
  %1381 = vmatprep.subr.mxu0 0.0
  %1382 = vmatpush2.msra.mxu0 0.0
  %1383 = vmatprep.subr.mxu0 0.0
  %1384 = vmatpush2.msra.mxu0 0.0
  %1385 = vmatprep.subr.mxu0 0.0
  %1386 = vmatpush2.msra.mxu0 0.0
  %1387 = vmatprep.subr.mxu0 0.0
  %1388 = vmatpush2.msra.mxu0 0.0
  %1389 = vmatprep.subr.mxu0 0.0
  %1390 = vmatpush2.msra.mxu0 0.0
  %1391 = vmatprep.mubr.f32.mxu0 0.0
  %1392 = vmatmul.mubr.f32.gmra.mxu0 %v1322
  %v1393 = vpop.f32.mrf.mxu0
  %v1394 = vadd.f32 %v1062, %v1393
  %v1395 = vpop.f32.mrf.mxu0
  %1396 = vmatprep.mubr.f32.mxu0 0.0
  %1397 = vmatmul.mubr.f32.gmra.mxu0 %v1325
  %v1398 = vpop.f32.mrf.mxu0
  %v1399 = vadd.f32 %v1067, %v1398
  %v1400 = vpop.f32.mrf.mxu0
  %1401 = vdwg.mxu0
  %v1402 = vmul.f32 %v1151, 0.33333334
  %v1403 = vmul.f32 %v1156, 0.33333334
  %v1404 = vmul.f32 %v1232, 0.33333334
  %v1405 = vmul.f32 %v1237, 0.33333334
  %v1406 = vmul.f32 %v1313, 0.33333334
  %v1407 = vmul.f32 %v1318, 0.33333334
  %v1408 = vmul.f32 %v1394, 0.33333334
  %v1409 = vmul.f32 %v1399, 0.33333334
  %v1410 = vadd.f32 %v1070, %v1402
  %v1411 = vadd.f32 %v1071, %v1403
  %v1412 = vadd.f32 %v1072, %v1404
  %v1413 = vadd.f32 %v1073, %v1405
  %v1414 = vadd.f32 %v1074, %v1406
  %v1415 = vadd.f32 %v1075, %v1407
  %v1416 = vadd.f32 %v1076, %v1408
  %v1417 = vadd.f32 %v1077, %v1409
  %v1418 = vadd.f32 %v1410, %v478
  %v1419 = vadd.f32 %v1411, %v483
  %v1420 = vadd.f32 %v1412, %v553
  %v1421 = vadd.f32 %v1413, %v558
  %v1422 = vadd.f32 %v1414, %v628
  %v1423 = vadd.f32 %v1415, %v633
  %v1424 = vadd.f32 %v1416, %v703
  %v1425 = vadd.f32 %v1417, %v708
  %1426 = vst.msk [vmem:[%s11] sm:$0xff] %vm763, %v1418
  %1427 = vst.msk [vmem:[%s11 + $0x8] sm:$0xff] %vm763, %v1419
  %1428 = vst.msk [vmem:[%s11 + $0x10] sm:$0xff] %vm763, %v1420
  %1429 = vst.msk [vmem:[%s11 + $0x18] sm:$0xff] %vm763, %v1421
  %1430 = vst.msk [vmem:[%s11 + $0x20] sm:$0xff] %vm763, %v1422
  %1431 = vst.msk [vmem:[%s11 + $0x28] sm:$0xff] %vm763, %v1423
  %1432 = vst.msk [vmem:[%s11 + $0x30] sm:$0xff] %vm763, %v1424
  %1433 = vst.msk [vmem:[%s11 + $0x38] sm:$0xff] %vm763, %v1425
  // Predicated region
  $region46: #{forward.6} parent=0 // pred_check
    _
  $region47: #{forward.6} parent=0 // pred_check_branch
    %1435 = sbr.rel (0) target = $region49
  $region48: #{forward.6} parent=0 // pred_region
    _
  $region49: #{forward.6} parent=0 // pred_fallthru
    _
  // Predicated region
  $region50: #{forward.6} parent=0 // pred_check
    _
  $region51: #{forward.6} parent=0 // pred_check_branch
    %1437 = sbr.rel (0) target = $region53
  $region52: #{forward.6} parent=0 // pred_region
    _
  $region53: #{forward.6} parent=0 // pred_fallthru
    _

// kernel: forward.7
$region0: #{forward.7}
  #allocation0 [shape = 'u32[]', space=smem, size = 0x4, offset = 0x4, fixed_abs, tag = 'smem constant byte address 0x4 - core index']
  #allocation1 [shape = 'u32[144,128]{1,0:T(1,128)}', space=vmem, size = 0x12000, scoped, tag = 'internal scratch']
  %s0 = inlined_call_operand.vmem [shape: f32[4,16,16], index: 0, kind: input, shape index: {}, may-alias: {0,10}]
  %s1 = inlined_call_operand.vmem [shape: f32[4,16,16], index: 1, kind: input, shape index: {}, may-alias: {1,11}]
  %s2 = inlined_call_operand.vmem [shape: f32[4,16,16], index: 2, kind: input, shape index: {}, may-alias: {2,13}]
  %s3 = inlined_call_operand.vmem [shape: f32[4,16,16], index: 3, kind: input, shape index: {}, may-alias: {3,12}]
  %s4 = inlined_call_operand.vmem [shape: f32[4,16,16], index: 4, kind: input, shape index: {}, may-alias: {4,14}]
  %s5 = inlined_call_operand.vmem [shape: f32[4,32,128], index: 5, kind: input, shape index: {}, may-alias: {5,16}]
  %s6 = inlined_call_operand.vmem [shape: f32[32,16], index: 6, kind: input, shape index: {}]
  %s7 = inlined_call_operand.vmem [shape: f32[16,128], index: 7, kind: input, shape index: {}]
  %s8 = inlined_call_operand.vmem [shape: f32[16,16], index: 8, kind: input, shape index: {}]
  %s9 = inlined_call_operand.vmem [shape: f32[16,16], index: 9, kind: input, shape index: {}]
  %s10 = inlined_call_operand.vmem [shape: f32[4,16,16], index: 10, kind: output, shape index: {0}, may-alias: {0,10}]
  %s11 = inlined_call_operand.vmem [shape: f32[4,16,16], index: 11, kind: output, shape index: {1}, may-alias: {1,11}]
  %s12 = inlined_call_operand.vmem [shape: f32[4,16,16], index: 12, kind: output, shape index: {2}, may-alias: {3,12}]
  %s13 = inlined_call_operand.vmem [shape: f32[4,16,16], index: 13, kind: output, shape index: {3}, may-alias: {2,13}]
  %s14 = inlined_call_operand.vmem [shape: f32[4,16,16], index: 14, kind: output, shape index: {4}, may-alias: {4,14}]
  %s15 = inlined_call_operand.vmem [shape: f32[4,32,128], index: 15, kind: output, shape index: {5}]
  %s16 = inlined_call_operand.vmem [shape: f32[4,32,128], index: 16, kind: output, shape index: {6}, may-alias: {5,16}]
  %17 = xla_tuple %s10, %s11, %s12, %s13, %s14, %s15, %s16
  %s18 = sld [smem:[#allocation0]]
  $region98: #{forward.7} parent=0
    _
  %s20 = ssub.s32 1, %s18
  %s21 = scalar_select 0, %s20, %s18
  // Predicated region
  $region2: #{forward.7} parent=0 // pred_check
    _
  $region3: #{forward.7} parent=0 // pred_check_branch
    %23 = sbr.rel (0) target = $region5
  $region4: #{forward.7} parent=0 // pred_region
    _
  $region5: #{forward.7} parent=0 // pred_fallthru
    _
  // Predicated region
  $region6: #{forward.7} parent=0 // pred_check
    _
  $region7: #{forward.7} parent=0 // pred_check_branch
    %25 = sbr.rel (0) target = $region9
  $region8: #{forward.7} parent=0 // pred_region
    _
  $region9: #{forward.7} parent=0 // pred_fallthru
    _
  // Predicated region
  $region10: #{forward.7} parent=0 // pred_check
    _
  $region11: #{forward.7} parent=0 // pred_check_branch
    %27 = sbr.rel (0) target = $region13
  $region12: #{forward.7} parent=0 // pred_region
    _
  $region13: #{forward.7} parent=0 // pred_fallthru
    _
  // Predicated region
  $region14: #{forward.7} parent=0 // pred_check
    _
  $region15: #{forward.7} parent=0 // pred_check_branch
    %29 = sbr.rel (0) target = $region17
  $region16: #{forward.7} parent=0 // pred_region
    _
  $region17: #{forward.7} parent=0 // pred_fallthru
    _
  // Predicated region
  $region18: #{forward.7} parent=0 // pred_check
    _
  $region19: #{forward.7} parent=0 // pred_check_branch
    %31 = sbr.rel (0) target = $region21
  $region20: #{forward.7} parent=0 // pred_region
    _
  $region21: #{forward.7} parent=0 // pred_fallthru
    _
  // Predicated region
  $region22: #{forward.7} parent=0 // pred_check
    _
  $region23: #{forward.7} parent=0 // pred_check_branch
    %33 = sbr.rel (0) target = $region25
  $region24: #{forward.7} parent=0 // pred_region
    _
  $region25: #{forward.7} parent=0 // pred_fallthru
    _
  // Predicated region
  $region26: #{forward.7} parent=0 // pred_check
    _
  $region27: #{forward.7} parent=0 // pred_check_branch
    %35 = sbr.rel (0) target = $region29
  $region28: #{forward.7} parent=0 // pred_region
    _
  $region29: #{forward.7} parent=0 // pred_fallthru
    _
  // Predicated region
  $region30: #{forward.7} parent=0 // pred_check
    _
  $region31: #{forward.7} parent=0 // pred_check_branch
    %37 = sbr.rel (0) target = $region33
  $region32: #{forward.7} parent=0 // pred_region
    _
  $region33: #{forward.7} parent=0 // pred_fallthru
    _
  // Predicated region
  $region34: #{forward.7} parent=0 // pred_check
    _
  $region35: #{forward.7} parent=0 // pred_check_branch
    %39 = sbr.rel (0) target = $region37
  $region36: #{forward.7} parent=0 // pred_region
    _
  $region37: #{forward.7} parent=0 // pred_fallthru
    _
  // Predicated region
  $region38: #{forward.7} parent=0 // pred_check
    _
  $region39: #{forward.7} parent=0 // pred_check_branch
    %41 = sbr.rel (0) target = $region41
  $region40: #{forward.7} parent=0 // pred_region
    _
  $region41: #{forward.7} parent=0 // pred_fallthru
    _
  %v42 = vld [vmem:[%s0] sm:$0xff]
  %v43 = vld [vmem:[%s0 + $0x8] sm:$0xff]
  %v44 = vld [vmem:[%s0 + $0x10] sm:$0xff]
  %v45 = vld [vmem:[%s0 + $0x18] sm:$0xff]
  %v46 = vld [vmem:[%s0 + $0x20] sm:$0xff]
  %v47 = vld [vmem:[%s0 + $0x28] sm:$0xff]
  %v48 = vld [vmem:[%s0 + $0x30] sm:$0xff]
  %v49 = vld [vmem:[%s0 + $0x38] sm:$0xff]
  %vm50 = vcmp.ge.f32.partialorder %v42, 0.0
  %vm51 = vcmp.ge.f32.partialorder %v43, 0.0
  %vm52 = vcmp.ge.f32.partialorder %v44, 0.0
  %vm53 = vcmp.ge.f32.partialorder %v45, 0.0
  %vm54 = vcmp.ge.f32.partialorder %v46, 0.0
  %vm55 = vcmp.ge.f32.partialorder %v47, 0.0
  %vm56 = vcmp.ge.f32.partialorder %v48, 0.0
  %vm57 = vcmp.ge.f32.partialorder %v49, 0.0
  %v58 = vmul.f32 %v42, 0.2
  %v59 = vmul.f32 %v43, 0.2
  %v60 = vmul.f32 %v44, 0.2
  %v61 = vmul.f32 %v45, 0.2
  %v62 = vmul.f32 %v46, 0.2
  %v63 = vmul.f32 %v47, 0.2
  %v64 = vmul.f32 %v48, 0.2
  %v65 = vmul.f32 %v49, 0.2
  %v66 = vsel %vm50, %v42, %v58
  %v67 = vsel %vm51, %v43, %v59
  %v68 = vsel %vm52, %v44, %v60
  %v69 = vsel %vm53, %v45, %v61
  %v70 = vsel %vm54, %v46, %v62
  %v71 = vsel %vm55, %v47, %v63
  %v72 = vsel %vm56, %v48, %v64
  %v73 = vsel %vm57, %v49, %v65
  %vm74 = vcmask 130048
  %75 = vst.msk [vmem:[%s10] sm:$0xff] %vm74, %v66
  %76 = vst.msk [vmem:[%s10 + $0x8] sm:$0xff] %vm74, %v67
  %77 = vst.msk [vmem:[%s10 + $0x10] sm:$0xff] %vm74, %v68
  %78 = vst.msk [vmem:[%s10 + $0x18] sm:$0xff] %vm74, %v69
  %79 = vst.msk [vmem:[%s10 + $0x20] sm:$0xff] %vm74, %v70
  %80 = vst.msk [vmem:[%s10 + $0x28] sm:$0xff] %vm74, %v71
  %81 = vst.msk [vmem:[%s10 + $0x30] sm:$0xff] %vm74, %v72
  %82 = vst.msk [vmem:[%s10 + $0x38] sm:$0xff] %vm74, %v73
  %v83 = vld [vmem:[%s1] sm:$0xff]
  %v84 = vld [vmem:[%s1 + $0x8] sm:$0xff]
  %v85 = vld [vmem:[%s1 + $0x10] sm:$0xff]
  %v86 = vld [vmem:[%s1 + $0x18] sm:$0xff]
  %v87 = vld [vmem:[%s1 + $0x20] sm:$0xff]
  %v88 = vld [vmem:[%s1 + $0x28] sm:$0xff]
  %v89 = vld [vmem:[%s1 + $0x30] sm:$0xff]
  %v90 = vld [vmem:[%s1 + $0x38] sm:$0xff]
  %v91 = vld [vmem:[%s2] sm:$0xff]
  %v92 = vld [vmem:[%s2 + $0x8] sm:$0xff]
  %v93 = vld [vmem:[%s2 + $0x10] sm:$0xff]
  %v94 = vld [vmem:[%s2 + $0x18] sm:$0xff]
  %v95 = vld [vmem:[%s2 + $0x20] sm:$0xff]
  %v96 = vld [vmem:[%s2 + $0x28] sm:$0xff]
  %v97 = vld [vmem:[%s2 + $0x30] sm:$0xff]
  %v98 = vld [vmem:[%s2 + $0x38] sm:$0xff]
  %v99 = vadd.f32 %v83, %v91
  %v100 = vadd.f32 %v84, %v92
  %v101 = vadd.f32 %v85, %v93
  %v102 = vadd.f32 %v86, %v94
  %v103 = vadd.f32 %v87, %v95
  %v104 = vadd.f32 %v88, %v96
  %v105 = vadd.f32 %v89, %v97
  %v106 = vadd.f32 %v90, %v98
  %v107 = vld [vmem:[%s3] sm:$0xff]
  %v108 = vld [vmem:[%s3 + $0x8] sm:$0xff]
  %v109 = vld [vmem:[%s3 + $0x10] sm:$0xff]
  %v110 = vld [vmem:[%s3 + $0x18] sm:$0xff]
  %v111 = vld [vmem:[%s3 + $0x20] sm:$0xff]
  %v112 = vld [vmem:[%s3 + $0x28] sm:$0xff]
  %v113 = vld [vmem:[%s3 + $0x30] sm:$0xff]
  %v114 = vld [vmem:[%s3 + $0x38] sm:$0xff]
  %v115 = vld [vmem:[%s4] sm:$0xff]
  %v116 = vld [vmem:[%s4 + $0x8] sm:$0xff]
  %v117 = vld [vmem:[%s4 + $0x10] sm:$0xff]
  %v118 = vld [vmem:[%s4 + $0x18] sm:$0xff]
  %v119 = vld [vmem:[%s4 + $0x20] sm:$0xff]
  %v120 = vld [vmem:[%s4 + $0x28] sm:$0xff]
  %v121 = vld [vmem:[%s4 + $0x30] sm:$0xff]
  %v122 = vld [vmem:[%s4 + $0x38] sm:$0xff]
  %v123 = vadd.f32 %v107, %v115
  %v124 = vadd.f32 %v108, %v116
  %v125 = vadd.f32 %v109, %v117
  %v126 = vadd.f32 %v110, %v118
  %v127 = vadd.f32 %v111, %v119
  %v128 = vadd.f32 %v112, %v120
  %v129 = vadd.f32 %v113, %v121
  %v130 = vadd.f32 %v114, %v122
  %v131 = vmul.f32 %v99, %v99
  %v132 = vmul.f32 %v100, %v100
  %v133 = vmul.f32 %v101, %v101
  %v134 = vmul.f32 %v102, %v102
  %v135 = vmul.f32 %v103, %v103
  %v136 = vmul.f32 %v104, %v104
  %v137 = vmul.f32 %v105, %v105
  %v138 = vmul.f32 %v106, %v106
  %v139 = vmul.f32 %v123, %v123
  %v140 = vmul.f32 %v124, %v124
  %v141 = vmul.f32 %v125, %v125
  %v142 = vmul.f32 %v126, %v126
  %v143 = vmul.f32 %v127, %v127
  %v144 = vmul.f32 %v128, %v128
  %v145 = vmul.f32 %v129, %v129
  %v146 = vmul.f32 %v130, %v130
  %v147 = vadd.f32 %v131, %v139
  %v148 = vadd.f32 %v132, %v140
  %v149 = vadd.f32 %v133, %v141
  %v150 = vadd.f32 %v134, %v142
  %v151 = vadd.f32 %v135, %v143
  %v152 = vadd.f32 %v136, %v144
  %v153 = vadd.f32 %v137, %v145
  %v154 = vadd.f32 %v138, %v146
  %v155 = vrsqrt.pop %v147
  %v156 = vmul.f32 %v147, %v155
  %vm157 = vcmp.eq.f32.partialorder %v147, inf
  %v158 = vsel %vm157, %v147, %v156
  %vm159 = vcmp.eq.f32.partialorder %v147, 0.0
  %v160 = vand.u32 %v147, 2147483648
  %v161 = vsel %vm159, %v160, %v158
  %v162 = vrsqrt.pop %v148
  %v163 = vmul.f32 %v148, %v162
  %vm164 = vcmp.eq.f32.partialorder %v148, inf
  %v165 = vsel %vm164, %v148, %v163
  %vm166 = vcmp.eq.f32.partialorder %v148, 0.0
  %v167 = vand.u32 %v148, 2147483648
  %v168 = vsel %vm166, %v167, %v165
  %v169 = vrsqrt.pop %v149
  %v170 = vmul.f32 %v149, %v169
  %vm171 = vcmp.eq.f32.partialorder %v149, inf
  %v172 = vsel %vm171, %v149, %v170
  %vm173 = vcmp.eq.f32.partialorder %v149, 0.0
  %v174 = vand.u32 %v149, 2147483648
  %v175 = vsel %vm173, %v174, %v172
  %v176 = vrsqrt.pop %v150
  %v177 = vmul.f32 %v150, %v176
  %vm178 = vcmp.eq.f32.partialorder %v150, inf
  %v179 = vsel %vm178, %v150, %v177
  %vm180 = vcmp.eq.f32.partialorder %v150, 0.0
  %v181 = vand.u32 %v150, 2147483648
  %v182 = vsel %vm180, %v181, %v179
  %v183 = vrsqrt.pop %v151
  %v184 = vmul.f32 %v151, %v183
  %vm185 = vcmp.eq.f32.partialorder %v151, inf
  %v186 = vsel %vm185, %v151, %v184
  %vm187 = vcmp.eq.f32.partialorder %v151, 0.0
  %v188 = vand.u32 %v151, 2147483648
  %v189 = vsel %vm187, %v188, %v186
  %v190 = vrsqrt.pop %v152
  %v191 = vmul.f32 %v152, %v190
  %vm192 = vcmp.eq.f32.partialorder %v152, inf
  %v193 = vsel %vm192, %v152, %v191
  %vm194 = vcmp.eq.f32.partialorder %v152, 0.0
  %v195 = vand.u32 %v152, 2147483648
  %v196 = vsel %vm194, %v195, %v193
  %v197 = vrsqrt.pop %v153
  %v198 = vmul.f32 %v153, %v197
  %vm199 = vcmp.eq.f32.partialorder %v153, inf
  %v200 = vsel %vm199, %v153, %v198
  %vm201 = vcmp.eq.f32.partialorder %v153, 0.0
  %v202 = vand.u32 %v153, 2147483648
  %v203 = vsel %vm201, %v202, %v200
  %v204 = vrsqrt.pop %v154
  %v205 = vmul.f32 %v154, %v204
  %vm206 = vcmp.eq.f32.partialorder %v154, inf
  %v207 = vsel %vm206, %v154, %v205
  %vm208 = vcmp.eq.f32.partialorder %v154, 0.0
  %v209 = vand.u32 %v154, 2147483648
  %v210 = vsel %vm208, %v209, %v207
  %v211 = vmul.f32 %v161, 3.0
  %v212 = vmul.f32 %v168, 3.0
  %v213 = vmul.f32 %v175, 3.0
  %v214 = vmul.f32 %v182, 3.0
  %v215 = vmul.f32 %v189, 3.0
  %v216 = vmul.f32 %v196, 3.0
  %v217 = vmul.f32 %v203, 3.0
  %v218 = vmul.f32 %v210, 3.0
  %v219 = vsub.f32 %v99, %v211
  %v220 = vsub.f32 %v100, %v212
  %v221 = vsub.f32 %v101, %v213
  %v222 = vsub.f32 %v102, %v214
  %v223 = vsub.f32 %v103, %v215
  %v224 = vsub.f32 %v104, %v216
  %v225 = vsub.f32 %v105, %v217
  %v226 = vsub.f32 %v106, %v218
  %vm227 = vcmp.ge.f32.partialorder %v219, 0.0
  %vm228 = vcmp.ge.f32.partialorder %v220, 0.0
  %vm229 = vcmp.ge.f32.partialorder %v221, 0.0
  %vm230 = vcmp.ge.f32.partialorder %v222, 0.0
  %vm231 = vcmp.ge.f32.partialorder %v223, 0.0
  %vm232 = vcmp.ge.f32.partialorder %v224, 0.0
  %vm233 = vcmp.ge.f32.partialorder %v225, 0.0
  %vm234 = vcmp.ge.f32.partialorder %v226, 0.0
  %v235 = vmul.f32 %v219, 0.2
  %v236 = vmul.f32 %v220, 0.2
  %v237 = vmul.f32 %v221, 0.2
  %v238 = vmul.f32 %v222, 0.2
  %v239 = vmul.f32 %v223, 0.2
  %v240 = vmul.f32 %v224, 0.2
  %v241 = vmul.f32 %v225, 0.2
  %v242 = vmul.f32 %v226, 0.2
  %v243 = vsel %vm227, %v219, %v235
  %v244 = vsel %vm228, %v220, %v236
  %v245 = vsel %vm229, %v221, %v237
  %v246 = vsel %vm230, %v222, %v238
  %v247 = vsel %vm231, %v223, %v239
  %v248 = vsel %vm232, %v224, %v240
  %v249 = vsel %vm233, %v225, %v241
  %v250 = vsel %vm234, %v226, %v242
  %v251 = vsub.f32 %v123, %v211
  %v252 = vsub.f32 %v124, %v212
  %v253 = vsub.f32 %v125, %v213
  %v254 = vsub.f32 %v126, %v214
  %v255 = vsub.f32 %v127, %v215
  %v256 = vsub.f32 %v128, %v216
  %v257 = vsub.f32 %v129, %v217
  %v258 = vsub.f32 %v130, %v218
  %vm259 = vcmp.ge.f32.partialorder %v251, 0.0
  %vm260 = vcmp.ge.f32.partialorder %v252, 0.0
  %vm261 = vcmp.ge.f32.partialorder %v253, 0.0
  %vm262 = vcmp.ge.f32.partialorder %v254, 0.0
  %vm263 = vcmp.ge.f32.partialorder %v255, 0.0
  %vm264 = vcmp.ge.f32.partialorder %v256, 0.0
  %vm265 = vcmp.ge.f32.partialorder %v257, 0.0
  %vm266 = vcmp.ge.f32.partialorder %v258, 0.0
  %v267 = vmul.f32 %v251, 0.2
  %v268 = vmul.f32 %v252, 0.2
  %v269 = vmul.f32 %v253, 0.2
  %v270 = vmul.f32 %v254, 0.2
  %v271 = vmul.f32 %v255, 0.2
  %v272 = vmul.f32 %v256, 0.2
  %v273 = vmul.f32 %v257, 0.2
  %v274 = vmul.f32 %v258, 0.2
  %v275 = vsel %vm259, %v251, %v267
  %v276 = vsel %vm260, %v252, %v268
  %v277 = vsel %vm261, %v253, %v269
  %v278 = vsel %vm262, %v254, %v270
  %v279 = vsel %vm263, %v255, %v271
  %v280 = vsel %vm264, %v256, %v272
  %v281 = vsel %vm265, %v257, %v273
  %v282 = vsel %vm266, %v258, %v274
  %283 = vst.msk [vmem:[%s11] sm:$0xff] %vm74, %v243
  %284 = vst.msk [vmem:[%s11 + $0x8] sm:$0xff] %vm74, %v244
  %285 = vst.msk [vmem:[%s11 + $0x10] sm:$0xff] %vm74, %v245
  %286 = vst.msk [vmem:[%s11 + $0x18] sm:$0xff] %vm74, %v246
  %287 = vst.msk [vmem:[%s11 + $0x20] sm:$0xff] %vm74, %v247
  %288 = vst.msk [vmem:[%s11 + $0x28] sm:$0xff] %vm74, %v248
  %289 = vst.msk [vmem:[%s11 + $0x30] sm:$0xff] %vm74, %v249
  %290 = vst.msk [vmem:[%s11 + $0x38] sm:$0xff] %vm74, %v250
  %291 = vst.msk [vmem:[%s12] sm:$0xff] %vm74, %v275
  %292 = vst.msk [vmem:[%s12 + $0x8] sm:$0xff] %vm74, %v276
  %293 = vst.msk [vmem:[%s12 + $0x10] sm:$0xff] %vm74, %v277
  %294 = vst.msk [vmem:[%s12 + $0x18] sm:$0xff] %vm74, %v278
  %295 = vst.msk [vmem:[%s12 + $0x20] sm:$0xff] %vm74, %v279
  %296 = vst.msk [vmem:[%s12 + $0x28] sm:$0xff] %vm74, %v280
  %297 = vst.msk [vmem:[%s12 + $0x30] sm:$0xff] %vm74, %v281
  %298 = vst.msk [vmem:[%s12 + $0x38] sm:$0xff] %vm74, %v282
  %v299 = vld [vmem:[%s7] sm:$0xff]
  %v300 = vld [vmem:[%s7 + $0x8] sm:$0xff]
  %v302 = vsel %vm74, %v66, 0
  %v305 = vsel %vm74, %v67, 0
  %307 = vmatprep.subr.mxu0 0.0
  %308 = vmatpush1.msra.mxu0 0.0
  %309 = vmatprep.subr.mxu0 0.0
  %310 = vmatpush1.msra.mxu0 0.0
  %311 = vmatprep.subr.mxu0 0.0
  %312 = vmatpush1.msra.mxu0 0.0
  %313 = vmatprep.subr.mxu0 0.0
  %314 = vmatpush1.msra.mxu0 0.0
  %315 = vmatprep.subr.mxu0 0.0
  %316 = vmatpush1.msra.mxu0 0.0
  %317 = vmatprep.subr.mxu0 0.0
  %318 = vmatpush1.msra.mxu0 0.0
  %319 = vmatprep.subr.mxu0 0.0
  %320 = vmatpush1.msra.mxu0 0.0
  %321 = vmatprep.subr.mxu0 0.0
  %322 = vmatpush1.msra.mxu0 0.0
  %323 = vmatprep.subr.mxu0 0.0
  %324 = vmatpush1.msra.mxu0 0.0
  %325 = vmatprep.subr.mxu0 0.0
  %326 = vmatpush1.msra.mxu0 0.0
  %327 = vmatprep.subr.mxu0 0.0
  %328 = vmatpush1.msra.mxu0 0.0
  %329 = vmatprep.subr.mxu0 0.0
  %330 = vmatpush1.msra.mxu0 0.0
  %331 = vmatprep.subr.mxu0 0.0
  %332 = vmatpush1.msra.mxu0 0.0
  %333 = vmatprep.subr.mxu0 0.0
  %334 = vmatpush1.msra.mxu0 0.0
  %335 = vmatprep.subr.mxu0 0.0
  %336 = vmatpush1.msra.mxu0 %v300
  %337 = vmatprep.subr.mxu0 0.0
  %338 = vmatpush1.msra.mxu0 %v299
  %339 = vmatprep.subr.mxu0 0.0
  %340 = vmatpush2.msra.mxu0 0.0
  %341 = vmatprep.subr.mxu0 0.0
  %342 = vmatpush2.msra.mxu0 0.0
  %343 = vmatprep.subr.mxu0 0.0
  %344 = vmatpush2.msra.mxu0 0.0
  %345 = vmatprep.subr.mxu0 0.0
  %346 = vmatpush2.msra.mxu0 0.0
  %347 = vmatprep.subr.mxu0 0.0
  %348 = vmatpush2.msra.mxu0 0.0
  %349 = vmatprep.subr.mxu0 0.0
  %350 = vmatpush2.msra.mxu0 0.0
  %351 = vmatprep.subr.mxu0 0.0
  %352 = vmatpush2.msra.mxu0 0.0
  %353 = vmatprep.subr.mxu0 0.0
  %354 = vmatpush2.msra.mxu0 0.0
  %355 = vmatprep.subr.mxu0 0.0
  %356 = vmatpush2.msra.mxu0 0.0
  %357 = vmatprep.subr.mxu0 0.0
  %358 = vmatpush2.msra.mxu0 0.0
  %359 = vmatprep.subr.mxu0 0.0
  %360 = vmatpush2.msra.mxu0 0.0
  %361 = vmatprep.subr.mxu0 0.0
  %362 = vmatpush2.msra.mxu0 0.0
  %363 = vmatprep.subr.mxu0 0.0
  %364 = vmatpush2.msra.mxu0 0.0
  %365 = vmatprep.subr.mxu0 0.0
  %366 = vmatpush2.msra.mxu0 0.0
  %367 = vmatprep.subr.mxu0 0.0
  %368 = vmatpush2.msra.mxu0 0.0
  %369 = vmatprep.subr.mxu0 0.0
  %370 = vmatpush2.msra.mxu0 0.0
  %371 = vmatprep.mubr.f32.mxu0 0.0
  %372 = vmatmul.mubr.f32.gmra.mxu0 %v302
  %v373 = vpop.f32.mrf.mxu0
  %v374 = vadd.f32 0.0, %v373
  %v375 = vpop.f32.mrf.mxu0
  %376 = vmatprep.mubr.f32.mxu0 0.0
  %377 = vmatmul.mubr.f32.gmra.mxu0 %v305
  %v378 = vpop.f32.mrf.mxu0
  %v379 = vadd.f32 0.0, %v378
  %v380 = vpop.f32.mrf.mxu0
  %381 = vdwg.mxu0
  %v383 = vsel %vm74, %v68, 0
  %v386 = vsel %vm74, %v69, 0
  %388 = vmatprep.subr.mxu0 0.0
  %389 = vmatpush1.msra.mxu0 0.0
  %390 = vmatprep.subr.mxu0 0.0
  %391 = vmatpush1.msra.mxu0 0.0
  %392 = vmatprep.subr.mxu0 0.0
  %393 = vmatpush1.msra.mxu0 0.0
  %394 = vmatprep.subr.mxu0 0.0
  %395 = vmatpush1.msra.mxu0 0.0
  %396 = vmatprep.subr.mxu0 0.0
  %397 = vmatpush1.msra.mxu0 0.0
  %398 = vmatprep.subr.mxu0 0.0
  %399 = vmatpush1.msra.mxu0 0.0
  %400 = vmatprep.subr.mxu0 0.0
  %401 = vmatpush1.msra.mxu0 0.0
  %402 = vmatprep.subr.mxu0 0.0
  %403 = vmatpush1.msra.mxu0 0.0
  %404 = vmatprep.subr.mxu0 0.0
  %405 = vmatpush1.msra.mxu0 0.0
  %406 = vmatprep.subr.mxu0 0.0
  %407 = vmatpush1.msra.mxu0 0.0
  %408 = vmatprep.subr.mxu0 0.0
  %409 = vmatpush1.msra.mxu0 0.0
  %410 = vmatprep.subr.mxu0 0.0
  %411 = vmatpush1.msra.mxu0 0.0
  %412 = vmatprep.subr.mxu0 0.0
  %413 = vmatpush1.msra.mxu0 0.0
  %414 = vmatprep.subr.mxu0 0.0
  %415 = vmatpush1.msra.mxu0 0.0
  %416 = vmatprep.subr.mxu0 0.0
  %417 = vmatpush1.msra.mxu0 %v300
  %418 = vmatprep.subr.mxu0 0.0
  %419 = vmatpush1.msra.mxu0 %v299
  %420 = vmatprep.subr.mxu0 0.0
  %421 = vmatpush2.msra.mxu0 0.0
  %422 = vmatprep.subr.mxu0 0.0
  %423 = vmatpush2.msra.mxu0 0.0
  %424 = vmatprep.subr.mxu0 0.0
  %425 = vmatpush2.msra.mxu0 0.0
  %426 = vmatprep.subr.mxu0 0.0
  %427 = vmatpush2.msra.mxu0 0.0
  %428 = vmatprep.subr.mxu0 0.0
  %429 = vmatpush2.msra.mxu0 0.0
  %430 = vmatprep.subr.mxu0 0.0
  %431 = vmatpush2.msra.mxu0 0.0
  %432 = vmatprep.subr.mxu0 0.0
  %433 = vmatpush2.msra.mxu0 0.0
  %434 = vmatprep.subr.mxu0 0.0
  %435 = vmatpush2.msra.mxu0 0.0
  %436 = vmatprep.subr.mxu0 0.0
  %437 = vmatpush2.msra.mxu0 0.0
  %438 = vmatprep.subr.mxu0 0.0
  %439 = vmatpush2.msra.mxu0 0.0
  %440 = vmatprep.subr.mxu0 0.0
  %441 = vmatpush2.msra.mxu0 0.0
  %442 = vmatprep.subr.mxu0 0.0
  %443 = vmatpush2.msra.mxu0 0.0
  %444 = vmatprep.subr.mxu0 0.0
  %445 = vmatpush2.msra.mxu0 0.0
  %446 = vmatprep.subr.mxu0 0.0
  %447 = vmatpush2.msra.mxu0 0.0
  %448 = vmatprep.subr.mxu0 0.0
  %449 = vmatpush2.msra.mxu0 0.0
  %450 = vmatprep.subr.mxu0 0.0
  %451 = vmatpush2.msra.mxu0 0.0
  %452 = vmatprep.mubr.f32.mxu0 0.0
  %453 = vmatmul.mubr.f32.gmra.mxu0 %v383
  %v454 = vpop.f32.mrf.mxu0
  %v455 = vadd.f32 0.0, %v454
  %v456 = vpop.f32.mrf.mxu0
  %457 = vmatprep.mubr.f32.mxu0 0.0
  %458 = vmatmul.mubr.f32.gmra.mxu0 %v386
  %v459 = vpop.f32.mrf.mxu0
  %v460 = vadd.f32 0.0, %v459
  %v461 = vpop.f32.mrf.mxu0
  %462 = vdwg.mxu0
  %v464 = vsel %vm74, %v70, 0
  %v467 = vsel %vm74, %v71, 0
  %469 = vmatprep.subr.mxu0 0.0
  %470 = vmatpush1.msra.mxu0 0.0
  %471 = vmatprep.subr.mxu0 0.0
  %472 = vmatpush1.msra.mxu0 0.0
  %473 = vmatprep.subr.mxu0 0.0
  %474 = vmatpush1.msra.mxu0 0.0
  %475 = vmatprep.subr.mxu0 0.0
  %476 = vmatpush1.msra.mxu0 0.0
  %477 = vmatprep.subr.mxu0 0.0
  %478 = vmatpush1.msra.mxu0 0.0
  %479 = vmatprep.subr.mxu0 0.0
  %480 = vmatpush1.msra.mxu0 0.0
  %481 = vmatprep.subr.mxu0 0.0
  %482 = vmatpush1.msra.mxu0 0.0
  %483 = vmatprep.subr.mxu0 0.0
  %484 = vmatpush1.msra.mxu0 0.0
  %485 = vmatprep.subr.mxu0 0.0
  %486 = vmatpush1.msra.mxu0 0.0
  %487 = vmatprep.subr.mxu0 0.0
  %488 = vmatpush1.msra.mxu0 0.0
  %489 = vmatprep.subr.mxu0 0.0
  %490 = vmatpush1.msra.mxu0 0.0
  %491 = vmatprep.subr.mxu0 0.0
  %492 = vmatpush1.msra.mxu0 0.0
  %493 = vmatprep.subr.mxu0 0.0
  %494 = vmatpush1.msra.mxu0 0.0
  %495 = vmatprep.subr.mxu0 0.0
  %496 = vmatpush1.msra.mxu0 0.0
  %497 = vmatprep.subr.mxu0 0.0
  %498 = vmatpush1.msra.mxu0 %v300
  %499 = vmatprep.subr.mxu0 0.0
  %500 = vmatpush1.msra.mxu0 %v299
  %501 = vmatprep.subr.mxu0 0.0
  %502 = vmatpush2.msra.mxu0 0.0
  %503 = vmatprep.subr.mxu0 0.0
  %504 = vmatpush2.msra.mxu0 0.0
  %505 = vmatprep.subr.mxu0 0.0
  %506 = vmatpush2.msra.mxu0 0.0
  %507 = vmatprep.subr.mxu0 0.0
  %508 = vmatpush2.msra.mxu0 0.0
  %509 = vmatprep.subr.mxu0 0.0
  %510 = vmatpush2.msra.mxu0 0.0
  %511 = vmatprep.subr.mxu0 0.0
  %512 = vmatpush2.msra.mxu0 0.0
  %513 = vmatprep.subr.mxu0 0.0
  %514 = vmatpush2.msra.mxu0 0.0
  %515 = vmatprep.subr.mxu0 0.0
  %516 = vmatpush2.msra.mxu0 0.0
  %517 = vmatprep.subr.mxu0 0.0
  %518 = vmatpush2.msra.mxu0 0.0
  %519 = vmatprep.subr.mxu0 0.0
  %520 = vmatpush2.msra.mxu0 0.0
  %521 = vmatprep.subr.mxu0 0.0
  %522 = vmatpush2.msra.mxu0 0.0
  %523 = vmatprep.subr.mxu0 0.0
  %524 = vmatpush2.msra.mxu0 0.0
  %525 = vmatprep.subr.mxu0 0.0
  %526 = vmatpush2.msra.mxu0 0.0
  %527 = vmatprep.subr.mxu0 0.0
  %528 = vmatpush2.msra.mxu0 0.0
  %529 = vmatprep.subr.mxu0 0.0
  %530 = vmatpush2.msra.mxu0 0.0
  %531 = vmatprep.subr.mxu0 0.0
  %532 = vmatpush2.msra.mxu0 0.0
  %533 = vmatprep.mubr.f32.mxu0 0.0
  %534 = vmatmul.mubr.f32.gmra.mxu0 %v464
  %v535 = vpop.f32.mrf.mxu0
  %v536 = vadd.f32 0.0, %v535
  %v537 = vpop.f32.mrf.mxu0
  %538 = vmatprep.mubr.f32.mxu0 0.0
  %539 = vmatmul.mubr.f32.gmra.mxu0 %v467
  %v540 = vpop.f32.mrf.mxu0
  %v541 = vadd.f32 0.0, %v540
  %v542 = vpop.f32.mrf.mxu0
  %543 = vdwg.mxu0
  %v545 = vsel %vm74, %v72, 0
  %v548 = vsel %vm74, %v73, 0
  %550 = vmatprep.subr.mxu0 0.0
  %551 = vmatpush1.msra.mxu0 0.0
  %552 = vmatprep.subr.mxu0 0.0
  %553 = vmatpush1.msra.mxu0 0.0
  %554 = vmatprep.subr.mxu0 0.0
  %555 = vmatpush1.msra.mxu0 0.0
  %556 = vmatprep.subr.mxu0 0.0
  %557 = vmatpush1.msra.mxu0 0.0
  %558 = vmatprep.subr.mxu0 0.0
  %559 = vmatpush1.msra.mxu0 0.0
  %560 = vmatprep.subr.mxu0 0.0
  %561 = vmatpush1.msra.mxu0 0.0
  %562 = vmatprep.subr.mxu0 0.0
  %563 = vmatpush1.msra.mxu0 0.0
  %564 = vmatprep.subr.mxu0 0.0
  %565 = vmatpush1.msra.mxu0 0.0
  %566 = vmatprep.subr.mxu0 0.0
  %567 = vmatpush1.msra.mxu0 0.0
  %568 = vmatprep.subr.mxu0 0.0
  %569 = vmatpush1.msra.mxu0 0.0
  %570 = vmatprep.subr.mxu0 0.0
  %571 = vmatpush1.msra.mxu0 0.0
  %572 = vmatprep.subr.mxu0 0.0
  %573 = vmatpush1.msra.mxu0 0.0
  %574 = vmatprep.subr.mxu0 0.0
  %575 = vmatpush1.msra.mxu0 0.0
  %576 = vmatprep.subr.mxu0 0.0
  %577 = vmatpush1.msra.mxu0 0.0
  %578 = vmatprep.subr.mxu0 0.0
  %579 = vmatpush1.msra.mxu0 %v300
  %580 = vmatprep.subr.mxu0 0.0
  %581 = vmatpush1.msra.mxu0 %v299
  %582 = vmatprep.subr.mxu0 0.0
  %583 = vmatpush2.msra.mxu0 0.0
  %584 = vmatprep.subr.mxu0 0.0
  %585 = vmatpush2.msra.mxu0 0.0
  %586 = vmatprep.subr.mxu0 0.0
  %587 = vmatpush2.msra.mxu0 0.0
  %588 = vmatprep.subr.mxu0 0.0
  %589 = vmatpush2.msra.mxu0 0.0
  %590 = vmatprep.subr.mxu0 0.0
  %591 = vmatpush2.msra.mxu0 0.0
  %592 = vmatprep.subr.mxu0 0.0
  %593 = vmatpush2.msra.mxu0 0.0
  %594 = vmatprep.subr.mxu0 0.0
  %595 = vmatpush2.msra.mxu0 0.0
  %596 = vmatprep.subr.mxu0 0.0
  %597 = vmatpush2.msra.mxu0 0.0
  %598 = vmatprep.subr.mxu0 0.0
  %599 = vmatpush2.msra.mxu0 0.0
  %600 = vmatprep.subr.mxu0 0.0
  %601 = vmatpush2.msra.mxu0 0.0
  %602 = vmatprep.subr.mxu0 0.0
  %603 = vmatpush2.msra.mxu0 0.0
  %604 = vmatprep.subr.mxu0 0.0
  %605 = vmatpush2.msra.mxu0 0.0
  %606 = vmatprep.subr.mxu0 0.0
  %607 = vmatpush2.msra.mxu0 0.0
  %608 = vmatprep.subr.mxu0 0.0
  %609 = vmatpush2.msra.mxu0 0.0
  %610 = vmatprep.subr.mxu0 0.0
  %611 = vmatpush2.msra.mxu0 0.0
  %612 = vmatprep.subr.mxu0 0.0
  %613 = vmatpush2.msra.mxu0 0.0
  %614 = vmatprep.mubr.f32.mxu0 0.0
  %615 = vmatmul.mubr.f32.gmra.mxu0 %v545
  %v616 = vpop.f32.mrf.mxu0
  %v617 = vadd.f32 0.0, %v616
  %v618 = vpop.f32.mrf.mxu0
  %619 = vmatprep.mubr.f32.mxu0 0.0
  %620 = vmatmul.mubr.f32.gmra.mxu0 %v548
  %v621 = vpop.f32.mrf.mxu0
  %v622 = vadd.f32 0.0, %v621
  %v623 = vpop.f32.mrf.mxu0
  %624 = vdwg.mxu0
  %v625 = vld [vmem:[%s6] sm:$0xff]
  %v626 = vld [vmem:[%s6 + $0x8] sm:$0xff]
  %v627 = vld [vmem:[%s6 + $0x10] sm:$0xff]
  %v628 = vld [vmem:[%s6 + $0x18] sm:$0xff]
  %v630 = vsel %vm74, %v625, 0
  %v633 = vsel %vm74, %v626, 0
  %v636 = vsel %vm74, %v627, 0
  %v639 = vsel %vm74, %v628, 0
  %641 = vmatprep.subr.mxu0 0.0
  %642 = vmatpush1.msra.mxu0 0.0
  %643 = vmatprep.subr.mxu0 0.0
  %644 = vmatpush1.msra.mxu0 0.0
  %645 = vmatprep.subr.mxu0 0.0
  %646 = vmatpush1.msra.mxu0 0.0
  %647 = vmatprep.subr.mxu0 0.0
  %648 = vmatpush1.msra.mxu0 0.0
  %649 = vmatprep.subr.mxu0 0.0
  %650 = vmatpush1.msra.mxu0 0.0
  %651 = vmatprep.subr.mxu0 0.0
  %652 = vmatpush1.msra.mxu0 0.0
  %653 = vmatprep.subr.mxu0 0.0
  %654 = vmatpush1.msra.mxu0 0.0
  %655 = vmatprep.subr.mxu0 0.0
  %656 = vmatpush1.msra.mxu0 0.0
  %657 = vmatprep.subr.mxu0 0.0
  %658 = vmatpush1.msra.mxu0 0.0
  %659 = vmatprep.subr.mxu0 0.0
  %660 = vmatpush1.msra.mxu0 0.0
  %661 = vmatprep.subr.mxu0 0.0
  %662 = vmatpush1.msra.mxu0 0.0
  %663 = vmatprep.subr.mxu0 0.0
  %664 = vmatpush1.msra.mxu0 0.0
  %665 = vmatprep.subr.mxu0 0.0
  %666 = vmatpush1.msra.mxu0 0.0
  %667 = vmatprep.subr.mxu0 0.0
  %668 = vmatpush1.msra.mxu0 0.0
  %669 = vmatprep.subr.mxu0 0.0
  %670 = vmatpush1.msra.mxu0 %v379
  %671 = vmatprep.subr.mxu0 0.0
  %672 = vmatpush1.msra.mxu0 %v374
  %673 = vmatprep.subr.mxu0 0.0
  %674 = vmatpush2.msra.mxu0 0.0
  %675 = vmatprep.subr.mxu0 0.0
  %676 = vmatpush2.msra.mxu0 0.0
  %677 = vmatprep.subr.mxu0 0.0
  %678 = vmatpush2.msra.mxu0 0.0
  %679 = vmatprep.subr.mxu0 0.0
  %680 = vmatpush2.msra.mxu0 0.0
  %681 = vmatprep.subr.mxu0 0.0
  %682 = vmatpush2.msra.mxu0 0.0
  %683 = vmatprep.subr.mxu0 0.0
  %684 = vmatpush2.msra.mxu0 0.0
  %685 = vmatprep.subr.mxu0 0.0
  %686 = vmatpush2.msra.mxu0 0.0
  %687 = vmatprep.subr.mxu0 0.0
  %688 = vmatpush2.msra.mxu0 0.0
  %689 = vmatprep.subr.mxu0 0.0
  %690 = vmatpush2.msra.mxu0 0.0
  %691 = vmatprep.subr.mxu0 0.0
  %692 = vmatpush2.msra.mxu0 0.0
  %693 = vmatprep.subr.mxu0 0.0
  %694 = vmatpush2.msra.mxu0 0.0
  %695 = vmatprep.subr.mxu0 0.0
  %696 = vmatpush2.msra.mxu0 0.0
  %697 = vmatprep.subr.mxu0 0.0
  %698 = vmatpush2.msra.mxu0 0.0
  %699 = vmatprep.subr.mxu0 0.0
  %700 = vmatpush2.msra.mxu0 0.0
  %701 = vmatprep.subr.mxu0 0.0
  %702 = vmatpush2.msra.mxu0 0.0
  %703 = vmatprep.subr.mxu0 0.0
  %704 = vmatpush2.msra.mxu0 0.0
  %705 = vmatprep.mubr.f32.mxu0 0.0
  %706 = vmatmul.mubr.f32.gmra.mxu0 %v630
  %v707 = vpop.f32.mrf.mxu0
  %v708 = vadd.f32 0.0, %v707
  %v709 = vpop.f32.mrf.mxu0
  %710 = vmatprep.mubr.f32.mxu0 0.0
  %711 = vmatmul.mubr.f32.gmra.mxu0 %v633
  %v712 = vpop.f32.mrf.mxu0
  %v713 = vadd.f32 0.0, %v712
  %v714 = vpop.f32.mrf.mxu0
  %715 = vmatprep.mubr.f32.mxu0 0.0
  %716 = vmatmul.mubr.f32.gmra.mxu0 %v636
  %v717 = vpop.f32.mrf.mxu0
  %v718 = vadd.f32 0.0, %v717
  %v719 = vpop.f32.mrf.mxu0
  %720 = vmatprep.mubr.f32.mxu0 0.0
  %721 = vmatmul.mubr.f32.gmra.mxu0 %v639
  %v722 = vpop.f32.mrf.mxu0
  %v723 = vadd.f32 0.0, %v722
  %v724 = vpop.f32.mrf.mxu0
  %725 = vdwg.mxu0
  %726 = vmatprep.subr.mxu0 0.0
  %727 = vmatpush1.msra.mxu0 0.0
  %728 = vmatprep.subr.mxu0 0.0
  %729 = vmatpush1.msra.mxu0 0.0
  %730 = vmatprep.subr.mxu0 0.0
  %731 = vmatpush1.msra.mxu0 0.0
  %732 = vmatprep.subr.mxu0 0.0
  %733 = vmatpush1.msra.mxu0 0.0
  %734 = vmatprep.subr.mxu0 0.0
  %735 = vmatpush1.msra.mxu0 0.0
  %736 = vmatprep.subr.mxu0 0.0
  %737 = vmatpush1.msra.mxu0 0.0
  %738 = vmatprep.subr.mxu0 0.0
  %739 = vmatpush1.msra.mxu0 0.0
  %740 = vmatprep.subr.mxu0 0.0
  %741 = vmatpush1.msra.mxu0 0.0
  %742 = vmatprep.subr.mxu0 0.0
  %743 = vmatpush1.msra.mxu0 0.0
  %744 = vmatprep.subr.mxu0 0.0
  %745 = vmatpush1.msra.mxu0 0.0
  %746 = vmatprep.subr.mxu0 0.0
  %747 = vmatpush1.msra.mxu0 0.0
  %748 = vmatprep.subr.mxu0 0.0
  %749 = vmatpush1.msra.mxu0 0.0
  %750 = vmatprep.subr.mxu0 0.0
  %751 = vmatpush1.msra.mxu0 0.0
  %752 = vmatprep.subr.mxu0 0.0
  %753 = vmatpush1.msra.mxu0 0.0
  %754 = vmatprep.subr.mxu0 0.0
  %755 = vmatpush1.msra.mxu0 %v460
  %756 = vmatprep.subr.mxu0 0.0
  %757 = vmatpush1.msra.mxu0 %v455
  %758 = vmatprep.subr.mxu0 0.0
  %759 = vmatpush2.msra.mxu0 0.0
  %760 = vmatprep.subr.mxu0 0.0
  %761 = vmatpush2.msra.mxu0 0.0
  %762 = vmatprep.subr.mxu0 0.0
  %763 = vmatpush2.msra.mxu0 0.0
  %764 = vmatprep.subr.mxu0 0.0
  %765 = vmatpush2.msra.mxu0 0.0
  %766 = vmatprep.subr.mxu0 0.0
  %767 = vmatpush2.msra.mxu0 0.0
  %768 = vmatprep.subr.mxu0 0.0
  %769 = vmatpush2.msra.mxu0 0.0
  %770 = vmatprep.subr.mxu0 0.0
  %771 = vmatpush2.msra.mxu0 0.0
  %772 = vmatprep.subr.mxu0 0.0
  %773 = vmatpush2.msra.mxu0 0.0
  %774 = vmatprep.subr.mxu0 0.0
  %775 = vmatpush2.msra.mxu0 0.0
  %776 = vmatprep.subr.mxu0 0.0
  %777 = vmatpush2.msra.mxu0 0.0
  %778 = vmatprep.subr.mxu0 0.0
  %779 = vmatpush2.msra.mxu0 0.0
  %780 = vmatprep.subr.mxu0 0.0
  %781 = vmatpush2.msra.mxu0 0.0
  %782 = vmatprep.subr.mxu0 0.0
  %783 = vmatpush2.msra.mxu0 0.0
  %784 = vmatprep.subr.mxu0 0.0
  %785 = vmatpush2.msra.mxu0 0.0
  %786 = vmatprep.subr.mxu0 0.0
  %787 = vmatpush2.msra.mxu0 0.0
  %788 = vmatprep.subr.mxu0 0.0
  %789 = vmatpush2.msra.mxu0 0.0
  %790 = vmatprep.mubr.f32.mxu0 0.0
  %791 = vmatmul.mubr.f32.gmra.mxu0 %v630
  %v792 = vpop.f32.mrf.mxu0
  %v793 = vadd.f32 0.0, %v792
  %v794 = vpop.f32.mrf.mxu0
  %795 = vmatprep.mubr.f32.mxu0 0.0
  %796 = vmatmul.mubr.f32.gmra.mxu0 %v633
  %v797 = vpop.f32.mrf.mxu0
  %v798 = vadd.f32 0.0, %v797
  %v799 = vpop.f32.mrf.mxu0
  %800 = vmatprep.mubr.f32.mxu0 0.0
  %801 = vmatmul.mubr.f32.gmra.mxu0 %v636
  %v802 = vpop.f32.mrf.mxu0
  %v803 = vadd.f32 0.0, %v802
  %v804 = vpop.f32.mrf.mxu0
  %805 = vmatprep.mubr.f32.mxu0 0.0
  %806 = vmatmul.mubr.f32.gmra.mxu0 %v639
  %v807 = vpop.f32.mrf.mxu0
  %v808 = vadd.f32 0.0, %v807
  %v809 = vpop.f32.mrf.mxu0
  %810 = vdwg.mxu0
  %811 = vmatprep.subr.mxu0 0.0
  %812 = vmatpush1.msra.mxu0 0.0
  %813 = vmatprep.subr.mxu0 0.0
  %814 = vmatpush1.msra.mxu0 0.0
  %815 = vmatprep.subr.mxu0 0.0
  %816 = vmatpush1.msra.mxu0 0.0
  %817 = vmatprep.subr.mxu0 0.0
  %818 = vmatpush1.msra.mxu0 0.0
  %819 = vmatprep.subr.mxu0 0.0
  %820 = vmatpush1.msra.mxu0 0.0
  %821 = vmatprep.subr.mxu0 0.0
  %822 = vmatpush1.msra.mxu0 0.0
  %823 = vmatprep.subr.mxu0 0.0
  %824 = vmatpush1.msra.mxu0 0.0
  %825 = vmatprep.subr.mxu0 0.0
  %826 = vmatpush1.msra.mxu0 0.0
  %827 = vmatprep.subr.mxu0 0.0
  %828 = vmatpush1.msra.mxu0 0.0
  %829 = vmatprep.subr.mxu0 0.0
  %830 = vmatpush1.msra.mxu0 0.0
  %831 = vmatprep.subr.mxu0 0.0
  %832 = vmatpush1.msra.mxu0 0.0
  %833 = vmatprep.subr.mxu0 0.0
  %834 = vmatpush1.msra.mxu0 0.0
  %835 = vmatprep.subr.mxu0 0.0
  %836 = vmatpush1.msra.mxu0 0.0
  %837 = vmatprep.subr.mxu0 0.0
  %838 = vmatpush1.msra.mxu0 0.0
  %839 = vmatprep.subr.mxu0 0.0
  %840 = vmatpush1.msra.mxu0 %v541
  %841 = vmatprep.subr.mxu0 0.0
  %842 = vmatpush1.msra.mxu0 %v536
  %843 = vmatprep.subr.mxu0 0.0
  %844 = vmatpush2.msra.mxu0 0.0
  %845 = vmatprep.subr.mxu0 0.0
  %846 = vmatpush2.msra.mxu0 0.0
  %847 = vmatprep.subr.mxu0 0.0
  %848 = vmatpush2.msra.mxu0 0.0
  %849 = vmatprep.subr.mxu0 0.0
  %850 = vmatpush2.msra.mxu0 0.0
  %851 = vmatprep.subr.mxu0 0.0
  %852 = vmatpush2.msra.mxu0 0.0
  %853 = vmatprep.subr.mxu0 0.0
  %854 = vmatpush2.msra.mxu0 0.0
  %855 = vmatprep.subr.mxu0 0.0
  %856 = vmatpush2.msra.mxu0 0.0
  %857 = vmatprep.subr.mxu0 0.0
  %858 = vmatpush2.msra.mxu0 0.0
  %859 = vmatprep.subr.mxu0 0.0
  %860 = vmatpush2.msra.mxu0 0.0
  %861 = vmatprep.subr.mxu0 0.0
  %862 = vmatpush2.msra.mxu0 0.0
  %863 = vmatprep.subr.mxu0 0.0
  %864 = vmatpush2.msra.mxu0 0.0
  %865 = vmatprep.subr.mxu0 0.0
  %866 = vmatpush2.msra.mxu0 0.0
  %867 = vmatprep.subr.mxu0 0.0
  %868 = vmatpush2.msra.mxu0 0.0
  %869 = vmatprep.subr.mxu0 0.0
  %870 = vmatpush2.msra.mxu0 0.0
  %871 = vmatprep.subr.mxu0 0.0
  %872 = vmatpush2.msra.mxu0 0.0
  %873 = vmatprep.subr.mxu0 0.0
  %874 = vmatpush2.msra.mxu0 0.0
  %875 = vmatprep.mubr.f32.mxu0 0.0
  %876 = vmatmul.mubr.f32.gmra.mxu0 %v630
  %v877 = vpop.f32.mrf.mxu0
  %v878 = vadd.f32 0.0, %v877
  %v879 = vpop.f32.mrf.mxu0
  %880 = vmatprep.mubr.f32.mxu0 0.0
  %881 = vmatmul.mubr.f32.gmra.mxu0 %v633
  %v882 = vpop.f32.mrf.mxu0
  %v883 = vadd.f32 0.0, %v882
  %v884 = vpop.f32.mrf.mxu0
  %885 = vmatprep.mubr.f32.mxu0 0.0
  %886 = vmatmul.mubr.f32.gmra.mxu0 %v636
  %v887 = vpop.f32.mrf.mxu0
  %v888 = vadd.f32 0.0, %v887
  %v889 = vpop.f32.mrf.mxu0
  %890 = vmatprep.mubr.f32.mxu0 0.0
  %891 = vmatmul.mubr.f32.gmra.mxu0 %v639
  %v892 = vpop.f32.mrf.mxu0
  %v893 = vadd.f32 0.0, %v892
  %v894 = vpop.f32.mrf.mxu0
  %895 = vdwg.mxu0
  %896 = vmatprep.subr.mxu0 0.0
  %897 = vmatpush1.msra.mxu0 0.0
  %898 = vmatprep.subr.mxu0 0.0
  %899 = vmatpush1.msra.mxu0 0.0
  %900 = vmatprep.subr.mxu0 0.0
  %901 = vmatpush1.msra.mxu0 0.0
  %902 = vmatprep.subr.mxu0 0.0
  %903 = vmatpush1.msra.mxu0 0.0
  %904 = vmatprep.subr.mxu0 0.0
  %905 = vmatpush1.msra.mxu0 0.0
  %906 = vmatprep.subr.mxu0 0.0
  %907 = vmatpush1.msra.mxu0 0.0
  %908 = vmatprep.subr.mxu0 0.0
  %909 = vmatpush1.msra.mxu0 0.0
  %910 = vmatprep.subr.mxu0 0.0
  %911 = vmatpush1.msra.mxu0 0.0
  %912 = vmatprep.subr.mxu0 0.0
  %913 = vmatpush1.msra.mxu0 0.0
  %914 = vmatprep.subr.mxu0 0.0
  %915 = vmatpush1.msra.mxu0 0.0
  %916 = vmatprep.subr.mxu0 0.0
  %917 = vmatpush1.msra.mxu0 0.0
  %918 = vmatprep.subr.mxu0 0.0
  %919 = vmatpush1.msra.mxu0 0.0
  %920 = vmatprep.subr.mxu0 0.0
  %921 = vmatpush1.msra.mxu0 0.0
  %922 = vmatprep.subr.mxu0 0.0
  %923 = vmatpush1.msra.mxu0 0.0
  %924 = vmatprep.subr.mxu0 0.0
  %925 = vmatpush1.msra.mxu0 %v622
  %926 = vmatprep.subr.mxu0 0.0
  %927 = vmatpush1.msra.mxu0 %v617
  %928 = vmatprep.subr.mxu0 0.0
  %929 = vmatpush2.msra.mxu0 0.0
  %930 = vmatprep.subr.mxu0 0.0
  %931 = vmatpush2.msra.mxu0 0.0
  %932 = vmatprep.subr.mxu0 0.0
  %933 = vmatpush2.msra.mxu0 0.0
  %934 = vmatprep.subr.mxu0 0.0
  %935 = vmatpush2.msra.mxu0 0.0
  %936 = vmatprep.subr.mxu0 0.0
  %937 = vmatpush2.msra.mxu0 0.0
  %938 = vmatprep.subr.mxu0 0.0
  %939 = vmatpush2.msra.mxu0 0.0
  %940 = vmatprep.subr.mxu0 0.0
  %941 = vmatpush2.msra.mxu0 0.0
  %942 = vmatprep.subr.mxu0 0.0
  %943 = vmatpush2.msra.mxu0 0.0
  %944 = vmatprep.subr.mxu0 0.0
  %945 = vmatpush2.msra.mxu0 0.0
  %946 = vmatprep.subr.mxu0 0.0
  %947 = vmatpush2.msra.mxu0 0.0
  %948 = vmatprep.subr.mxu0 0.0
  %949 = vmatpush2.msra.mxu0 0.0
  %950 = vmatprep.subr.mxu0 0.0
  %951 = vmatpush2.msra.mxu0 0.0
  %952 = vmatprep.subr.mxu0 0.0
  %953 = vmatpush2.msra.mxu0 0.0
  %954 = vmatprep.subr.mxu0 0.0
  %955 = vmatpush2.msra.mxu0 0.0
  %956 = vmatprep.subr.mxu0 0.0
  %957 = vmatpush2.msra.mxu0 0.0
  %958 = vmatprep.subr.mxu0 0.0
  %959 = vmatpush2.msra.mxu0 0.0
  %960 = vmatprep.mubr.f32.mxu0 0.0
  %961 = vmatmul.mubr.f32.gmra.mxu0 %v630
  %v962 = vpop.f32.mrf.mxu0
  %v963 = vadd.f32 0.0, %v962
  %v964 = vpop.f32.mrf.mxu0
  %965 = vmatprep.mubr.f32.mxu0 0.0
  %966 = vmatmul.mubr.f32.gmra.mxu0 %v633
  %v967 = vpop.f32.mrf.mxu0
  %v968 = vadd.f32 0.0, %v967
  %v969 = vpop.f32.mrf.mxu0
  %970 = vmatprep.mubr.f32.mxu0 0.0
  %971 = vmatmul.mubr.f32.gmra.mxu0 %v636
  %v972 = vpop.f32.mrf.mxu0
  %v973 = vadd.f32 0.0, %v972
  %v974 = vpop.f32.mrf.mxu0
  %975 = vmatprep.mubr.f32.mxu0 0.0
  %976 = vmatmul.mubr.f32.gmra.mxu0 %v639
  %v977 = vpop.f32.mrf.mxu0
  %v978 = vadd.f32 0.0, %v977
  %v979 = vpop.f32.mrf.mxu0
  %980 = vdwg.mxu0
  %v981 = vld [vmem:[%s5] sm:$0xff]
  %v982 = vld [vmem:[%s5 + $0x8] sm:$0xff]
  %v983 = vld [vmem:[%s5 + $0x10] sm:$0xff]
  %v984 = vld [vmem:[%s5 + $0x18] sm:$0xff]
  %v985 = vld [vmem:[%s5 + $0x20] sm:$0xff]
  %v986 = vld [vmem:[%s5 + $0x28] sm:$0xff]
  %v987 = vld [vmem:[%s5 + $0x30] sm:$0xff]
  %v988 = vld [vmem:[%s5 + $0x38] sm:$0xff]
  %v989 = vld [vmem:[%s5 + $0x40] sm:$0xff]
  %v990 = vld [vmem:[%s5 + $0x48] sm:$0xff]
  %v991 = vld [vmem:[%s5 + $0x50] sm:$0xff]
  %v992 = vld [vmem:[%s5 + $0x58] sm:$0xff]
  %v993 = vld [vmem:[%s5 + $0x60] sm:$0xff]
  %v994 = vld [vmem:[%s5 + $0x68] sm:$0xff]
  %v995 = vld [vmem:[%s5 + $0x70] sm:$0xff]
  %v996 = vld [vmem:[%s5 + $0x78] sm:$0xff]
  %v997 = vadd.f32 %v708, %v981
  %v998 = vadd.f32 %v713, %v982
  %v999 = vadd.f32 %v718, %v983
  %v1000 = vadd.f32 %v723, %v984
  %v1001 = vadd.f32 %v793, %v985
  %v1002 = vadd.f32 %v798, %v986
  %v1003 = vadd.f32 %v803, %v987
  %v1004 = vadd.f32 %v808, %v988
  %v1005 = vadd.f32 %v878, %v989
  %v1006 = vadd.f32 %v883, %v990
  %v1007 = vadd.f32 %v888, %v991
  %v1008 = vadd.f32 %v893, %v992
  %v1009 = vadd.f32 %v963, %v993
  %v1010 = vadd.f32 %v968, %v994
  %v1011 = vadd.f32 %v973, %v995
  %v1012 = vadd.f32 %v978, %v996
  %v1013 = vsub.f32 %v997, 1.0
  %v1014 = vsub.f32 %v998, 1.0
  %v1015 = vsub.f32 %v999, 1.0
  %v1016 = vsub.f32 %v1000, 1.0
  %v1017 = vsub.f32 %v1001, 1.0
  %v1018 = vsub.f32 %v1002, 1.0
  %v1019 = vsub.f32 %v1003, 1.0
  %v1020 = vsub.f32 %v1004, 1.0
  %v1021 = vsub.f32 %v1005, 1.0
  %v1022 = vsub.f32 %v1006, 1.0
  %v1023 = vsub.f32 %v1007, 1.0
  %v1024 = vsub.f32 %v1008, 1.0
  %v1025 = vsub.f32 %v1009, 1.0
  %v1026 = vsub.f32 %v1010, 1.0
  %v1027 = vsub.f32 %v1011, 1.0
  %v1028 = vsub.f32 %v1012, 1.0
  %vm1029 = vcmp.ge.f32.partialorder %v1013, 0.0
  %vm1030 = vcmp.ge.f32.partialorder %v1014, 0.0
  %vm1031 = vcmp.ge.f32.partialorder %v1015, 0.0
  %vm1032 = vcmp.ge.f32.partialorder %v1016, 0.0
  %vm1033 = vcmp.ge.f32.partialorder %v1017, 0.0
  %vm1034 = vcmp.ge.f32.partialorder %v1018, 0.0
  %vm1035 = vcmp.ge.f32.partialorder %v1019, 0.0
  %vm1036 = vcmp.ge.f32.partialorder %v1020, 0.0
  %vm1037 = vcmp.ge.f32.partialorder %v1021, 0.0
  %vm1038 = vcmp.ge.f32.partialorder %v1022, 0.0
  %vm1039 = vcmp.ge.f32.partialorder %v1023, 0.0
  %vm1040 = vcmp.ge.f32.partialorder %v1024, 0.0
  %vm1041 = vcmp.ge.f32.partialorder %v1025, 0.0
  %vm1042 = vcmp.ge.f32.partialorder %v1026, 0.0
  %vm1043 = vcmp.ge.f32.partialorder %v1027, 0.0
  %vm1044 = vcmp.ge.f32.partialorder %v1028, 0.0
  %v1045 = vmul.f32 %v1013, 0.2
  %v1046 = vmul.f32 %v1014, 0.2
  %v1047 = vmul.f32 %v1015, 0.2
  %v1048 = vmul.f32 %v1016, 0.2
  %v1049 = vmul.f32 %v1017, 0.2
  %v1050 = vmul.f32 %v1018, 0.2
  %v1051 = vmul.f32 %v1019, 0.2
  %v1052 = vmul.f32 %v1020, 0.2
  %v1053 = vmul.f32 %v1021, 0.2
  %v1054 = vmul.f32 %v1022, 0.2
  %v1055 = vmul.f32 %v1023, 0.2
  %v1056 = vmul.f32 %v1024, 0.2
  %v1057 = vmul.f32 %v1025, 0.2
  %v1058 = vmul.f32 %v1026, 0.2
  %v1059 = vmul.f32 %v1027, 0.2
  %v1060 = vmul.f32 %v1028, 0.2
  %v1061 = vsel %vm1029, %v1013, %v1045
  %v1062 = vsel %vm1030, %v1014, %v1046
  %v1063 = vsel %vm1031, %v1015, %v1047
  %v1064 = vsel %vm1032, %v1016, %v1048
  %v1065 = vsel %vm1033, %v1017, %v1049
  %v1066 = vsel %vm1034, %v1018, %v1050
  %v1067 = vsel %vm1035, %v1019, %v1051
  %v1068 = vsel %vm1036, %v1020, %v1052
  %v1069 = vsel %vm1037, %v1021, %v1053
  %v1070 = vsel %vm1038, %v1022, %v1054
  %v1071 = vsel %vm1039, %v1023, %v1055
  %v1072 = vsel %vm1040, %v1024, %v1056
  %v1073 = vsel %vm1041, %v1025, %v1057
  %v1074 = vsel %vm1042, %v1026, %v1058
  %v1075 = vsel %vm1043, %v1027, %v1059
  %v1076 = vsel %vm1044, %v1028, %v1060
  %1077 = vst [vmem:[%s15] sm:$0xff] %v1061
  %1078 = vst [vmem:[%s15 + $0x8] sm:$0xff] %v1062
  %1079 = vst [vmem:[%s15 + $0x10] sm:$0xff] %v1063
  %1080 = vst [vmem:[%s15 + $0x18] sm:$0xff] %v1064
  %1081 = vst [vmem:[%s15 + $0x20] sm:$0xff] %v1065
  %1082 = vst [vmem:[%s15 + $0x28] sm:$0xff] %v1066
  %1083 = vst [vmem:[%s15 + $0x30] sm:$0xff] %v1067
  %1084 = vst [vmem:[%s15 + $0x38] sm:$0xff] %v1068
  %1085 = vst [vmem:[%s15 + $0x40] sm:$0xff] %v1069
  %1086 = vst [vmem:[%s15 + $0x48] sm:$0xff] %v1070
  %1087 = vst [vmem:[%s15 + $0x50] sm:$0xff] %v1071
  %1088 = vst [vmem:[%s15 + $0x58] sm:$0xff] %v1072
  %1089 = vst [vmem:[%s15 + $0x60] sm:$0xff] %v1073
  %1090 = vst [vmem:[%s15 + $0x68] sm:$0xff] %v1074
  %1091 = vst [vmem:[%s15 + $0x70] sm:$0xff] %v1075
  %1092 = vst [vmem:[%s15 + $0x78] sm:$0xff] %v1076
  %v1093 = vsub.f32 %v997, %v1061
  %v1094 = vsub.f32 %v998, %v1062
  %v1095 = vsub.f32 %v999, %v1063
  %v1096 = vsub.f32 %v1000, %v1064
  %v1097 = vsub.f32 %v1001, %v1065
  %v1098 = vsub.f32 %v1002, %v1066
  %v1099 = vsub.f32 %v1003, %v1067
  %v1100 = vsub.f32 %v1004, %v1068
  %v1101 = vsub.f32 %v1005, %v1069
  %v1102 = vsub.f32 %v1006, %v1070
  %v1103 = vsub.f32 %v1007, %v1071
  %v1104 = vsub.f32 %v1008, %v1072
  %v1105 = vsub.f32 %v1009, %v1073
  %v1106 = vsub.f32 %v1010, %v1074
  %v1107 = vsub.f32 %v1011, %v1075
  %v1108 = vsub.f32 %v1012, %v1076
  %1109 = vst [vmem:[%s16] sm:$0xff] %v1093
  %1110 = vst [vmem:[%s16 + $0x8] sm:$0xff] %v1094
  %1111 = vst [vmem:[%s16 + $0x10] sm:$0xff] %v1095
  %1112 = vst [vmem:[%s16 + $0x18] sm:$0xff] %v1096
  %1113 = vst [vmem:[%s16 + $0x20] sm:$0xff] %v1097
  %1114 = vst [vmem:[%s16 + $0x28] sm:$0xff] %v1098
  %1115 = vst [vmem:[%s16 + $0x30] sm:$0xff] %v1099
  %1116 = vst [vmem:[%s16 + $0x38] sm:$0xff] %v1100
  %1117 = vst [vmem:[%s16 + $0x40] sm:$0xff] %v1101
  %1118 = vst [vmem:[%s16 + $0x48] sm:$0xff] %v1102
  %1119 = vst [vmem:[%s16 + $0x50] sm:$0xff] %v1103
  %1120 = vst [vmem:[%s16 + $0x58] sm:$0xff] %v1104
  %1121 = vst [vmem:[%s16 + $0x60] sm:$0xff] %v1105
  %1122 = vst [vmem:[%s16 + $0x68] sm:$0xff] %v1106
  %1123 = vst [vmem:[%s16 + $0x70] sm:$0xff] %v1107
  %1124 = vst [vmem:[%s16 + $0x78] sm:$0xff] %v1108
  %v1125 = vld [vmem:[%s2] sm:$0xff]
  %v1126 = vld [vmem:[%s2 + $0x8] sm:$0xff]
  %v1127 = vld [vmem:[%s2 + $0x10] sm:$0xff]
  %v1128 = vld [vmem:[%s2 + $0x18] sm:$0xff]
  %v1129 = vld [vmem:[%s2 + $0x20] sm:$0xff]
  %v1130 = vld [vmem:[%s2 + $0x28] sm:$0xff]
  %v1131 = vld [vmem:[%s2 + $0x30] sm:$0xff]
  %v1132 = vld [vmem:[%s2 + $0x38] sm:$0xff]
  %v1133 = vld [vmem:[%s8] sm:$0xff]
  %v1134 = vld [vmem:[%s8 + $0x8] sm:$0xff]
  %1135 = vmatprep.subr.mxu0 0.0
  %1136 = vmatpush1.msra.mxu0 0.0
  %1137 = vmatprep.subr.mxu0 0.0
  %1138 = vmatpush1.msra.mxu0 0.0
  %1139 = vmatprep.subr.mxu0 0.0
  %1140 = vmatpush1.msra.mxu0 0.0
  %1141 = vmatprep.subr.mxu0 0.0
  %1142 = vmatpush1.msra.mxu0 0.0
  %1143 = vmatprep.subr.mxu0 0.0
  %1144 = vmatpush1.msra.mxu0 0.0
  %1145 = vmatprep.subr.mxu0 0.0
  %1146 = vmatpush1.msra.mxu0 0.0
  %1147 = vmatprep.subr.mxu0 0.0
  %1148 = vmatpush1.msra.mxu0 0.0
  %1149 = vmatprep.subr.mxu0 0.0
  %1150 = vmatpush1.msra.mxu0 0.0
  %1151 = vmatprep.subr.mxu0 0.0
  %1152 = vmatpush1.msra.mxu0 0.0
  %1153 = vmatprep.subr.mxu0 0.0
  %1154 = vmatpush1.msra.mxu0 0.0
  %1155 = vmatprep.subr.mxu0 0.0
  %1156 = vmatpush1.msra.mxu0 0.0
  %1157 = vmatprep.subr.mxu0 0.0
  %1158 = vmatpush1.msra.mxu0 0.0
  %1159 = vmatprep.subr.mxu0 0.0
  %1160 = vmatpush1.msra.mxu0 0.0
  %1161 = vmatprep.subr.mxu0 0.0
  %1162 = vmatpush1.msra.mxu0 0.0
  %1163 = vmatprep.subr.mxu0 0.0
  %1164 = vmatpush1.msra.mxu0 %v1134
  %1165 = vmatprep.subr.mxu0 0.0
  %1166 = vmatpush1.msra.mxu0 %v1133
  %1167 = vmatprep.subr.mxu0 0.0
  %1168 = vmatpush2.msra.mxu0 0.0
  %1169 = vmatprep.subr.mxu0 0.0
  %1170 = vmatpush2.msra.mxu0 0.0
  %1171 = vmatprep.subr.mxu0 0.0
  %1172 = vmatpush2.msra.mxu0 0.0
  %1173 = vmatprep.subr.mxu0 0.0
  %1174 = vmatpush2.msra.mxu0 0.0
  %1175 = vmatprep.subr.mxu0 0.0
  %1176 = vmatpush2.msra.mxu0 0.0
  %1177 = vmatprep.subr.mxu0 0.0
  %1178 = vmatpush2.msra.mxu0 0.0
  %1179 = vmatprep.subr.mxu0 0.0
  %1180 = vmatpush2.msra.mxu0 0.0
  %1181 = vmatprep.subr.mxu0 0.0
  %1182 = vmatpush2.msra.mxu0 0.0
  %1183 = vmatprep.subr.mxu0 0.0
  %1184 = vmatpush2.msra.mxu0 0.0
  %1185 = vmatprep.subr.mxu0 0.0
  %1186 = vmatpush2.msra.mxu0 0.0
  %1187 = vmatprep.subr.mxu0 0.0
  %1188 = vmatpush2.msra.mxu0 0.0
  %1189 = vmatprep.subr.mxu0 0.0
  %1190 = vmatpush2.msra.mxu0 0.0
  %1191 = vmatprep.subr.mxu0 0.0
  %1192 = vmatpush2.msra.mxu0 0.0
  %1193 = vmatprep.subr.mxu0 0.0
  %1194 = vmatpush2.msra.mxu0 0.0
  %1195 = vmatprep.subr.mxu0 0.0
  %1196 = vmatpush2.msra.mxu0 0.0
  %1197 = vmatprep.subr.mxu0 0.0
  %1198 = vmatpush2.msra.mxu0 0.0
  %1199 = vmatprep.mubr.f32.mxu0 0.0
  %1200 = vmatmul.mubr.f32.gmra.mxu0 %v302
  %v1201 = vpop.f32.mrf.mxu0
  %v1202 = vadd.f32 0.0, %v1201
  %v1203 = vpop.f32.mrf.mxu0
  %1204 = vmatprep.mubr.f32.mxu0 0.0
  %1205 = vmatmul.mubr.f32.gmra.mxu0 %v305
  %v1206 = vpop.f32.mrf.mxu0
  %v1207 = vadd.f32 0.0, %v1206
  %v1208 = vpop.f32.mrf.mxu0
  %1209 = vdwg.mxu0
  %1210 = vmatprep.subr.mxu0 0.0
  %1211 = vmatpush1.msra.mxu0 0.0
  %1212 = vmatprep.subr.mxu0 0.0
  %1213 = vmatpush1.msra.mxu0 0.0
  %1214 = vmatprep.subr.mxu0 0.0
  %1215 = vmatpush1.msra.mxu0 0.0
  %1216 = vmatprep.subr.mxu0 0.0
  %1217 = vmatpush1.msra.mxu0 0.0
  %1218 = vmatprep.subr.mxu0 0.0
  %1219 = vmatpush1.msra.mxu0 0.0
  %1220 = vmatprep.subr.mxu0 0.0
  %1221 = vmatpush1.msra.mxu0 0.0
  %1222 = vmatprep.subr.mxu0 0.0
  %1223 = vmatpush1.msra.mxu0 0.0
  %1224 = vmatprep.subr.mxu0 0.0
  %1225 = vmatpush1.msra.mxu0 0.0
  %1226 = vmatprep.subr.mxu0 0.0
  %1227 = vmatpush1.msra.mxu0 0.0
  %1228 = vmatprep.subr.mxu0 0.0
  %1229 = vmatpush1.msra.mxu0 0.0
  %1230 = vmatprep.subr.mxu0 0.0
  %1231 = vmatpush1.msra.mxu0 0.0
  %1232 = vmatprep.subr.mxu0 0.0
  %1233 = vmatpush1.msra.mxu0 0.0
  %1234 = vmatprep.subr.mxu0 0.0
  %1235 = vmatpush1.msra.mxu0 0.0
  %1236 = vmatprep.subr.mxu0 0.0
  %1237 = vmatpush1.msra.mxu0 0.0
  %1238 = vmatprep.subr.mxu0 0.0
  %1239 = vmatpush1.msra.mxu0 %v1134
  %1240 = vmatprep.subr.mxu0 0.0
  %1241 = vmatpush1.msra.mxu0 %v1133
  %1242 = vmatprep.subr.mxu0 0.0
  %1243 = vmatpush2.msra.mxu0 0.0
  %1244 = vmatprep.subr.mxu0 0.0
  %1245 = vmatpush2.msra.mxu0 0.0
  %1246 = vmatprep.subr.mxu0 0.0
  %1247 = vmatpush2.msra.mxu0 0.0
  %1248 = vmatprep.subr.mxu0 0.0
  %1249 = vmatpush2.msra.mxu0 0.0
  %1250 = vmatprep.subr.mxu0 0.0
  %1251 = vmatpush2.msra.mxu0 0.0
  %1252 = vmatprep.subr.mxu0 0.0
  %1253 = vmatpush2.msra.mxu0 0.0
  %1254 = vmatprep.subr.mxu0 0.0
  %1255 = vmatpush2.msra.mxu0 0.0
  %1256 = vmatprep.subr.mxu0 0.0
  %1257 = vmatpush2.msra.mxu0 0.0
  %1258 = vmatprep.subr.mxu0 0.0
  %1259 = vmatpush2.msra.mxu0 0.0
  %1260 = vmatprep.subr.mxu0 0.0
  %1261 = vmatpush2.msra.mxu0 0.0
  %1262 = vmatprep.subr.mxu0 0.0
  %1263 = vmatpush2.msra.mxu0 0.0
  %1264 = vmatprep.subr.mxu0 0.0
  %1265 = vmatpush2.msra.mxu0 0.0
  %1266 = vmatprep.subr.mxu0 0.0
  %1267 = vmatpush2.msra.mxu0 0.0
  %1268 = vmatprep.subr.mxu0 0.0
  %1269 = vmatpush2.msra.mxu0 0.0
  %1270 = vmatprep.subr.mxu0 0.0
  %1271 = vmatpush2.msra.mxu0 0.0
  %1272 = vmatprep.subr.mxu0 0.0
  %1273 = vmatpush2.msra.mxu0 0.0
  %1274 = vmatprep.mubr.f32.mxu0 0.0
  %1275 = vmatmul.mubr.f32.gmra.mxu0 %v383
  %v1276 = vpop.f32.mrf.mxu0
  %v1277 = vadd.f32 0.0, %v1276
  %v1278 = vpop.f32.mrf.mxu0
  %1279 = vmatprep.mubr.f32.mxu0 0.0
  %1280 = vmatmul.mubr.f32.gmra.mxu0 %v386
  %v1281 = vpop.f32.mrf.mxu0
  %v1282 = vadd.f32 0.0, %v1281
  %v1283 = vpop.f32.mrf.mxu0
  %1284 = vdwg.mxu0
  %1285 = vmatprep.subr.mxu0 0.0
  %1286 = vmatpush1.msra.mxu0 0.0
  %1287 = vmatprep.subr.mxu0 0.0
  %1288 = vmatpush1.msra.mxu0 0.0
  %1289 = vmatprep.subr.mxu0 0.0
  %1290 = vmatpush1.msra.mxu0 0.0
  %1291 = vmatprep.subr.mxu0 0.0
  %1292 = vmatpush1.msra.mxu0 0.0
  %1293 = vmatprep.subr.mxu0 0.0
  %1294 = vmatpush1.msra.mxu0 0.0
  %1295 = vmatprep.subr.mxu0 0.0
  %1296 = vmatpush1.msra.mxu0 0.0
  %1297 = vmatprep.subr.mxu0 0.0
  %1298 = vmatpush1.msra.mxu0 0.0
  %1299 = vmatprep.subr.mxu0 0.0
  %1300 = vmatpush1.msra.mxu0 0.0
  %1301 = vmatprep.subr.mxu0 0.0
  %1302 = vmatpush1.msra.mxu0 0.0
  %1303 = vmatprep.subr.mxu0 0.0
  %1304 = vmatpush1.msra.mxu0 0.0
  %1305 = vmatprep.subr.mxu0 0.0
  %1306 = vmatpush1.msra.mxu0 0.0
  %1307 = vmatprep.subr.mxu0 0.0
  %1308 = vmatpush1.msra.mxu0 0.0
  %1309 = vmatprep.subr.mxu0 0.0
  %1310 = vmatpush1.msra.mxu0 0.0
  %1311 = vmatprep.subr.mxu0 0.0
  %1312 = vmatpush1.msra.mxu0 0.0
  %1313 = vmatprep.subr.mxu0 0.0
  %1314 = vmatpush1.msra.mxu0 %v1134
  %1315 = vmatprep.subr.mxu0 0.0
  %1316 = vmatpush1.msra.mxu0 %v1133
  %1317 = vmatprep.subr.mxu0 0.0
  %1318 = vmatpush2.msra.mxu0 0.0
  %1319 = vmatprep.subr.mxu0 0.0
  %1320 = vmatpush2.msra.mxu0 0.0
  %1321 = vmatprep.subr.mxu0 0.0
  %1322 = vmatpush2.msra.mxu0 0.0
  %1323 = vmatprep.subr.mxu0 0.0
  %1324 = vmatpush2.msra.mxu0 0.0
  %1325 = vmatprep.subr.mxu0 0.0
  %1326 = vmatpush2.msra.mxu0 0.0
  %1327 = vmatprep.subr.mxu0 0.0
  %1328 = vmatpush2.msra.mxu0 0.0
  %1329 = vmatprep.subr.mxu0 0.0
  %1330 = vmatpush2.msra.mxu0 0.0
  %1331 = vmatprep.subr.mxu0 0.0
  %1332 = vmatpush2.msra.mxu0 0.0
  %1333 = vmatprep.subr.mxu0 0.0
  %1334 = vmatpush2.msra.mxu0 0.0
  %1335 = vmatprep.subr.mxu0 0.0
  %1336 = vmatpush2.msra.mxu0 0.0
  %1337 = vmatprep.subr.mxu0 0.0
  %1338 = vmatpush2.msra.mxu0 0.0
  %1339 = vmatprep.subr.mxu0 0.0
  %1340 = vmatpush2.msra.mxu0 0.0
  %1341 = vmatprep.subr.mxu0 0.0
  %1342 = vmatpush2.msra.mxu0 0.0
  %1343 = vmatprep.subr.mxu0 0.0
  %1344 = vmatpush2.msra.mxu0 0.0
  %1345 = vmatprep.subr.mxu0 0.0
  %1346 = vmatpush2.msra.mxu0 0.0
  %1347 = vmatprep.subr.mxu0 0.0
  %1348 = vmatpush2.msra.mxu0 0.0
  %1349 = vmatprep.mubr.f32.mxu0 0.0
  %1350 = vmatmul.mubr.f32.gmra.mxu0 %v464
  %v1351 = vpop.f32.mrf.mxu0
  %v1352 = vadd.f32 0.0, %v1351
  %v1353 = vpop.f32.mrf.mxu0
  %1354 = vmatprep.mubr.f32.mxu0 0.0
  %1355 = vmatmul.mubr.f32.gmra.mxu0 %v467
  %v1356 = vpop.f32.mrf.mxu0
  %v1357 = vadd.f32 0.0, %v1356
  %v1358 = vpop.f32.mrf.mxu0
  %1359 = vdwg.mxu0
  %1360 = vmatprep.subr.mxu0 0.0
  %1361 = vmatpush1.msra.mxu0 0.0
  %1362 = vmatprep.subr.mxu0 0.0
  %1363 = vmatpush1.msra.mxu0 0.0
  %1364 = vmatprep.subr.mxu0 0.0
  %1365 = vmatpush1.msra.mxu0 0.0
  %1366 = vmatprep.subr.mxu0 0.0
  %1367 = vmatpush1.msra.mxu0 0.0
  %1368 = vmatprep.subr.mxu0 0.0
  %1369 = vmatpush1.msra.mxu0 0.0
  %1370 = vmatprep.subr.mxu0 0.0
  %1371 = vmatpush1.msra.mxu0 0.0
  %1372 = vmatprep.subr.mxu0 0.0
  %1373 = vmatpush1.msra.mxu0 0.0
  %1374 = vmatprep.subr.mxu0 0.0
  %1375 = vmatpush1.msra.mxu0 0.0
  %1376 = vmatprep.subr.mxu0 0.0
  %1377 = vmatpush1.msra.mxu0 0.0
  %1378 = vmatprep.subr.mxu0 0.0
  %1379 = vmatpush1.msra.mxu0 0.0
  %1380 = vmatprep.subr.mxu0 0.0
  %1381 = vmatpush1.msra.mxu0 0.0
  %1382 = vmatprep.subr.mxu0 0.0
  %1383 = vmatpush1.msra.mxu0 0.0
  %1384 = vmatprep.subr.mxu0 0.0
  %1385 = vmatpush1.msra.mxu0 0.0
  %1386 = vmatprep.subr.mxu0 0.0
  %1387 = vmatpush1.msra.mxu0 0.0
  %1388 = vmatprep.subr.mxu0 0.0
  %1389 = vmatpush1.msra.mxu0 %v1134
  %1390 = vmatprep.subr.mxu0 0.0
  %1391 = vmatpush1.msra.mxu0 %v1133
  %1392 = vmatprep.subr.mxu0 0.0
  %1393 = vmatpush2.msra.mxu0 0.0
  %1394 = vmatprep.subr.mxu0 0.0
  %1395 = vmatpush2.msra.mxu0 0.0
  %1396 = vmatprep.subr.mxu0 0.0
  %1397 = vmatpush2.msra.mxu0 0.0
  %1398 = vmatprep.subr.mxu0 0.0
  %1399 = vmatpush2.msra.mxu0 0.0
  %1400 = vmatprep.subr.mxu0 0.0
  %1401 = vmatpush2.msra.mxu0 0.0
  %1402 = vmatprep.subr.mxu0 0.0
  %1403 = vmatpush2.msra.mxu0 0.0
  %1404 = vmatprep.subr.mxu0 0.0
  %1405 = vmatpush2.msra.mxu0 0.0
  %1406 = vmatprep.subr.mxu0 0.0
  %1407 = vmatpush2.msra.mxu0 0.0
  %1408 = vmatprep.subr.mxu0 0.0
  %1409 = vmatpush2.msra.mxu0 0.0
  %1410 = vmatprep.subr.mxu0 0.0
  %1411 = vmatpush2.msra.mxu0 0.0
  %1412 = vmatprep.subr.mxu0 0.0
  %1413 = vmatpush2.msra.mxu0 0.0
  %1414 = vmatprep.subr.mxu0 0.0
  %1415 = vmatpush2.msra.mxu0 0.0
  %1416 = vmatprep.subr.mxu0 0.0
  %1417 = vmatpush2.msra.mxu0 0.0
  %1418 = vmatprep.subr.mxu0 0.0
  %1419 = vmatpush2.msra.mxu0 0.0
  %1420 = vmatprep.subr.mxu0 0.0
  %1421 = vmatpush2.msra.mxu0 0.0
  %1422 = vmatprep.subr.mxu0 0.0
  %1423 = vmatpush2.msra.mxu0 0.0
  %1424 = vmatprep.mubr.f32.mxu0 0.0
  %1425 = vmatmul.mubr.f32.gmra.mxu0 %v545
  %v1426 = vpop.f32.mrf.mxu0
  %v1427 = vadd.f32 0.0, %v1426
  %v1428 = vpop.f32.mrf.mxu0
  %1429 = vmatprep.mubr.f32.mxu0 0.0
  %1430 = vmatmul.mubr.f32.gmra.mxu0 %v548
  %v1431 = vpop.f32.mrf.mxu0
  %v1432 = vadd.f32 0.0, %v1431
  %v1433 = vpop.f32.mrf.mxu0
  %1434 = vdwg.mxu0
  %v1435 = vadd.f32 %v1125, %v1202
  %v1436 = vadd.f32 %v1126, %v1207
  %v1437 = vadd.f32 %v1127, %v1277
  %v1438 = vadd.f32 %v1128, %v1282
  %v1439 = vadd.f32 %v1129, %v1352
  %v1440 = vadd.f32 %v1130, %v1357
  %v1441 = vadd.f32 %v1131, %v1427
  %v1442 = vadd.f32 %v1132, %v1432
  %v1443 = vsub.f32 %v1435, %v243
  %v1444 = vsub.f32 %v1436, %v244
  %v1445 = vsub.f32 %v1437, %v245
  %v1446 = vsub.f32 %v1438, %v246
  %v1447 = vsub.f32 %v1439, %v247
  %v1448 = vsub.f32 %v1440, %v248
  %v1449 = vsub.f32 %v1441, %v249
  %v1450 = vsub.f32 %v1442, %v250
  %1451 = vst.msk [vmem:[%s13] sm:$0xff] %vm74, %v1443
  %1452 = vst.msk [vmem:[%s13 + $0x8] sm:$0xff] %vm74, %v1444
  %1453 = vst.msk [vmem:[%s13 + $0x10] sm:$0xff] %vm74, %v1445
  %1454 = vst.msk [vmem:[%s13 + $0x18] sm:$0xff] %vm74, %v1446
  %1455 = vst.msk [vmem:[%s13 + $0x20] sm:$0xff] %vm74, %v1447
  %1456 = vst.msk [vmem:[%s13 + $0x28] sm:$0xff] %vm74, %v1448
  %1457 = vst.msk [vmem:[%s13 + $0x30] sm:$0xff] %vm74, %v1449
  %1458 = vst.msk [vmem:[%s13 + $0x38] sm:$0xff] %vm74, %v1450
  %v1459 = vld [vmem:[%s4] sm:$0xff]
  %v1460 = vld [vmem:[%s4 + $0x8] sm:$0xff]
  %v1461 = vld [vmem:[%s4 + $0x10] sm:$0xff]
  %v1462 = vld [vmem:[%s4 + $0x18] sm:$0xff]
  %v1463 = vld [vmem:[%s4 + $0x20] sm:$0xff]
  %v1464 = vld [vmem:[%s4 + $0x28] sm:$0xff]
  %v1465 = vld [vmem:[%s4 + $0x30] sm:$0xff]
  %v1466 = vld [vmem:[%s4 + $0x38] sm:$0xff]
  %v1467 = vld [vmem:[%s9] sm:$0xff]
  %v1468 = vld [vmem:[%s9 + $0x8] sm:$0xff]
  %v1470 = vsel %vm74, %v1467, 0
  %v1473 = vsel %vm74, %v1468, 0
  %1475 = vmatprep.subr.mxu0 0.0
  %1476 = vmatpush1.msra.mxu0 0.0
  %1477 = vmatprep.subr.mxu0 0.0
  %1478 = vmatpush1.msra.mxu0 0.0
  %1479 = vmatprep.subr.mxu0 0.0
  %1480 = vmatpush1.msra.mxu0 0.0
  %1481 = vmatprep.subr.mxu0 0.0
  %1482 = vmatpush1.msra.mxu0 0.0
  %1483 = vmatprep.subr.mxu0 0.0
  %1484 = vmatpush1.msra.mxu0 0.0
  %1485 = vmatprep.subr.mxu0 0.0
  %1486 = vmatpush1.msra.mxu0 0.0
  %1487 = vmatprep.subr.mxu0 0.0
  %1488 = vmatpush1.msra.mxu0 0.0
  %1489 = vmatprep.subr.mxu0 0.0
  %1490 = vmatpush1.msra.mxu0 0.0
  %1491 = vmatprep.subr.mxu0 0.0
  %1492 = vmatpush1.msra.mxu0 0.0
  %1493 = vmatprep.subr.mxu0 0.0
  %1494 = vmatpush1.msra.mxu0 0.0
  %1495 = vmatprep.subr.mxu0 0.0
  %1496 = vmatpush1.msra.mxu0 0.0
  %1497 = vmatprep.subr.mxu0 0.0
  %1498 = vmatpush1.msra.mxu0 0.0
  %1499 = vmatprep.subr.mxu0 0.0
  %1500 = vmatpush1.msra.mxu0 0.0
  %1501 = vmatprep.subr.mxu0 0.0
  %1502 = vmatpush1.msra.mxu0 0.0
  %1503 = vmatprep.subr.mxu0 0.0
  %1504 = vmatpush1.msra.mxu0 %v67
  %1505 = vmatprep.subr.mxu0 0.0
  %1506 = vmatpush1.msra.mxu0 %v66
  %1507 = vmatprep.subr.mxu0 0.0
  %1508 = vmatpush2.msra.mxu0 0.0
  %1509 = vmatprep.subr.mxu0 0.0
  %1510 = vmatpush2.msra.mxu0 0.0
  %1511 = vmatprep.subr.mxu0 0.0
  %1512 = vmatpush2.msra.mxu0 0.0
  %1513 = vmatprep.subr.mxu0 0.0
  %1514 = vmatpush2.msra.mxu0 0.0
  %1515 = vmatprep.subr.mxu0 0.0
  %1516 = vmatpush2.msra.mxu0 0.0
  %1517 = vmatprep.subr.mxu0 0.0
  %1518 = vmatpush2.msra.mxu0 0.0
  %1519 = vmatprep.subr.mxu0 0.0
  %1520 = vmatpush2.msra.mxu0 0.0
  %1521 = vmatprep.subr.mxu0 0.0
  %1522 = vmatpush2.msra.mxu0 0.0
  %1523 = vmatprep.subr.mxu0 0.0
  %1524 = vmatpush2.msra.mxu0 0.0
  %1525 = vmatprep.subr.mxu0 0.0
  %1526 = vmatpush2.msra.mxu0 0.0
  %1527 = vmatprep.subr.mxu0 0.0
  %1528 = vmatpush2.msra.mxu0 0.0
  %1529 = vmatprep.subr.mxu0 0.0
  %1530 = vmatpush2.msra.mxu0 0.0
  %1531 = vmatprep.subr.mxu0 0.0
  %1532 = vmatpush2.msra.mxu0 0.0
  %1533 = vmatprep.subr.mxu0 0.0
  %1534 = vmatpush2.msra.mxu0 0.0
  %1535 = vmatprep.subr.mxu0 0.0
  %1536 = vmatpush2.msra.mxu0 0.0
  %1537 = vmatprep.subr.mxu0 0.0
  %1538 = vmatpush2.msra.mxu0 0.0
  %1539 = vmatprep.mubr.f32.mxu0 0.0
  %1540 = vmatmul.mubr.f32.gmra.mxu0 %v1470
  %v1541 = vpop.f32.mrf.mxu0
  %v1542 = vadd.f32 0.0, %v1541
  %v1543 = vpop.f32.mrf.mxu0
  %1544 = vmatprep.mubr.f32.mxu0 0.0
  %1545 = vmatmul.mubr.f32.gmra.mxu0 %v1473
  %v1546 = vpop.f32.mrf.mxu0
  %v1547 = vadd.f32 0.0, %v1546
  %v1548 = vpop.f32.mrf.mxu0
  %1549 = vdwg.mxu0
  %1550 = vmatprep.subr.mxu0 0.0
  %1551 = vmatpush1.msra.mxu0 0.0
  %1552 = vmatprep.subr.mxu0 0.0
  %1553 = vmatpush1.msra.mxu0 0.0
  %1554 = vmatprep.subr.mxu0 0.0
  %1555 = vmatpush1.msra.mxu0 0.0
  %1556 = vmatprep.subr.mxu0 0.0
  %1557 = vmatpush1.msra.mxu0 0.0
  %1558 = vmatprep.subr.mxu0 0.0
  %1559 = vmatpush1.msra.mxu0 0.0
  %1560 = vmatprep.subr.mxu0 0.0
  %1561 = vmatpush1.msra.mxu0 0.0
  %1562 = vmatprep.subr.mxu0 0.0
  %1563 = vmatpush1.msra.mxu0 0.0
  %1564 = vmatprep.subr.mxu0 0.0
  %1565 = vmatpush1.msra.mxu0 0.0
  %1566 = vmatprep.subr.mxu0 0.0
  %1567 = vmatpush1.msra.mxu0 0.0
  %1568 = vmatprep.subr.mxu0 0.0
  %1569 = vmatpush1.msra.mxu0 0.0
  %1570 = vmatprep.subr.mxu0 0.0
  %1571 = vmatpush1.msra.mxu0 0.0
  %1572 = vmatprep.subr.mxu0 0.0
  %1573 = vmatpush1.msra.mxu0 0.0
  %1574 = vmatprep.subr.mxu0 0.0
  %1575 = vmatpush1.msra.mxu0 0.0
  %1576 = vmatprep.subr.mxu0 0.0
  %1577 = vmatpush1.msra.mxu0 0.0
  %1578 = vmatprep.subr.mxu0 0.0
  %1579 = vmatpush1.msra.mxu0 %v69
  %1580 = vmatprep.subr.mxu0 0.0
  %1581 = vmatpush1.msra.mxu0 %v68
  %1582 = vmatprep.subr.mxu0 0.0
  %1583 = vmatpush2.msra.mxu0 0.0
  %1584 = vmatprep.subr.mxu0 0.0
  %1585 = vmatpush2.msra.mxu0 0.0
  %1586 = vmatprep.subr.mxu0 0.0
  %1587 = vmatpush2.msra.mxu0 0.0
  %1588 = vmatprep.subr.mxu0 0.0
  %1589 = vmatpush2.msra.mxu0 0.0
  %1590 = vmatprep.subr.mxu0 0.0
  %1591 = vmatpush2.msra.mxu0 0.0
  %1592 = vmatprep.subr.mxu0 0.0
  %1593 = vmatpush2.msra.mxu0 0.0
  %1594 = vmatprep.subr.mxu0 0.0
  %1595 = vmatpush2.msra.mxu0 0.0
  %1596 = vmatprep.subr.mxu0 0.0
  %1597 = vmatpush2.msra.mxu0 0.0
  %1598 = vmatprep.subr.mxu0 0.0
  %1599 = vmatpush2.msra.mxu0 0.0
  %1600 = vmatprep.subr.mxu0 0.0
  %1601 = vmatpush2.msra.mxu0 0.0
  %1602 = vmatprep.subr.mxu0 0.0
  %1603 = vmatpush2.msra.mxu0 0.0
  %1604 = vmatprep.subr.mxu0 0.0
  %1605 = vmatpush2.msra.mxu0 0.0
  %1606 = vmatprep.subr.mxu0 0.0
  %1607 = vmatpush2.msra.mxu0 0.0
  %1608 = vmatprep.subr.mxu0 0.0
  %1609 = vmatpush2.msra.mxu0 0.0
  %1610 = vmatprep.subr.mxu0 0.0
  %1611 = vmatpush2.msra.mxu0 0.0
  %1612 = vmatprep.subr.mxu0 0.0
  %1613 = vmatpush2.msra.mxu0 0.0
  %1614 = vmatprep.mubr.f32.mxu0 0.0
  %1615 = vmatmul.mubr.f32.gmra.mxu0 %v1470
  %v1616 = vpop.f32.mrf.mxu0
  %v1617 = vadd.f32 0.0, %v1616
  %v1618 = vpop.f32.mrf.mxu0
  %1619 = vmatprep.mubr.f32.mxu0 0.0
  %1620 = vmatmul.mubr.f32.gmra.mxu0 %v1473
  %v1621 = vpop.f32.mrf.mxu0
  %v1622 = vadd.f32 0.0, %v1621
  %v1623 = vpop.f32.mrf.mxu0
  %1624 = vdwg.mxu0
  %1625 = vmatprep.subr.mxu0 0.0
  %1626 = vmatpush1.msra.mxu0 0.0
  %1627 = vmatprep.subr.mxu0 0.0
  %1628 = vmatpush1.msra.mxu0 0.0
  %1629 = vmatprep.subr.mxu0 0.0
  %1630 = vmatpush1.msra.mxu0 0.0
  %1631 = vmatprep.subr.mxu0 0.0
  %1632 = vmatpush1.msra.mxu0 0.0
  %1633 = vmatprep.subr.mxu0 0.0
  %1634 = vmatpush1.msra.mxu0 0.0
  %1635 = vmatprep.subr.mxu0 0.0
  %1636 = vmatpush1.msra.mxu0 0.0
  %1637 = vmatprep.subr.mxu0 0.0
  %1638 = vmatpush1.msra.mxu0 0.0
  %1639 = vmatprep.subr.mxu0 0.0
  %1640 = vmatpush1.msra.mxu0 0.0
  %1641 = vmatprep.subr.mxu0 0.0
  %1642 = vmatpush1.msra.mxu0 0.0
  %1643 = vmatprep.subr.mxu0 0.0
  %1644 = vmatpush1.msra.mxu0 0.0
  %1645 = vmatprep.subr.mxu0 0.0
  %1646 = vmatpush1.msra.mxu0 0.0
  %1647 = vmatprep.subr.mxu0 0.0
  %1648 = vmatpush1.msra.mxu0 0.0
  %1649 = vmatprep.subr.mxu0 0.0
  %1650 = vmatpush1.msra.mxu0 0.0
  %1651 = vmatprep.subr.mxu0 0.0
  %1652 = vmatpush1.msra.mxu0 0.0
  %1653 = vmatprep.subr.mxu0 0.0
  %1654 = vmatpush1.msra.mxu0 %v71
  %1655 = vmatprep.subr.mxu0 0.0
  %1656 = vmatpush1.msra.mxu0 %v70
  %1657 = vmatprep.subr.mxu0 0.0
  %1658 = vmatpush2.msra.mxu0 0.0
  %1659 = vmatprep.subr.mxu0 0.0
  %1660 = vmatpush2.msra.mxu0 0.0
  %1661 = vmatprep.subr.mxu0 0.0
  %1662 = vmatpush2.msra.mxu0 0.0
  %1663 = vmatprep.subr.mxu0 0.0
  %1664 = vmatpush2.msra.mxu0 0.0
  %1665 = vmatprep.subr.mxu0 0.0
  %1666 = vmatpush2.msra.mxu0 0.0
  %1667 = vmatprep.subr.mxu0 0.0
  %1668 = vmatpush2.msra.mxu0 0.0
  %1669 = vmatprep.subr.mxu0 0.0
  %1670 = vmatpush2.msra.mxu0 0.0
  %1671 = vmatprep.subr.mxu0 0.0
  %1672 = vmatpush2.msra.mxu0 0.0
  %1673 = vmatprep.subr.mxu0 0.0
  %1674 = vmatpush2.msra.mxu0 0.0
  %1675 = vmatprep.subr.mxu0 0.0
  %1676 = vmatpush2.msra.mxu0 0.0
  %1677 = vmatprep.subr.mxu0 0.0
  %1678 = vmatpush2.msra.mxu0 0.0
  %1679 = vmatprep.subr.mxu0 0.0
  %1680 = vmatpush2.msra.mxu0 0.0
  %1681 = vmatprep.subr.mxu0 0.0
  %1682 = vmatpush2.msra.mxu0 0.0
  %1683 = vmatprep.subr.mxu0 0.0
  %1684 = vmatpush2.msra.mxu0 0.0
  %1685 = vmatprep.subr.mxu0 0.0
  %1686 = vmatpush2.msra.mxu0 0.0
  %1687 = vmatprep.subr.mxu0 0.0
  %1688 = vmatpush2.msra.mxu0 0.0
  %1689 = vmatprep.mubr.f32.mxu0 0.0
  %1690 = vmatmul.mubr.f32.gmra.mxu0 %v1470
  %v1691 = vpop.f32.mrf.mxu0
  %v1692 = vadd.f32 0.0, %v1691
  %v1693 = vpop.f32.mrf.mxu0
  %1694 = vmatprep.mubr.f32.mxu0 0.0
  %1695 = vmatmul.mubr.f32.gmra.mxu0 %v1473
  %v1696 = vpop.f32.mrf.mxu0
  %v1697 = vadd.f32 0.0, %v1696
  %v1698 = vpop.f32.mrf.mxu0
  %1699 = vdwg.mxu0
  %1700 = vmatprep.subr.mxu0 0.0
  %1701 = vmatpush1.msra.mxu0 0.0
  %1702 = vmatprep.subr.mxu0 0.0
  %1703 = vmatpush1.msra.mxu0 0.0
  %1704 = vmatprep.subr.mxu0 0.0
  %1705 = vmatpush1.msra.mxu0 0.0
  %1706 = vmatprep.subr.mxu0 0.0
  %1707 = vmatpush1.msra.mxu0 0.0
  %1708 = vmatprep.subr.mxu0 0.0
  %1709 = vmatpush1.msra.mxu0 0.0
  %1710 = vmatprep.subr.mxu0 0.0
  %1711 = vmatpush1.msra.mxu0 0.0
  %1712 = vmatprep.subr.mxu0 0.0
  %1713 = vmatpush1.msra.mxu0 0.0
  %1714 = vmatprep.subr.mxu0 0.0
  %1715 = vmatpush1.msra.mxu0 0.0
  %1716 = vmatprep.subr.mxu0 0.0
  %1717 = vmatpush1.msra.mxu0 0.0
  %1718 = vmatprep.subr.mxu0 0.0
  %1719 = vmatpush1.msra.mxu0 0.0
  %1720 = vmatprep.subr.mxu0 0.0
  %1721 = vmatpush1.msra.mxu0 0.0
  %1722 = vmatprep.subr.mxu0 0.0
  %1723 = vmatpush1.msra.mxu0 0.0
  %1724 = vmatprep.subr.mxu0 0.0
  %1725 = vmatpush1.msra.mxu0 0.0
  %1726 = vmatprep.subr.mxu0 0.0
  %1727 = vmatpush1.msra.mxu0 0.0
  %1728 = vmatprep.subr.mxu0 0.0
  %1729 = vmatpush1.msra.mxu0 %v73
  %1730 = vmatprep.subr.mxu0 0.0
  %1731 = vmatpush1.msra.mxu0 %v72
  %1732 = vmatprep.subr.mxu0 0.0
  %1733 = vmatpush2.msra.mxu0 0.0
  %1734 = vmatprep.subr.mxu0 0.0
  %1735 = vmatpush2.msra.mxu0 0.0
  %1736 = vmatprep.subr.mxu0 0.0
  %1737 = vmatpush2.msra.mxu0 0.0
  %1738 = vmatprep.subr.mxu0 0.0
  %1739 = vmatpush2.msra.mxu0 0.0
  %1740 = vmatprep.subr.mxu0 0.0
  %1741 = vmatpush2.msra.mxu0 0.0
  %1742 = vmatprep.subr.mxu0 0.0
  %1743 = vmatpush2.msra.mxu0 0.0
  %1744 = vmatprep.subr.mxu0 0.0
  %1745 = vmatpush2.msra.mxu0 0.0
  %1746 = vmatprep.subr.mxu0 0.0
  %1747 = vmatpush2.msra.mxu0 0.0
  %1748 = vmatprep.subr.mxu0 0.0
  %1749 = vmatpush2.msra.mxu0 0.0
  %1750 = vmatprep.subr.mxu0 0.0
  %1751 = vmatpush2.msra.mxu0 0.0
  %1752 = vmatprep.subr.mxu0 0.0
  %1753 = vmatpush2.msra.mxu0 0.0
  %1754 = vmatprep.subr.mxu0 0.0
  %1755 = vmatpush2.msra.mxu0 0.0
  %1756 = vmatprep.subr.mxu0 0.0
  %1757 = vmatpush2.msra.mxu0 0.0
  %1758 = vmatprep.subr.mxu0 0.0
  %1759 = vmatpush2.msra.mxu0 0.0
  %1760 = vmatprep.subr.mxu0 0.0
  %1761 = vmatpush2.msra.mxu0 0.0
  %1762 = vmatprep.subr.mxu0 0.0
  %1763 = vmatpush2.msra.mxu0 0.0
  %1764 = vmatprep.mubr.f32.mxu0 0.0
  %1765 = vmatmul.mubr.f32.gmra.mxu0 %v1470
  %v1766 = vpop.f32.mrf.mxu0
  %v1767 = vadd.f32 0.0, %v1766
  %v1768 = vpop.f32.mrf.mxu0
  %1769 = vmatprep.mubr.f32.mxu0 0.0
  %1770 = vmatmul.mubr.f32.gmra.mxu0 %v1473
  %v1771 = vpop.f32.mrf.mxu0
  %v1772 = vadd.f32 0.0, %v1771
  %v1773 = vpop.f32.mrf.mxu0
  %1774 = vdwg.mxu0
  %v1775 = vadd.f32 %v1459, %v1542
  %v1776 = vadd.f32 %v1460, %v1547
  %v1777 = vadd.f32 %v1461, %v1617
  %v1778 = vadd.f32 %v1462, %v1622
  %v1779 = vadd.f32 %v1463, %v1692
  %v1780 = vadd.f32 %v1464, %v1697
  %v1781 = vadd.f32 %v1465, %v1767
  %v1782 = vadd.f32 %v1466, %v1772
  %v1783 = vsub.f32 %v1775, %v275
  %v1784 = vsub.f32 %v1776, %v276
  %v1785 = vsub.f32 %v1777, %v277
  %v1786 = vsub.f32 %v1778, %v278
  %v1787 = vsub.f32 %v1779, %v279
  %v1788 = vsub.f32 %v1780, %v280
  %v1789 = vsub.f32 %v1781, %v281
  %v1790 = vsub.f32 %v1782, %v282
  %1791 = vst.msk [vmem:[%s14] sm:$0xff] %vm74, %v1783
  %1792 = vst.msk [vmem:[%s14 + $0x8] sm:$0xff] %vm74, %v1784
  %1793 = vst.msk [vmem:[%s14 + $0x10] sm:$0xff] %vm74, %v1785
  %1794 = vst.msk [vmem:[%s14 + $0x18] sm:$0xff] %vm74, %v1786
  %1795 = vst.msk [vmem:[%s14 + $0x20] sm:$0xff] %vm74, %v1787
  %1796 = vst.msk [vmem:[%s14 + $0x28] sm:$0xff] %vm74, %v1788
  %1797 = vst.msk [vmem:[%s14 + $0x30] sm:$0xff] %vm74, %v1789
  %1798 = vst.msk [vmem:[%s14 + $0x38] sm:$0xff] %vm74, %v1790
  // Predicated region
  $region42: #{forward.7} parent=0 // pred_check
    _
  $region43: #{forward.7} parent=0 // pred_check_branch
    %1800 = sbr.rel (0) target = $region45
  $region44: #{forward.7} parent=0 // pred_region
    _
  $region45: #{forward.7} parent=0 // pred_fallthru
    _
  // Predicated region
  $region46: #{forward.7} parent=0 // pred_check
    _
  $region47: #{forward.7} parent=0 // pred_check_branch
    %1802 = sbr.rel (0) target = $region49
  $region48: #{forward.7} parent=0 // pred_region
    _
  $region49: #{forward.7} parent=0 // pred_fallthru
    _
  // Predicated region
  $region50: #{forward.7} parent=0 // pred_check
    _
  $region51: #{forward.7} parent=0 // pred_check_branch
    %1804 = sbr.rel (0) target = $region53
  $region52: #{forward.7} parent=0 // pred_region
    _
  $region53: #{forward.7} parent=0 // pred_fallthru
    _
  // Predicated region
  $region54: #{forward.7} parent=0 // pred_check
    _
  $region55: #{forward.7} parent=0 // pred_check_branch
    %1806 = sbr.rel (0) target = $region57
  $region56: #{forward.7} parent=0 // pred_region
    _
  $region57: #{forward.7} parent=0 // pred_fallthru
    _
  // Predicated region
  $region58: #{forward.7} parent=0 // pred_check
    _
  $region59: #{forward.7} parent=0 // pred_check_branch
    %1808 = sbr.rel (0) target = $region61
  $region60: #{forward.7} parent=0 // pred_region
    _
  $region61: #{forward.7} parent=0 // pred_fallthru
    _
  // Predicated region
  $region62: #{forward.7} parent=0 // pred_check
    _
  $region63: #{forward.7} parent=0 // pred_check_branch
    %1810 = sbr.rel (0) target = $region65
  $region64: #{forward.7} parent=0 // pred_region
    _
  $region65: #{forward.7} parent=0 // pred_fallthru
    _
  // Predicated region
  $region66: #{forward.7} parent=0 // pred_check
    _
  $region67: #{forward.7} parent=0 // pred_check_branch
    %1812 = sbr.rel (0) target = $region69
  $region68: #{forward.7} parent=0 // pred_region
    _
  $region69: #{forward.7} parent=0 // pred_fallthru
    _
  // Predicated region
  $region70: #{forward.7} parent=0 // pred_check
    _
  $region71: #{forward.7} parent=0 // pred_check_branch
    %1814 = sbr.rel (0) target = $region73
  $region72: #{forward.7} parent=0 // pred_region
    _
  $region73: #{forward.7} parent=0 // pred_fallthru
    _
  // Predicated region
  $region74: #{forward.7} parent=0 // pred_check
    _
  $region75: #{forward.7} parent=0 // pred_check_branch
    %1816 = sbr.rel (0) target = $region77
  $region76: #{forward.7} parent=0 // pred_region
    _
  $region77: #{forward.7} parent=0 // pred_fallthru
    _
  // Predicated region
  $region78: #{forward.7} parent=0 // pred_check
    _
  $region79: #{forward.7} parent=0 // pred_check_branch
    %1818 = sbr.rel (0) target = $region81
  $region80: #{forward.7} parent=0 // pred_region
    _
  $region81: #{forward.7} parent=0 // pred_fallthru
    _
  // Predicated region
  $region82: #{forward.7} parent=0 // pred_check
    _
  $region83: #{forward.7} parent=0 // pred_check_branch
    %1820 = sbr.rel (0) target = $region85
  $region84: #{forward.7} parent=0 // pred_region
    _
  $region85: #{forward.7} parent=0 // pred_fallthru
    _
  // Predicated region
  $region86: #{forward.7} parent=0 // pred_check
    _
  $region87: #{forward.7} parent=0 // pred_check_branch
    %1822 = sbr.rel (0) target = $region89
  $region88: #{forward.7} parent=0 // pred_region
    _
  $region89: #{forward.7} parent=0 // pred_fallthru
    _
  // Predicated region
  $region90: #{forward.7} parent=0 // pred_check
    _
  $region91: #{forward.7} parent=0 // pred_check_branch
    %1824 = sbr.rel (0) target = $region93
  $region92: #{forward.7} parent=0 // pred_region
    _
  $region93: #{forward.7} parent=0 // pred_fallthru
    _
  // Predicated region
  $region94: #{forward.7} parent=0 // pred_check
    _
  $region95: #{forward.7} parent=0 // pred_check_branch
    %1826 = sbr.rel (0) target = $region97
  $region96: #{forward.7} parent=0 // pred_region
    _
  $region97: #{forward.7} parent=0 // pred_fallthru
    _

// kernel: forward.9
$region0: #{forward.9}
  #allocation0 [shape = 'u32[]', space=smem, size = 0x4, offset = 0x4, fixed_abs, tag = 'smem constant byte address 0x4 - core index']
  #allocation1 [shape = 'u32[144,128]{1,0:T(1,128)}', space=vmem, size = 0x12000, scoped, tag = 'internal scratch']
  %s0 = inlined_call_operand.vmem [shape: f32[4,16,16], index: 0, kind: input, shape index: {}, may-alias: {0,10}]
  %s1 = inlined_call_operand.vmem [shape: f32[4,16,16], index: 1, kind: input, shape index: {}, may-alias: {1,11}]
  %s2 = inlined_call_operand.vmem [shape: f32[4,16,16], index: 2, kind: input, shape index: {}, may-alias: {2,13}]
  %s3 = inlined_call_operand.vmem [shape: f32[4,16,16], index: 3, kind: input, shape index: {}, may-alias: {3,12}]
  %s4 = inlined_call_operand.vmem [shape: f32[4,16,16], index: 4, kind: input, shape index: {}, may-alias: {4,14}]
  %s5 = inlined_call_operand.vmem [shape: f32[4,32,128], index: 5, kind: input, shape index: {}, may-alias: {5,16}]
  %s6 = inlined_call_operand.vmem [shape: f32[32,16], index: 6, kind: input, shape index: {}]
  %s7 = inlined_call_operand.vmem [shape: f32[16,128], index: 7, kind: input, shape index: {}]
  %s8 = inlined_call_operand.vmem [shape: f32[16,16], index: 8, kind: input, shape index: {}]
  %s9 = inlined_call_operand.vmem [shape: f32[16,16], index: 9, kind: input, shape index: {}]
  %s10 = inlined_call_operand.vmem [shape: f32[4,16,16], index: 10, kind: output, shape index: {0}, may-alias: {0,10}]
  %s11 = inlined_call_operand.vmem [shape: f32[4,16,16], index: 11, kind: output, shape index: {1}, may-alias: {1,11}]
  %s12 = inlined_call_operand.vmem [shape: f32[4,16,16], index: 12, kind: output, shape index: {2}, may-alias: {3,12}]
  %s13 = inlined_call_operand.vmem [shape: f32[4,16,16], index: 13, kind: output, shape index: {3}, may-alias: {2,13}]
  %s14 = inlined_call_operand.vmem [shape: f32[4,16,16], index: 14, kind: output, shape index: {4}, may-alias: {4,14}]
  %s15 = inlined_call_operand.hbm [shape: f32[4,32,128], index: 15, kind: output, shape index: {5}]
  %s16 = inlined_call_operand.vmem [shape: f32[4,32,128], index: 16, kind: output, shape index: {6}, may-alias: {5,16}]
  %17 = xla_tuple %s10, %s11, %s12, %s13, %s14, %s15, %s16
  %s18 = sld [smem:[#allocation0]]
  $region98: #{forward.9} parent=0
    _
  %s20 = ssub.s32 1, %s18
  %s21 = scalar_select 0, %s20, %s18
  $region1: #{forward.9} parent=0
    #allocation2 [shape = 'u8[65536]{0}', space=vmem, size = 0x10000, scoped, tag = 'output window, operand 5, single buffered']
    #allocation3 [shape = 's32[1]{0}', space=sflag, size = 0x4, scoped, tag = 'scoped memory for forward.9']
    %22 = vsyncpa [#allocation3], 0
    // Predicated region
    $region2: #{forward.9} parent=1 // pred_check
      _
    $region3: #{forward.9} parent=1 // pred_check_branch
      %24 = sbr.rel (0) target = $region5
    $region4: #{forward.9} parent=1 // pred_region
      _
    $region5: #{forward.9} parent=1 // pred_fallthru
      _
    // Predicated region
    $region6: #{forward.9} parent=1 // pred_check
      _
    $region7: #{forward.9} parent=1 // pred_check_branch
      %26 = sbr.rel (0) target = $region9
    $region8: #{forward.9} parent=1 // pred_region
      _
    $region9: #{forward.9} parent=1 // pred_fallthru
      _
    // Predicated region
    $region10: #{forward.9} parent=1 // pred_check
      _
    $region11: #{forward.9} parent=1 // pred_check_branch
      %28 = sbr.rel (0) target = $region13
    $region12: #{forward.9} parent=1 // pred_region
      _
    $region13: #{forward.9} parent=1 // pred_fallthru
      _
    // Predicated region
    $region14: #{forward.9} parent=1 // pred_check
      _
    $region15: #{forward.9} parent=1 // pred_check_branch
      %30 = sbr.rel (0) target = $region17
    $region16: #{forward.9} parent=1 // pred_region
      _
    $region17: #{forward.9} parent=1 // pred_fallthru
      _
    // Predicated region
    $region18: #{forward.9} parent=1 // pred_check
      _
    $region19: #{forward.9} parent=1 // pred_check_branch
      %32 = sbr.rel (0) target = $region21
    $region20: #{forward.9} parent=1 // pred_region
      _
    $region21: #{forward.9} parent=1 // pred_fallthru
      _
    // Predicated region
    $region22: #{forward.9} parent=1 // pred_check
      _
    $region23: #{forward.9} parent=1 // pred_check_branch
      %34 = sbr.rel (0) target = $region25
    $region24: #{forward.9} parent=1 // pred_region
      _
    $region25: #{forward.9} parent=1 // pred_fallthru
      _
    // Predicated region
    $region26: #{forward.9} parent=1 // pred_check
      _
    $region27: #{forward.9} parent=1 // pred_check_branch
      %36 = sbr.rel (0) target = $region29
    $region28: #{forward.9} parent=1 // pred_region
      _
    $region29: #{forward.9} parent=1 // pred_fallthru
      _
    // Predicated region
    $region30: #{forward.9} parent=1 // pred_check
      _
    $region31: #{forward.9} parent=1 // pred_check_branch
      %38 = sbr.rel (0) target = $region33
    $region32: #{forward.9} parent=1 // pred_region
      _
    $region33: #{forward.9} parent=1 // pred_fallthru
      _
    // Predicated region
    $region34: #{forward.9} parent=1 // pred_check
      _
    $region35: #{forward.9} parent=1 // pred_check_branch
      %40 = sbr.rel (0) target = $region37
    $region36: #{forward.9} parent=1 // pred_region
      _
    $region37: #{forward.9} parent=1 // pred_fallthru
      _
    // Predicated region
    $region38: #{forward.9} parent=1 // pred_check
      _
    $region39: #{forward.9} parent=1 // pred_check_branch
      %42 = sbr.rel (0) target = $region41
    $region40: #{forward.9} parent=1 // pred_region
      _
    $region41: #{forward.9} parent=1 // pred_fallthru
      _
    %v43 = vld [vmem:[%s0] sm:$0xff]
    %v44 = vld [vmem:[%s0 + $0x8] sm:$0xff]
    %v45 = vld [vmem:[%s0 + $0x10] sm:$0xff]
    %v46 = vld [vmem:[%s0 + $0x18] sm:$0xff]
    %v47 = vld [vmem:[%s0 + $0x20] sm:$0xff]
    %v48 = vld [vmem:[%s0 + $0x28] sm:$0xff]
    %v49 = vld [vmem:[%s0 + $0x30] sm:$0xff]
    %v50 = vld [vmem:[%s0 + $0x38] sm:$0xff]
    %vm51 = vcmp.ge.f32.partialorder %v43, 0.0
    %vm52 = vcmp.ge.f32.partialorder %v44, 0.0
    %vm53 = vcmp.ge.f32.partialorder %v45, 0.0
    %vm54 = vcmp.ge.f32.partialorder %v46, 0.0
    %vm55 = vcmp.ge.f32.partialorder %v47, 0.0
    %vm56 = vcmp.ge.f32.partialorder %v48, 0.0
    %vm57 = vcmp.ge.f32.partialorder %v49, 0.0
    %vm58 = vcmp.ge.f32.partialorder %v50, 0.0
    %v59 = vmul.f32 %v43, 0.2
    %v60 = vmul.f32 %v44, 0.2
    %v61 = vmul.f32 %v45, 0.2
    %v62 = vmul.f32 %v46, 0.2
    %v63 = vmul.f32 %v47, 0.2
    %v64 = vmul.f32 %v48, 0.2
    %v65 = vmul.f32 %v49, 0.2
    %v66 = vmul.f32 %v50, 0.2
    %v67 = vsel %vm51, %v43, %v59
    %v68 = vsel %vm52, %v44, %v60
    %v69 = vsel %vm53, %v45, %v61
    %v70 = vsel %vm54, %v46, %v62
    %v71 = vsel %vm55, %v47, %v63
    %v72 = vsel %vm56, %v48, %v64
    %v73 = vsel %vm57, %v49, %v65
    %v74 = vsel %vm58, %v50, %v66
    %vm75 = vcmask 130048
    %76 = vst.msk [vmem:[%s10] sm:$0xff] %vm75, %v67
    %77 = vst.msk [vmem:[%s10 + $0x8] sm:$0xff] %vm75, %v68
    %78 = vst.msk [vmem:[%s10 + $0x10] sm:$0xff] %vm75, %v69
    %79 = vst.msk [vmem:[%s10 + $0x18] sm:$0xff] %vm75, %v70
    %80 = vst.msk [vmem:[%s10 + $0x20] sm:$0xff] %vm75, %v71
    %81 = vst.msk [vmem:[%s10 + $0x28] sm:$0xff] %vm75, %v72
    %82 = vst.msk [vmem:[%s10 + $0x30] sm:$0xff] %vm75, %v73
    %83 = vst.msk [vmem:[%s10 + $0x38] sm:$0xff] %vm75, %v74
    %v84 = vld [vmem:[%s1] sm:$0xff]
    %v85 = vld [vmem:[%s1 + $0x8] sm:$0xff]
    %v86 = vld [vmem:[%s1 + $0x10] sm:$0xff]
    %v87 = vld [vmem:[%s1 + $0x18] sm:$0xff]
    %v88 = vld [vmem:[%s1 + $0x20] sm:$0xff]
    %v89 = vld [vmem:[%s1 + $0x28] sm:$0xff]
    %v90 = vld [vmem:[%s1 + $0x30] sm:$0xff]
    %v91 = vld [vmem:[%s1 + $0x38] sm:$0xff]
    %v92 = vld [vmem:[%s2] sm:$0xff]
    %v93 = vld [vmem:[%s2 + $0x8] sm:$0xff]
    %v94 = vld [vmem:[%s2 + $0x10] sm:$0xff]
    %v95 = vld [vmem:[%s2 + $0x18] sm:$0xff]
    %v96 = vld [vmem:[%s2 + $0x20] sm:$0xff]
    %v97 = vld [vmem:[%s2 + $0x28] sm:$0xff]
    %v98 = vld [vmem:[%s2 + $0x30] sm:$0xff]
    %v99 = vld [vmem:[%s2 + $0x38] sm:$0xff]
    %v100 = vadd.f32 %v84, %v92
    %v101 = vadd.f32 %v85, %v93
    %v102 = vadd.f32 %v86, %v94
    %v103 = vadd.f32 %v87, %v95
    %v104 = vadd.f32 %v88, %v96
    %v105 = vadd.f32 %v89, %v97
    %v106 = vadd.f32 %v90, %v98
    %v107 = vadd.f32 %v91, %v99
    %v108 = vld [vmem:[%s3] sm:$0xff]
    %v109 = vld [vmem:[%s3 + $0x8] sm:$0xff]
    %v110 = vld [vmem:[%s3 + $0x10] sm:$0xff]
    %v111 = vld [vmem:[%s3 + $0x18] sm:$0xff]
    %v112 = vld [vmem:[%s3 + $0x20] sm:$0xff]
    %v113 = vld [vmem:[%s3 + $0x28] sm:$0xff]
    %v114 = vld [vmem:[%s3 + $0x30] sm:$0xff]
    %v115 = vld [vmem:[%s3 + $0x38] sm:$0xff]
    %v116 = vld [vmem:[%s4] sm:$0xff]
    %v117 = vld [vmem:[%s4 + $0x8] sm:$0xff]
    %v118 = vld [vmem:[%s4 + $0x10] sm:$0xff]
    %v119 = vld [vmem:[%s4 + $0x18] sm:$0xff]
    %v120 = vld [vmem:[%s4 + $0x20] sm:$0xff]
    %v121 = vld [vmem:[%s4 + $0x28] sm:$0xff]
    %v122 = vld [vmem:[%s4 + $0x30] sm:$0xff]
    %v123 = vld [vmem:[%s4 + $0x38] sm:$0xff]
    %v124 = vadd.f32 %v108, %v116
    %v125 = vadd.f32 %v109, %v117
    %v126 = vadd.f32 %v110, %v118
    %v127 = vadd.f32 %v111, %v119
    %v128 = vadd.f32 %v112, %v120
    %v129 = vadd.f32 %v113, %v121
    %v130 = vadd.f32 %v114, %v122
    %v131 = vadd.f32 %v115, %v123
    %v132 = vmul.f32 %v100, %v100
    %v133 = vmul.f32 %v101, %v101
    %v134 = vmul.f32 %v102, %v102
    %v135 = vmul.f32 %v103, %v103
    %v136 = vmul.f32 %v104, %v104
    %v137 = vmul.f32 %v105, %v105
    %v138 = vmul.f32 %v106, %v106
    %v139 = vmul.f32 %v107, %v107
    %v140 = vmul.f32 %v124, %v124
    %v141 = vmul.f32 %v125, %v125
    %v142 = vmul.f32 %v126, %v126
    %v143 = vmul.f32 %v127, %v127
    %v144 = vmul.f32 %v128, %v128
    %v145 = vmul.f32 %v129, %v129
    %v146 = vmul.f32 %v130, %v130
    %v147 = vmul.f32 %v131, %v131
    %v148 = vadd.f32 %v132, %v140
    %v149 = vadd.f32 %v133, %v141
    %v150 = vadd.f32 %v134, %v142
    %v151 = vadd.f32 %v135, %v143
    %v152 = vadd.f32 %v136, %v144
    %v153 = vadd.f32 %v137, %v145
    %v154 = vadd.f32 %v138, %v146
    %v155 = vadd.f32 %v139, %v147
    %v156 = vrsqrt.pop %v148
    %v157 = vmul.f32 %v148, %v156
    %vm158 = vcmp.eq.f32.partialorder %v148, inf
    %v159 = vsel %vm158, %v148, %v157
    %vm160 = vcmp.eq.f32.partialorder %v148, 0.0
    %v161 = vand.u32 %v148, 2147483648
    %v162 = vsel %vm160, %v161, %v159
    %v163 = vrsqrt.pop %v149
    %v164 = vmul.f32 %v149, %v163
    %vm165 = vcmp.eq.f32.partialorder %v149, inf
    %v166 = vsel %vm165, %v149, %v164
    %vm167 = vcmp.eq.f32.partialorder %v149, 0.0
    %v168 = vand.u32 %v149, 2147483648
    %v169 = vsel %vm167, %v168, %v166
    %v170 = vrsqrt.pop %v150
    %v171 = vmul.f32 %v150, %v170
    %vm172 = vcmp.eq.f32.partialorder %v150, inf
    %v173 = vsel %vm172, %v150, %v171
    %vm174 = vcmp.eq.f32.partialorder %v150, 0.0
    %v175 = vand.u32 %v150, 2147483648
    %v176 = vsel %vm174, %v175, %v173
    %v177 = vrsqrt.pop %v151
    %v178 = vmul.f32 %v151, %v177
    %vm179 = vcmp.eq.f32.partialorder %v151, inf
    %v180 = vsel %vm179, %v151, %v178
    %vm181 = vcmp.eq.f32.partialorder %v151, 0.0
    %v182 = vand.u32 %v151, 2147483648
    %v183 = vsel %vm181, %v182, %v180
    %v184 = vrsqrt.pop %v152
    %v185 = vmul.f32 %v152, %v184
    %vm186 = vcmp.eq.f32.partialorder %v152, inf
    %v187 = vsel %vm186, %v152, %v185
    %vm188 = vcmp.eq.f32.partialorder %v152, 0.0
    %v189 = vand.u32 %v152, 2147483648
    %v190 = vsel %vm188, %v189, %v187
    %v191 = vrsqrt.pop %v153
    %v192 = vmul.f32 %v153, %v191
    %vm193 = vcmp.eq.f32.partialorder %v153, inf
    %v194 = vsel %vm193, %v153, %v192
    %vm195 = vcmp.eq.f32.partialorder %v153, 0.0
    %v196 = vand.u32 %v153, 2147483648
    %v197 = vsel %vm195, %v196, %v194
    %v198 = vrsqrt.pop %v154
    %v199 = vmul.f32 %v154, %v198
    %vm200 = vcmp.eq.f32.partialorder %v154, inf
    %v201 = vsel %vm200, %v154, %v199
    %vm202 = vcmp.eq.f32.partialorder %v154, 0.0
    %v203 = vand.u32 %v154, 2147483648
    %v204 = vsel %vm202, %v203, %v201
    %v205 = vrsqrt.pop %v155
    %v206 = vmul.f32 %v155, %v205
    %vm207 = vcmp.eq.f32.partialorder %v155, inf
    %v208 = vsel %vm207, %v155, %v206
    %vm209 = vcmp.eq.f32.partialorder %v155, 0.0
    %v210 = vand.u32 %v155, 2147483648
    %v211 = vsel %vm209, %v210, %v208
    %v212 = vmul.f32 %v162, 3.0
    %v213 = vmul.f32 %v169, 3.0
    %v214 = vmul.f32 %v176, 3.0
    %v215 = vmul.f32 %v183, 3.0
    %v216 = vmul.f32 %v190, 3.0
    %v217 = vmul.f32 %v197, 3.0
    %v218 = vmul.f32 %v204, 3.0
    %v219 = vmul.f32 %v211, 3.0
    %v220 = vsub.f32 %v100, %v212
    %v221 = vsub.f32 %v101, %v213
    %v222 = vsub.f32 %v102, %v214
    %v223 = vsub.f32 %v103, %v215
    %v224 = vsub.f32 %v104, %v216
    %v225 = vsub.f32 %v105, %v217
    %v226 = vsub.f32 %v106, %v218
    %v227 = vsub.f32 %v107, %v219
    %vm228 = vcmp.ge.f32.partialorder %v220, 0.0
    %vm229 = vcmp.ge.f32.partialorder %v221, 0.0
    %vm230 = vcmp.ge.f32.partialorder %v222, 0.0
    %vm231 = vcmp.ge.f32.partialorder %v223, 0.0
    %vm232 = vcmp.ge.f32.partialorder %v224, 0.0
    %vm233 = vcmp.ge.f32.partialorder %v225, 0.0
    %vm234 = vcmp.ge.f32.partialorder %v226, 0.0
    %vm235 = vcmp.ge.f32.partialorder %v227, 0.0
    %v236 = vmul.f32 %v220, 0.2
    %v237 = vmul.f32 %v221, 0.2
    %v238 = vmul.f32 %v222, 0.2
    %v239 = vmul.f32 %v223, 0.2
    %v240 = vmul.f32 %v224, 0.2
    %v241 = vmul.f32 %v225, 0.2
    %v242 = vmul.f32 %v226, 0.2
    %v243 = vmul.f32 %v227, 0.2
    %v244 = vsel %vm228, %v220, %v236
    %v245 = vsel %vm229, %v221, %v237
    %v246 = vsel %vm230, %v222, %v238
    %v247 = vsel %vm231, %v223, %v239
    %v248 = vsel %vm232, %v224, %v240
    %v249 = vsel %vm233, %v225, %v241
    %v250 = vsel %vm234, %v226, %v242
    %v251 = vsel %vm235, %v227, %v243
    %v252 = vsub.f32 %v124, %v212
    %v253 = vsub.f32 %v125, %v213
    %v254 = vsub.f32 %v126, %v214
    %v255 = vsub.f32 %v127, %v215
    %v256 = vsub.f32 %v128, %v216
    %v257 = vsub.f32 %v129, %v217
    %v258 = vsub.f32 %v130, %v218
    %v259 = vsub.f32 %v131, %v219
    %vm260 = vcmp.ge.f32.partialorder %v252, 0.0
    %vm261 = vcmp.ge.f32.partialorder %v253, 0.0
    %vm262 = vcmp.ge.f32.partialorder %v254, 0.0
    %vm263 = vcmp.ge.f32.partialorder %v255, 0.0
    %vm264 = vcmp.ge.f32.partialorder %v256, 0.0
    %vm265 = vcmp.ge.f32.partialorder %v257, 0.0
    %vm266 = vcmp.ge.f32.partialorder %v258, 0.0
    %vm267 = vcmp.ge.f32.partialorder %v259, 0.0
    %v268 = vmul.f32 %v252, 0.2
    %v269 = vmul.f32 %v253, 0.2
    %v270 = vmul.f32 %v254, 0.2
    %v271 = vmul.f32 %v255, 0.2
    %v272 = vmul.f32 %v256, 0.2
    %v273 = vmul.f32 %v257, 0.2
    %v274 = vmul.f32 %v258, 0.2
    %v275 = vmul.f32 %v259, 0.2
    %v276 = vsel %vm260, %v252, %v268
    %v277 = vsel %vm261, %v253, %v269
    %v278 = vsel %vm262, %v254, %v270
    %v279 = vsel %vm263, %v255, %v271
    %v280 = vsel %vm264, %v256, %v272
    %v281 = vsel %vm265, %v257, %v273
    %v282 = vsel %vm266, %v258, %v274
    %v283 = vsel %vm267, %v259, %v275
    %284 = vst.msk [vmem:[%s11] sm:$0xff] %vm75, %v244
    %285 = vst.msk [vmem:[%s11 + $0x8] sm:$0xff] %vm75, %v245
    %286 = vst.msk [vmem:[%s11 + $0x10] sm:$0xff] %vm75, %v246
    %287 = vst.msk [vmem:[%s11 + $0x18] sm:$0xff] %vm75, %v247
    %288 = vst.msk [vmem:[%s11 + $0x20] sm:$0xff] %vm75, %v248
    %289 = vst.msk [vmem:[%s11 + $0x28] sm:$0xff] %vm75, %v249
    %290 = vst.msk [vmem:[%s11 + $0x30] sm:$0xff] %vm75, %v250
    %291 = vst.msk [vmem:[%s11 + $0x38] sm:$0xff] %vm75, %v251
    %292 = vst.msk [vmem:[%s12] sm:$0xff] %vm75, %v276
    %293 = vst.msk [vmem:[%s12 + $0x8] sm:$0xff] %vm75, %v277
    %294 = vst.msk [vmem:[%s12 + $0x10] sm:$0xff] %vm75, %v278
    %295 = vst.msk [vmem:[%s12 + $0x18] sm:$0xff] %vm75, %v279
    %296 = vst.msk [vmem:[%s12 + $0x20] sm:$0xff] %vm75, %v280
    %297 = vst.msk [vmem:[%s12 + $0x28] sm:$0xff] %vm75, %v281
    %298 = vst.msk [vmem:[%s12 + $0x30] sm:$0xff] %vm75, %v282
    %299 = vst.msk [vmem:[%s12 + $0x38] sm:$0xff] %vm75, %v283
    %v300 = vld [vmem:[%s7] sm:$0xff]
    %v301 = vld [vmem:[%s7 + $0x8] sm:$0xff]
    %v303 = vsel %vm75, %v67, 0
    %v306 = vsel %vm75, %v68, 0
    %308 = vmatprep.subr.mxu0 0.0
    %309 = vmatpush1.msra.mxu0 0.0
    %310 = vmatprep.subr.mxu0 0.0
    %311 = vmatpush1.msra.mxu0 0.0
    %312 = vmatprep.subr.mxu0 0.0
    %313 = vmatpush1.msra.mxu0 0.0
    %314 = vmatprep.subr.mxu0 0.0
    %315 = vmatpush1.msra.mxu0 0.0
    %316 = vmatprep.subr.mxu0 0.0
    %317 = vmatpush1.msra.mxu0 0.0
    %318 = vmatprep.subr.mxu0 0.0
    %319 = vmatpush1.msra.mxu0 0.0
    %320 = vmatprep.subr.mxu0 0.0
    %321 = vmatpush1.msra.mxu0 0.0
    %322 = vmatprep.subr.mxu0 0.0
    %323 = vmatpush1.msra.mxu0 0.0
    %324 = vmatprep.subr.mxu0 0.0
    %325 = vmatpush1.msra.mxu0 0.0
    %326 = vmatprep.subr.mxu0 0.0
    %327 = vmatpush1.msra.mxu0 0.0
    %328 = vmatprep.subr.mxu0 0.0
    %329 = vmatpush1.msra.mxu0 0.0
    %330 = vmatprep.subr.mxu0 0.0
    %331 = vmatpush1.msra.mxu0 0.0
    %332 = vmatprep.subr.mxu0 0.0
    %333 = vmatpush1.msra.mxu0 0.0
    %334 = vmatprep.subr.mxu0 0.0
    %335 = vmatpush1.msra.mxu0 0.0
    %336 = vmatprep.subr.mxu0 0.0
    %337 = vmatpush1.msra.mxu0 %v301
    %338 = vmatprep.subr.mxu0 0.0
    %339 = vmatpush1.msra.mxu0 %v300
    %340 = vmatprep.subr.mxu0 0.0
    %341 = vmatpush2.msra.mxu0 0.0
    %342 = vmatprep.subr.mxu0 0.0
    %343 = vmatpush2.msra.mxu0 0.0
    %344 = vmatprep.subr.mxu0 0.0
    %345 = vmatpush2.msra.mxu0 0.0
    %346 = vmatprep.subr.mxu0 0.0
    %347 = vmatpush2.msra.mxu0 0.0
    %348 = vmatprep.subr.mxu0 0.0
    %349 = vmatpush2.msra.mxu0 0.0
    %350 = vmatprep.subr.mxu0 0.0
    %351 = vmatpush2.msra.mxu0 0.0
    %352 = vmatprep.subr.mxu0 0.0
    %353 = vmatpush2.msra.mxu0 0.0
    %354 = vmatprep.subr.mxu0 0.0
    %355 = vmatpush2.msra.mxu0 0.0
    %356 = vmatprep.subr.mxu0 0.0
    %357 = vmatpush2.msra.mxu0 0.0
    %358 = vmatprep.subr.mxu0 0.0
    %359 = vmatpush2.msra.mxu0 0.0
    %360 = vmatprep.subr.mxu0 0.0
    %361 = vmatpush2.msra.mxu0 0.0
    %362 = vmatprep.subr.mxu0 0.0
    %363 = vmatpush2.msra.mxu0 0.0
    %364 = vmatprep.subr.mxu0 0.0
    %365 = vmatpush2.msra.mxu0 0.0
    %366 = vmatprep.subr.mxu0 0.0
    %367 = vmatpush2.msra.mxu0 0.0
    %368 = vmatprep.subr.mxu0 0.0
    %369 = vmatpush2.msra.mxu0 0.0
    %370 = vmatprep.subr.mxu0 0.0
    %371 = vmatpush2.msra.mxu0 0.0
    %372 = vmatprep.mubr.f32.mxu0 0.0
    %373 = vmatmul.mubr.f32.gmra.mxu0 %v303
    %v374 = vpop.f32.mrf.mxu0
    %v375 = vadd.f32 0.0, %v374
    %v376 = vpop.f32.mrf.mxu0
    %377 = vmatprep.mubr.f32.mxu0 0.0
    %378 = vmatmul.mubr.f32.gmra.mxu0 %v306
    %v379 = vpop.f32.mrf.mxu0
    %v380 = vadd.f32 0.0, %v379
    %v381 = vpop.f32.mrf.mxu0
    %382 = vdwg.mxu0
    %v384 = vsel %vm75, %v69, 0
    %v387 = vsel %vm75, %v70, 0
    %389 = vmatprep.subr.mxu0 0.0
    %390 = vmatpush1.msra.mxu0 0.0
    %391 = vmatprep.subr.mxu0 0.0
    %392 = vmatpush1.msra.mxu0 0.0
    %393 = vmatprep.subr.mxu0 0.0
    %394 = vmatpush1.msra.mxu0 0.0
    %395 = vmatprep.subr.mxu0 0.0
    %396 = vmatpush1.msra.mxu0 0.0
    %397 = vmatprep.subr.mxu0 0.0
    %398 = vmatpush1.msra.mxu0 0.0
    %399 = vmatprep.subr.mxu0 0.0
    %400 = vmatpush1.msra.mxu0 0.0
    %401 = vmatprep.subr.mxu0 0.0
    %402 = vmatpush1.msra.mxu0 0.0
    %403 = vmatprep.subr.mxu0 0.0
    %404 = vmatpush1.msra.mxu0 0.0
    %405 = vmatprep.subr.mxu0 0.0
    %406 = vmatpush1.msra.mxu0 0.0
    %407 = vmatprep.subr.mxu0 0.0
    %408 = vmatpush1.msra.mxu0 0.0
    %409 = vmatprep.subr.mxu0 0.0
    %410 = vmatpush1.msra.mxu0 0.0
    %411 = vmatprep.subr.mxu0 0.0
    %412 = vmatpush1.msra.mxu0 0.0
    %413 = vmatprep.subr.mxu0 0.0
    %414 = vmatpush1.msra.mxu0 0.0
    %415 = vmatprep.subr.mxu0 0.0
    %416 = vmatpush1.msra.mxu0 0.0
    %417 = vmatprep.subr.mxu0 0.0
    %418 = vmatpush1.msra.mxu0 %v301
    %419 = vmatprep.subr.mxu0 0.0
    %420 = vmatpush1.msra.mxu0 %v300
    %421 = vmatprep.subr.mxu0 0.0
    %422 = vmatpush2.msra.mxu0 0.0
    %423 = vmatprep.subr.mxu0 0.0
    %424 = vmatpush2.msra.mxu0 0.0
    %425 = vmatprep.subr.mxu0 0.0
    %426 = vmatpush2.msra.mxu0 0.0
    %427 = vmatprep.subr.mxu0 0.0
    %428 = vmatpush2.msra.mxu0 0.0
    %429 = vmatprep.subr.mxu0 0.0
    %430 = vmatpush2.msra.mxu0 0.0
    %431 = vmatprep.subr.mxu0 0.0
    %432 = vmatpush2.msra.mxu0 0.0
    %433 = vmatprep.subr.mxu0 0.0
    %434 = vmatpush2.msra.mxu0 0.0
    %435 = vmatprep.subr.mxu0 0.0
    %436 = vmatpush2.msra.mxu0 0.0
    %437 = vmatprep.subr.mxu0 0.0
    %438 = vmatpush2.msra.mxu0 0.0
    %439 = vmatprep.subr.mxu0 0.0
    %440 = vmatpush2.msra.mxu0 0.0
    %441 = vmatprep.subr.mxu0 0.0
    %442 = vmatpush2.msra.mxu0 0.0
    %443 = vmatprep.subr.mxu0 0.0
    %444 = vmatpush2.msra.mxu0 0.0
    %445 = vmatprep.subr.mxu0 0.0
    %446 = vmatpush2.msra.mxu0 0.0
    %447 = vmatprep.subr.mxu0 0.0
    %448 = vmatpush2.msra.mxu0 0.0
    %449 = vmatprep.subr.mxu0 0.0
    %450 = vmatpush2.msra.mxu0 0.0
    %451 = vmatprep.subr.mxu0 0.0
    %452 = vmatpush2.msra.mxu0 0.0
    %453 = vmatprep.mubr.f32.mxu0 0.0
    %454 = vmatmul.mubr.f32.gmra.mxu0 %v384
    %v455 = vpop.f32.mrf.mxu0
    %v456 = vadd.f32 0.0, %v455
    %v457 = vpop.f32.mrf.mxu0
    %458 = vmatprep.mubr.f32.mxu0 0.0
    %459 = vmatmul.mubr.f32.gmra.mxu0 %v387
    %v460 = vpop.f32.mrf.mxu0
    %v461 = vadd.f32 0.0, %v460
    %v462 = vpop.f32.mrf.mxu0
    %463 = vdwg.mxu0
    %v465 = vsel %vm75, %v71, 0
    %v468 = vsel %vm75, %v72, 0
    %470 = vmatprep.subr.mxu0 0.0
    %471 = vmatpush1.msra.mxu0 0.0
    %472 = vmatprep.subr.mxu0 0.0
    %473 = vmatpush1.msra.mxu0 0.0
    %474 = vmatprep.subr.mxu0 0.0
    %475 = vmatpush1.msra.mxu0 0.0
    %476 = vmatprep.subr.mxu0 0.0
    %477 = vmatpush1.msra.mxu0 0.0
    %478 = vmatprep.subr.mxu0 0.0
    %479 = vmatpush1.msra.mxu0 0.0
    %480 = vmatprep.subr.mxu0 0.0
    %481 = vmatpush1.msra.mxu0 0.0
    %482 = vmatprep.subr.mxu0 0.0
    %483 = vmatpush1.msra.mxu0 0.0
    %484 = vmatprep.subr.mxu0 0.0
    %485 = vmatpush1.msra.mxu0 0.0
    %486 = vmatprep.subr.mxu0 0.0
    %487 = vmatpush1.msra.mxu0 0.0
    %488 = vmatprep.subr.mxu0 0.0
    %489 = vmatpush1.msra.mxu0 0.0
    %490 = vmatprep.subr.mxu0 0.0
    %491 = vmatpush1.msra.mxu0 0.0
    %492 = vmatprep.subr.mxu0 0.0
    %493 = vmatpush1.msra.mxu0 0.0
    %494 = vmatprep.subr.mxu0 0.0
    %495 = vmatpush1.msra.mxu0 0.0
    %496 = vmatprep.subr.mxu0 0.0
    %497 = vmatpush1.msra.mxu0 0.0
    %498 = vmatprep.subr.mxu0 0.0
    %499 = vmatpush1.msra.mxu0 %v301
    %500 = vmatprep.subr.mxu0 0.0
    %501 = vmatpush1.msra.mxu0 %v300
    %502 = vmatprep.subr.mxu0 0.0
    %503 = vmatpush2.msra.mxu0 0.0
    %504 = vmatprep.subr.mxu0 0.0
    %505 = vmatpush2.msra.mxu0 0.0
    %506 = vmatprep.subr.mxu0 0.0
    %507 = vmatpush2.msra.mxu0 0.0
    %508 = vmatprep.subr.mxu0 0.0
    %509 = vmatpush2.msra.mxu0 0.0
    %510 = vmatprep.subr.mxu0 0.0
    %511 = vmatpush2.msra.mxu0 0.0
    %512 = vmatprep.subr.mxu0 0.0
    %513 = vmatpush2.msra.mxu0 0.0
    %514 = vmatprep.subr.mxu0 0.0
    %515 = vmatpush2.msra.mxu0 0.0
    %516 = vmatprep.subr.mxu0 0.0
    %517 = vmatpush2.msra.mxu0 0.0
    %518 = vmatprep.subr.mxu0 0.0
    %519 = vmatpush2.msra.mxu0 0.0
    %520 = vmatprep.subr.mxu0 0.0
    %521 = vmatpush2.msra.mxu0 0.0
    %522 = vmatprep.subr.mxu0 0.0
    %523 = vmatpush2.msra.mxu0 0.0
    %524 = vmatprep.subr.mxu0 0.0
    %525 = vmatpush2.msra.mxu0 0.0
    %526 = vmatprep.subr.mxu0 0.0
    %527 = vmatpush2.msra.mxu0 0.0
    %528 = vmatprep.subr.mxu0 0.0
    %529 = vmatpush2.msra.mxu0 0.0
    %530 = vmatprep.subr.mxu0 0.0
    %531 = vmatpush2.msra.mxu0 0.0
    %532 = vmatprep.subr.mxu0 0.0
    %533 = vmatpush2.msra.mxu0 0.0
    %534 = vmatprep.mubr.f32.mxu0 0.0
    %535 = vmatmul.mubr.f32.gmra.mxu0 %v465
    %v536 = vpop.f32.mrf.mxu0
    %v537 = vadd.f32 0.0, %v536
    %v538 = vpop.f32.mrf.mxu0
    %539 = vmatprep.mubr.f32.mxu0 0.0
    %540 = vmatmul.mubr.f32.gmra.mxu0 %v468
    %v541 = vpop.f32.mrf.mxu0
    %v542 = vadd.f32 0.0, %v541
    %v543 = vpop.f32.mrf.mxu0
    %544 = vdwg.mxu0
    %v546 = vsel %vm75, %v73, 0
    %v549 = vsel %vm75, %v74, 0
    %551 = vmatprep.subr.mxu0 0.0
    %552 = vmatpush1.msra.mxu0 0.0
    %553 = vmatprep.subr.mxu0 0.0
    %554 = vmatpush1.msra.mxu0 0.0
    %555 = vmatprep.subr.mxu0 0.0
    %556 = vmatpush1.msra.mxu0 0.0
    %557 = vmatprep.subr.mxu0 0.0
    %558 = vmatpush1.msra.mxu0 0.0
    %559 = vmatprep.subr.mxu0 0.0
    %560 = vmatpush1.msra.mxu0 0.0
    %561 = vmatprep.subr.mxu0 0.0
    %562 = vmatpush1.msra.mxu0 0.0
    %563 = vmatprep.subr.mxu0 0.0
    %564 = vmatpush1.msra.mxu0 0.0
    %565 = vmatprep.subr.mxu0 0.0
    %566 = vmatpush1.msra.mxu0 0.0
    %567 = vmatprep.subr.mxu0 0.0
    %568 = vmatpush1.msra.mxu0 0.0
    %569 = vmatprep.subr.mxu0 0.0
    %570 = vmatpush1.msra.mxu0 0.0
    %571 = vmatprep.subr.mxu0 0.0
    %572 = vmatpush1.msra.mxu0 0.0
    %573 = vmatprep.subr.mxu0 0.0
    %574 = vmatpush1.msra.mxu0 0.0
    %575 = vmatprep.subr.mxu0 0.0
    %576 = vmatpush1.msra.mxu0 0.0
    %577 = vmatprep.subr.mxu0 0.0
    %578 = vmatpush1.msra.mxu0 0.0
    %579 = vmatprep.subr.mxu0 0.0
    %580 = vmatpush1.msra.mxu0 %v301
    %581 = vmatprep.subr.mxu0 0.0
    %582 = vmatpush1.msra.mxu0 %v300
    %583 = vmatprep.subr.mxu0 0.0
    %584 = vmatpush2.msra.mxu0 0.0
    %585 = vmatprep.subr.mxu0 0.0
    %586 = vmatpush2.msra.mxu0 0.0
    %587 = vmatprep.subr.mxu0 0.0
    %588 = vmatpush2.msra.mxu0 0.0
    %589 = vmatprep.subr.mxu0 0.0
    %590 = vmatpush2.msra.mxu0 0.0
    %591 = vmatprep.subr.mxu0 0.0
    %592 = vmatpush2.msra.mxu0 0.0
    %593 = vmatprep.subr.mxu0 0.0
    %594 = vmatpush2.msra.mxu0 0.0
    %595 = vmatprep.subr.mxu0 0.0
    %596 = vmatpush2.msra.mxu0 0.0
    %597 = vmatprep.subr.mxu0 0.0
    %598 = vmatpush2.msra.mxu0 0.0
    %599 = vmatprep.subr.mxu0 0.0
    %600 = vmatpush2.msra.mxu0 0.0
    %601 = vmatprep.subr.mxu0 0.0
    %602 = vmatpush2.msra.mxu0 0.0
    %603 = vmatprep.subr.mxu0 0.0
    %604 = vmatpush2.msra.mxu0 0.0
    %605 = vmatprep.subr.mxu0 0.0
    %606 = vmatpush2.msra.mxu0 0.0
    %607 = vmatprep.subr.mxu0 0.0
    %608 = vmatpush2.msra.mxu0 0.0
    %609 = vmatprep.subr.mxu0 0.0
    %610 = vmatpush2.msra.mxu0 0.0
    %611 = vmatprep.subr.mxu0 0.0
    %612 = vmatpush2.msra.mxu0 0.0
    %613 = vmatprep.subr.mxu0 0.0
    %614 = vmatpush2.msra.mxu0 0.0
    %615 = vmatprep.mubr.f32.mxu0 0.0
    %616 = vmatmul.mubr.f32.gmra.mxu0 %v546
    %v617 = vpop.f32.mrf.mxu0
    %v618 = vadd.f32 0.0, %v617
    %v619 = vpop.f32.mrf.mxu0
    %620 = vmatprep.mubr.f32.mxu0 0.0
    %621 = vmatmul.mubr.f32.gmra.mxu0 %v549
    %v622 = vpop.f32.mrf.mxu0
    %v623 = vadd.f32 0.0, %v622
    %v624 = vpop.f32.mrf.mxu0
    %625 = vdwg.mxu0
    %v626 = vld [vmem:[%s6] sm:$0xff]
    %v627 = vld [vmem:[%s6 + $0x8] sm:$0xff]
    %v628 = vld [vmem:[%s6 + $0x10] sm:$0xff]
    %v629 = vld [vmem:[%s6 + $0x18] sm:$0xff]
    %v631 = vsel %vm75, %v626, 0
    %v634 = vsel %vm75, %v627, 0
    %v637 = vsel %vm75, %v628, 0
    %v640 = vsel %vm75, %v629, 0
    %642 = vmatprep.subr.mxu0 0.0
    %643 = vmatpush1.msra.mxu0 0.0
    %644 = vmatprep.subr.mxu0 0.0
    %645 = vmatpush1.msra.mxu0 0.0
    %646 = vmatprep.subr.mxu0 0.0
    %647 = vmatpush1.msra.mxu0 0.0
    %648 = vmatprep.subr.mxu0 0.0
    %649 = vmatpush1.msra.mxu0 0.0
    %650 = vmatprep.subr.mxu0 0.0
    %651 = vmatpush1.msra.mxu0 0.0
    %652 = vmatprep.subr.mxu0 0.0
    %653 = vmatpush1.msra.mxu0 0.0
    %654 = vmatprep.subr.mxu0 0.0
    %655 = vmatpush1.msra.mxu0 0.0
    %656 = vmatprep.subr.mxu0 0.0
    %657 = vmatpush1.msra.mxu0 0.0
    %658 = vmatprep.subr.mxu0 0.0
    %659 = vmatpush1.msra.mxu0 0.0
    %660 = vmatprep.subr.mxu0 0.0
    %661 = vmatpush1.msra.mxu0 0.0
    %662 = vmatprep.subr.mxu0 0.0
    %663 = vmatpush1.msra.mxu0 0.0
    %664 = vmatprep.subr.mxu0 0.0
    %665 = vmatpush1.msra.mxu0 0.0
    %666 = vmatprep.subr.mxu0 0.0
    %667 = vmatpush1.msra.mxu0 0.0
    %668 = vmatprep.subr.mxu0 0.0
    %669 = vmatpush1.msra.mxu0 0.0
    %670 = vmatprep.subr.mxu0 0.0
    %671 = vmatpush1.msra.mxu0 %v380
    %672 = vmatprep.subr.mxu0 0.0
    %673 = vmatpush1.msra.mxu0 %v375
    %674 = vmatprep.subr.mxu0 0.0
    %675 = vmatpush2.msra.mxu0 0.0
    %676 = vmatprep.subr.mxu0 0.0
    %677 = vmatpush2.msra.mxu0 0.0
    %678 = vmatprep.subr.mxu0 0.0
    %679 = vmatpush2.msra.mxu0 0.0
    %680 = vmatprep.subr.mxu0 0.0
    %681 = vmatpush2.msra.mxu0 0.0
    %682 = vmatprep.subr.mxu0 0.0
    %683 = vmatpush2.msra.mxu0 0.0
    %684 = vmatprep.subr.mxu0 0.0
    %685 = vmatpush2.msra.mxu0 0.0
    %686 = vmatprep.subr.mxu0 0.0
    %687 = vmatpush2.msra.mxu0 0.0
    %688 = vmatprep.subr.mxu0 0.0
    %689 = vmatpush2.msra.mxu0 0.0
    %690 = vmatprep.subr.mxu0 0.0
    %691 = vmatpush2.msra.mxu0 0.0
    %692 = vmatprep.subr.mxu0 0.0
    %693 = vmatpush2.msra.mxu0 0.0
    %694 = vmatprep.subr.mxu0 0.0
    %695 = vmatpush2.msra.mxu0 0.0
    %696 = vmatprep.subr.mxu0 0.0
    %697 = vmatpush2.msra.mxu0 0.0
    %698 = vmatprep.subr.mxu0 0.0
    %699 = vmatpush2.msra.mxu0 0.0
    %700 = vmatprep.subr.mxu0 0.0
    %701 = vmatpush2.msra.mxu0 0.0
    %702 = vmatprep.subr.mxu0 0.0
    %703 = vmatpush2.msra.mxu0 0.0
    %704 = vmatprep.subr.mxu0 0.0
    %705 = vmatpush2.msra.mxu0 0.0
    %706 = vmatprep.mubr.f32.mxu0 0.0
    %707 = vmatmul.mubr.f32.gmra.mxu0 %v631
    %v708 = vpop.f32.mrf.mxu0
    %v709 = vadd.f32 0.0, %v708
    %v710 = vpop.f32.mrf.mxu0
    %711 = vmatprep.mubr.f32.mxu0 0.0
    %712 = vmatmul.mubr.f32.gmra.mxu0 %v634
    %v713 = vpop.f32.mrf.mxu0
    %v714 = vadd.f32 0.0, %v713
    %v715 = vpop.f32.mrf.mxu0
    %716 = vmatprep.mubr.f32.mxu0 0.0
    %717 = vmatmul.mubr.f32.gmra.mxu0 %v637
    %v718 = vpop.f32.mrf.mxu0
    %v719 = vadd.f32 0.0, %v718
    %v720 = vpop.f32.mrf.mxu0
    %721 = vmatprep.mubr.f32.mxu0 0.0
    %722 = vmatmul.mubr.f32.gmra.mxu0 %v640
    %v723 = vpop.f32.mrf.mxu0
    %v724 = vadd.f32 0.0, %v723
    %v725 = vpop.f32.mrf.mxu0
    %726 = vdwg.mxu0
    %727 = vmatprep.subr.mxu0 0.0
    %728 = vmatpush1.msra.mxu0 0.0
    %729 = vmatprep.subr.mxu0 0.0
    %730 = vmatpush1.msra.mxu0 0.0
    %731 = vmatprep.subr.mxu0 0.0
    %732 = vmatpush1.msra.mxu0 0.0
    %733 = vmatprep.subr.mxu0 0.0
    %734 = vmatpush1.msra.mxu0 0.0
    %735 = vmatprep.subr.mxu0 0.0
    %736 = vmatpush1.msra.mxu0 0.0
    %737 = vmatprep.subr.mxu0 0.0
    %738 = vmatpush1.msra.mxu0 0.0
    %739 = vmatprep.subr.mxu0 0.0
    %740 = vmatpush1.msra.mxu0 0.0
    %741 = vmatprep.subr.mxu0 0.0
    %742 = vmatpush1.msra.mxu0 0.0
    %743 = vmatprep.subr.mxu0 0.0
    %744 = vmatpush1.msra.mxu0 0.0
    %745 = vmatprep.subr.mxu0 0.0
    %746 = vmatpush1.msra.mxu0 0.0
    %747 = vmatprep.subr.mxu0 0.0
    %748 = vmatpush1.msra.mxu0 0.0
    %749 = vmatprep.subr.mxu0 0.0
    %750 = vmatpush1.msra.mxu0 0.0
    %751 = vmatprep.subr.mxu0 0.0
    %752 = vmatpush1.msra.mxu0 0.0
    %753 = vmatprep.subr.mxu0 0.0
    %754 = vmatpush1.msra.mxu0 0.0
    %755 = vmatprep.subr.mxu0 0.0
    %756 = vmatpush1.msra.mxu0 %v461
    %757 = vmatprep.subr.mxu0 0.0
    %758 = vmatpush1.msra.mxu0 %v456
    %759 = vmatprep.subr.mxu0 0.0
    %760 = vmatpush2.msra.mxu0 0.0
    %761 = vmatprep.subr.mxu0 0.0
    %762 = vmatpush2.msra.mxu0 0.0
    %763 = vmatprep.subr.mxu0 0.0
    %764 = vmatpush2.msra.mxu0 0.0
    %765 = vmatprep.subr.mxu0 0.0
    %766 = vmatpush2.msra.mxu0 0.0
    %767 = vmatprep.subr.mxu0 0.0
    %768 = vmatpush2.msra.mxu0 0.0
    %769 = vmatprep.subr.mxu0 0.0
    %770 = vmatpush2.msra.mxu0 0.0
    %771 = vmatprep.subr.mxu0 0.0
    %772 = vmatpush2.msra.mxu0 0.0
    %773 = vmatprep.subr.mxu0 0.0
    %774 = vmatpush2.msra.mxu0 0.0
    %775 = vmatprep.subr.mxu0 0.0
    %776 = vmatpush2.msra.mxu0 0.0
    %777 = vmatprep.subr.mxu0 0.0
    %778 = vmatpush2.msra.mxu0 0.0
    %779 = vmatprep.subr.mxu0 0.0
    %780 = vmatpush2.msra.mxu0 0.0
    %781 = vmatprep.subr.mxu0 0.0
    %782 = vmatpush2.msra.mxu0 0.0
    %783 = vmatprep.subr.mxu0 0.0
    %784 = vmatpush2.msra.mxu0 0.0
    %785 = vmatprep.subr.mxu0 0.0
    %786 = vmatpush2.msra.mxu0 0.0
    %787 = vmatprep.subr.mxu0 0.0
    %788 = vmatpush2.msra.mxu0 0.0
    %789 = vmatprep.subr.mxu0 0.0
    %790 = vmatpush2.msra.mxu0 0.0
    %791 = vmatprep.mubr.f32.mxu0 0.0
    %792 = vmatmul.mubr.f32.gmra.mxu0 %v631
    %v793 = vpop.f32.mrf.mxu0
    %v794 = vadd.f32 0.0, %v793
    %v795 = vpop.f32.mrf.mxu0
    %796 = vmatprep.mubr.f32.mxu0 0.0
    %797 = vmatmul.mubr.f32.gmra.mxu0 %v634
    %v798 = vpop.f32.mrf.mxu0
    %v799 = vadd.f32 0.0, %v798
    %v800 = vpop.f32.mrf.mxu0
    %801 = vmatprep.mubr.f32.mxu0 0.0
    %802 = vmatmul.mubr.f32.gmra.mxu0 %v637
    %v803 = vpop.f32.mrf.mxu0
    %v804 = vadd.f32 0.0, %v803
    %v805 = vpop.f32.mrf.mxu0
    %806 = vmatprep.mubr.f32.mxu0 0.0
    %807 = vmatmul.mubr.f32.gmra.mxu0 %v640
    %v808 = vpop.f32.mrf.mxu0
    %v809 = vadd.f32 0.0, %v808
    %v810 = vpop.f32.mrf.mxu0
    %811 = vdwg.mxu0
    %812 = vmatprep.subr.mxu0 0.0
    %813 = vmatpush1.msra.mxu0 0.0
    %814 = vmatprep.subr.mxu0 0.0
    %815 = vmatpush1.msra.mxu0 0.0
    %816 = vmatprep.subr.mxu0 0.0
    %817 = vmatpush1.msra.mxu0 0.0
    %818 = vmatprep.subr.mxu0 0.0
    %819 = vmatpush1.msra.mxu0 0.0
    %820 = vmatprep.subr.mxu0 0.0
    %821 = vmatpush1.msra.mxu0 0.0
    %822 = vmatprep.subr.mxu0 0.0
    %823 = vmatpush1.msra.mxu0 0.0
    %824 = vmatprep.subr.mxu0 0.0
    %825 = vmatpush1.msra.mxu0 0.0
    %826 = vmatprep.subr.mxu0 0.0
    %827 = vmatpush1.msra.mxu0 0.0
    %828 = vmatprep.subr.mxu0 0.0
    %829 = vmatpush1.msra.mxu0 0.0
    %830 = vmatprep.subr.mxu0 0.0
    %831 = vmatpush1.msra.mxu0 0.0
    %832 = vmatprep.subr.mxu0 0.0
    %833 = vmatpush1.msra.mxu0 0.0
    %834 = vmatprep.subr.mxu0 0.0
    %835 = vmatpush1.msra.mxu0 0.0
    %836 = vmatprep.subr.mxu0 0.0
    %837 = vmatpush1.msra.mxu0 0.0
    %838 = vmatprep.subr.mxu0 0.0
    %839 = vmatpush1.msra.mxu0 0.0
    %840 = vmatprep.subr.mxu0 0.0
    %841 = vmatpush1.msra.mxu0 %v542
    %842 = vmatprep.subr.mxu0 0.0
    %843 = vmatpush1.msra.mxu0 %v537
    %844 = vmatprep.subr.mxu0 0.0
    %845 = vmatpush2.msra.mxu0 0.0
    %846 = vmatprep.subr.mxu0 0.0
    %847 = vmatpush2.msra.mxu0 0.0
    %848 = vmatprep.subr.mxu0 0.0
    %849 = vmatpush2.msra.mxu0 0.0
    %850 = vmatprep.subr.mxu0 0.0
    %851 = vmatpush2.msra.mxu0 0.0
    %852 = vmatprep.subr.mxu0 0.0
    %853 = vmatpush2.msra.mxu0 0.0
    %854 = vmatprep.subr.mxu0 0.0
    %855 = vmatpush2.msra.mxu0 0.0
    %856 = vmatprep.subr.mxu0 0.0
    %857 = vmatpush2.msra.mxu0 0.0
    %858 = vmatprep.subr.mxu0 0.0
    %859 = vmatpush2.msra.mxu0 0.0
    %860 = vmatprep.subr.mxu0 0.0
    %861 = vmatpush2.msra.mxu0 0.0
    %862 = vmatprep.subr.mxu0 0.0
    %863 = vmatpush2.msra.mxu0 0.0
    %864 = vmatprep.subr.mxu0 0.0
    %865 = vmatpush2.msra.mxu0 0.0
    %866 = vmatprep.subr.mxu0 0.0
    %867 = vmatpush2.msra.mxu0 0.0
    %868 = vmatprep.subr.mxu0 0.0
    %869 = vmatpush2.msra.mxu0 0.0
    %870 = vmatprep.subr.mxu0 0.0
    %871 = vmatpush2.msra.mxu0 0.0
    %872 = vmatprep.subr.mxu0 0.0
    %873 = vmatpush2.msra.mxu0 0.0
    %874 = vmatprep.subr.mxu0 0.0
    %875 = vmatpush2.msra.mxu0 0.0
    %876 = vmatprep.mubr.f32.mxu0 0.0
    %877 = vmatmul.mubr.f32.gmra.mxu0 %v631
    %v878 = vpop.f32.mrf.mxu0
    %v879 = vadd.f32 0.0, %v878
    %v880 = vpop.f32.mrf.mxu0
    %881 = vmatprep.mubr.f32.mxu0 0.0
    %882 = vmatmul.mubr.f32.gmra.mxu0 %v634
    %v883 = vpop.f32.mrf.mxu0
    %v884 = vadd.f32 0.0, %v883
    %v885 = vpop.f32.mrf.mxu0
    %886 = vmatprep.mubr.f32.mxu0 0.0
    %887 = vmatmul.mubr.f32.gmra.mxu0 %v637
    %v888 = vpop.f32.mrf.mxu0
    %v889 = vadd.f32 0.0, %v888
    %v890 = vpop.f32.mrf.mxu0
    %891 = vmatprep.mubr.f32.mxu0 0.0
    %892 = vmatmul.mubr.f32.gmra.mxu0 %v640
    %v893 = vpop.f32.mrf.mxu0
    %v894 = vadd.f32 0.0, %v893
    %v895 = vpop.f32.mrf.mxu0
    %896 = vdwg.mxu0
    %897 = vmatprep.subr.mxu0 0.0
    %898 = vmatpush1.msra.mxu0 0.0
    %899 = vmatprep.subr.mxu0 0.0
    %900 = vmatpush1.msra.mxu0 0.0
    %901 = vmatprep.subr.mxu0 0.0
    %902 = vmatpush1.msra.mxu0 0.0
    %903 = vmatprep.subr.mxu0 0.0
    %904 = vmatpush1.msra.mxu0 0.0
    %905 = vmatprep.subr.mxu0 0.0
    %906 = vmatpush1.msra.mxu0 0.0
    %907 = vmatprep.subr.mxu0 0.0
    %908 = vmatpush1.msra.mxu0 0.0
    %909 = vmatprep.subr.mxu0 0.0
    %910 = vmatpush1.msra.mxu0 0.0
    %911 = vmatprep.subr.mxu0 0.0
    %912 = vmatpush1.msra.mxu0 0.0
    %913 = vmatprep.subr.mxu0 0.0
    %914 = vmatpush1.msra.mxu0 0.0
    %915 = vmatprep.subr.mxu0 0.0
    %916 = vmatpush1.msra.mxu0 0.0
    %917 = vmatprep.subr.mxu0 0.0
    %918 = vmatpush1.msra.mxu0 0.0
    %919 = vmatprep.subr.mxu0 0.0
    %920 = vmatpush1.msra.mxu0 0.0
    %921 = vmatprep.subr.mxu0 0.0
    %922 = vmatpush1.msra.mxu0 0.0
    %923 = vmatprep.subr.mxu0 0.0
    %924 = vmatpush1.msra.mxu0 0.0
    %925 = vmatprep.subr.mxu0 0.0
    %926 = vmatpush1.msra.mxu0 %v623
    %927 = vmatprep.subr.mxu0 0.0
    %928 = vmatpush1.msra.mxu0 %v618
    %929 = vmatprep.subr.mxu0 0.0
    %930 = vmatpush2.msra.mxu0 0.0
    %931 = vmatprep.subr.mxu0 0.0
    %932 = vmatpush2.msra.mxu0 0.0
    %933 = vmatprep.subr.mxu0 0.0
    %934 = vmatpush2.msra.mxu0 0.0
    %935 = vmatprep.subr.mxu0 0.0
    %936 = vmatpush2.msra.mxu0 0.0
    %937 = vmatprep.subr.mxu0 0.0
    %938 = vmatpush2.msra.mxu0 0.0
    %939 = vmatprep.subr.mxu0 0.0
    %940 = vmatpush2.msra.mxu0 0.0
    %941 = vmatprep.subr.mxu0 0.0
    %942 = vmatpush2.msra.mxu0 0.0
    %943 = vmatprep.subr.mxu0 0.0
    %944 = vmatpush2.msra.mxu0 0.0
    %945 = vmatprep.subr.mxu0 0.0
    %946 = vmatpush2.msra.mxu0 0.0
    %947 = vmatprep.subr.mxu0 0.0
    %948 = vmatpush2.msra.mxu0 0.0
    %949 = vmatprep.subr.mxu0 0.0
    %950 = vmatpush2.msra.mxu0 0.0
    %951 = vmatprep.subr.mxu0 0.0
    %952 = vmatpush2.msra.mxu0 0.0
    %953 = vmatprep.subr.mxu0 0.0
    %954 = vmatpush2.msra.mxu0 0.0
    %955 = vmatprep.subr.mxu0 0.0
    %956 = vmatpush2.msra.mxu0 0.0
    %957 = vmatprep.subr.mxu0 0.0
    %958 = vmatpush2.msra.mxu0 0.0
    %959 = vmatprep.subr.mxu0 0.0
    %960 = vmatpush2.msra.mxu0 0.0
    %961 = vmatprep.mubr.f32.mxu0 0.0
    %962 = vmatmul.mubr.f32.gmra.mxu0 %v631
    %v963 = vpop.f32.mrf.mxu0
    %v964 = vadd.f32 0.0, %v963
    %v965 = vpop.f32.mrf.mxu0
    %966 = vmatprep.mubr.f32.mxu0 0.0
    %967 = vmatmul.mubr.f32.gmra.mxu0 %v634
    %v968 = vpop.f32.mrf.mxu0
    %v969 = vadd.f32 0.0, %v968
    %v970 = vpop.f32.mrf.mxu0
    %971 = vmatprep.mubr.f32.mxu0 0.0
    %972 = vmatmul.mubr.f32.gmra.mxu0 %v637
    %v973 = vpop.f32.mrf.mxu0
    %v974 = vadd.f32 0.0, %v973
    %v975 = vpop.f32.mrf.mxu0
    %976 = vmatprep.mubr.f32.mxu0 0.0
    %977 = vmatmul.mubr.f32.gmra.mxu0 %v640
    %v978 = vpop.f32.mrf.mxu0
    %v979 = vadd.f32 0.0, %v978
    %v980 = vpop.f32.mrf.mxu0
    %981 = vdwg.mxu0
    %v982 = vld [vmem:[%s5] sm:$0xff]
    %v983 = vld [vmem:[%s5 + $0x8] sm:$0xff]
    %v984 = vld [vmem:[%s5 + $0x10] sm:$0xff]
    %v985 = vld [vmem:[%s5 + $0x18] sm:$0xff]
    %v986 = vld [vmem:[%s5 + $0x20] sm:$0xff]
    %v987 = vld [vmem:[%s5 + $0x28] sm:$0xff]
    %v988 = vld [vmem:[%s5 + $0x30] sm:$0xff]
    %v989 = vld [vmem:[%s5 + $0x38] sm:$0xff]
    %v990 = vld [vmem:[%s5 + $0x40] sm:$0xff]
    %v991 = vld [vmem:[%s5 + $0x48] sm:$0xff]
    %v992 = vld [vmem:[%s5 + $0x50] sm:$0xff]
    %v993 = vld [vmem:[%s5 + $0x58] sm:$0xff]
    %v994 = vld [vmem:[%s5 + $0x60] sm:$0xff]
    %v995 = vld [vmem:[%s5 + $0x68] sm:$0xff]
    %v996 = vld [vmem:[%s5 + $0x70] sm:$0xff]
    %v997 = vld [vmem:[%s5 + $0x78] sm:$0xff]
    %v998 = vadd.f32 %v709, %v982
    %v999 = vadd.f32 %v714, %v983
    %v1000 = vadd.f32 %v719, %v984
    %v1001 = vadd.f32 %v724, %v985
    %v1002 = vadd.f32 %v794, %v986
    %v1003 = vadd.f32 %v799, %v987
    %v1004 = vadd.f32 %v804, %v988
    %v1005 = vadd.f32 %v809, %v989
    %v1006 = vadd.f32 %v879, %v990
    %v1007 = vadd.f32 %v884, %v991
    %v1008 = vadd.f32 %v889, %v992
    %v1009 = vadd.f32 %v894, %v993
    %v1010 = vadd.f32 %v964, %v994
    %v1011 = vadd.f32 %v969, %v995
    %v1012 = vadd.f32 %v974, %v996
    %v1013 = vadd.f32 %v979, %v997
    %v1014 = vsub.f32 %v998, 1.0
    %v1015 = vsub.f32 %v999, 1.0
    %v1016 = vsub.f32 %v1000, 1.0
    %v1017 = vsub.f32 %v1001, 1.0
    %v1018 = vsub.f32 %v1002, 1.0
    %v1019 = vsub.f32 %v1003, 1.0
    %v1020 = vsub.f32 %v1004, 1.0
    %v1021 = vsub.f32 %v1005, 1.0
    %v1022 = vsub.f32 %v1006, 1.0
    %v1023 = vsub.f32 %v1007, 1.0
    %v1024 = vsub.f32 %v1008, 1.0
    %v1025 = vsub.f32 %v1009, 1.0
    %v1026 = vsub.f32 %v1010, 1.0
    %v1027 = vsub.f32 %v1011, 1.0
    %v1028 = vsub.f32 %v1012, 1.0
    %v1029 = vsub.f32 %v1013, 1.0
    %vm1030 = vcmp.ge.f32.partialorder %v1014, 0.0
    %vm1031 = vcmp.ge.f32.partialorder %v1015, 0.0
    %vm1032 = vcmp.ge.f32.partialorder %v1016, 0.0
    %vm1033 = vcmp.ge.f32.partialorder %v1017, 0.0
    %vm1034 = vcmp.ge.f32.partialorder %v1018, 0.0
    %vm1035 = vcmp.ge.f32.partialorder %v1019, 0.0
    %vm1036 = vcmp.ge.f32.partialorder %v1020, 0.0
    %vm1037 = vcmp.ge.f32.partialorder %v1021, 0.0
    %vm1038 = vcmp.ge.f32.partialorder %v1022, 0.0
    %vm1039 = vcmp.ge.f32.partialorder %v1023, 0.0
    %vm1040 = vcmp.ge.f32.partialorder %v1024, 0.0
    %vm1041 = vcmp.ge.f32.partialorder %v1025, 0.0
    %vm1042 = vcmp.ge.f32.partialorder %v1026, 0.0
    %vm1043 = vcmp.ge.f32.partialorder %v1027, 0.0
    %vm1044 = vcmp.ge.f32.partialorder %v1028, 0.0
    %vm1045 = vcmp.ge.f32.partialorder %v1029, 0.0
    %v1046 = vmul.f32 %v1014, 0.2
    %v1047 = vmul.f32 %v1015, 0.2
    %v1048 = vmul.f32 %v1016, 0.2
    %v1049 = vmul.f32 %v1017, 0.2
    %v1050 = vmul.f32 %v1018, 0.2
    %v1051 = vmul.f32 %v1019, 0.2
    %v1052 = vmul.f32 %v1020, 0.2
    %v1053 = vmul.f32 %v1021, 0.2
    %v1054 = vmul.f32 %v1022, 0.2
    %v1055 = vmul.f32 %v1023, 0.2
    %v1056 = vmul.f32 %v1024, 0.2
    %v1057 = vmul.f32 %v1025, 0.2
    %v1058 = vmul.f32 %v1026, 0.2
    %v1059 = vmul.f32 %v1027, 0.2
    %v1060 = vmul.f32 %v1028, 0.2
    %v1061 = vmul.f32 %v1029, 0.2
    %v1062 = vsel %vm1030, %v1014, %v1046
    %v1063 = vsel %vm1031, %v1015, %v1047
    %v1064 = vsel %vm1032, %v1016, %v1048
    %v1065 = vsel %vm1033, %v1017, %v1049
    %v1066 = vsel %vm1034, %v1018, %v1050
    %v1067 = vsel %vm1035, %v1019, %v1051
    %v1068 = vsel %vm1036, %v1020, %v1052
    %v1069 = vsel %vm1037, %v1021, %v1053
    %v1070 = vsel %vm1038, %v1022, %v1054
    %v1071 = vsel %vm1039, %v1023, %v1055
    %v1072 = vsel %vm1040, %v1024, %v1056
    %v1073 = vsel %vm1041, %v1025, %v1057
    %v1074 = vsel %vm1042, %v1026, %v1058
    %v1075 = vsel %vm1043, %v1027, %v1059
    %v1076 = vsel %vm1044, %v1028, %v1060
    %v1077 = vsel %vm1045, %v1029, %v1061
    %1078 = vst [vmem:[#allocation2] sm:$0xff] %v1062
    %1079 = vst [vmem:[#allocation2 + $0x8] sm:$0xff] %v1063
    %1080 = vst [vmem:[#allocation2 + $0x10] sm:$0xff] %v1064
    %1081 = vst [vmem:[#allocation2 + $0x18] sm:$0xff] %v1065
    %1082 = vst [vmem:[#allocation2 + $0x20] sm:$0xff] %v1066
    %1083 = vst [vmem:[#allocation2 + $0x28] sm:$0xff] %v1067
    %1084 = vst [vmem:[#allocation2 + $0x30] sm:$0xff] %v1068
    %1085 = vst [vmem:[#allocation2 + $0x38] sm:$0xff] %v1069
    %1086 = vst [vmem:[#allocation2 + $0x40] sm:$0xff] %v1070
    %1087 = vst [vmem:[#allocation2 + $0x48] sm:$0xff] %v1071
    %1088 = vst [vmem:[#allocation2 + $0x50] sm:$0xff] %v1072
    %1089 = vst [vmem:[#allocation2 + $0x58] sm:$0xff] %v1073
    %1090 = vst [vmem:[#allocation2 + $0x60] sm:$0xff] %v1074
    %1091 = vst [vmem:[#allocation2 + $0x68] sm:$0xff] %v1075
    %1092 = vst [vmem:[#allocation2 + $0x70] sm:$0xff] %v1076
    %1093 = vst [vmem:[#allocation2 + $0x78] sm:$0xff] %v1077
    %v1094 = vsub.f32 %v998, %v1062
    %v1095 = vsub.f32 %v999, %v1063
    %v1096 = vsub.f32 %v1000, %v1064
    %v1097 = vsub.f32 %v1001, %v1065
    %v1098 = vsub.f32 %v1002, %v1066
    %v1099 = vsub.f32 %v1003, %v1067
    %v1100 = vsub.f32 %v1004, %v1068
    %v1101 = vsub.f32 %v1005, %v1069
    %v1102 = vsub.f32 %v1006, %v1070
    %v1103 = vsub.f32 %v1007, %v1071
    %v1104 = vsub.f32 %v1008, %v1072
    %v1105 = vsub.f32 %v1009, %v1073
    %v1106 = vsub.f32 %v1010, %v1074
    %v1107 = vsub.f32 %v1011, %v1075
    %v1108 = vsub.f32 %v1012, %v1076
    %v1109 = vsub.f32 %v1013, %v1077
    %1110 = vst [vmem:[%s16] sm:$0xff] %v1094
    %1111 = vst [vmem:[%s16 + $0x8] sm:$0xff] %v1095
    %1112 = vst [vmem:[%s16 + $0x10] sm:$0xff] %v1096
    %1113 = vst [vmem:[%s16 + $0x18] sm:$0xff] %v1097
    %1114 = vst [vmem:[%s16 + $0x20] sm:$0xff] %v1098
    %1115 = vst [vmem:[%s16 + $0x28] sm:$0xff] %v1099
    %1116 = vst [vmem:[%s16 + $0x30] sm:$0xff] %v1100
    %1117 = vst [vmem:[%s16 + $0x38] sm:$0xff] %v1101
    %1118 = vst [vmem:[%s16 + $0x40] sm:$0xff] %v1102
    %1119 = vst [vmem:[%s16 + $0x48] sm:$0xff] %v1103
    %1120 = vst [vmem:[%s16 + $0x50] sm:$0xff] %v1104
    %1121 = vst [vmem:[%s16 + $0x58] sm:$0xff] %v1105
    %1122 = vst [vmem:[%s16 + $0x60] sm:$0xff] %v1106
    %1123 = vst [vmem:[%s16 + $0x68] sm:$0xff] %v1107
    %1124 = vst [vmem:[%s16 + $0x70] sm:$0xff] %v1108
    %1125 = vst [vmem:[%s16 + $0x78] sm:$0xff] %v1109
    %v1126 = vld [vmem:[%s2] sm:$0xff]
    %v1127 = vld [vmem:[%s2 + $0x8] sm:$0xff]
    %v1128 = vld [vmem:[%s2 + $0x10] sm:$0xff]
    %v1129 = vld [vmem:[%s2 + $0x18] sm:$0xff]
    %v1130 = vld [vmem:[%s2 + $0x20] sm:$0xff]
    %v1131 = vld [vmem:[%s2 + $0x28] sm:$0xff]
    %v1132 = vld [vmem:[%s2 + $0x30] sm:$0xff]
    %v1133 = vld [vmem:[%s2 + $0x38] sm:$0xff]
    %v1134 = vld [vmem:[%s8] sm:$0xff]
    %v1135 = vld [vmem:[%s8 + $0x8] sm:$0xff]
    %1136 = vmatprep.subr.mxu0 0.0
    %1137 = vmatpush1.msra.mxu0 0.0
    %1138 = vmatprep.subr.mxu0 0.0
    %1139 = vmatpush1.msra.mxu0 0.0
    %1140 = vmatprep.subr.mxu0 0.0
    %1141 = vmatpush1.msra.mxu0 0.0
    %1142 = vmatprep.subr.mxu0 0.0
    %1143 = vmatpush1.msra.mxu0 0.0
    %1144 = vmatprep.subr.mxu0 0.0
    %1145 = vmatpush1.msra.mxu0 0.0
    %1146 = vmatprep.subr.mxu0 0.0
    %1147 = vmatpush1.msra.mxu0 0.0
    %1148 = vmatprep.subr.mxu0 0.0
    %1149 = vmatpush1.msra.mxu0 0.0
    %1150 = vmatprep.subr.mxu0 0.0
    %1151 = vmatpush1.msra.mxu0 0.0
    %1152 = vmatprep.subr.mxu0 0.0
    %1153 = vmatpush1.msra.mxu0 0.0
    %1154 = vmatprep.subr.mxu0 0.0
    %1155 = vmatpush1.msra.mxu0 0.0
    %1156 = vmatprep.subr.mxu0 0.0
    %1157 = vmatpush1.msra.mxu0 0.0
    %1158 = vmatprep.subr.mxu0 0.0
    %1159 = vmatpush1.msra.mxu0 0.0
    %1160 = vmatprep.subr.mxu0 0.0
    %1161 = vmatpush1.msra.mxu0 0.0
    %1162 = vmatprep.subr.mxu0 0.0
    %1163 = vmatpush1.msra.mxu0 0.0
    %1164 = vmatprep.subr.mxu0 0.0
    %1165 = vmatpush1.msra.mxu0 %v1135
    %1166 = vmatprep.subr.mxu0 0.0
    %1167 = vmatpush1.msra.mxu0 %v1134
    %1168 = vmatprep.subr.mxu0 0.0
    %1169 = vmatpush2.msra.mxu0 0.0
    %1170 = vmatprep.subr.mxu0 0.0
    %1171 = vmatpush2.msra.mxu0 0.0
    %1172 = vmatprep.subr.mxu0 0.0
    %1173 = vmatpush2.msra.mxu0 0.0
    %1174 = vmatprep.subr.mxu0 0.0
    %1175 = vmatpush2.msra.mxu0 0.0
    %1176 = vmatprep.subr.mxu0 0.0
    %1177 = vmatpush2.msra.mxu0 0.0
    %1178 = vmatprep.subr.mxu0 0.0
    %1179 = vmatpush2.msra.mxu0 0.0
    %1180 = vmatprep.subr.mxu0 0.0
    %1181 = vmatpush2.msra.mxu0 0.0
    %1182 = vmatprep.subr.mxu0 0.0
    %1183 = vmatpush2.msra.mxu0 0.0
    %1184 = vmatprep.subr.mxu0 0.0
    %1185 = vmatpush2.msra.mxu0 0.0
    %1186 = vmatprep.subr.mxu0 0.0
    %1187 = vmatpush2.msra.mxu0 0.0
    %1188 = vmatprep.subr.mxu0 0.0
    %1189 = vmatpush2.msra.mxu0 0.0
    %1190 = vmatprep.subr.mxu0 0.0
    %1191 = vmatpush2.msra.mxu0 0.0
    %1192 = vmatprep.subr.mxu0 0.0
    %1193 = vmatpush2.msra.mxu0 0.0
    %1194 = vmatprep.subr.mxu0 0.0
    %1195 = vmatpush2.msra.mxu0 0.0
    %1196 = vmatprep.subr.mxu0 0.0
    %1197 = vmatpush2.msra.mxu0 0.0
    %1198 = vmatprep.subr.mxu0 0.0
    %1199 = vmatpush2.msra.mxu0 0.0
    %1200 = vmatprep.mubr.f32.mxu0 0.0
    %1201 = vmatmul.mubr.f32.gmra.mxu0 %v303
    %v1202 = vpop.f32.mrf.mxu0
    %v1203 = vadd.f32 0.0, %v1202
    %v1204 = vpop.f32.mrf.mxu0
    %1205 = vmatprep.mubr.f32.mxu0 0.0
    %1206 = vmatmul.mubr.f32.gmra.mxu0 %v306
    %v1207 = vpop.f32.mrf.mxu0
    %v1208 = vadd.f32 0.0, %v1207
    %v1209 = vpop.f32.mrf.mxu0
    %1210 = vdwg.mxu0
    %1211 = vmatprep.subr.mxu0 0.0
    %1212 = vmatpush1.msra.mxu0 0.0
    %1213 = vmatprep.subr.mxu0 0.0
    %1214 = vmatpush1.msra.mxu0 0.0
    %1215 = vmatprep.subr.mxu0 0.0
    %1216 = vmatpush1.msra.mxu0 0.0
    %1217 = vmatprep.subr.mxu0 0.0
    %1218 = vmatpush1.msra.mxu0 0.0
    %1219 = vmatprep.subr.mxu0 0.0
    %1220 = vmatpush1.msra.mxu0 0.0
    %1221 = vmatprep.subr.mxu0 0.0
    %1222 = vmatpush1.msra.mxu0 0.0
    %1223 = vmatprep.subr.mxu0 0.0
    %1224 = vmatpush1.msra.mxu0 0.0
    %1225 = vmatprep.subr.mxu0 0.0
    %1226 = vmatpush1.msra.mxu0 0.0
    %1227 = vmatprep.subr.mxu0 0.0
    %1228 = vmatpush1.msra.mxu0 0.0
    %1229 = vmatprep.subr.mxu0 0.0
    %1230 = vmatpush1.msra.mxu0 0.0
    %1231 = vmatprep.subr.mxu0 0.0
    %1232 = vmatpush1.msra.mxu0 0.0
    %1233 = vmatprep.subr.mxu0 0.0
    %1234 = vmatpush1.msra.mxu0 0.0
    %1235 = vmatprep.subr.mxu0 0.0
    %1236 = vmatpush1.msra.mxu0 0.0
    %1237 = vmatprep.subr.mxu0 0.0
    %1238 = vmatpush1.msra.mxu0 0.0
    %1239 = vmatprep.subr.mxu0 0.0
    %1240 = vmatpush1.msra.mxu0 %v1135
    %1241 = vmatprep.subr.mxu0 0.0
    %1242 = vmatpush1.msra.mxu0 %v1134
    %1243 = vmatprep.subr.mxu0 0.0
    %1244 = vmatpush2.msra.mxu0 0.0
    %1245 = vmatprep.subr.mxu0 0.0
    %1246 = vmatpush2.msra.mxu0 0.0
    %1247 = vmatprep.subr.mxu0 0.0
    %1248 = vmatpush2.msra.mxu0 0.0
    %1249 = vmatprep.subr.mxu0 0.0
    %1250 = vmatpush2.msra.mxu0 0.0
    %1251 = vmatprep.subr.mxu0 0.0
    %1252 = vmatpush2.msra.mxu0 0.0
    %1253 = vmatprep.subr.mxu0 0.0
    %1254 = vmatpush2.msra.mxu0 0.0
    %1255 = vmatprep.subr.mxu0 0.0
    %1256 = vmatpush2.msra.mxu0 0.0
    %1257 = vmatprep.subr.mxu0 0.0
    %1258 = vmatpush2.msra.mxu0 0.0
    %1259 = vmatprep.subr.mxu0 0.0
    %1260 = vmatpush2.msra.mxu0 0.0
    %1261 = vmatprep.subr.mxu0 0.0
    %1262 = vmatpush2.msra.mxu0 0.0
    %1263 = vmatprep.subr.mxu0 0.0
    %1264 = vmatpush2.msra.mxu0 0.0
    %1265 = vmatprep.subr.mxu0 0.0
    %1266 = vmatpush2.msra.mxu0 0.0
    %1267 = vmatprep.subr.mxu0 0.0
    %1268 = vmatpush2.msra.mxu0 0.0
    %1269 = vmatprep.subr.mxu0 0.0
    %1270 = vmatpush2.msra.mxu0 0.0
    %1271 = vmatprep.subr.mxu0 0.0
    %1272 = vmatpush2.msra.mxu0 0.0
    %1273 = vmatprep.subr.mxu0 0.0
    %1274 = vmatpush2.msra.mxu0 0.0
    %1275 = vmatprep.mubr.f32.mxu0 0.0
    %1276 = vmatmul.mubr.f32.gmra.mxu0 %v384
    %v1277 = vpop.f32.mrf.mxu0
    %v1278 = vadd.f32 0.0, %v1277
    %v1279 = vpop.f32.mrf.mxu0
    %1280 = vmatprep.mubr.f32.mxu0 0.0
    %1281 = vmatmul.mubr.f32.gmra.mxu0 %v387
    %v1282 = vpop.f32.mrf.mxu0
    %v1283 = vadd.f32 0.0, %v1282
    %v1284 = vpop.f32.mrf.mxu0
    %1285 = vdwg.mxu0
    %1286 = vmatprep.subr.mxu0 0.0
    %1287 = vmatpush1.msra.mxu0 0.0
    %1288 = vmatprep.subr.mxu0 0.0
    %1289 = vmatpush1.msra.mxu0 0.0
    %1290 = vmatprep.subr.mxu0 0.0
    %1291 = vmatpush1.msra.mxu0 0.0
    %1292 = vmatprep.subr.mxu0 0.0
    %1293 = vmatpush1.msra.mxu0 0.0
    %1294 = vmatprep.subr.mxu0 0.0
    %1295 = vmatpush1.msra.mxu0 0.0
    %1296 = vmatprep.subr.mxu0 0.0
    %1297 = vmatpush1.msra.mxu0 0.0
    %1298 = vmatprep.subr.mxu0 0.0
    %1299 = vmatpush1.msra.mxu0 0.0
    %1300 = vmatprep.subr.mxu0 0.0
    %1301 = vmatpush1.msra.mxu0 0.0
    %1302 = vmatprep.subr.mxu0 0.0
    %1303 = vmatpush1.msra.mxu0 0.0
    %1304 = vmatprep.subr.mxu0 0.0
    %1305 = vmatpush1.msra.mxu0 0.0
    %1306 = vmatprep.subr.mxu0 0.0
    %1307 = vmatpush1.msra.mxu0 0.0
    %1308 = vmatprep.subr.mxu0 0.0
    %1309 = vmatpush1.msra.mxu0 0.0
    %1310 = vmatprep.subr.mxu0 0.0
    %1311 = vmatpush1.msra.mxu0 0.0
    %1312 = vmatprep.subr.mxu0 0.0
    %1313 = vmatpush1.msra.mxu0 0.0
    %1314 = vmatprep.subr.mxu0 0.0
    %1315 = vmatpush1.msra.mxu0 %v1135
    %1316 = vmatprep.subr.mxu0 0.0
    %1317 = vmatpush1.msra.mxu0 %v1134
    %1318 = vmatprep.subr.mxu0 0.0
    %1319 = vmatpush2.msra.mxu0 0.0
    %1320 = vmatprep.subr.mxu0 0.0
    %1321 = vmatpush2.msra.mxu0 0.0
    %1322 = vmatprep.subr.mxu0 0.0
    %1323 = vmatpush2.msra.mxu0 0.0
    %1324 = vmatprep.subr.mxu0 0.0
    %1325 = vmatpush2.msra.mxu0 0.0
    %1326 = vmatprep.subr.mxu0 0.0
    %1327 = vmatpush2.msra.mxu0 0.0
    %1328 = vmatprep.subr.mxu0 0.0
    %1329 = vmatpush2.msra.mxu0 0.0
    %1330 = vmatprep.subr.mxu0 0.0
    %1331 = vmatpush2.msra.mxu0 0.0
    %1332 = vmatprep.subr.mxu0 0.0
    %1333 = vmatpush2.msra.mxu0 0.0
    %1334 = vmatprep.subr.mxu0 0.0
    %1335 = vmatpush2.msra.mxu0 0.0
    %1336 = vmatprep.subr.mxu0 0.0
    %1337 = vmatpush2.msra.mxu0 0.0
    %1338 = vmatprep.subr.mxu0 0.0
    %1339 = vmatpush2.msra.mxu0 0.0
    %1340 = vmatprep.subr.mxu0 0.0
    %1341 = vmatpush2.msra.mxu0 0.0
    %1342 = vmatprep.subr.mxu0 0.0
    %1343 = vmatpush2.msra.mxu0 0.0
    %1344 = vmatprep.subr.mxu0 0.0
    %1345 = vmatpush2.msra.mxu0 0.0
    %1346 = vmatprep.subr.mxu0 0.0
    %1347 = vmatpush2.msra.mxu0 0.0
    %1348 = vmatprep.subr.mxu0 0.0
    %1349 = vmatpush2.msra.mxu0 0.0
    %1350 = vmatprep.mubr.f32.mxu0 0.0
    %1351 = vmatmul.mubr.f32.gmra.mxu0 %v465
    %v1352 = vpop.f32.mrf.mxu0
    %v1353 = vadd.f32 0.0, %v1352
    %v1354 = vpop.f32.mrf.mxu0
    %1355 = vmatprep.mubr.f32.mxu0 0.0
    %1356 = vmatmul.mubr.f32.gmra.mxu0 %v468
    %v1357 = vpop.f32.mrf.mxu0
    %v1358 = vadd.f32 0.0, %v1357
    %v1359 = vpop.f32.mrf.mxu0
    %1360 = vdwg.mxu0
    %1361 = vmatprep.subr.mxu0 0.0
    %1362 = vmatpush1.msra.mxu0 0.0
    %1363 = vmatprep.subr.mxu0 0.0
    %1364 = vmatpush1.msra.mxu0 0.0
    %1365 = vmatprep.subr.mxu0 0.0
    %1366 = vmatpush1.msra.mxu0 0.0
    %1367 = vmatprep.subr.mxu0 0.0
    %1368 = vmatpush1.msra.mxu0 0.0
    %1369 = vmatprep.subr.mxu0 0.0
    %1370 = vmatpush1.msra.mxu0 0.0
    %1371 = vmatprep.subr.mxu0 0.0
    %1372 = vmatpush1.msra.mxu0 0.0
    %1373 = vmatprep.subr.mxu0 0.0
    %1374 = vmatpush1.msra.mxu0 0.0
    %1375 = vmatprep.subr.mxu0 0.0
    %1376 = vmatpush1.msra.mxu0 0.0
    %1377 = vmatprep.subr.mxu0 0.0
    %1378 = vmatpush1.msra.mxu0 0.0
    %1379 = vmatprep.subr.mxu0 0.0
    %1380 = vmatpush1.msra.mxu0 0.0
    %1381 = vmatprep.subr.mxu0 0.0
    %1382 = vmatpush1.msra.mxu0 0.0
    %1383 = vmatprep.subr.mxu0 0.0
    %1384 = vmatpush1.msra.mxu0 0.0
    %1385 = vmatprep.subr.mxu0 0.0
    %1386 = vmatpush1.msra.mxu0 0.0
    %1387 = vmatprep.subr.mxu0 0.0
    %1388 = vmatpush1.msra.mxu0 0.0
    %1389 = vmatprep.subr.mxu0 0.0
    %1390 = vmatpush1.msra.mxu0 %v1135
    %1391 = vmatprep.subr.mxu0 0.0
    %1392 = vmatpush1.msra.mxu0 %v1134
    %1393 = vmatprep.subr.mxu0 0.0
    %1394 = vmatpush2.msra.mxu0 0.0
    %1395 = vmatprep.subr.mxu0 0.0
    %1396 = vmatpush2.msra.mxu0 0.0
    %1397 = vmatprep.subr.mxu0 0.0
    %1398 = vmatpush2.msra.mxu0 0.0
    %1399 = vmatprep.subr.mxu0 0.0
    %1400 = vmatpush2.msra.mxu0 0.0
    %1401 = vmatprep.subr.mxu0 0.0
    %1402 = vmatpush2.msra.mxu0 0.0
    %1403 = vmatprep.subr.mxu0 0.0
    %1404 = vmatpush2.msra.mxu0 0.0
    %1405 = vmatprep.subr.mxu0 0.0
    %1406 = vmatpush2.msra.mxu0 0.0
    %1407 = vmatprep.subr.mxu0 0.0
    %1408 = vmatpush2.msra.mxu0 0.0
    %1409 = vmatprep.subr.mxu0 0.0
    %1410 = vmatpush2.msra.mxu0 0.0
    %1411 = vmatprep.subr.mxu0 0.0
    %1412 = vmatpush2.msra.mxu0 0.0
    %1413 = vmatprep.subr.mxu0 0.0
    %1414 = vmatpush2.msra.mxu0 0.0
    %1415 = vmatprep.subr.mxu0 0.0
    %1416 = vmatpush2.msra.mxu0 0.0
    %1417 = vmatprep.subr.mxu0 0.0
    %1418 = vmatpush2.msra.mxu0 0.0
    %1419 = vmatprep.subr.mxu0 0.0
    %1420 = vmatpush2.msra.mxu0 0.0
    %1421 = vmatprep.subr.mxu0 0.0
    %1422 = vmatpush2.msra.mxu0 0.0
    %1423 = vmatprep.subr.mxu0 0.0
    %1424 = vmatpush2.msra.mxu0 0.0
    %1425 = vmatprep.mubr.f32.mxu0 0.0
    %1426 = vmatmul.mubr.f32.gmra.mxu0 %v546
    %v1427 = vpop.f32.mrf.mxu0
    %v1428 = vadd.f32 0.0, %v1427
    %v1429 = vpop.f32.mrf.mxu0
    %1430 = vmatprep.mubr.f32.mxu0 0.0
    %1431 = vmatmul.mubr.f32.gmra.mxu0 %v549
    %v1432 = vpop.f32.mrf.mxu0
    %v1433 = vadd.f32 0.0, %v1432
    %v1434 = vpop.f32.mrf.mxu0
    %1435 = vdwg.mxu0
    %v1436 = vadd.f32 %v1126, %v1203
    %v1437 = vadd.f32 %v1127, %v1208
    %v1438 = vadd.f32 %v1128, %v1278
    %v1439 = vadd.f32 %v1129, %v1283
    %v1440 = vadd.f32 %v1130, %v1353
    %v1441 = vadd.f32 %v1131, %v1358
    %v1442 = vadd.f32 %v1132, %v1428
    %v1443 = vadd.f32 %v1133, %v1433
    %v1444 = vsub.f32 %v1436, %v244
    %v1445 = vsub.f32 %v1437, %v245
    %v1446 = vsub.f32 %v1438, %v246
    %v1447 = vsub.f32 %v1439, %v247
    %v1448 = vsub.f32 %v1440, %v248
    %v1449 = vsub.f32 %v1441, %v249
    %v1450 = vsub.f32 %v1442, %v250
    %v1451 = vsub.f32 %v1443, %v251
    %1452 = vst.msk [vmem:[%s13] sm:$0xff] %vm75, %v1444
    %1453 = vst.msk [vmem:[%s13 + $0x8] sm:$0xff] %vm75, %v1445
    %1454 = vst.msk [vmem:[%s13 + $0x10] sm:$0xff] %vm75, %v1446
    %1455 = vst.msk [vmem:[%s13 + $0x18] sm:$0xff] %vm75, %v1447
    %1456 = vst.msk [vmem:[%s13 + $0x20] sm:$0xff] %vm75, %v1448
    %1457 = vst.msk [vmem:[%s13 + $0x28] sm:$0xff] %vm75, %v1449
    %1458 = vst.msk [vmem:[%s13 + $0x30] sm:$0xff] %vm75, %v1450
    %1459 = vst.msk [vmem:[%s13 + $0x38] sm:$0xff] %vm75, %v1451
    %v1460 = vld [vmem:[%s4] sm:$0xff]
    %v1461 = vld [vmem:[%s4 + $0x8] sm:$0xff]
    %v1462 = vld [vmem:[%s4 + $0x10] sm:$0xff]
    %v1463 = vld [vmem:[%s4 + $0x18] sm:$0xff]
    %v1464 = vld [vmem:[%s4 + $0x20] sm:$0xff]
    %v1465 = vld [vmem:[%s4 + $0x28] sm:$0xff]
    %v1466 = vld [vmem:[%s4 + $0x30] sm:$0xff]
    %v1467 = vld [vmem:[%s4 + $0x38] sm:$0xff]
    %v1468 = vld [vmem:[%s9] sm:$0xff]
    %v1469 = vld [vmem:[%s9 + $0x8] sm:$0xff]
    %v1471 = vsel %vm75, %v1468, 0
    %v1474 = vsel %vm75, %v1469, 0
    %1476 = vmatprep.subr.mxu0 0.0
    %1477 = vmatpush1.msra.mxu0 0.0
    %1478 = vmatprep.subr.mxu0 0.0
    %1479 = vmatpush1.msra.mxu0 0.0
    %1480 = vmatprep.subr.mxu0 0.0
    %1481 = vmatpush1.msra.mxu0 0.0
    %1482 = vmatprep.subr.mxu0 0.0
    %1483 = vmatpush1.msra.mxu0 0.0
    %1484 = vmatprep.subr.mxu0 0.0
    %1485 = vmatpush1.msra.mxu0 0.0
    %1486 = vmatprep.subr.mxu0 0.0
    %1487 = vmatpush1.msra.mxu0 0.0
    %1488 = vmatprep.subr.mxu0 0.0
    %1489 = vmatpush1.msra.mxu0 0.0
    %1490 = vmatprep.subr.mxu0 0.0
    %1491 = vmatpush1.msra.mxu0 0.0
    %1492 = vmatprep.subr.mxu0 0.0
    %1493 = vmatpush1.msra.mxu0 0.0
    %1494 = vmatprep.subr.mxu0 0.0
    %1495 = vmatpush1.msra.mxu0 0.0
    %1496 = vmatprep.subr.mxu0 0.0
    %1497 = vmatpush1.msra.mxu0 0.0
    %1498 = vmatprep.subr.mxu0 0.0
    %1499 = vmatpush1.msra.mxu0 0.0
    %1500 = vmatprep.subr.mxu0 0.0
    %1501 = vmatpush1.msra.mxu0 0.0
    %1502 = vmatprep.subr.mxu0 0.0
    %1503 = vmatpush1.msra.mxu0 0.0
    %1504 = vmatprep.subr.mxu0 0.0
    %1505 = vmatpush1.msra.mxu0 %v68
    %1506 = vmatprep.subr.mxu0 0.0
    %1507 = vmatpush1.msra.mxu0 %v67
    %1508 = vmatprep.subr.mxu0 0.0
    %1509 = vmatpush2.msra.mxu0 0.0
    %1510 = vmatprep.subr.mxu0 0.0
    %1511 = vmatpush2.msra.mxu0 0.0
    %1512 = vmatprep.subr.mxu0 0.0
    %1513 = vmatpush2.msra.mxu0 0.0
    %1514 = vmatprep.subr.mxu0 0.0
    %1515 = vmatpush2.msra.mxu0 0.0
    %1516 = vmatprep.subr.mxu0 0.0
    %1517 = vmatpush2.msra.mxu0 0.0
    %1518 = vmatprep.subr.mxu0 0.0
    %1519 = vmatpush2.msra.mxu0 0.0
    %1520 = vmatprep.subr.mxu0 0.0
    %1521 = vmatpush2.msra.mxu0 0.0
    %1522 = vmatprep.subr.mxu0 0.0
    %1523 = vmatpush2.msra.mxu0 0.0
    %1524 = vmatprep.subr.mxu0 0.0
    %1525 = vmatpush2.msra.mxu0 0.0
    %1526 = vmatprep.subr.mxu0 0.0
    %1527 = vmatpush2.msra.mxu0 0.0
    %1528 = vmatprep.subr.mxu0 0.0
    %1529 = vmatpush2.msra.mxu0 0.0
    %1530 = vmatprep.subr.mxu0 0.0
    %1531 = vmatpush2.msra.mxu0 0.0
    %1532 = vmatprep.subr.mxu0 0.0
    %1533 = vmatpush2.msra.mxu0 0.0
    %1534 = vmatprep.subr.mxu0 0.0
    %1535 = vmatpush2.msra.mxu0 0.0
    %1536 = vmatprep.subr.mxu0 0.0
    %1537 = vmatpush2.msra.mxu0 0.0
    %1538 = vmatprep.subr.mxu0 0.0
    %1539 = vmatpush2.msra.mxu0 0.0
    %1540 = vmatprep.mubr.f32.mxu0 0.0
    %1541 = vmatmul.mubr.f32.gmra.mxu0 %v1471
    %v1542 = vpop.f32.mrf.mxu0
    %v1543 = vadd.f32 0.0, %v1542
    %v1544 = vpop.f32.mrf.mxu0
    %1545 = vmatprep.mubr.f32.mxu0 0.0
    %1546 = vmatmul.mubr.f32.gmra.mxu0 %v1474
    %v1547 = vpop.f32.mrf.mxu0
    %v1548 = vadd.f32 0.0, %v1547
    %v1549 = vpop.f32.mrf.mxu0
    %1550 = vdwg.mxu0
    %1551 = vmatprep.subr.mxu0 0.0
    %1552 = vmatpush1.msra.mxu0 0.0
    %1553 = vmatprep.subr.mxu0 0.0
    %1554 = vmatpush1.msra.mxu0 0.0
    %1555 = vmatprep.subr.mxu0 0.0
    %1556 = vmatpush1.msra.mxu0 0.0
    %1557 = vmatprep.subr.mxu0 0.0
    %1558 = vmatpush1.msra.mxu0 0.0
    %1559 = vmatprep.subr.mxu0 0.0
    %1560 = vmatpush1.msra.mxu0 0.0
    %1561 = vmatprep.subr.mxu0 0.0
    %1562 = vmatpush1.msra.mxu0 0.0
    %1563 = vmatprep.subr.mxu0 0.0
    %1564 = vmatpush1.msra.mxu0 0.0
    %1565 = vmatprep.subr.mxu0 0.0
    %1566 = vmatpush1.msra.mxu0 0.0
    %1567 = vmatprep.subr.mxu0 0.0
    %1568 = vmatpush1.msra.mxu0 0.0
    %1569 = vmatprep.subr.mxu0 0.0
    %1570 = vmatpush1.msra.mxu0 0.0
    %1571 = vmatprep.subr.mxu0 0.0
    %1572 = vmatpush1.msra.mxu0 0.0
    %1573 = vmatprep.subr.mxu0 0.0
    %1574 = vmatpush1.msra.mxu0 0.0
    %1575 = vmatprep.subr.mxu0 0.0
    %1576 = vmatpush1.msra.mxu0 0.0
    %1577 = vmatprep.subr.mxu0 0.0
    %1578 = vmatpush1.msra.mxu0 0.0
    %1579 = vmatprep.subr.mxu0 0.0
    %1580 = vmatpush1.msra.mxu0 %v70
    %1581 = vmatprep.subr.mxu0 0.0
    %1582 = vmatpush1.msra.mxu0 %v69
    %1583 = vmatprep.subr.mxu0 0.0
    %1584 = vmatpush2.msra.mxu0 0.0
    %1585 = vmatprep.subr.mxu0 0.0
    %1586 = vmatpush2.msra.mxu0 0.0
    %1587 = vmatprep.subr.mxu0 0.0
    %1588 = vmatpush2.msra.mxu0 0.0
    %1589 = vmatprep.subr.mxu0 0.0
    %1590 = vmatpush2.msra.mxu0 0.0
    %1591 = vmatprep.subr.mxu0 0.0
    %1592 = vmatpush2.msra.mxu0 0.0
    %1593 = vmatprep.subr.mxu0 0.0
    %1594 = vmatpush2.msra.mxu0 0.0
    %1595 = vmatprep.subr.mxu0 0.0
    %1596 = vmatpush2.msra.mxu0 0.0
    %1597 = vmatprep.subr.mxu0 0.0
    %1598 = vmatpush2.msra.mxu0 0.0
    %1599 = vmatprep.subr.mxu0 0.0
    %1600 = vmatpush2.msra.mxu0 0.0
    %1601 = vmatprep.subr.mxu0 0.0
    %1602 = vmatpush2.msra.mxu0 0.0
    %1603 = vmatprep.subr.mxu0 0.0
    %1604 = vmatpush2.msra.mxu0 0.0
    %1605 = vmatprep.subr.mxu0 0.0
    %1606 = vmatpush2.msra.mxu0 0.0
    %1607 = vmatprep.subr.mxu0 0.0
    %1608 = vmatpush2.msra.mxu0 0.0
    %1609 = vmatprep.subr.mxu0 0.0
    %1610 = vmatpush2.msra.mxu0 0.0
    %1611 = vmatprep.subr.mxu0 0.0
    %1612 = vmatpush2.msra.mxu0 0.0
    %1613 = vmatprep.subr.mxu0 0.0
    %1614 = vmatpush2.msra.mxu0 0.0
    %1615 = vmatprep.mubr.f32.mxu0 0.0
    %1616 = vmatmul.mubr.f32.gmra.mxu0 %v1471
    %v1617 = vpop.f32.mrf.mxu0
    %v1618 = vadd.f32 0.0, %v1617
    %v1619 = vpop.f32.mrf.mxu0
    %1620 = vmatprep.mubr.f32.mxu0 0.0
    %1621 = vmatmul.mubr.f32.gmra.mxu0 %v1474
    %v1622 = vpop.f32.mrf.mxu0
    %v1623 = vadd.f32 0.0, %v1622
    %v1624 = vpop.f32.mrf.mxu0
    %1625 = vdwg.mxu0
    %1626 = vmatprep.subr.mxu0 0.0
    %1627 = vmatpush1.msra.mxu0 0.0
    %1628 = vmatprep.subr.mxu0 0.0
    %1629 = vmatpush1.msra.mxu0 0.0
    %1630 = vmatprep.subr.mxu0 0.0
    %1631 = vmatpush1.msra.mxu0 0.0
    %1632 = vmatprep.subr.mxu0 0.0
    %1633 = vmatpush1.msra.mxu0 0.0
    %1634 = vmatprep.subr.mxu0 0.0
    %1635 = vmatpush1.msra.mxu0 0.0
    %1636 = vmatprep.subr.mxu0 0.0
    %1637 = vmatpush1.msra.mxu0 0.0
    %1638 = vmatprep.subr.mxu0 0.0
    %1639 = vmatpush1.msra.mxu0 0.0
    %1640 = vmatprep.subr.mxu0 0.0
    %1641 = vmatpush1.msra.mxu0 0.0
    %1642 = vmatprep.subr.mxu0 0.0
    %1643 = vmatpush1.msra.mxu0 0.0
    %1644 = vmatprep.subr.mxu0 0.0
    %1645 = vmatpush1.msra.mxu0 0.0
    %1646 = vmatprep.subr.mxu0 0.0
    %1647 = vmatpush1.msra.mxu0 0.0
    %1648 = vmatprep.subr.mxu0 0.0
    %1649 = vmatpush1.msra.mxu0 0.0
    %1650 = vmatprep.subr.mxu0 0.0
    %1651 = vmatpush1.msra.mxu0 0.0
    %1652 = vmatprep.subr.mxu0 0.0
    %1653 = vmatpush1.msra.mxu0 0.0
    %1654 = vmatprep.subr.mxu0 0.0
    %1655 = vmatpush1.msra.mxu0 %v72
    %1656 = vmatprep.subr.mxu0 0.0
    %1657 = vmatpush1.msra.mxu0 %v71
    %1658 = vmatprep.subr.mxu0 0.0
    %1659 = vmatpush2.msra.mxu0 0.0
    %1660 = vmatprep.subr.mxu0 0.0
    %1661 = vmatpush2.msra.mxu0 0.0
    %1662 = vmatprep.subr.mxu0 0.0
    %1663 = vmatpush2.msra.mxu0 0.0
    %1664 = vmatprep.subr.mxu0 0.0
    %1665 = vmatpush2.msra.mxu0 0.0
    %1666 = vmatprep.subr.mxu0 0.0
    %1667 = vmatpush2.msra.mxu0 0.0
    %1668 = vmatprep.subr.mxu0 0.0
    %1669 = vmatpush2.msra.mxu0 0.0
    %1670 = vmatprep.subr.mxu0 0.0
    %1671 = vmatpush2.msra.mxu0 0.0
    %1672 = vmatprep.subr.mxu0 0.0
    %1673 = vmatpush2.msra.mxu0 0.0
    %1674 = vmatprep.subr.mxu0 0.0
    %1675 = vmatpush2.msra.mxu0 0.0
    %1676 = vmatprep.subr.mxu0 0.0
    %1677 = vmatpush2.msra.mxu0 0.0
    %1678 = vmatprep.subr.mxu0 0.0
    %1679 = vmatpush2.msra.mxu0 0.0
    %1680 = vmatprep.subr.mxu0 0.0
    %1681 = vmatpush2.msra.mxu0 0.0
    %1682 = vmatprep.subr.mxu0 0.0
    %1683 = vmatpush2.msra.mxu0 0.0
    %1684 = vmatprep.subr.mxu0 0.0
    %1685 = vmatpush2.msra.mxu0 0.0
    %1686 = vmatprep.subr.mxu0 0.0
    %1687 = vmatpush2.msra.mxu0 0.0
    %1688 = vmatprep.subr.mxu0 0.0
    %1689 = vmatpush2.msra.mxu0 0.0
    %1690 = vmatprep.mubr.f32.mxu0 0.0
    %1691 = vmatmul.mubr.f32.gmra.mxu0 %v1471
    %v1692 = vpop.f32.mrf.mxu0
    %v1693 = vadd.f32 0.0, %v1692
    %v1694 = vpop.f32.mrf.mxu0
    %1695 = vmatprep.mubr.f32.mxu0 0.0
    %1696 = vmatmul.mubr.f32.gmra.mxu0 %v1474
    %v1697 = vpop.f32.mrf.mxu0
    %v1698 = vadd.f32 0.0, %v1697
    %v1699 = vpop.f32.mrf.mxu0
    %1700 = vdwg.mxu0
    %1701 = vmatprep.subr.mxu0 0.0
    %1702 = vmatpush1.msra.mxu0 0.0
    %1703 = vmatprep.subr.mxu0 0.0
    %1704 = vmatpush1.msra.mxu0 0.0
    %1705 = vmatprep.subr.mxu0 0.0
    %1706 = vmatpush1.msra.mxu0 0.0
    %1707 = vmatprep.subr.mxu0 0.0
    %1708 = vmatpush1.msra.mxu0 0.0
    %1709 = vmatprep.subr.mxu0 0.0
    %1710 = vmatpush1.msra.mxu0 0.0
    %1711 = vmatprep.subr.mxu0 0.0
    %1712 = vmatpush1.msra.mxu0 0.0
    %1713 = vmatprep.subr.mxu0 0.0
    %1714 = vmatpush1.msra.mxu0 0.0
    %1715 = vmatprep.subr.mxu0 0.0
    %1716 = vmatpush1.msra.mxu0 0.0
    %1717 = vmatprep.subr.mxu0 0.0
    %1718 = vmatpush1.msra.mxu0 0.0
    %1719 = vmatprep.subr.mxu0 0.0
    %1720 = vmatpush1.msra.mxu0 0.0
    %1721 = vmatprep.subr.mxu0 0.0
    %1722 = vmatpush1.msra.mxu0 0.0
    %1723 = vmatprep.subr.mxu0 0.0
    %1724 = vmatpush1.msra.mxu0 0.0
    %1725 = vmatprep.subr.mxu0 0.0
    %1726 = vmatpush1.msra.mxu0 0.0
    %1727 = vmatprep.subr.mxu0 0.0
    %1728 = vmatpush1.msra.mxu0 0.0
    %1729 = vmatprep.subr.mxu0 0.0
    %1730 = vmatpush1.msra.mxu0 %v74
    %1731 = vmatprep.subr.mxu0 0.0
    %1732 = vmatpush1.msra.mxu0 %v73
    %1733 = vmatprep.subr.mxu0 0.0
    %1734 = vmatpush2.msra.mxu0 0.0
    %1735 = vmatprep.subr.mxu0 0.0
    %1736 = vmatpush2.msra.mxu0 0.0
    %1737 = vmatprep.subr.mxu0 0.0
    %1738 = vmatpush2.msra.mxu0 0.0
    %1739 = vmatprep.subr.mxu0 0.0
    %1740 = vmatpush2.msra.mxu0 0.0
    %1741 = vmatprep.subr.mxu0 0.0
    %1742 = vmatpush2.msra.mxu0 0.0
    %1743 = vmatprep.subr.mxu0 0.0
    %1744 = vmatpush2.msra.mxu0 0.0
    %1745 = vmatprep.subr.mxu0 0.0
    %1746 = vmatpush2.msra.mxu0 0.0
    %1747 = vmatprep.subr.mxu0 0.0
    %1748 = vmatpush2.msra.mxu0 0.0
    %1749 = vmatprep.subr.mxu0 0.0
    %1750 = vmatpush2.msra.mxu0 0.0
    %1751 = vmatprep.subr.mxu0 0.0
    %1752 = vmatpush2.msra.mxu0 0.0
    %1753 = vmatprep.subr.mxu0 0.0
    %1754 = vmatpush2.msra.mxu0 0.0
    %1755 = vmatprep.subr.mxu0 0.0
    %1756 = vmatpush2.msra.mxu0 0.0
    %1757 = vmatprep.subr.mxu0 0.0
    %1758 = vmatpush2.msra.mxu0 0.0
    %1759 = vmatprep.subr.mxu0 0.0
    %1760 = vmatpush2.msra.mxu0 0.0
    %1761 = vmatprep.subr.mxu0 0.0
    %1762 = vmatpush2.msra.mxu0 0.0
    %1763 = vmatprep.subr.mxu0 0.0
    %1764 = vmatpush2.msra.mxu0 0.0
    %1765 = vmatprep.mubr.f32.mxu0 0.0
    %1766 = vmatmul.mubr.f32.gmra.mxu0 %v1471
    %v1767 = vpop.f32.mrf.mxu0
    %v1768 = vadd.f32 0.0, %v1767
    %v1769 = vpop.f32.mrf.mxu0
    %1770 = vmatprep.mubr.f32.mxu0 0.0
    %1771 = vmatmul.mubr.f32.gmra.mxu0 %v1474
    %v1772 = vpop.f32.mrf.mxu0
    %v1773 = vadd.f32 0.0, %v1772
    %v1774 = vpop.f32.mrf.mxu0
    %1775 = vdwg.mxu0
    %v1776 = vadd.f32 %v1460, %v1543
    %v1777 = vadd.f32 %v1461, %v1548
    %v1778 = vadd.f32 %v1462, %v1618
    %v1779 = vadd.f32 %v1463, %v1623
    %v1780 = vadd.f32 %v1464, %v1693
    %v1781 = vadd.f32 %v1465, %v1698
    %v1782 = vadd.f32 %v1466, %v1768
    %v1783 = vadd.f32 %v1467, %v1773
    %v1784 = vsub.f32 %v1776, %v276
    %v1785 = vsub.f32 %v1777, %v277
    %v1786 = vsub.f32 %v1778, %v278
    %v1787 = vsub.f32 %v1779, %v279
    %v1788 = vsub.f32 %v1780, %v280
    %v1789 = vsub.f32 %v1781, %v281
    %v1790 = vsub.f32 %v1782, %v282
    %v1791 = vsub.f32 %v1783, %v283
    %1792 = vst.msk [vmem:[%s14] sm:$0xff] %vm75, %v1784
    %1793 = vst.msk [vmem:[%s14 + $0x8] sm:$0xff] %vm75, %v1785
    %1794 = vst.msk [vmem:[%s14 + $0x10] sm:$0xff] %vm75, %v1786
    %1795 = vst.msk [vmem:[%s14 + $0x18] sm:$0xff] %vm75, %v1787
    %1796 = vst.msk [vmem:[%s14 + $0x20] sm:$0xff] %vm75, %v1788
    %1797 = vst.msk [vmem:[%s14 + $0x28] sm:$0xff] %vm75, %v1789
    %1798 = vst.msk [vmem:[%s14 + $0x30] sm:$0xff] %vm75, %v1790
    %1799 = vst.msk [vmem:[%s14 + $0x38] sm:$0xff] %vm75, %v1791
    // Predicated region
    $region42: #{forward.9} parent=1 // pred_check
      _
    $region43: #{forward.9} parent=1 // pred_check_branch
      %1801 = sbr.rel (0) target = $region45
    $region44: #{forward.9} parent=1 // pred_region
      _
    $region45: #{forward.9} parent=1 // pred_fallthru
      _
    // Predicated region
    $region46: #{forward.9} parent=1 // pred_check
      _
    $region47: #{forward.9} parent=1 // pred_check_branch
      %1803 = sbr.rel (0) target = $region49
    $region48: #{forward.9} parent=1 // pred_region
      _
    $region49: #{forward.9} parent=1 // pred_fallthru
      _
    // Predicated region
    $region50: #{forward.9} parent=1 // pred_check
      _
    $region51: #{forward.9} parent=1 // pred_check_branch
      %1805 = sbr.rel (0) target = $region53
    $region52: #{forward.9} parent=1 // pred_region
      _
    $region53: #{forward.9} parent=1 // pred_fallthru
      _
    // Predicated region
    $region54: #{forward.9} parent=1 // pred_check
      _
    $region55: #{forward.9} parent=1 // pred_check_branch
      %1807 = sbr.rel (0) target = $region57
    $region56: #{forward.9} parent=1 // pred_region
      _
    $region57: #{forward.9} parent=1 // pred_fallthru
      _
    // Predicated region
    $region58: #{forward.9} parent=1 // pred_check
      _
    $region59: #{forward.9} parent=1 // pred_check_branch
      %1809 = sbr.rel (0) target = $region61
    $region60: #{forward.9} parent=1 // pred_region
      _
    $region61: #{forward.9} parent=1 // pred_fallthru
      _
    // Predicated region
    $region62: #{forward.9} parent=1 // pred_check
      _
    $region63: #{forward.9} parent=1 // pred_check_branch
      %1811 = sbr.rel (0) target = $region65
    $region64: #{forward.9} parent=1 // pred_region
      %s1813 = ssub.s32 2048, 2048
      %1814 = vsyncadd [#allocation3], %s1813
      %s1815 = sshll.u32 [#allocation2], 4
      %s1816 = int_to_ptr.vmem [resolvable:$true] %s1815
      %1821 = dma.vmem_to_hbm [thread:$0]  %s1816, 2048, %s15, [#allocation3], 128, 128, 8
    $region65: #{forward.9} parent=1 // pred_fallthru
      _
    // Predicated region
    $region66: #{forward.9} parent=1 // pred_check
      _
    $region67: #{forward.9} parent=1 // pred_check_branch
      %1823 = sbr.rel (0) target = $region69
    $region68: #{forward.9} parent=1 // pred_region
      _
    $region69: #{forward.9} parent=1 // pred_fallthru
      _
    // Predicated region
    $region70: #{forward.9} parent=1 // pred_check
      _
    $region71: #{forward.9} parent=1 // pred_check_branch
      %1825 = sbr.rel (0) target = $region73
    $region72: #{forward.9} parent=1 // pred_region
      _
    $region73: #{forward.9} parent=1 // pred_fallthru
      _
    // Predicated region
    $region74: #{forward.9} parent=1 // pred_check
      _
    $region75: #{forward.9} parent=1 // pred_check_branch
      %1827 = sbr.rel (0) target = $region77
    $region76: #{forward.9} parent=1 // pred_region
      _
    $region77: #{forward.9} parent=1 // pred_fallthru
      _
    // Predicated region
    $region78: #{forward.9} parent=1 // pred_check
      _
    $region79: #{forward.9} parent=1 // pred_check_branch
      %1829 = sbr.rel (0) target = $region81
    $region80: #{forward.9} parent=1 // pred_region
      _
    $region81: #{forward.9} parent=1 // pred_fallthru
      _
    // Predicated region
    $region82: #{forward.9} parent=1 // pred_check
      _
    $region83: #{forward.9} parent=1 // pred_check_branch
      %1831 = sbr.rel (0) target = $region85
    $region84: #{forward.9} parent=1 // pred_region
      _
    $region85: #{forward.9} parent=1 // pred_fallthru
      _
    // Predicated region
    $region86: #{forward.9} parent=1 // pred_check
      _
    $region87: #{forward.9} parent=1 // pred_check_branch
      %1833 = sbr.rel (0) target = $region89
    $region88: #{forward.9} parent=1 // pred_region
      _
    $region89: #{forward.9} parent=1 // pred_fallthru
      _
    // Predicated region
    $region90: #{forward.9} parent=1 // pred_check
      _
    $region91: #{forward.9} parent=1 // pred_check_branch
      %1835 = sbr.rel (0) target = $region93
    $region92: #{forward.9} parent=1 // pred_region
      %1836 = dma.done [#allocation3], 2048
    $region93: #{forward.9} parent=1 // pred_fallthru
      _
    // Predicated region
    $region94: #{forward.9} parent=1 // pred_check
      _
    $region95: #{forward.9} parent=1 // pred_check_branch
      %1838 = sbr.rel (0) target = $region97
    $region96: #{forward.9} parent=1 // pred_region
      _
    $region97: #{forward.9} parent=1 // pred_fallthru
      _
    %1839 = vsyncpa [#allocation3], 1

</llo_original>
